<compile_context>
chip_gen: v5e
topology: v5e:2x2
jax: 0.10.0
libtpu: 0.0.40
codegen_flags: <defaults>
</compile_context>

<pallas_src>
import jax
import jax.numpy as jnp
from jax import lax
from jax.experimental import pallas as pl
from jax.experimental.pallas import tpu as pltpu


def residual_block(x_nchw, w0, g0, b0, a0, w1, g1, b1):
    """x_nchw: (N, C, H, W); w*: (Cout, Cin, 3, 3); g/b/a: (C,) -> (N, C, H, W)."""
    N, C, H, W = x_nchw.shape
    NHW = N * H * W
    Wp = ((W + 2 + 7) // 8) * 8          # padded width, sublane(8)-aligned
    eps = 1e-5
    inv_n = 1.0 / float(NHW)

    x_nhwc = jnp.transpose(x_nchw, (0, 2, 3, 1))
    # "same" zero padding done once, outside the kernel (H: 1|1, W: 1|Wp-W-1).
    x_pad = jnp.pad(x_nhwc, ((0, 0), (1, 1), (1, Wp - W - 1), (0, 0)))
    x_res = x_nhwc.reshape(NHW, C)        # residual term, matches output layout

    def prep_w(w):
        # (Cout, Cin, 3, 3) -> (kh, kw, Cin, Cout) -> (9*Cin, Cout), bf16 MXU operand
        return jnp.transpose(w, (2, 3, 1, 0)).reshape(9 * C, C).astype(jnp.bfloat16)

    def kernel(xpad_ref, xres_ref, w0_ref, w1_ref,
               g0_ref, b0_ref, a0_ref, g1_ref, b1_ref,
               o_ref, slab_ref, ypad_ref):
        # xpad_ref: (N, H+2, Wp, C) f32   pre-padded input
        # xres_ref: (N*H*W, C)      f32   residual term
        # w*_ref:   (9*C, C)        bf16  im2col-ordered conv weights
        # g/b/a:    (1, C)          f32   BN gamma/beta, PReLU alpha
        # o_ref:    (N*H*W, C)            output
        # slab_ref: (N*H*W, 9*C)    f32   im2col slab (reused by both convs)
        # ypad_ref: (N, H+2, Wp, C) f32   padded intermediate for conv1

        def conv3x3(src_ref, w_ref):
            # im2col: build one (NHW, 9C) slab, then a single K=9C MXU matmul
            # (bf16 operands, f32 accumulation) instead of 9 tiny K=C matmuls.
            for k in range(9):
                dy, dx = divmod(k, 3)
                win = src_ref[:, dy:dy + H, dx:dx + W, :].reshape(NHW, C)
                slab_ref[:, k * C:(k + 1) * C] = win
            return jnp.dot(slab_ref[...].astype(jnp.bfloat16), w_ref[...],
                           preferred_element_type=jnp.float32)

        def batchnorm(y, g_ref, b_ref):
            # training-mode BN, one-pass stats: biased var = E[y^2] - E[y]^2
            mean = jnp.sum(y, axis=0, keepdims=True) * inv_n
            ex2 = jnp.sum(y * y, axis=0, keepdims=True) * inv_n
            var = ex2 - mean * mean
            return (y - mean) * (lax.rsqrt(var + eps) * g_ref[...]) + b_ref[...]

        # conv0 -> bn0 -> PReLU(act0)
        y = conv3x3(xpad_ref, w0_ref)
        y = batchnorm(y, g0_ref, b0_ref)
        y = jnp.where(y >= 0.0, y, a0_ref[...] * y)

        # stage padded intermediate for conv1; zero border written exactly once,
        # interior fully overwritten (keep this invariant if scratch is reused).
        ypad_ref[...] = jnp.zeros(ypad_ref.shape, ypad_ref.dtype)
        ypad_ref[:, 1:H + 1, 1:W + 1, :] = y.reshape(N, H, W, C)

        # conv1 -> bn1  (act1 exists in the module but is unused in forward)
        y = conv3x3(ypad_ref, w1_ref)
        y = batchnorm(y, g1_ref, b1_ref)

        # residual add; output kept in (NHW, C) layout, wrapper folds it back.
        # TODO(synk): lane-dense (N*H, W*C) output store skipped — the
        # (NHW, C) -> (N*H, W*C) sublane->lane relayout has no cheap in-kernel
        # form; the wrapper reshape handles it instead.
        o_ref[...] = (y + xres_ref[...]).astype(o_ref.dtype)

    args = (x_pad, x_res, prep_w(w0), prep_w(w1),
            g0.reshape(1, C), b0.reshape(1, C), a0.reshape(1, C),
            g1.reshape(1, C), b1.reshape(1, C))

    vmem_spec = pl.BlockSpec(memory_space=pltpu.MemorySpace.VMEM)
    # TODO(synk): for large feature maps (esp. v7x: 64 MiB VMEM, 2 TensorCores)
    # this gridless all-in-VMEM design should become a pipelined grid over
    # (N, H row-tiles with a 1-row halo); that needs cross-step sum/sumsq
    # accumulators for the global training-mode BN stats, so it is left out here.
    out2d = pl.pallas_call(
        kernel,
        out_shape=jax.ShapeDtypeStruct((NHW, C), x_nchw.dtype),
        in_specs=[vmem_spec] * len(args),
        out_specs=vmem_spec,
        scratch_shapes=[
            pltpu.VMEM((NHW, 9 * C), jnp.float32),       # im2col slab
            pltpu.VMEM((N, H + 2, Wp, C), jnp.float32),  # padded conv1 input
        ],
        compiler_params=pltpu.CompilerParams(vmem_limit_bytes=32 * 1024 * 1024),
    )(*args)

    return jnp.transpose(out2d.reshape(N, H, W, C), (0, 3, 1, 2))


def residual_block_reference(x_nchw, w0, g0, b0, a0, w1, g1, b1):
    """Pure-JAX f32 reference matching the PyTorch training-mode forward."""
    eps = 1e-5
    x = jnp.transpose(x_nchw, (0, 2, 3, 1))  # NHWC

    def conv(inp, w):
        w_hwio = jnp.transpose(w, (2, 3, 1, 0))
        return lax.conv_general_dilated(
            inp, w_hwio, window_strides=(1, 1), padding='SAME',
            dimension_numbers=('NHWC', 'HWIO', 'NHWC'),
            precision=lax.Precision.HIGHEST)

    def bn(y, g, b):
        mean = jnp.mean(y, axis=(0, 1, 2), keepdims=True)
        var = jnp.mean((y - mean) ** 2, axis=(0, 1, 2), keepdims=True)
        return (y - mean) * lax.rsqrt(var + eps) * g + b

    y = bn(conv(x, w0), g0, b0)
    y = jnp.where(y >= 0.0, y, a0 * y)
    y = bn(conv(y, w1), g1, b1)
    return jnp.transpose(y + x, (0, 3, 1, 2))


if __name__ == "__main__":
    # filters must be 64 because the module hard-codes PReLU(num_parameters=64).
    N, C, H, W = 2, 64, 16, 16
    init_gain = 0.1

    keys = jax.random.split(jax.random.PRNGKey(0), 8)
    x = jax.random.normal(keys[0], (N, C, H, W), jnp.float32)
    w0 = init_gain * jax.random.normal(keys[1], (C, C, 3, 3), jnp.float32)
    w1 = init_gain * jax.random.normal(keys[2], (C, C, 3, 3), jnp.float32)
    g0 = 1.0 + 0.1 * jax.random.normal(keys[3], (C,), jnp.float32)
    b0 = 0.1 * jax.random.normal(keys[4], (C,), jnp.float32)
    g1 = 1.0 + 0.1 * jax.random.normal(keys[5], (C,), jnp.float32)
    b1 = 0.1 * jax.random.normal(keys[6], (C,), jnp.float32)
    a0 = 0.25 + 0.05 * jax.random.normal(keys[7], (C,), jnp.float32)
    # TODO(synk): bn0/bn1 running-stat buffer updates (training-mode side effect)
    # are not reproduced; only the returned tensor semantics are.

    out = jax.block_until_ready(residual_block(x, w0, g0, b0, a0, w1, g1, b1))
    ref = residual_block_reference(x, w0, g0, b0, a0, w1, g1, b1)
    assert out.shape == (N, C, H, W)
    # bf16 MXU operands with K = 9*C = 576 give ~1e-2 worst-case elementwise
    # deviation from the f32 reference after BatchNorm rescaling; 3e-2 still
    # catches any structural bug (tap order / BN stats / residual), which
    # would show up at O(0.1) or larger.
    err = float(jnp.max(jnp.abs(out - ref)))
    assert jnp.allclose(out, ref, atol=3e-2, rtol=3e-2), err
    print("KERNEL_OK")
</pallas_src>

<mosaic_0001>
module attributes {stable_mosaic.version = 11 : i64} {
  func.func @kernel(%arg0: memref<2x18x24x64xf32, #tpu.memory_space<vmem>>, %arg1: memref<512x64xf32, #tpu.memory_space<vmem>>, %arg2: memref<576x64xbf16, #tpu.memory_space<vmem>>, %arg3: memref<576x64xbf16, #tpu.memory_space<vmem>>, %arg4: memref<1x64xf32, #tpu.memory_space<vmem>>, %arg5: memref<1x64xf32, #tpu.memory_space<vmem>>, %arg6: memref<1x64xf32, #tpu.memory_space<vmem>>, %arg7: memref<1x64xf32, #tpu.memory_space<vmem>>, %arg8: memref<1x64xf32, #tpu.memory_space<vmem>>, %arg9: memref<512x64xf32, #tpu.memory_space<vmem>>, %arg10: memref<512x576xf32, #tpu.memory_space<vmem>>, %arg11: memref<2x18x24x64xf32, #tpu.memory_space<vmem>>) attributes {dimension_semantics = [], scalar_prefetch = 0 : i64, scratch_operands = 2 : i64, tpu.core_type = #tpu.core_type<tc>} {
    %c0 = arith.constant 0 : index
    %c0_0 = arith.constant 0 : index
    %c0_1 = arith.constant 0 : index
    %c0_2 = arith.constant 0 : index
    %0 = vector.load %arg0[%c0, %c0_0, %c0_1, %c0_2] : memref<2x18x24x64xf32, #tpu.memory_space<vmem>>, vector<2x16x16x64xf32>
    %1 = vector.shape_cast %0 : vector<2x16x16x64xf32> to vector<512x64xf32>
    %c0_3 = arith.constant 0 : index
    %c0_4 = arith.constant 0 : index
    %2 = vector.load %arg10[%c0_3, %c0_4] : memref<512x576xf32, #tpu.memory_space<vmem>>, vector<512x64xf32>
    tpu.vector_store %arg10[%c0_3, %c0_4], %1 {strides = array<i32>} : memref<512x576xf32, #tpu.memory_space<vmem>>, vector<512x64xf32>,
    %c0_5 = arith.constant 0 : index
    %c0_6 = arith.constant 0 : index
    %c1 = arith.constant 1 : index
    %c0_7 = arith.constant 0 : index
    %3 = vector.load %arg0[%c0_5, %c0_6, %c1, %c0_7] : memref<2x18x24x64xf32, #tpu.memory_space<vmem>>, vector<2x16x16x64xf32>
    %4 = vector.shape_cast %3 : vector<2x16x16x64xf32> to vector<512x64xf32>
    %c0_8 = arith.constant 0 : index
    %c64 = arith.constant 64 : index
    %5 = vector.load %arg10[%c0_8, %c64] : memref<512x576xf32, #tpu.memory_space<vmem>>, vector<512x64xf32>
    tpu.vector_store %arg10[%c0_8, %c64], %4 {strides = array<i32>} : memref<512x576xf32, #tpu.memory_space<vmem>>, vector<512x64xf32>,
    %c0_9 = arith.constant 0 : index
    %c0_10 = arith.constant 0 : index
    %c2 = arith.constant 2 : index
    %c0_11 = arith.constant 0 : index
    %6 = vector.load %arg0[%c0_9, %c0_10, %c2, %c0_11] : memref<2x18x24x64xf32, #tpu.memory_space<vmem>>, vector<2x16x16x64xf32>
    %7 = vector.shape_cast %6 : vector<2x16x16x64xf32> to vector<512x64xf32>
    %c0_12 = arith.constant 0 : index
    %c128 = arith.constant 128 : index
    %8 = vector.load %arg10[%c0_12, %c128] : memref<512x576xf32, #tpu.memory_space<vmem>>, vector<512x64xf32>
    tpu.vector_store %arg10[%c0_12, %c128], %7 {strides = array<i32>} : memref<512x576xf32, #tpu.memory_space<vmem>>, vector<512x64xf32>,
    %c0_13 = arith.constant 0 : index
    %c1_14 = arith.constant 1 : index
    %c0_15 = arith.constant 0 : index
    %c0_16 = arith.constant 0 : index
    %9 = vector.load %arg0[%c0_13, %c1_14, %c0_15, %c0_16] : memref<2x18x24x64xf32, #tpu.memory_space<vmem>>, vector<2x16x16x64xf32>
    %10 = vector.shape_cast %9 : vector<2x16x16x64xf32> to vector<512x64xf32>
    %c0_17 = arith.constant 0 : index
    %c192 = arith.constant 192 : index
    %11 = vector.load %arg10[%c0_17, %c192] : memref<512x576xf32, #tpu.memory_space<vmem>>, vector<512x64xf32>
    tpu.vector_store %arg10[%c0_17, %c192], %10 {strides = array<i32>} : memref<512x576xf32, #tpu.memory_space<vmem>>, vector<512x64xf32>,
    %c0_18 = arith.constant 0 : index
    %c1_19 = arith.constant 1 : index
    %c1_20 = arith.constant 1 : index
    %c0_21 = arith.constant 0 : index
    %12 = vector.load %arg0[%c0_18, %c1_19, %c1_20, %c0_21] : memref<2x18x24x64xf32, #tpu.memory_space<vmem>>, vector<2x16x16x64xf32>
    %13 = vector.shape_cast %12 : vector<2x16x16x64xf32> to vector<512x64xf32>
    %c0_22 = arith.constant 0 : index
    %c256 = arith.constant 256 : index
    %14 = vector.load %arg10[%c0_22, %c256] : memref<512x576xf32, #tpu.memory_space<vmem>>, vector<512x64xf32>
    tpu.vector_store %arg10[%c0_22, %c256], %13 {strides = array<i32>} : memref<512x576xf32, #tpu.memory_space<vmem>>, vector<512x64xf32>,
    %c0_23 = arith.constant 0 : index
    %c1_24 = arith.constant 1 : index
    %c2_25 = arith.constant 2 : index
    %c0_26 = arith.constant 0 : index
    %15 = vector.load %arg0[%c0_23, %c1_24, %c2_25, %c0_26] : memref<2x18x24x64xf32, #tpu.memory_space<vmem>>, vector<2x16x16x64xf32>
    %16 = vector.shape_cast %15 : vector<2x16x16x64xf32> to vector<512x64xf32>
    %c0_27 = arith.constant 0 : index
    %c320 = arith.constant 320 : index
    %17 = vector.load %arg10[%c0_27, %c320] : memref<512x576xf32, #tpu.memory_space<vmem>>, vector<512x64xf32>
    tpu.vector_store %arg10[%c0_27, %c320], %16 {strides = array<i32>} : memref<512x576xf32, #tpu.memory_space<vmem>>, vector<512x64xf32>,
    %c0_28 = arith.constant 0 : index
    %c2_29 = arith.constant 2 : index
    %c0_30 = arith.constant 0 : index
    %c0_31 = arith.constant 0 : index
    %18 = vector.load %arg0[%c0_28, %c2_29, %c0_30, %c0_31] : memref<2x18x24x64xf32, #tpu.memory_space<vmem>>, vector<2x16x16x64xf32>
    %19 = vector.shape_cast %18 : vector<2x16x16x64xf32> to vector<512x64xf32>
    %c0_32 = arith.constant 0 : index
    %c384 = arith.constant 384 : index
    %20 = vector.load %arg10[%c0_32, %c384] : memref<512x576xf32, #tpu.memory_space<vmem>>, vector<512x64xf32>
    tpu.vector_store %arg10[%c0_32, %c384], %19 {strides = array<i32>} : memref<512x576xf32, #tpu.memory_space<vmem>>, vector<512x64xf32>,
    %c0_33 = arith.constant 0 : index
    %c2_34 = arith.constant 2 : index
    %c1_35 = arith.constant 1 : index
    %c0_36 = arith.constant 0 : index
    %21 = vector.load %arg0[%c0_33, %c2_34, %c1_35, %c0_36] : memref<2x18x24x64xf32, #tpu.memory_space<vmem>>, vector<2x16x16x64xf32>
    %22 = vector.shape_cast %21 : vector<2x16x16x64xf32> to vector<512x64xf32>
    %c0_37 = arith.constant 0 : index
    %c448 = arith.constant 448 : index
    %23 = vector.load %arg10[%c0_37, %c448] : memref<512x576xf32, #tpu.memory_space<vmem>>, vector<512x64xf32>
    tpu.vector_store %arg10[%c0_37, %c448], %22 {strides = array<i32>} : memref<512x576xf32, #tpu.memory_space<vmem>>, vector<512x64xf32>,
    %c0_38 = arith.constant 0 : index
    %c2_39 = arith.constant 2 : index
    %c2_40 = arith.constant 2 : index
    %c0_41 = arith.constant 0 : index
    %24 = vector.load %arg0[%c0_38, %c2_39, %c2_40, %c0_41] : memref<2x18x24x64xf32, #tpu.memory_space<vmem>>, vector<2x16x16x64xf32>
    %25 = vector.shape_cast %24 : vector<2x16x16x64xf32> to vector<512x64xf32>
    %c0_42 = arith.constant 0 : index
    %c512 = arith.constant 512 : index
    %26 = vector.load %arg10[%c0_42, %c512] : memref<512x576xf32, #tpu.memory_space<vmem>>, vector<512x64xf32>
    tpu.vector_store %arg10[%c0_42, %c512], %25 {strides = array<i32>} : memref<512x576xf32, #tpu.memory_space<vmem>>, vector<512x64xf32>,
    %c0_43 = arith.constant 0 : index
    %c0_44 = arith.constant 0 : index
    %27 = vector.load %arg10[%c0_43, %c0_44] : memref<512x576xf32, #tpu.memory_space<vmem>>, vector<512x576xf32>
    %28 = arith.truncf %27 : vector<512x576xf32> to vector<512x576xbf16>
    %c0_45 = arith.constant 0 : index
    %c0_46 = arith.constant 0 : index
    %29 = vector.load %arg2[%c0_45, %c0_46] : memref<576x64xbf16, #tpu.memory_space<vmem>>, vector<576x64xbf16>
    %cst = arith.constant dense<0.000000e+00> : vector<512x64xf32>
    %30 = tpu.matmul %28, %29, %cst {dimension_numbers = #tpu.dot_dimension_numbers<[1], [0], [0], [1], [0, 0, 1, 1], [], []>} : vector<512x576xbf16>, vector<576x64xbf16>, vector<512x64xf32> -> vector<512x64xf32>
    %cst_47 = arith.constant dense<0.000000e+00> : vector<64xf32>
    %31 = vector.multi_reduction <add>, %30, %cst_47 [0] : vector<512x64xf32> to vector<64xf32>
    %32 = vector.shape_cast %31 : vector<64xf32> to vector<1x64xf32>
    %cst_48 = arith.constant 0.001953125 : f32
    %33 = vector.broadcast %cst_48 : f32 to vector<1x64xf32>
    %34 = arith.mulf %32, %33 : vector<1x64xf32>
    %35 = arith.mulf %30, %30 : vector<512x64xf32>
    %cst_49 = arith.constant dense<0.000000e+00> : vector<64xf32>
    %36 = vector.multi_reduction <add>, %35, %cst_49 [0] : vector<512x64xf32> to vector<64xf32>
    %37 = vector.shape_cast %36 : vector<64xf32> to vector<1x64xf32>
    %cst_50 = arith.constant 0.001953125 : f32
    %38 = vector.broadcast %cst_50 : f32 to vector<1x64xf32>
    %39 = arith.mulf %37, %38 : vector<1x64xf32>
    %40 = arith.mulf %34, %34 : vector<1x64xf32>
    %41 = arith.subf %39, %40 : vector<1x64xf32>
    %42 = vector.broadcast %34 : vector<1x64xf32> to vector<512x64xf32>
    %43 = arith.subf %30, %42 : vector<512x64xf32>
    %cst_51 = arith.constant 9.99999974E-6 : f32
    %44 = vector.broadcast %cst_51 : f32 to vector<1x64xf32>
    %45 = arith.addf %41, %44 : vector<1x64xf32>
    %46 = math.rsqrt %45 : vector<1x64xf32>
    %c0_52 = arith.constant 0 : index
    %c0_53 = arith.constant 0 : index
    %47 = vector.load %arg4[%c0_52, %c0_53] : memref<1x64xf32, #tpu.memory_space<vmem>>, vector<1x64xf32>
    %48 = arith.mulf %46, %47 : vector<1x64xf32>
    %49 = vector.broadcast %48 : vector<1x64xf32> to vector<512x64xf32>
    %50 = arith.mulf %43, %49 : vector<512x64xf32>
    %c0_54 = arith.constant 0 : index
    %c0_55 = arith.constant 0 : index
    %51 = vector.load %arg5[%c0_54, %c0_55] : memref<1x64xf32, #tpu.memory_space<vmem>>, vector<1x64xf32>
    %52 = vector.broadcast %51 : vector<1x64xf32> to vector<512x64xf32>
    %53 = arith.addf %50, %52 : vector<512x64xf32>
    %cst_56 = arith.constant 0.000000e+00 : f32
    %54 = vector.broadcast %cst_56 : f32 to vector<512x64xf32>
    %55 = arith.cmpf oge, %53, %54 : vector<512x64xf32>
    %c0_57 = arith.constant 0 : index
    %c0_58 = arith.constant 0 : index
    %56 = vector.load %arg6[%c0_57, %c0_58] : memref<1x64xf32, #tpu.memory_space<vmem>>, vector<1x64xf32>
    %57 = vector.broadcast %56 : vector<1x64xf32> to vector<512x64xf32>
    %58 = arith.mulf %57, %53 : vector<512x64xf32>
    %59 = arith.select %55, %53, %58 : vector<512x64xi1>, vector<512x64xf32>
    %cst_59 = arith.constant 0.000000e+00 : f32
    %60 = vector.broadcast %cst_59 : f32 to vector<2x18x24x64xf32>
    %c0_60 = arith.constant 0 : index
    %c0_61 = arith.constant 0 : index
    %c0_62 = arith.constant 0 : index
    %c0_63 = arith.constant 0 : index
    %61 = vector.load %arg11[%c0_60, %c0_61, %c0_62, %c0_63] : memref<2x18x24x64xf32, #tpu.memory_space<vmem>>, vector<2x18x24x64xf32>
    tpu.vector_store %arg11[%c0_60, %c0_61, %c0_62, %c0_63], %60 {strides = array<i32>} : memref<2x18x24x64xf32, #tpu.memory_space<vmem>>, vector<2x18x24x64xf32>,
    %62 = vector.shape_cast %59 : vector<512x64xf32> to vector<2x16x16x64xf32>
    %c0_64 = arith.constant 0 : index
    %c1_65 = arith.constant 1 : index
    %c1_66 = arith.constant 1 : index
    %c0_67 = arith.constant 0 : index
    %63 = vector.load %arg11[%c0_64, %c1_65, %c1_66, %c0_67] : memref<2x18x24x64xf32, #tpu.memory_space<vmem>>, vector<2x16x16x64xf32>
    tpu.vector_store %arg11[%c0_64, %c1_65, %c1_66, %c0_67], %62 {strides = array<i32>} : memref<2x18x24x64xf32, #tpu.memory_space<vmem>>, vector<2x16x16x64xf32>,
    %c0_68 = arith.constant 0 : index
    %c0_69 = arith.constant 0 : index
    %c0_70 = arith.constant 0 : index
    %c0_71 = arith.constant 0 : index
    %64 = vector.load %arg11[%c0_68, %c0_69, %c0_70, %c0_71] : memref<2x18x24x64xf32, #tpu.memory_space<vmem>>, vector<2x16x16x64xf32>
    %65 = vector.shape_cast %64 : vector<2x16x16x64xf32> to vector<512x64xf32>
    %c0_72 = arith.constant 0 : index
    %c0_73 = arith.constant 0 : index
    %66 = vector.load %arg10[%c0_72, %c0_73] : memref<512x576xf32, #tpu.memory_space<vmem>>, vector<512x64xf32>
    tpu.vector_store %arg10[%c0_72, %c0_73], %65 {strides = array<i32>} : memref<512x576xf32, #tpu.memory_space<vmem>>, vector<512x64xf32>,
    %c0_74 = arith.constant 0 : index
    %c0_75 = arith.constant 0 : index
    %c1_76 = arith.constant 1 : index
    %c0_77 = arith.constant 0 : index
    %67 = vector.load %arg11[%c0_74, %c0_75, %c1_76, %c0_77] : memref<2x18x24x64xf32, #tpu.memory_space<vmem>>, vector<2x16x16x64xf32>
    %68 = vector.shape_cast %67 : vector<2x16x16x64xf32> to vector<512x64xf32>
    %c0_78 = arith.constant 0 : index
    %c64_79 = arith.constant 64 : index
    %69 = vector.load %arg10[%c0_78, %c64_79] : memref<512x576xf32, #tpu.memory_space<vmem>>, vector<512x64xf32>
    tpu.vector_store %arg10[%c0_78, %c64_79], %68 {strides = array<i32>} : memref<512x576xf32, #tpu.memory_space<vmem>>, vector<512x64xf32>,
    %c0_80 = arith.constant 0 : index
    %c0_81 = arith.constant 0 : index
    %c2_82 = arith.constant 2 : index
    %c0_83 = arith.constant 0 : index
    %70 = vector.load %arg11[%c0_80, %c0_81, %c2_82, %c0_83] : memref<2x18x24x64xf32, #tpu.memory_space<vmem>>, vector<2x16x16x64xf32>
    %71 = vector.shape_cast %70 : vector<2x16x16x64xf32> to vector<512x64xf32>
    %c0_84 = arith.constant 0 : index
    %c128_85 = arith.constant 128 : index
    %72 = vector.load %arg10[%c0_84, %c128_85] : memref<512x576xf32, #tpu.memory_space<vmem>>, vector<512x64xf32>
    tpu.vector_store %arg10[%c0_84, %c128_85], %71 {strides = array<i32>} : memref<512x576xf32, #tpu.memory_space<vmem>>, vector<512x64xf32>,
    %c0_86 = arith.constant 0 : index
    %c1_87 = arith.constant 1 : index
    %c0_88 = arith.constant 0 : index
    %c0_89 = arith.constant 0 : index
    %73 = vector.load %arg11[%c0_86, %c1_87, %c0_88, %c0_89] : memref<2x18x24x64xf32, #tpu.memory_space<vmem>>, vector<2x16x16x64xf32>
    %74 = vector.shape_cast %73 : vector<2x16x16x64xf32> to vector<512x64xf32>
    %c0_90 = arith.constant 0 : index
    %c192_91 = arith.constant 192 : index
    %75 = vector.load %arg10[%c0_90, %c192_91] : memref<512x576xf32, #tpu.memory_space<vmem>>, vector<512x64xf32>
    tpu.vector_store %arg10[%c0_90, %c192_91], %74 {strides = array<i32>} : memref<512x576xf32, #tpu.memory_space<vmem>>, vector<512x64xf32>,
    %c0_92 = arith.constant 0 : index
    %c1_93 = arith.constant 1 : index
    %c1_94 = arith.constant 1 : index
    %c0_95 = arith.constant 0 : index
    %76 = vector.load %arg11[%c0_92, %c1_93, %c1_94, %c0_95] : memref<2x18x24x64xf32, #tpu.memory_space<vmem>>, vector<2x16x16x64xf32>
    %77 = vector.shape_cast %76 : vector<2x16x16x64xf32> to vector<512x64xf32>
    %c0_96 = arith.constant 0 : index
    %c256_97 = arith.constant 256 : index
    %78 = vector.load %arg10[%c0_96, %c256_97] : memref<512x576xf32, #tpu.memory_space<vmem>>, vector<512x64xf32>
    tpu.vector_store %arg10[%c0_96, %c256_97], %77 {strides = array<i32>} : memref<512x576xf32, #tpu.memory_space<vmem>>, vector<512x64xf32>,
    %c0_98 = arith.constant 0 : index
    %c1_99 = arith.constant 1 : index
    %c2_100 = arith.constant 2 : index
    %c0_101 = arith.constant 0 : index
    %79 = vector.load %arg11[%c0_98, %c1_99, %c2_100, %c0_101] : memref<2x18x24x64xf32, #tpu.memory_space<vmem>>, vector<2x16x16x64xf32>
    %80 = vector.shape_cast %79 : vector<2x16x16x64xf32> to vector<512x64xf32>
    %c0_102 = arith.constant 0 : index
    %c320_103 = arith.constant 320 : index
    %81 = vector.load %arg10[%c0_102, %c320_103] : memref<512x576xf32, #tpu.memory_space<vmem>>, vector<512x64xf32>
    tpu.vector_store %arg10[%c0_102, %c320_103], %80 {strides = array<i32>} : memref<512x576xf32, #tpu.memory_space<vmem>>, vector<512x64xf32>,
    %c0_104 = arith.constant 0 : index
    %c2_105 = arith.constant 2 : index
    %c0_106 = arith.constant 0 : index
    %c0_107 = arith.constant 0 : index
    %82 = vector.load %arg11[%c0_104, %c2_105, %c0_106, %c0_107] : memref<2x18x24x64xf32, #tpu.memory_space<vmem>>, vector<2x16x16x64xf32>
    %83 = vector.shape_cast %82 : vector<2x16x16x64xf32> to vector<512x64xf32>
    %c0_108 = arith.constant 0 : index
    %c384_109 = arith.constant 384 : index
    %84 = vector.load %arg10[%c0_108, %c384_109] : memref<512x576xf32, #tpu.memory_space<vmem>>, vector<512x64xf32>
    tpu.vector_store %arg10[%c0_108, %c384_109], %83 {strides = array<i32>} : memref<512x576xf32, #tpu.memory_space<vmem>>, vector<512x64xf32>,
    %c0_110 = arith.constant 0 : index
    %c2_111 = arith.constant 2 : index
    %c1_112 = arith.constant 1 : index
    %c0_113 = arith.constant 0 : index
    %85 = vector.load %arg11[%c0_110, %c2_111, %c1_112, %c0_113] : memref<2x18x24x64xf32, #tpu.memory_space<vmem>>, vector<2x16x16x64xf32>
    %86 = vector.shape_cast %85 : vector<2x16x16x64xf32> to vector<512x64xf32>
    %c0_114 = arith.constant 0 : index
    %c448_115 = arith.constant 448 : index
    %87 = vector.load %arg10[%c0_114, %c448_115] : memref<512x576xf32, #tpu.memory_space<vmem>>, vector<512x64xf32>
    tpu.vector_store %arg10[%c0_114, %c448_115], %86 {strides = array<i32>} : memref<512x576xf32, #tpu.memory_space<vmem>>, vector<512x64xf32>,
    %c0_116 = arith.constant 0 : index
    %c2_117 = arith.constant 2 : index
    %c2_118 = arith.constant 2 : index
    %c0_119 = arith.constant 0 : index
    %88 = vector.load %arg11[%c0_116, %c2_117, %c2_118, %c0_119] : memref<2x18x24x64xf32, #tpu.memory_space<vmem>>, vector<2x16x16x64xf32>
    %89 = vector.shape_cast %88 : vector<2x16x16x64xf32> to vector<512x64xf32>
    %c0_120 = arith.constant 0 : index
    %c512_121 = arith.constant 512 : index
    %90 = vector.load %arg10[%c0_120, %c512_121] : memref<512x576xf32, #tpu.memory_space<vmem>>, vector<512x64xf32>
    tpu.vector_store %arg10[%c0_120, %c512_121], %89 {strides = array<i32>} : memref<512x576xf32, #tpu.memory_space<vmem>>, vector<512x64xf32>,
    %c0_122 = arith.constant 0 : index
    %c0_123 = arith.constant 0 : index
    %91 = vector.load %arg10[%c0_122, %c0_123] : memref<512x576xf32, #tpu.memory_space<vmem>>, vector<512x576xf32>
    %92 = arith.truncf %91 : vector<512x576xf32> to vector<512x576xbf16>
    %c0_124 = arith.constant 0 : index
    %c0_125 = arith.constant 0 : index
    %93 = vector.load %arg3[%c0_124, %c0_125] : memref<576x64xbf16, #tpu.memory_space<vmem>>, vector<576x64xbf16>
    %cst_126 = arith.constant dense<0.000000e+00> : vector<512x64xf32>
    %94 = tpu.matmul %92, %93, %cst_126 {dimension_numbers = #tpu.dot_dimension_numbers<[1], [0], [0], [1], [0, 0, 1, 1], [], []>} : vector<512x576xbf16>, vector<576x64xbf16>, vector<512x64xf32> -> vector<512x64xf32>
    %cst_127 = arith.constant dense<0.000000e+00> : vector<64xf32>
    %95 = vector.multi_reduction <add>, %94, %cst_127 [0] : vector<512x64xf32> to vector<64xf32>
    %96 = vector.shape_cast %95 : vector<64xf32> to vector<1x64xf32>
    %cst_128 = arith.constant 0.001953125 : f32
    %97 = vector.broadcast %cst_128 : f32 to vector<1x64xf32>
    %98 = arith.mulf %96, %97 : vector<1x64xf32>
    %99 = arith.mulf %94, %94 : vector<512x64xf32>
    %cst_129 = arith.constant dense<0.000000e+00> : vector<64xf32>
    %100 = vector.multi_reduction <add>, %99, %cst_129 [0] : vector<512x64xf32> to vector<64xf32>
    %101 = vector.shape_cast %100 : vector<64xf32> to vector<1x64xf32>
    %cst_130 = arith.constant 0.001953125 : f32
    %102 = vector.broadcast %cst_130 : f32 to vector<1x64xf32>
    %103 = arith.mulf %101, %102 : vector<1x64xf32>
    %104 = arith.mulf %98, %98 : vector<1x64xf32>
    %105 = arith.subf %103, %104 : vector<1x64xf32>
    %106 = vector.broadcast %98 : vector<1x64xf32> to vector<512x64xf32>
    %107 = arith.subf %94, %106 : vector<512x64xf32>
    %cst_131 = arith.constant 9.99999974E-6 : f32
    %108 = vector.broadcast %cst_131 : f32 to vector<1x64xf32>
    %109 = arith.addf %105, %108 : vector<1x64xf32>
    %110 = math.rsqrt %109 : vector<1x64xf32>
    %c0_132 = arith.constant 0 : index
    %c0_133 = arith.constant 0 : index
    %111 = vector.load %arg7[%c0_132, %c0_133] : memref<1x64xf32, #tpu.memory_space<vmem>>, vector<1x64xf32>
    %112 = arith.mulf %110, %111 : vector<1x64xf32>
    %113 = vector.broadcast %112 : vector<1x64xf32> to vector<512x64xf32>
    %114 = arith.mulf %107, %113 : vector<512x64xf32>
    %c0_134 = arith.constant 0 : index
    %c0_135 = arith.constant 0 : index
    %115 = vector.load %arg8[%c0_134, %c0_135] : memref<1x64xf32, #tpu.memory_space<vmem>>, vector<1x64xf32>
    %116 = vector.broadcast %115 : vector<1x64xf32> to vector<512x64xf32>
    %117 = arith.addf %114, %116 : vector<512x64xf32>
    %c0_136 = arith.constant 0 : index
    %c0_137 = arith.constant 0 : index
    %118 = vector.load %arg1[%c0_136, %c0_137] : memref<512x64xf32, #tpu.memory_space<vmem>>, vector<512x64xf32>
    %119 = arith.addf %117, %118 : vector<512x64xf32>
    %c0_138 = arith.constant 0 : index
    %c0_139 = arith.constant 0 : index
    %120 = vector.load %arg9[%c0_138, %c0_139] : memref<512x64xf32, #tpu.memory_space<vmem>>, vector<512x64xf32>
    tpu.vector_store %arg9[%c0_138, %c0_139], %119 {strides = array<i32>} : memref<512x64xf32, #tpu.memory_space<vmem>>, vector<512x64xf32>,
    return
  }
}

</mosaic_0001>

<llo_original>
// kernel: tpu_custom_call.1
$region0: #{tpu_custom_call.1}
  #allocation0 [shape = 'u32[]', space=smem, size = 0x4, offset = 0x4, fixed_abs, tag = 'smem constant byte address 0x4 - core index']
  #allocation1 [shape = 'u32[72,128]{1,0:T(1,128)}', space=vmem, size = 0x9000, scoped, tag = 'internal scratch']
  #allocation2 [shape = 'f32[512,576]{1,0:T(8,128)}', space=vmem, size = 0x140000, scoped, tag = 'scratch operand']
  #allocation3 [shape = 'f32[2,18,24,64]{3,2,1,0:T(8,128)}', space=vmem, size = 0x6c000, scoped, tag = 'scratch operand']
  %s0 = inlined_call_operand.vmem [shape: f32[2,18,24,64], index: 0, kind: input, shape index: {}]
  %s1 = inlined_call_operand.vmem [shape: f32[512,64], index: 1, kind: input, shape index: {}]
  %s2 = inlined_call_operand.vmem [shape: bf16[576,64], index: 2, kind: input, shape index: {}]
  %s3 = inlined_call_operand.vmem [shape: bf16[576,64], index: 3, kind: input, shape index: {}]
  %s4 = inlined_call_operand.vmem [shape: f32[1,64], index: 4, kind: input, shape index: {}]
  %s5 = inlined_call_operand.vmem [shape: f32[1,64], index: 5, kind: input, shape index: {}]
  %s6 = inlined_call_operand.vmem [shape: f32[1,64], index: 6, kind: input, shape index: {}]
  %s7 = inlined_call_operand.vmem [shape: f32[1,64], index: 7, kind: input, shape index: {}]
  %s8 = inlined_call_operand.vmem [shape: f32[1,64], index: 8, kind: input, shape index: {}]
  %s9 = inlined_call_operand.vmem [shape: f32[512,64], index: 9, kind: output, shape index: {}]
  %s10 = sld [smem:[#allocation0]]
  $region46: #{tpu_custom_call.1} parent=0
    _
  %s12 = ssub.s32 1, %s10
  %s13 = scalar_select 0, %s12, %s10
  // Predicated region
  $region2: #{tpu_custom_call.1} parent=0 // pred_check
    _
  $region3: #{tpu_custom_call.1} parent=0 // pred_check_branch
    %15 = sbr.rel (0) target = $region5
  $region4: #{tpu_custom_call.1} parent=0 // pred_region
    _
  $region5: #{tpu_custom_call.1} parent=0 // pred_fallthru
    _
  // Predicated region
  $region6: #{tpu_custom_call.1} parent=0 // pred_check
    _
  $region7: #{tpu_custom_call.1} parent=0 // pred_check_branch
    %17 = sbr.rel (0) target = $region9
  $region8: #{tpu_custom_call.1} parent=0 // pred_region
    _
  $region9: #{tpu_custom_call.1} parent=0 // pred_fallthru
    _
  // Predicated region
  $region10: #{tpu_custom_call.1} parent=0 // pred_check
    _
  $region11: #{tpu_custom_call.1} parent=0 // pred_check_branch
    %19 = sbr.rel (0) target = $region13
  $region12: #{tpu_custom_call.1} parent=0 // pred_region
    _
  $region13: #{tpu_custom_call.1} parent=0 // pred_fallthru
    _
  // Predicated region
  $region14: #{tpu_custom_call.1} parent=0 // pred_check
    _
  $region15: #{tpu_custom_call.1} parent=0 // pred_check_branch
    %21 = sbr.rel (0) target = $region17
  $region16: #{tpu_custom_call.1} parent=0 // pred_region
    _
  $region17: #{tpu_custom_call.1} parent=0 // pred_fallthru
    _
  // Predicated region
  $region18: #{tpu_custom_call.1} parent=0 // pred_check
    _
  $region19: #{tpu_custom_call.1} parent=0 // pred_check_branch
    %23 = sbr.rel (0) target = $region21
  $region20: #{tpu_custom_call.1} parent=0 // pred_region
    _
  $region21: #{tpu_custom_call.1} parent=0 // pred_fallthru
    _
  // Predicated region
  $region22: #{tpu_custom_call.1} parent=0 // pred_check
    _
  $region23: #{tpu_custom_call.1} parent=0 // pred_check_branch
    %25 = sbr.rel (0) target = $region25
  $region24: #{tpu_custom_call.1} parent=0 // pred_region
    _
  $region25: #{tpu_custom_call.1} parent=0 // pred_fallthru
    _
  // Predicated region
  $region26: #{tpu_custom_call.1} parent=0 // pred_check
    _
  $region27: #{tpu_custom_call.1} parent=0 // pred_check_branch
    %27 = sbr.rel (0) target = $region29
  $region28: #{tpu_custom_call.1} parent=0 // pred_region
    _
  $region29: #{tpu_custom_call.1} parent=0 // pred_fallthru
    _
  // Predicated region
  $region30: #{tpu_custom_call.1} parent=0 // pred_check
    _
  $region31: #{tpu_custom_call.1} parent=0 // pred_check_branch
    %29 = sbr.rel (0) target = $region33
  $region32: #{tpu_custom_call.1} parent=0 // pred_region
    _
  $region33: #{tpu_custom_call.1} parent=0 // pred_fallthru
    _
  // Predicated region
  $region34: #{tpu_custom_call.1} parent=0 // pred_check
    _
  $region35: #{tpu_custom_call.1} parent=0 // pred_check_branch
    %31 = sbr.rel (0) target = $region37
  $region36: #{tpu_custom_call.1} parent=0 // pred_region
    _
  $region37: #{tpu_custom_call.1} parent=0 // pred_fallthru
    _
  %v33 = vld [vmem:[%s0] sm:$0xff]
  %v34 = vld [vmem:[%s0 + $0x8] sm:$0xff]
  %v35 = vld [vmem:[%s0 + $0x18] sm:$0xff]
  %v36 = vld [vmem:[%s0 + $0x20] sm:$0xff]
  %v37 = vld [vmem:[%s0 + $0x30] sm:$0xff]
  %v38 = vld [vmem:[%s0 + $0x38] sm:$0xff]
  %v39 = vld [vmem:[%s0 + $0x48] sm:$0xff]
  %v40 = vld [vmem:[%s0 + $0x50] sm:$0xff]
  %v41 = vld [vmem:[%s0 + $0x60] sm:$0xff]
  %v42 = vld [vmem:[%s0 + $0x68] sm:$0xff]
  %v43 = vld [vmem:[%s0 + $0x78] sm:$0xff]
  %v44 = vld [vmem:[%s0 + $0x80] sm:$0xff]
  %v45 = vld [vmem:[%s0 + $0x90] sm:$0xff]
  %v46 = vld [vmem:[%s0 + $0x98] sm:$0xff]
  %v47 = vld [vmem:[%s0 + $0xa8] sm:$0xff]
  %v48 = vld [vmem:[%s0 + $0xb0] sm:$0xff]
  %v49 = vld [vmem:[%s0 + $0xc0] sm:$0xff]
  %v50 = vld [vmem:[%s0 + $0xc8] sm:$0xff]
  %v51 = vld [vmem:[%s0 + $0xd8] sm:$0xff]
  %v52 = vld [vmem:[%s0 + $0xe0] sm:$0xff]
  %v53 = vld [vmem:[%s0 + $0xf0] sm:$0xff]
  %v54 = vld [vmem:[%s0 + $0xf8] sm:$0xff]
  %v55 = vld [vmem:[%s0 + $0x108] sm:$0xff]
  %v56 = vld [vmem:[%s0 + $0x110] sm:$0xff]
  %v57 = vld [vmem:[%s0 + $0x120] sm:$0xff]
  %v58 = vld [vmem:[%s0 + $0x128] sm:$0xff]
  %v59 = vld [vmem:[%s0 + $0x138] sm:$0xff]
  %v60 = vld [vmem:[%s0 + $0x140] sm:$0xff]
  %v61 = vld [vmem:[%s0 + $0x150] sm:$0xff]
  %v62 = vld [vmem:[%s0 + $0x158] sm:$0xff]
  %v63 = vld [vmem:[%s0 + $0x168] sm:$0xff]
  %v64 = vld [vmem:[%s0 + $0x170] sm:$0xff]
  %v65 = vld [vmem:[%s0 + $0x1b0] sm:$0xff]
  %v66 = vld [vmem:[%s0 + $0x1b8] sm:$0xff]
  %v67 = vld [vmem:[%s0 + $0x1c8] sm:$0xff]
  %v68 = vld [vmem:[%s0 + $0x1d0] sm:$0xff]
  %v69 = vld [vmem:[%s0 + $0x1e0] sm:$0xff]
  %v70 = vld [vmem:[%s0 + $0x1e8] sm:$0xff]
  %v71 = vld [vmem:[%s0 + $0x1f8] sm:$0xff]
  %v72 = vld [vmem:[%s0 + $0x200] sm:$0xff]
  %v73 = vld [vmem:[%s0 + $0x210] sm:$0xff]
  %v74 = vld [vmem:[%s0 + $0x218] sm:$0xff]
  %v75 = vld [vmem:[%s0 + $0x228] sm:$0xff]
  %v76 = vld [vmem:[%s0 + $0x230] sm:$0xff]
  %v77 = vld [vmem:[%s0 + $0x240] sm:$0xff]
  %v78 = vld [vmem:[%s0 + $0x248] sm:$0xff]
  %v79 = vld [vmem:[%s0 + $0x258] sm:$0xff]
  %v80 = vld [vmem:[%s0 + $0x260] sm:$0xff]
  %v81 = vld [vmem:[%s0 + $0x270] sm:$0xff]
  %v82 = vld [vmem:[%s0 + $0x278] sm:$0xff]
  %v83 = vld [vmem:[%s0 + $0x288] sm:$0xff]
  %v84 = vld [vmem:[%s0 + $0x290] sm:$0xff]
  %v85 = vld [vmem:[%s0 + $0x2a0] sm:$0xff]
  %v86 = vld [vmem:[%s0 + $0x2a8] sm:$0xff]
  %v87 = vld [vmem:[%s0 + $0x2b8] sm:$0xff]
  %v88 = vld [vmem:[%s0 + $0x2c0] sm:$0xff]
  %v89 = vld [vmem:[%s0 + $0x2d0] sm:$0xff]
  %v90 = vld [vmem:[%s0 + $0x2d8] sm:$0xff]
  %v91 = vld [vmem:[%s0 + $0x2e8] sm:$0xff]
  %v92 = vld [vmem:[%s0 + $0x2f0] sm:$0xff]
  %v93 = vld [vmem:[%s0 + $0x300] sm:$0xff]
  %v94 = vld [vmem:[%s0 + $0x308] sm:$0xff]
  %v95 = vld [vmem:[%s0 + $0x318] sm:$0xff]
  %v96 = vld [vmem:[%s0 + $0x320] sm:$0xff]
  %vm97 = vcmask 523264
  %98 = vst.msk [vmem:[#allocation2] sm:$0xff] %vm97, %v33
  %99 = vst.msk [vmem:[#allocation2 + $0x28] sm:$0xff] %vm97, %v34
  %100 = vst.msk [vmem:[#allocation2 + $0x50] sm:$0xff] %vm97, %v35
  %101 = vst.msk [vmem:[#allocation2 + $0x78] sm:$0xff] %vm97, %v36
  %102 = vst.msk [vmem:[#allocation2 + $0xa0] sm:$0xff] %vm97, %v37
  %103 = vst.msk [vmem:[#allocation2 + $0xc8] sm:$0xff] %vm97, %v38
  %104 = vst.msk [vmem:[#allocation2 + $0xf0] sm:$0xff] %vm97, %v39
  %105 = vst.msk [vmem:[#allocation2 + $0x118] sm:$0xff] %vm97, %v40
  %106 = vst.msk [vmem:[#allocation2 + $0x140] sm:$0xff] %vm97, %v41
  %107 = vst.msk [vmem:[#allocation2 + $0x168] sm:$0xff] %vm97, %v42
  %108 = vst.msk [vmem:[#allocation2 + $0x190] sm:$0xff] %vm97, %v43
  %109 = vst.msk [vmem:[#allocation2 + $0x1b8] sm:$0xff] %vm97, %v44
  %110 = vst.msk [vmem:[#allocation2 + $0x1e0] sm:$0xff] %vm97, %v45
  %111 = vst.msk [vmem:[#allocation2 + $0x208] sm:$0xff] %vm97, %v46
  %112 = vst.msk [vmem:[#allocation2 + $0x230] sm:$0xff] %vm97, %v47
  %113 = vst.msk [vmem:[#allocation2 + $0x258] sm:$0xff] %vm97, %v48
  %114 = vst.msk [vmem:[#allocation2 + $0x280] sm:$0xff] %vm97, %v49
  %115 = vst.msk [vmem:[#allocation2 + $0x2a8] sm:$0xff] %vm97, %v50
  %116 = vst.msk [vmem:[#allocation2 + $0x2d0] sm:$0xff] %vm97, %v51
  %117 = vst.msk [vmem:[#allocation2 + $0x2f8] sm:$0xff] %vm97, %v52
  %118 = vst.msk [vmem:[#allocation2 + $0x320] sm:$0xff] %vm97, %v53
  %119 = vst.msk [vmem:[#allocation2 + $0x348] sm:$0xff] %vm97, %v54
  %120 = vst.msk [vmem:[#allocation2 + $0x370] sm:$0xff] %vm97, %v55
  %121 = vst.msk [vmem:[#allocation2 + $0x398] sm:$0xff] %vm97, %v56
  %122 = vst.msk [vmem:[#allocation2 + $0x3c0] sm:$0xff] %vm97, %v57
  %123 = vst.msk [vmem:[#allocation2 + $0x3e8] sm:$0xff] %vm97, %v58
  %124 = vst.msk [vmem:[#allocation2 + $0x410] sm:$0xff] %vm97, %v59
  %125 = vst.msk [vmem:[#allocation2 + $0x438] sm:$0xff] %vm97, %v60
  %126 = vst.msk [vmem:[#allocation2 + $0x460] sm:$0xff] %vm97, %v61
  %127 = vst.msk [vmem:[#allocation2 + $0x488] sm:$0xff] %vm97, %v62
  %128 = vst.msk [vmem:[#allocation2 + $0x4b0] sm:$0xff] %vm97, %v63
  %129 = vst.msk [vmem:[#allocation2 + $0x4d8] sm:$0xff] %vm97, %v64
  %130 = vst.msk [vmem:[#allocation2 + $0x500] sm:$0xff] %vm97, %v65
  %131 = vst.msk [vmem:[#allocation2 + $0x528] sm:$0xff] %vm97, %v66
  %132 = vst.msk [vmem:[#allocation2 + $0x550] sm:$0xff] %vm97, %v67
  %133 = vst.msk [vmem:[#allocation2 + $0x578] sm:$0xff] %vm97, %v68
  %134 = vst.msk [vmem:[#allocation2 + $0x5a0] sm:$0xff] %vm97, %v69
  %135 = vst.msk [vmem:[#allocation2 + $0x5c8] sm:$0xff] %vm97, %v70
  %136 = vst.msk [vmem:[#allocation2 + $0x5f0] sm:$0xff] %vm97, %v71
  %137 = vst.msk [vmem:[#allocation2 + $0x618] sm:$0xff] %vm97, %v72
  %138 = vst.msk [vmem:[#allocation2 + $0x640] sm:$0xff] %vm97, %v73
  %139 = vst.msk [vmem:[#allocation2 + $0x668] sm:$0xff] %vm97, %v74
  %140 = vst.msk [vmem:[#allocation2 + $0x690] sm:$0xff] %vm97, %v75
  %141 = vst.msk [vmem:[#allocation2 + $0x6b8] sm:$0xff] %vm97, %v76
  %142 = vst.msk [vmem:[#allocation2 + $0x6e0] sm:$0xff] %vm97, %v77
  %143 = vst.msk [vmem:[#allocation2 + $0x708] sm:$0xff] %vm97, %v78
  %144 = vst.msk [vmem:[#allocation2 + $0x730] sm:$0xff] %vm97, %v79
  %145 = vst.msk [vmem:[#allocation2 + $0x758] sm:$0xff] %vm97, %v80
  %146 = vst.msk [vmem:[#allocation2 + $0x780] sm:$0xff] %vm97, %v81
  %147 = vst.msk [vmem:[#allocation2 + $0x7a8] sm:$0xff] %vm97, %v82
  %148 = vst.msk [vmem:[#allocation2 + $0x7d0] sm:$0xff] %vm97, %v83
  %149 = vst.msk [vmem:[#allocation2 + $0x7f8] sm:$0xff] %vm97, %v84
  %150 = vst.msk [vmem:[#allocation2 + $0x820] sm:$0xff] %vm97, %v85
  %151 = vst.msk [vmem:[#allocation2 + $0x848] sm:$0xff] %vm97, %v86
  %152 = vst.msk [vmem:[#allocation2 + $0x870] sm:$0xff] %vm97, %v87
  %153 = vst.msk [vmem:[#allocation2 + $0x898] sm:$0xff] %vm97, %v88
  %154 = vst.msk [vmem:[#allocation2 + $0x8c0] sm:$0xff] %vm97, %v89
  %155 = vst.msk [vmem:[#allocation2 + $0x8e8] sm:$0xff] %vm97, %v90
  %156 = vst.msk [vmem:[#allocation2 + $0x910] sm:$0xff] %vm97, %v91
  %157 = vst.msk [vmem:[#allocation2 + $0x938] sm:$0xff] %vm97, %v92
  %158 = vst.msk [vmem:[#allocation2 + $0x960] sm:$0xff] %vm97, %v93
  %159 = vst.msk [vmem:[#allocation2 + $0x988] sm:$0xff] %vm97, %v94
  %160 = vst.msk [vmem:[#allocation2 + $0x9b0] sm:$0xff] %vm97, %v95
  %161 = vst.msk [vmem:[#allocation2 + $0x9d8] sm:$0xff] %vm97, %v96
  %v162 = vld [vmem:[%s0 + $0x1] sm:$0xff]
  %v163 = vld [vmem:[%s0 + $0x9] sm:$0xff]
  %v164 = vld [vmem:[%s0 + $0x19] sm:$0xff]
  %v165 = vld [vmem:[%s0 + $0x21] sm:$0xff]
  %v166 = vld [vmem:[%s0 + $0x31] sm:$0xff]
  %v167 = vld [vmem:[%s0 + $0x39] sm:$0xff]
  %v168 = vld [vmem:[%s0 + $0x49] sm:$0xff]
  %v169 = vld [vmem:[%s0 + $0x51] sm:$0xff]
  %v170 = vld [vmem:[%s0 + $0x61] sm:$0xff]
  %v171 = vld [vmem:[%s0 + $0x69] sm:$0xff]
  %v172 = vld [vmem:[%s0 + $0x79] sm:$0xff]
  %v173 = vld [vmem:[%s0 + $0x81] sm:$0xff]
  %v174 = vld [vmem:[%s0 + $0x91] sm:$0xff]
  %v175 = vld [vmem:[%s0 + $0x99] sm:$0xff]
  %v176 = vld [vmem:[%s0 + $0xa9] sm:$0xff]
  %v177 = vld [vmem:[%s0 + $0xb1] sm:$0xff]
  %v178 = vld [vmem:[%s0 + $0xc1] sm:$0xff]
  %v179 = vld [vmem:[%s0 + $0xc9] sm:$0xff]
  %v180 = vld [vmem:[%s0 + $0xd9] sm:$0xff]
  %v181 = vld [vmem:[%s0 + $0xe1] sm:$0xff]
  %v182 = vld [vmem:[%s0 + $0xf1] sm:$0xff]
  %v183 = vld [vmem:[%s0 + $0xf9] sm:$0xff]
  %v184 = vld [vmem:[%s0 + $0x109] sm:$0xff]
  %v185 = vld [vmem:[%s0 + $0x111] sm:$0xff]
  %v186 = vld [vmem:[%s0 + $0x121] sm:$0xff]
  %v187 = vld [vmem:[%s0 + $0x129] sm:$0xff]
  %v188 = vld [vmem:[%s0 + $0x139] sm:$0xff]
  %v189 = vld [vmem:[%s0 + $0x141] sm:$0xff]
  %v190 = vld [vmem:[%s0 + $0x151] sm:$0xff]
  %v191 = vld [vmem:[%s0 + $0x159] sm:$0xff]
  %v192 = vld [vmem:[%s0 + $0x169] sm:$0xff]
  %v193 = vld [vmem:[%s0 + $0x171] sm:$0xff]
  %v194 = vld [vmem:[%s0 + $0x1b1] sm:$0xff]
  %v195 = vld [vmem:[%s0 + $0x1b9] sm:$0xff]
  %v196 = vld [vmem:[%s0 + $0x1c9] sm:$0xff]
  %v197 = vld [vmem:[%s0 + $0x1d1] sm:$0xff]
  %v198 = vld [vmem:[%s0 + $0x1e1] sm:$0xff]
  %v199 = vld [vmem:[%s0 + $0x1e9] sm:$0xff]
  %v200 = vld [vmem:[%s0 + $0x1f9] sm:$0xff]
  %v201 = vld [vmem:[%s0 + $0x201] sm:$0xff]
  %v202 = vld [vmem:[%s0 + $0x211] sm:$0xff]
  %v203 = vld [vmem:[%s0 + $0x219] sm:$0xff]
  %v204 = vld [vmem:[%s0 + $0x229] sm:$0xff]
  %v205 = vld [vmem:[%s0 + $0x231] sm:$0xff]
  %v206 = vld [vmem:[%s0 + $0x241] sm:$0xff]
  %v207 = vld [vmem:[%s0 + $0x249] sm:$0xff]
  %v208 = vld [vmem:[%s0 + $0x259] sm:$0xff]
  %v209 = vld [vmem:[%s0 + $0x261] sm:$0xff]
  %v210 = vld [vmem:[%s0 + $0x271] sm:$0xff]
  %v211 = vld [vmem:[%s0 + $0x279] sm:$0xff]
  %v212 = vld [vmem:[%s0 + $0x289] sm:$0xff]
  %v213 = vld [vmem:[%s0 + $0x291] sm:$0xff]
  %v214 = vld [vmem:[%s0 + $0x2a1] sm:$0xff]
  %v215 = vld [vmem:[%s0 + $0x2a9] sm:$0xff]
  %v216 = vld [vmem:[%s0 + $0x2b9] sm:$0xff]
  %v217 = vld [vmem:[%s0 + $0x2c1] sm:$0xff]
  %v218 = vld [vmem:[%s0 + $0x2d1] sm:$0xff]
  %v219 = vld [vmem:[%s0 + $0x2d9] sm:$0xff]
  %v220 = vld [vmem:[%s0 + $0x2e9] sm:$0xff]
  %v221 = vld [vmem:[%s0 + $0x2f1] sm:$0xff]
  %v222 = vld [vmem:[%s0 + $0x301] sm:$0xff]
  %v223 = vld [vmem:[%s0 + $0x309] sm:$0xff]
  %v224 = vld [vmem:[%s0 + $0x319] sm:$0xff]
  %v225 = vld [vmem:[%s0 + $0x321] sm:$0xff]
  %290 = vrot.lane.b32.xlu0 %v162, 64
  %v291 = vpop.permute.xlu0 %290
  %292 = vrot.lane.b32.xlu0 %v163, 64
  %v293 = vpop.permute.xlu0 %292
  %294 = vrot.lane.b32.xlu0 %v164, 64
  %v295 = vpop.permute.xlu0 %294
  %296 = vrot.lane.b32.xlu0 %v165, 64
  %v297 = vpop.permute.xlu0 %296
  %298 = vrot.lane.b32.xlu0 %v166, 64
  %v299 = vpop.permute.xlu0 %298
  %300 = vrot.lane.b32.xlu0 %v167, 64
  %v301 = vpop.permute.xlu0 %300
  %302 = vrot.lane.b32.xlu0 %v168, 64
  %v303 = vpop.permute.xlu0 %302
  %304 = vrot.lane.b32.xlu0 %v169, 64
  %v305 = vpop.permute.xlu0 %304
  %306 = vrot.lane.b32.xlu0 %v170, 64
  %v307 = vpop.permute.xlu0 %306
  %308 = vrot.lane.b32.xlu0 %v171, 64
  %v309 = vpop.permute.xlu0 %308
  %310 = vrot.lane.b32.xlu0 %v172, 64
  %v311 = vpop.permute.xlu0 %310
  %312 = vrot.lane.b32.xlu0 %v173, 64
  %v313 = vpop.permute.xlu0 %312
  %314 = vrot.lane.b32.xlu0 %v174, 64
  %v315 = vpop.permute.xlu0 %314
  %316 = vrot.lane.b32.xlu0 %v175, 64
  %v317 = vpop.permute.xlu0 %316
  %318 = vrot.lane.b32.xlu0 %v176, 64
  %v319 = vpop.permute.xlu0 %318
  %320 = vrot.lane.b32.xlu0 %v177, 64
  %v321 = vpop.permute.xlu0 %320
  %322 = vrot.lane.b32.xlu0 %v178, 64
  %v323 = vpop.permute.xlu0 %322
  %324 = vrot.lane.b32.xlu0 %v179, 64
  %v325 = vpop.permute.xlu0 %324
  %326 = vrot.lane.b32.xlu0 %v180, 64
  %v327 = vpop.permute.xlu0 %326
  %328 = vrot.lane.b32.xlu0 %v181, 64
  %v329 = vpop.permute.xlu0 %328
  %330 = vrot.lane.b32.xlu0 %v182, 64
  %v331 = vpop.permute.xlu0 %330
  %332 = vrot.lane.b32.xlu0 %v183, 64
  %v333 = vpop.permute.xlu0 %332
  %334 = vrot.lane.b32.xlu0 %v184, 64
  %v335 = vpop.permute.xlu0 %334
  %336 = vrot.lane.b32.xlu0 %v185, 64
  %v337 = vpop.permute.xlu0 %336
  %338 = vrot.lane.b32.xlu0 %v186, 64
  %v339 = vpop.permute.xlu0 %338
  %340 = vrot.lane.b32.xlu0 %v187, 64
  %v341 = vpop.permute.xlu0 %340
  %342 = vrot.lane.b32.xlu0 %v188, 64
  %v343 = vpop.permute.xlu0 %342
  %344 = vrot.lane.b32.xlu0 %v189, 64
  %v345 = vpop.permute.xlu0 %344
  %346 = vrot.lane.b32.xlu0 %v190, 64
  %v347 = vpop.permute.xlu0 %346
  %348 = vrot.lane.b32.xlu0 %v191, 64
  %v349 = vpop.permute.xlu0 %348
  %350 = vrot.lane.b32.xlu0 %v192, 64
  %v351 = vpop.permute.xlu0 %350
  %352 = vrot.lane.b32.xlu0 %v193, 64
  %v353 = vpop.permute.xlu0 %352
  %354 = vrot.lane.b32.xlu0 %v194, 64
  %v355 = vpop.permute.xlu0 %354
  %356 = vrot.lane.b32.xlu0 %v195, 64
  %v357 = vpop.permute.xlu0 %356
  %358 = vrot.lane.b32.xlu0 %v196, 64
  %v359 = vpop.permute.xlu0 %358
  %360 = vrot.lane.b32.xlu0 %v197, 64
  %v361 = vpop.permute.xlu0 %360
  %362 = vrot.lane.b32.xlu0 %v198, 64
  %v363 = vpop.permute.xlu0 %362
  %364 = vrot.lane.b32.xlu0 %v199, 64
  %v365 = vpop.permute.xlu0 %364
  %366 = vrot.lane.b32.xlu0 %v200, 64
  %v367 = vpop.permute.xlu0 %366
  %368 = vrot.lane.b32.xlu0 %v201, 64
  %v369 = vpop.permute.xlu0 %368
  %370 = vrot.lane.b32.xlu0 %v202, 64
  %v371 = vpop.permute.xlu0 %370
  %372 = vrot.lane.b32.xlu0 %v203, 64
  %v373 = vpop.permute.xlu0 %372
  %374 = vrot.lane.b32.xlu0 %v204, 64
  %v375 = vpop.permute.xlu0 %374
  %376 = vrot.lane.b32.xlu0 %v205, 64
  %v377 = vpop.permute.xlu0 %376
  %378 = vrot.lane.b32.xlu0 %v206, 64
  %v379 = vpop.permute.xlu0 %378
  %380 = vrot.lane.b32.xlu0 %v207, 64
  %v381 = vpop.permute.xlu0 %380
  %382 = vrot.lane.b32.xlu0 %v208, 64
  %v383 = vpop.permute.xlu0 %382
  %384 = vrot.lane.b32.xlu0 %v209, 64
  %v385 = vpop.permute.xlu0 %384
  %386 = vrot.lane.b32.xlu0 %v210, 64
  %v387 = vpop.permute.xlu0 %386
  %388 = vrot.lane.b32.xlu0 %v211, 64
  %v389 = vpop.permute.xlu0 %388
  %390 = vrot.lane.b32.xlu0 %v212, 64
  %v391 = vpop.permute.xlu0 %390
  %392 = vrot.lane.b32.xlu0 %v213, 64
  %v393 = vpop.permute.xlu0 %392
  %394 = vrot.lane.b32.xlu0 %v214, 64
  %v395 = vpop.permute.xlu0 %394
  %396 = vrot.lane.b32.xlu0 %v215, 64
  %v397 = vpop.permute.xlu0 %396
  %398 = vrot.lane.b32.xlu0 %v216, 64
  %v399 = vpop.permute.xlu0 %398
  %400 = vrot.lane.b32.xlu0 %v217, 64
  %v401 = vpop.permute.xlu0 %400
  %402 = vrot.lane.b32.xlu0 %v218, 64
  %v403 = vpop.permute.xlu0 %402
  %404 = vrot.lane.b32.xlu0 %v219, 64
  %v405 = vpop.permute.xlu0 %404
  %406 = vrot.lane.b32.xlu0 %v220, 64
  %v407 = vpop.permute.xlu0 %406
  %408 = vrot.lane.b32.xlu0 %v221, 64
  %v409 = vpop.permute.xlu0 %408
  %410 = vrot.lane.b32.xlu0 %v222, 64
  %v411 = vpop.permute.xlu0 %410
  %412 = vrot.lane.b32.xlu0 %v223, 64
  %v413 = vpop.permute.xlu0 %412
  %414 = vrot.lane.b32.xlu0 %v224, 64
  %v415 = vpop.permute.xlu0 %414
  %416 = vrot.lane.b32.xlu0 %v225, 64
  %v417 = vpop.permute.xlu0 %416
  %vm482 = vcmask 1048064
  %483 = vst.msk [vmem:[#allocation2] sm:$0xff] %vm482, %v291
  %484 = vst.msk [vmem:[#allocation2 + $0x28] sm:$0xff] %vm482, %v293
  %485 = vst.msk [vmem:[#allocation2 + $0x50] sm:$0xff] %vm482, %v295
  %486 = vst.msk [vmem:[#allocation2 + $0x78] sm:$0xff] %vm482, %v297
  %487 = vst.msk [vmem:[#allocation2 + $0xa0] sm:$0xff] %vm482, %v299
  %488 = vst.msk [vmem:[#allocation2 + $0xc8] sm:$0xff] %vm482, %v301
  %489 = vst.msk [vmem:[#allocation2 + $0xf0] sm:$0xff] %vm482, %v303
  %490 = vst.msk [vmem:[#allocation2 + $0x118] sm:$0xff] %vm482, %v305
  %491 = vst.msk [vmem:[#allocation2 + $0x140] sm:$0xff] %vm482, %v307
  %492 = vst.msk [vmem:[#allocation2 + $0x168] sm:$0xff] %vm482, %v309
  %493 = vst.msk [vmem:[#allocation2 + $0x190] sm:$0xff] %vm482, %v311
  %494 = vst.msk [vmem:[#allocation2 + $0x1b8] sm:$0xff] %vm482, %v313
  %495 = vst.msk [vmem:[#allocation2 + $0x1e0] sm:$0xff] %vm482, %v315
  %496 = vst.msk [vmem:[#allocation2 + $0x208] sm:$0xff] %vm482, %v317
  %497 = vst.msk [vmem:[#allocation2 + $0x230] sm:$0xff] %vm482, %v319
  %498 = vst.msk [vmem:[#allocation2 + $0x258] sm:$0xff] %vm482, %v321
  %499 = vst.msk [vmem:[#allocation2 + $0x280] sm:$0xff] %vm482, %v323
  %500 = vst.msk [vmem:[#allocation2 + $0x2a8] sm:$0xff] %vm482, %v325
  %501 = vst.msk [vmem:[#allocation2 + $0x2d0] sm:$0xff] %vm482, %v327
  %502 = vst.msk [vmem:[#allocation2 + $0x2f8] sm:$0xff] %vm482, %v329
  %503 = vst.msk [vmem:[#allocation2 + $0x320] sm:$0xff] %vm482, %v331
  %504 = vst.msk [vmem:[#allocation2 + $0x348] sm:$0xff] %vm482, %v333
  %505 = vst.msk [vmem:[#allocation2 + $0x370] sm:$0xff] %vm482, %v335
  %506 = vst.msk [vmem:[#allocation2 + $0x398] sm:$0xff] %vm482, %v337
  %507 = vst.msk [vmem:[#allocation2 + $0x3c0] sm:$0xff] %vm482, %v339
  %508 = vst.msk [vmem:[#allocation2 + $0x3e8] sm:$0xff] %vm482, %v341
  %509 = vst.msk [vmem:[#allocation2 + $0x410] sm:$0xff] %vm482, %v343
  %510 = vst.msk [vmem:[#allocation2 + $0x438] sm:$0xff] %vm482, %v345
  %511 = vst.msk [vmem:[#allocation2 + $0x460] sm:$0xff] %vm482, %v347
  %512 = vst.msk [vmem:[#allocation2 + $0x488] sm:$0xff] %vm482, %v349
  %513 = vst.msk [vmem:[#allocation2 + $0x4b0] sm:$0xff] %vm482, %v351
  %514 = vst.msk [vmem:[#allocation2 + $0x4d8] sm:$0xff] %vm482, %v353
  %515 = vst.msk [vmem:[#allocation2 + $0x500] sm:$0xff] %vm482, %v355
  %516 = vst.msk [vmem:[#allocation2 + $0x528] sm:$0xff] %vm482, %v357
  %517 = vst.msk [vmem:[#allocation2 + $0x550] sm:$0xff] %vm482, %v359
  %518 = vst.msk [vmem:[#allocation2 + $0x578] sm:$0xff] %vm482, %v361
  %519 = vst.msk [vmem:[#allocation2 + $0x5a0] sm:$0xff] %vm482, %v363
  %520 = vst.msk [vmem:[#allocation2 + $0x5c8] sm:$0xff] %vm482, %v365
  %521 = vst.msk [vmem:[#allocation2 + $0x5f0] sm:$0xff] %vm482, %v367
  %522 = vst.msk [vmem:[#allocation2 + $0x618] sm:$0xff] %vm482, %v369
  %523 = vst.msk [vmem:[#allocation2 + $0x640] sm:$0xff] %vm482, %v371
  %524 = vst.msk [vmem:[#allocation2 + $0x668] sm:$0xff] %vm482, %v373
  %525 = vst.msk [vmem:[#allocation2 + $0x690] sm:$0xff] %vm482, %v375
  %526 = vst.msk [vmem:[#allocation2 + $0x6b8] sm:$0xff] %vm482, %v377
  %527 = vst.msk [vmem:[#allocation2 + $0x6e0] sm:$0xff] %vm482, %v379
  %528 = vst.msk [vmem:[#allocation2 + $0x708] sm:$0xff] %vm482, %v381
  %529 = vst.msk [vmem:[#allocation2 + $0x730] sm:$0xff] %vm482, %v383
  %530 = vst.msk [vmem:[#allocation2 + $0x758] sm:$0xff] %vm482, %v385
  %531 = vst.msk [vmem:[#allocation2 + $0x780] sm:$0xff] %vm482, %v387
  %532 = vst.msk [vmem:[#allocation2 + $0x7a8] sm:$0xff] %vm482, %v389
  %533 = vst.msk [vmem:[#allocation2 + $0x7d0] sm:$0xff] %vm482, %v391
  %534 = vst.msk [vmem:[#allocation2 + $0x7f8] sm:$0xff] %vm482, %v393
  %535 = vst.msk [vmem:[#allocation2 + $0x820] sm:$0xff] %vm482, %v395
  %536 = vst.msk [vmem:[#allocation2 + $0x848] sm:$0xff] %vm482, %v397
  %537 = vst.msk [vmem:[#allocation2 + $0x870] sm:$0xff] %vm482, %v399
  %538 = vst.msk [vmem:[#allocation2 + $0x898] sm:$0xff] %vm482, %v401
  %539 = vst.msk [vmem:[#allocation2 + $0x8c0] sm:$0xff] %vm482, %v403
  %540 = vst.msk [vmem:[#allocation2 + $0x8e8] sm:$0xff] %vm482, %v405
  %541 = vst.msk [vmem:[#allocation2 + $0x910] sm:$0xff] %vm482, %v407
  %542 = vst.msk [vmem:[#allocation2 + $0x938] sm:$0xff] %vm482, %v409
  %543 = vst.msk [vmem:[#allocation2 + $0x960] sm:$0xff] %vm482, %v411
  %544 = vst.msk [vmem:[#allocation2 + $0x988] sm:$0xff] %vm482, %v413
  %545 = vst.msk [vmem:[#allocation2 + $0x9b0] sm:$0xff] %vm482, %v415
  %546 = vst.msk [vmem:[#allocation2 + $0x9d8] sm:$0xff] %vm482, %v417
  %v547 = vld [vmem:[%s0 + $0x2] sm:$0xff]
  %v548 = vld [vmem:[%s0 + $0xa] sm:$0xff]
  %v549 = vld [vmem:[%s0 + $0x1a] sm:$0xff]
  %v550 = vld [vmem:[%s0 + $0x22] sm:$0xff]
  %v551 = vld [vmem:[%s0 + $0x32] sm:$0xff]
  %v552 = vld [vmem:[%s0 + $0x3a] sm:$0xff]
  %v553 = vld [vmem:[%s0 + $0x4a] sm:$0xff]
  %v554 = vld [vmem:[%s0 + $0x52] sm:$0xff]
  %v555 = vld [vmem:[%s0 + $0x62] sm:$0xff]
  %v556 = vld [vmem:[%s0 + $0x6a] sm:$0xff]
  %v557 = vld [vmem:[%s0 + $0x7a] sm:$0xff]
  %v558 = vld [vmem:[%s0 + $0x82] sm:$0xff]
  %v559 = vld [vmem:[%s0 + $0x92] sm:$0xff]
  %v560 = vld [vmem:[%s0 + $0x9a] sm:$0xff]
  %v561 = vld [vmem:[%s0 + $0xaa] sm:$0xff]
  %v562 = vld [vmem:[%s0 + $0xb2] sm:$0xff]
  %v563 = vld [vmem:[%s0 + $0xc2] sm:$0xff]
  %v564 = vld [vmem:[%s0 + $0xca] sm:$0xff]
  %v565 = vld [vmem:[%s0 + $0xda] sm:$0xff]
  %v566 = vld [vmem:[%s0 + $0xe2] sm:$0xff]
  %v567 = vld [vmem:[%s0 + $0xf2] sm:$0xff]
  %v568 = vld [vmem:[%s0 + $0xfa] sm:$0xff]
  %v569 = vld [vmem:[%s0 + $0x10a] sm:$0xff]
  %v570 = vld [vmem:[%s0 + $0x112] sm:$0xff]
  %v571 = vld [vmem:[%s0 + $0x122] sm:$0xff]
  %v572 = vld [vmem:[%s0 + $0x12a] sm:$0xff]
  %v573 = vld [vmem:[%s0 + $0x13a] sm:$0xff]
  %v574 = vld [vmem:[%s0 + $0x142] sm:$0xff]
  %v575 = vld [vmem:[%s0 + $0x152] sm:$0xff]
  %v576 = vld [vmem:[%s0 + $0x15a] sm:$0xff]
  %v577 = vld [vmem:[%s0 + $0x16a] sm:$0xff]
  %v578 = vld [vmem:[%s0 + $0x172] sm:$0xff]
  %v579 = vld [vmem:[%s0 + $0x1b2] sm:$0xff]
  %v580 = vld [vmem:[%s0 + $0x1ba] sm:$0xff]
  %v581 = vld [vmem:[%s0 + $0x1ca] sm:$0xff]
  %v582 = vld [vmem:[%s0 + $0x1d2] sm:$0xff]
  %v583 = vld [vmem:[%s0 + $0x1e2] sm:$0xff]
  %v584 = vld [vmem:[%s0 + $0x1ea] sm:$0xff]
  %v585 = vld [vmem:[%s0 + $0x1fa] sm:$0xff]
  %v586 = vld [vmem:[%s0 + $0x202] sm:$0xff]
  %v587 = vld [vmem:[%s0 + $0x212] sm:$0xff]
  %v588 = vld [vmem:[%s0 + $0x21a] sm:$0xff]
  %v589 = vld [vmem:[%s0 + $0x22a] sm:$0xff]
  %v590 = vld [vmem:[%s0 + $0x232] sm:$0xff]
  %v591 = vld [vmem:[%s0 + $0x242] sm:$0xff]
  %v592 = vld [vmem:[%s0 + $0x24a] sm:$0xff]
  %v593 = vld [vmem:[%s0 + $0x25a] sm:$0xff]
  %v594 = vld [vmem:[%s0 + $0x262] sm:$0xff]
  %v595 = vld [vmem:[%s0 + $0x272] sm:$0xff]
  %v596 = vld [vmem:[%s0 + $0x27a] sm:$0xff]
  %v597 = vld [vmem:[%s0 + $0x28a] sm:$0xff]
  %v598 = vld [vmem:[%s0 + $0x292] sm:$0xff]
  %v599 = vld [vmem:[%s0 + $0x2a2] sm:$0xff]
  %v600 = vld [vmem:[%s0 + $0x2aa] sm:$0xff]
  %v601 = vld [vmem:[%s0 + $0x2ba] sm:$0xff]
  %v602 = vld [vmem:[%s0 + $0x2c2] sm:$0xff]
  %v603 = vld [vmem:[%s0 + $0x2d2] sm:$0xff]
  %v604 = vld [vmem:[%s0 + $0x2da] sm:$0xff]
  %v605 = vld [vmem:[%s0 + $0x2ea] sm:$0xff]
  %v606 = vld [vmem:[%s0 + $0x2f2] sm:$0xff]
  %v607 = vld [vmem:[%s0 + $0x302] sm:$0xff]
  %v608 = vld [vmem:[%s0 + $0x30a] sm:$0xff]
  %v609 = vld [vmem:[%s0 + $0x31a] sm:$0xff]
  %v610 = vld [vmem:[%s0 + $0x322] sm:$0xff]
  %611 = vst.msk [vmem:[#allocation2 + $0x8] sm:$0xff] %vm97, %v547
  %612 = vst.msk [vmem:[#allocation2 + $0x30] sm:$0xff] %vm97, %v548
  %613 = vst.msk [vmem:[#allocation2 + $0x58] sm:$0xff] %vm97, %v549
  %614 = vst.msk [vmem:[#allocation2 + $0x80] sm:$0xff] %vm97, %v550
  %615 = vst.msk [vmem:[#allocation2 + $0xa8] sm:$0xff] %vm97, %v551
  %616 = vst.msk [vmem:[#allocation2 + $0xd0] sm:$0xff] %vm97, %v552
  %617 = vst.msk [vmem:[#allocation2 + $0xf8] sm:$0xff] %vm97, %v553
  %618 = vst.msk [vmem:[#allocation2 + $0x120] sm:$0xff] %vm97, %v554
  %619 = vst.msk [vmem:[#allocation2 + $0x148] sm:$0xff] %vm97, %v555
  %620 = vst.msk [vmem:[#allocation2 + $0x170] sm:$0xff] %vm97, %v556
  %621 = vst.msk [vmem:[#allocation2 + $0x198] sm:$0xff] %vm97, %v557
  %622 = vst.msk [vmem:[#allocation2 + $0x1c0] sm:$0xff] %vm97, %v558
  %623 = vst.msk [vmem:[#allocation2 + $0x1e8] sm:$0xff] %vm97, %v559
  %624 = vst.msk [vmem:[#allocation2 + $0x210] sm:$0xff] %vm97, %v560
  %625 = vst.msk [vmem:[#allocation2 + $0x238] sm:$0xff] %vm97, %v561
  %626 = vst.msk [vmem:[#allocation2 + $0x260] sm:$0xff] %vm97, %v562
  %627 = vst.msk [vmem:[#allocation2 + $0x288] sm:$0xff] %vm97, %v563
  %628 = vst.msk [vmem:[#allocation2 + $0x2b0] sm:$0xff] %vm97, %v564
  %629 = vst.msk [vmem:[#allocation2 + $0x2d8] sm:$0xff] %vm97, %v565
  %630 = vst.msk [vmem:[#allocation2 + $0x300] sm:$0xff] %vm97, %v566
  %631 = vst.msk [vmem:[#allocation2 + $0x328] sm:$0xff] %vm97, %v567
  %632 = vst.msk [vmem:[#allocation2 + $0x350] sm:$0xff] %vm97, %v568
  %633 = vst.msk [vmem:[#allocation2 + $0x378] sm:$0xff] %vm97, %v569
  %634 = vst.msk [vmem:[#allocation2 + $0x3a0] sm:$0xff] %vm97, %v570
  %635 = vst.msk [vmem:[#allocation2 + $0x3c8] sm:$0xff] %vm97, %v571
  %636 = vst.msk [vmem:[#allocation2 + $0x3f0] sm:$0xff] %vm97, %v572
  %637 = vst.msk [vmem:[#allocation2 + $0x418] sm:$0xff] %vm97, %v573
  %638 = vst.msk [vmem:[#allocation2 + $0x440] sm:$0xff] %vm97, %v574
  %639 = vst.msk [vmem:[#allocation2 + $0x468] sm:$0xff] %vm97, %v575
  %640 = vst.msk [vmem:[#allocation2 + $0x490] sm:$0xff] %vm97, %v576
  %641 = vst.msk [vmem:[#allocation2 + $0x4b8] sm:$0xff] %vm97, %v577
  %642 = vst.msk [vmem:[#allocation2 + $0x4e0] sm:$0xff] %vm97, %v578
  %643 = vst.msk [vmem:[#allocation2 + $0x508] sm:$0xff] %vm97, %v579
  %644 = vst.msk [vmem:[#allocation2 + $0x530] sm:$0xff] %vm97, %v580
  %645 = vst.msk [vmem:[#allocation2 + $0x558] sm:$0xff] %vm97, %v581
  %646 = vst.msk [vmem:[#allocation2 + $0x580] sm:$0xff] %vm97, %v582
  %647 = vst.msk [vmem:[#allocation2 + $0x5a8] sm:$0xff] %vm97, %v583
  %648 = vst.msk [vmem:[#allocation2 + $0x5d0] sm:$0xff] %vm97, %v584
  %649 = vst.msk [vmem:[#allocation2 + $0x5f8] sm:$0xff] %vm97, %v585
  %650 = vst.msk [vmem:[#allocation2 + $0x620] sm:$0xff] %vm97, %v586
  %651 = vst.msk [vmem:[#allocation2 + $0x648] sm:$0xff] %vm97, %v587
  %652 = vst.msk [vmem:[#allocation2 + $0x670] sm:$0xff] %vm97, %v588
  %653 = vst.msk [vmem:[#allocation2 + $0x698] sm:$0xff] %vm97, %v589
  %654 = vst.msk [vmem:[#allocation2 + $0x6c0] sm:$0xff] %vm97, %v590
  %655 = vst.msk [vmem:[#allocation2 + $0x6e8] sm:$0xff] %vm97, %v591
  %656 = vst.msk [vmem:[#allocation2 + $0x710] sm:$0xff] %vm97, %v592
  %657 = vst.msk [vmem:[#allocation2 + $0x738] sm:$0xff] %vm97, %v593
  %658 = vst.msk [vmem:[#allocation2 + $0x760] sm:$0xff] %vm97, %v594
  %659 = vst.msk [vmem:[#allocation2 + $0x788] sm:$0xff] %vm97, %v595
  %660 = vst.msk [vmem:[#allocation2 + $0x7b0] sm:$0xff] %vm97, %v596
  %661 = vst.msk [vmem:[#allocation2 + $0x7d8] sm:$0xff] %vm97, %v597
  %662 = vst.msk [vmem:[#allocation2 + $0x800] sm:$0xff] %vm97, %v598
  %663 = vst.msk [vmem:[#allocation2 + $0x828] sm:$0xff] %vm97, %v599
  %664 = vst.msk [vmem:[#allocation2 + $0x850] sm:$0xff] %vm97, %v600
  %665 = vst.msk [vmem:[#allocation2 + $0x878] sm:$0xff] %vm97, %v601
  %666 = vst.msk [vmem:[#allocation2 + $0x8a0] sm:$0xff] %vm97, %v602
  %667 = vst.msk [vmem:[#allocation2 + $0x8c8] sm:$0xff] %vm97, %v603
  %668 = vst.msk [vmem:[#allocation2 + $0x8f0] sm:$0xff] %vm97, %v604
  %669 = vst.msk [vmem:[#allocation2 + $0x918] sm:$0xff] %vm97, %v605
  %670 = vst.msk [vmem:[#allocation2 + $0x940] sm:$0xff] %vm97, %v606
  %671 = vst.msk [vmem:[#allocation2 + $0x968] sm:$0xff] %vm97, %v607
  %672 = vst.msk [vmem:[#allocation2 + $0x990] sm:$0xff] %vm97, %v608
  %673 = vst.msk [vmem:[#allocation2 + $0x9b8] sm:$0xff] %vm97, %v609
  %674 = vst.msk [vmem:[#allocation2 + $0x9e0] sm:$0xff] %vm97, %v610
  %s675 = scalar_lea.vmem %s0, 24
  %v676 = vld [vmem:[%s675] sm:$0xff]
  %v677 = vld [vmem:[%s675 + $0x8] sm:$0xff]
  %v678 = vld [vmem:[%s675 + $0x18] sm:$0xff]
  %v679 = vld [vmem:[%s675 + $0x20] sm:$0xff]
  %v680 = vld [vmem:[%s675 + $0x30] sm:$0xff]
  %v681 = vld [vmem:[%s675 + $0x38] sm:$0xff]
  %v682 = vld [vmem:[%s675 + $0x48] sm:$0xff]
  %v683 = vld [vmem:[%s675 + $0x50] sm:$0xff]
  %v684 = vld [vmem:[%s675 + $0x60] sm:$0xff]
  %v685 = vld [vmem:[%s675 + $0x68] sm:$0xff]
  %v686 = vld [vmem:[%s675 + $0x78] sm:$0xff]
  %v687 = vld [vmem:[%s675 + $0x80] sm:$0xff]
  %v688 = vld [vmem:[%s675 + $0x90] sm:$0xff]
  %v689 = vld [vmem:[%s675 + $0x98] sm:$0xff]
  %v690 = vld [vmem:[%s675 + $0xa8] sm:$0xff]
  %v691 = vld [vmem:[%s675 + $0xb0] sm:$0xff]
  %v692 = vld [vmem:[%s675 + $0xc0] sm:$0xff]
  %v693 = vld [vmem:[%s675 + $0xc8] sm:$0xff]
  %v694 = vld [vmem:[%s675 + $0xd8] sm:$0xff]
  %v695 = vld [vmem:[%s675 + $0xe0] sm:$0xff]
  %v696 = vld [vmem:[%s675 + $0xf0] sm:$0xff]
  %v697 = vld [vmem:[%s675 + $0xf8] sm:$0xff]
  %v698 = vld [vmem:[%s675 + $0x108] sm:$0xff]
  %v699 = vld [vmem:[%s675 + $0x110] sm:$0xff]
  %v700 = vld [vmem:[%s675 + $0x120] sm:$0xff]
  %v701 = vld [vmem:[%s675 + $0x128] sm:$0xff]
  %v702 = vld [vmem:[%s675 + $0x138] sm:$0xff]
  %v703 = vld [vmem:[%s675 + $0x140] sm:$0xff]
  %v704 = vld [vmem:[%s675 + $0x150] sm:$0xff]
  %v705 = vld [vmem:[%s675 + $0x158] sm:$0xff]
  %v706 = vld [vmem:[%s675 + $0x168] sm:$0xff]
  %v707 = vld [vmem:[%s675 + $0x170] sm:$0xff]
  %v708 = vld [vmem:[%s675 + $0x1b0] sm:$0xff]
  %v709 = vld [vmem:[%s675 + $0x1b8] sm:$0xff]
  %v710 = vld [vmem:[%s675 + $0x1c8] sm:$0xff]
  %v711 = vld [vmem:[%s675 + $0x1d0] sm:$0xff]
  %v712 = vld [vmem:[%s675 + $0x1e0] sm:$0xff]
  %v713 = vld [vmem:[%s675 + $0x1e8] sm:$0xff]
  %v714 = vld [vmem:[%s675 + $0x1f8] sm:$0xff]
  %v715 = vld [vmem:[%s675 + $0x200] sm:$0xff]
  %v716 = vld [vmem:[%s675 + $0x210] sm:$0xff]
  %v717 = vld [vmem:[%s675 + $0x218] sm:$0xff]
  %v718 = vld [vmem:[%s675 + $0x228] sm:$0xff]
  %v719 = vld [vmem:[%s675 + $0x230] sm:$0xff]
  %v720 = vld [vmem:[%s675 + $0x240] sm:$0xff]
  %v721 = vld [vmem:[%s675 + $0x248] sm:$0xff]
  %v722 = vld [vmem:[%s675 + $0x258] sm:$0xff]
  %v723 = vld [vmem:[%s675 + $0x260] sm:$0xff]
  %v724 = vld [vmem:[%s675 + $0x270] sm:$0xff]
  %v725 = vld [vmem:[%s675 + $0x278] sm:$0xff]
  %v726 = vld [vmem:[%s675 + $0x288] sm:$0xff]
  %v727 = vld [vmem:[%s675 + $0x290] sm:$0xff]
  %v728 = vld [vmem:[%s675 + $0x2a0] sm:$0xff]
  %v729 = vld [vmem:[%s675 + $0x2a8] sm:$0xff]
  %v730 = vld [vmem:[%s675 + $0x2b8] sm:$0xff]
  %v731 = vld [vmem:[%s675 + $0x2c0] sm:$0xff]
  %v732 = vld [vmem:[%s675 + $0x2d0] sm:$0xff]
  %v733 = vld [vmem:[%s675 + $0x2d8] sm:$0xff]
  %v734 = vld [vmem:[%s675 + $0x2e8] sm:$0xff]
  %v735 = vld [vmem:[%s675 + $0x2f0] sm:$0xff]
  %v736 = vld [vmem:[%s675 + $0x300] sm:$0xff]
  %v737 = vld [vmem:[%s675 + $0x308] sm:$0xff]
  %v738 = vld [vmem:[%s675 + $0x318] sm:$0xff]
  %v739 = vld [vmem:[%s675 + $0x320] sm:$0xff]
  %804 = vrot.lane.b32.xlu0 %v676, 64
  %v805 = vpop.permute.xlu0 %804
  %806 = vrot.lane.b32.xlu0 %v677, 64
  %v807 = vpop.permute.xlu0 %806
  %808 = vrot.lane.b32.xlu0 %v678, 64
  %v809 = vpop.permute.xlu0 %808
  %810 = vrot.lane.b32.xlu0 %v679, 64
  %v811 = vpop.permute.xlu0 %810
  %812 = vrot.lane.b32.xlu0 %v680, 64
  %v813 = vpop.permute.xlu0 %812
  %814 = vrot.lane.b32.xlu0 %v681, 64
  %v815 = vpop.permute.xlu0 %814
  %816 = vrot.lane.b32.xlu0 %v682, 64
  %v817 = vpop.permute.xlu0 %816
  %818 = vrot.lane.b32.xlu0 %v683, 64
  %v819 = vpop.permute.xlu0 %818
  %820 = vrot.lane.b32.xlu0 %v684, 64
  %v821 = vpop.permute.xlu0 %820
  %822 = vrot.lane.b32.xlu0 %v685, 64
  %v823 = vpop.permute.xlu0 %822
  %824 = vrot.lane.b32.xlu0 %v686, 64
  %v825 = vpop.permute.xlu0 %824
  %826 = vrot.lane.b32.xlu0 %v687, 64
  %v827 = vpop.permute.xlu0 %826
  %828 = vrot.lane.b32.xlu0 %v688, 64
  %v829 = vpop.permute.xlu0 %828
  %830 = vrot.lane.b32.xlu0 %v689, 64
  %v831 = vpop.permute.xlu0 %830
  %832 = vrot.lane.b32.xlu0 %v690, 64
  %v833 = vpop.permute.xlu0 %832
  %834 = vrot.lane.b32.xlu0 %v691, 64
  %v835 = vpop.permute.xlu0 %834
  %836 = vrot.lane.b32.xlu0 %v692, 64
  %v837 = vpop.permute.xlu0 %836
  %838 = vrot.lane.b32.xlu0 %v693, 64
  %v839 = vpop.permute.xlu0 %838
  %840 = vrot.lane.b32.xlu0 %v694, 64
  %v841 = vpop.permute.xlu0 %840
  %842 = vrot.lane.b32.xlu0 %v695, 64
  %v843 = vpop.permute.xlu0 %842
  %844 = vrot.lane.b32.xlu0 %v696, 64
  %v845 = vpop.permute.xlu0 %844
  %846 = vrot.lane.b32.xlu0 %v697, 64
  %v847 = vpop.permute.xlu0 %846
  %848 = vrot.lane.b32.xlu0 %v698, 64
  %v849 = vpop.permute.xlu0 %848
  %850 = vrot.lane.b32.xlu0 %v699, 64
  %v851 = vpop.permute.xlu0 %850
  %852 = vrot.lane.b32.xlu0 %v700, 64
  %v853 = vpop.permute.xlu0 %852
  %854 = vrot.lane.b32.xlu0 %v701, 64
  %v855 = vpop.permute.xlu0 %854
  %856 = vrot.lane.b32.xlu0 %v702, 64
  %v857 = vpop.permute.xlu0 %856
  %858 = vrot.lane.b32.xlu0 %v703, 64
  %v859 = vpop.permute.xlu0 %858
  %860 = vrot.lane.b32.xlu0 %v704, 64
  %v861 = vpop.permute.xlu0 %860
  %862 = vrot.lane.b32.xlu0 %v705, 64
  %v863 = vpop.permute.xlu0 %862
  %864 = vrot.lane.b32.xlu0 %v706, 64
  %v865 = vpop.permute.xlu0 %864
  %866 = vrot.lane.b32.xlu0 %v707, 64
  %v867 = vpop.permute.xlu0 %866
  %868 = vrot.lane.b32.xlu0 %v708, 64
  %v869 = vpop.permute.xlu0 %868
  %870 = vrot.lane.b32.xlu0 %v709, 64
  %v871 = vpop.permute.xlu0 %870
  %872 = vrot.lane.b32.xlu0 %v710, 64
  %v873 = vpop.permute.xlu0 %872
  %874 = vrot.lane.b32.xlu0 %v711, 64
  %v875 = vpop.permute.xlu0 %874
  %876 = vrot.lane.b32.xlu0 %v712, 64
  %v877 = vpop.permute.xlu0 %876
  %878 = vrot.lane.b32.xlu0 %v713, 64
  %v879 = vpop.permute.xlu0 %878
  %880 = vrot.lane.b32.xlu0 %v714, 64
  %v881 = vpop.permute.xlu0 %880
  %882 = vrot.lane.b32.xlu0 %v715, 64
  %v883 = vpop.permute.xlu0 %882
  %884 = vrot.lane.b32.xlu0 %v716, 64
  %v885 = vpop.permute.xlu0 %884
  %886 = vrot.lane.b32.xlu0 %v717, 64
  %v887 = vpop.permute.xlu0 %886
  %888 = vrot.lane.b32.xlu0 %v718, 64
  %v889 = vpop.permute.xlu0 %888
  %890 = vrot.lane.b32.xlu0 %v719, 64
  %v891 = vpop.permute.xlu0 %890
  %892 = vrot.lane.b32.xlu0 %v720, 64
  %v893 = vpop.permute.xlu0 %892
  %894 = vrot.lane.b32.xlu0 %v721, 64
  %v895 = vpop.permute.xlu0 %894
  %896 = vrot.lane.b32.xlu0 %v722, 64
  %v897 = vpop.permute.xlu0 %896
  %898 = vrot.lane.b32.xlu0 %v723, 64
  %v899 = vpop.permute.xlu0 %898
  %900 = vrot.lane.b32.xlu0 %v724, 64
  %v901 = vpop.permute.xlu0 %900
  %902 = vrot.lane.b32.xlu0 %v725, 64
  %v903 = vpop.permute.xlu0 %902
  %904 = vrot.lane.b32.xlu0 %v726, 64
  %v905 = vpop.permute.xlu0 %904
  %906 = vrot.lane.b32.xlu0 %v727, 64
  %v907 = vpop.permute.xlu0 %906
  %908 = vrot.lane.b32.xlu0 %v728, 64
  %v909 = vpop.permute.xlu0 %908
  %910 = vrot.lane.b32.xlu0 %v729, 64
  %v911 = vpop.permute.xlu0 %910
  %912 = vrot.lane.b32.xlu0 %v730, 64
  %v913 = vpop.permute.xlu0 %912
  %914 = vrot.lane.b32.xlu0 %v731, 64
  %v915 = vpop.permute.xlu0 %914
  %916 = vrot.lane.b32.xlu0 %v732, 64
  %v917 = vpop.permute.xlu0 %916
  %918 = vrot.lane.b32.xlu0 %v733, 64
  %v919 = vpop.permute.xlu0 %918
  %920 = vrot.lane.b32.xlu0 %v734, 64
  %v921 = vpop.permute.xlu0 %920
  %922 = vrot.lane.b32.xlu0 %v735, 64
  %v923 = vpop.permute.xlu0 %922
  %924 = vrot.lane.b32.xlu0 %v736, 64
  %v925 = vpop.permute.xlu0 %924
  %926 = vrot.lane.b32.xlu0 %v737, 64
  %v927 = vpop.permute.xlu0 %926
  %928 = vrot.lane.b32.xlu0 %v738, 64
  %v929 = vpop.permute.xlu0 %928
  %930 = vrot.lane.b32.xlu0 %v739, 64
  %v931 = vpop.permute.xlu0 %930
  %996 = vst.msk [vmem:[#allocation2 + $0x8] sm:$0xff] %vm482, %v805
  %997 = vst.msk [vmem:[#allocation2 + $0x30] sm:$0xff] %vm482, %v807
  %998 = vst.msk [vmem:[#allocation2 + $0x58] sm:$0xff] %vm482, %v809
  %999 = vst.msk [vmem:[#allocation2 + $0x80] sm:$0xff] %vm482, %v811
  %1000 = vst.msk [vmem:[#allocation2 + $0xa8] sm:$0xff] %vm482, %v813
  %1001 = vst.msk [vmem:[#allocation2 + $0xd0] sm:$0xff] %vm482, %v815
  %1002 = vst.msk [vmem:[#allocation2 + $0xf8] sm:$0xff] %vm482, %v817
  %1003 = vst.msk [vmem:[#allocation2 + $0x120] sm:$0xff] %vm482, %v819
  %1004 = vst.msk [vmem:[#allocation2 + $0x148] sm:$0xff] %vm482, %v821
  %1005 = vst.msk [vmem:[#allocation2 + $0x170] sm:$0xff] %vm482, %v823
  %1006 = vst.msk [vmem:[#allocation2 + $0x198] sm:$0xff] %vm482, %v825
  %1007 = vst.msk [vmem:[#allocation2 + $0x1c0] sm:$0xff] %vm482, %v827
  %1008 = vst.msk [vmem:[#allocation2 + $0x1e8] sm:$0xff] %vm482, %v829
  %1009 = vst.msk [vmem:[#allocation2 + $0x210] sm:$0xff] %vm482, %v831
  %1010 = vst.msk [vmem:[#allocation2 + $0x238] sm:$0xff] %vm482, %v833
  %1011 = vst.msk [vmem:[#allocation2 + $0x260] sm:$0xff] %vm482, %v835
  %1012 = vst.msk [vmem:[#allocation2 + $0x288] sm:$0xff] %vm482, %v837
  %1013 = vst.msk [vmem:[#allocation2 + $0x2b0] sm:$0xff] %vm482, %v839
  %1014 = vst.msk [vmem:[#allocation2 + $0x2d8] sm:$0xff] %vm482, %v841
  %1015 = vst.msk [vmem:[#allocation2 + $0x300] sm:$0xff] %vm482, %v843
  %1016 = vst.msk [vmem:[#allocation2 + $0x328] sm:$0xff] %vm482, %v845
  %1017 = vst.msk [vmem:[#allocation2 + $0x350] sm:$0xff] %vm482, %v847
  %1018 = vst.msk [vmem:[#allocation2 + $0x378] sm:$0xff] %vm482, %v849
  %1019 = vst.msk [vmem:[#allocation2 + $0x3a0] sm:$0xff] %vm482, %v851
  %1020 = vst.msk [vmem:[#allocation2 + $0x3c8] sm:$0xff] %vm482, %v853
  %1021 = vst.msk [vmem:[#allocation2 + $0x3f0] sm:$0xff] %vm482, %v855
  %1022 = vst.msk [vmem:[#allocation2 + $0x418] sm:$0xff] %vm482, %v857
  %1023 = vst.msk [vmem:[#allocation2 + $0x440] sm:$0xff] %vm482, %v859
  %1024 = vst.msk [vmem:[#allocation2 + $0x468] sm:$0xff] %vm482, %v861
  %1025 = vst.msk [vmem:[#allocation2 + $0x490] sm:$0xff] %vm482, %v863
  %1026 = vst.msk [vmem:[#allocation2 + $0x4b8] sm:$0xff] %vm482, %v865
  %1027 = vst.msk [vmem:[#allocation2 + $0x4e0] sm:$0xff] %vm482, %v867
  %1028 = vst.msk [vmem:[#allocation2 + $0x508] sm:$0xff] %vm482, %v869
  %1029 = vst.msk [vmem:[#allocation2 + $0x530] sm:$0xff] %vm482, %v871
  %1030 = vst.msk [vmem:[#allocation2 + $0x558] sm:$0xff] %vm482, %v873
  %1031 = vst.msk [vmem:[#allocation2 + $0x580] sm:$0xff] %vm482, %v875
  %1032 = vst.msk [vmem:[#allocation2 + $0x5a8] sm:$0xff] %vm482, %v877
  %1033 = vst.msk [vmem:[#allocation2 + $0x5d0] sm:$0xff] %vm482, %v879
  %1034 = vst.msk [vmem:[#allocation2 + $0x5f8] sm:$0xff] %vm482, %v881
  %1035 = vst.msk [vmem:[#allocation2 + $0x620] sm:$0xff] %vm482, %v883
  %1036 = vst.msk [vmem:[#allocation2 + $0x648] sm:$0xff] %vm482, %v885
  %1037 = vst.msk [vmem:[#allocation2 + $0x670] sm:$0xff] %vm482, %v887
  %1038 = vst.msk [vmem:[#allocation2 + $0x698] sm:$0xff] %vm482, %v889
  %1039 = vst.msk [vmem:[#allocation2 + $0x6c0] sm:$0xff] %vm482, %v891
  %1040 = vst.msk [vmem:[#allocation2 + $0x6e8] sm:$0xff] %vm482, %v893
  %1041 = vst.msk [vmem:[#allocation2 + $0x710] sm:$0xff] %vm482, %v895
  %1042 = vst.msk [vmem:[#allocation2 + $0x738] sm:$0xff] %vm482, %v897
  %1043 = vst.msk [vmem:[#allocation2 + $0x760] sm:$0xff] %vm482, %v899
  %1044 = vst.msk [vmem:[#allocation2 + $0x788] sm:$0xff] %vm482, %v901
  %1045 = vst.msk [vmem:[#allocation2 + $0x7b0] sm:$0xff] %vm482, %v903
  %1046 = vst.msk [vmem:[#allocation2 + $0x7d8] sm:$0xff] %vm482, %v905
  %1047 = vst.msk [vmem:[#allocation2 + $0x800] sm:$0xff] %vm482, %v907
  %1048 = vst.msk [vmem:[#allocation2 + $0x828] sm:$0xff] %vm482, %v909
  %1049 = vst.msk [vmem:[#allocation2 + $0x850] sm:$0xff] %vm482, %v911
  %1050 = vst.msk [vmem:[#allocation2 + $0x878] sm:$0xff] %vm482, %v913
  %1051 = vst.msk [vmem:[#allocation2 + $0x8a0] sm:$0xff] %vm482, %v915
  %1052 = vst.msk [vmem:[#allocation2 + $0x8c8] sm:$0xff] %vm482, %v917
  %1053 = vst.msk [vmem:[#allocation2 + $0x8f0] sm:$0xff] %vm482, %v919
  %1054 = vst.msk [vmem:[#allocation2 + $0x918] sm:$0xff] %vm482, %v921
  %1055 = vst.msk [vmem:[#allocation2 + $0x940] sm:$0xff] %vm482, %v923
  %1056 = vst.msk [vmem:[#allocation2 + $0x968] sm:$0xff] %vm482, %v925
  %1057 = vst.msk [vmem:[#allocation2 + $0x990] sm:$0xff] %vm482, %v927
  %1058 = vst.msk [vmem:[#allocation2 + $0x9b8] sm:$0xff] %vm482, %v929
  %1059 = vst.msk [vmem:[#allocation2 + $0x9e0] sm:$0xff] %vm482, %v931
  %v1060 = vld [vmem:[%s675 + $0x1] sm:$0xff]
  %v1061 = vld [vmem:[%s675 + $0x9] sm:$0xff]
  %v1062 = vld [vmem:[%s675 + $0x19] sm:$0xff]
  %v1063 = vld [vmem:[%s675 + $0x21] sm:$0xff]
  %v1064 = vld [vmem:[%s675 + $0x31] sm:$0xff]
  %v1065 = vld [vmem:[%s675 + $0x39] sm:$0xff]
  %v1066 = vld [vmem:[%s675 + $0x49] sm:$0xff]
  %v1067 = vld [vmem:[%s675 + $0x51] sm:$0xff]
  %v1068 = vld [vmem:[%s675 + $0x61] sm:$0xff]
  %v1069 = vld [vmem:[%s675 + $0x69] sm:$0xff]
  %v1070 = vld [vmem:[%s675 + $0x79] sm:$0xff]
  %v1071 = vld [vmem:[%s675 + $0x81] sm:$0xff]
  %v1072 = vld [vmem:[%s675 + $0x91] sm:$0xff]
  %v1073 = vld [vmem:[%s675 + $0x99] sm:$0xff]
  %v1074 = vld [vmem:[%s675 + $0xa9] sm:$0xff]
  %v1075 = vld [vmem:[%s675 + $0xb1] sm:$0xff]
  %v1076 = vld [vmem:[%s675 + $0xc1] sm:$0xff]
  %v1077 = vld [vmem:[%s675 + $0xc9] sm:$0xff]
  %v1078 = vld [vmem:[%s675 + $0xd9] sm:$0xff]
  %v1079 = vld [vmem:[%s675 + $0xe1] sm:$0xff]
  %v1080 = vld [vmem:[%s675 + $0xf1] sm:$0xff]
  %v1081 = vld [vmem:[%s675 + $0xf9] sm:$0xff]
  %v1082 = vld [vmem:[%s675 + $0x109] sm:$0xff]
  %v1083 = vld [vmem:[%s675 + $0x111] sm:$0xff]
  %v1084 = vld [vmem:[%s675 + $0x121] sm:$0xff]
  %v1085 = vld [vmem:[%s675 + $0x129] sm:$0xff]
  %v1086 = vld [vmem:[%s675 + $0x139] sm:$0xff]
  %v1087 = vld [vmem:[%s675 + $0x141] sm:$0xff]
  %v1088 = vld [vmem:[%s675 + $0x151] sm:$0xff]
  %v1089 = vld [vmem:[%s675 + $0x159] sm:$0xff]
  %v1090 = vld [vmem:[%s675 + $0x169] sm:$0xff]
  %v1091 = vld [vmem:[%s675 + $0x171] sm:$0xff]
  %v1092 = vld [vmem:[%s675 + $0x1b1] sm:$0xff]
  %v1093 = vld [vmem:[%s675 + $0x1b9] sm:$0xff]
  %v1094 = vld [vmem:[%s675 + $0x1c9] sm:$0xff]
  %v1095 = vld [vmem:[%s675 + $0x1d1] sm:$0xff]
  %v1096 = vld [vmem:[%s675 + $0x1e1] sm:$0xff]
  %v1097 = vld [vmem:[%s675 + $0x1e9] sm:$0xff]
  %v1098 = vld [vmem:[%s675 + $0x1f9] sm:$0xff]
  %v1099 = vld [vmem:[%s675 + $0x201] sm:$0xff]
  %v1100 = vld [vmem:[%s675 + $0x211] sm:$0xff]
  %v1101 = vld [vmem:[%s675 + $0x219] sm:$0xff]
  %v1102 = vld [vmem:[%s675 + $0x229] sm:$0xff]
  %v1103 = vld [vmem:[%s675 + $0x231] sm:$0xff]
  %v1104 = vld [vmem:[%s675 + $0x241] sm:$0xff]
  %v1105 = vld [vmem:[%s675 + $0x249] sm:$0xff]
  %v1106 = vld [vmem:[%s675 + $0x259] sm:$0xff]
  %v1107 = vld [vmem:[%s675 + $0x261] sm:$0xff]
  %v1108 = vld [vmem:[%s675 + $0x271] sm:$0xff]
  %v1109 = vld [vmem:[%s675 + $0x279] sm:$0xff]
  %v1110 = vld [vmem:[%s675 + $0x289] sm:$0xff]
  %v1111 = vld [vmem:[%s675 + $0x291] sm:$0xff]
  %v1112 = vld [vmem:[%s675 + $0x2a1] sm:$0xff]
  %v1113 = vld [vmem:[%s675 + $0x2a9] sm:$0xff]
  %v1114 = vld [vmem:[%s675 + $0x2b9] sm:$0xff]
  %v1115 = vld [vmem:[%s675 + $0x2c1] sm:$0xff]
  %v1116 = vld [vmem:[%s675 + $0x2d1] sm:$0xff]
  %v1117 = vld [vmem:[%s675 + $0x2d9] sm:$0xff]
  %v1118 = vld [vmem:[%s675 + $0x2e9] sm:$0xff]
  %v1119 = vld [vmem:[%s675 + $0x2f1] sm:$0xff]
  %v1120 = vld [vmem:[%s675 + $0x301] sm:$0xff]
  %v1121 = vld [vmem:[%s675 + $0x309] sm:$0xff]
  %v1122 = vld [vmem:[%s675 + $0x319] sm:$0xff]
  %v1123 = vld [vmem:[%s675 + $0x321] sm:$0xff]
  %1124 = vst.msk [vmem:[#allocation2 + $0x10] sm:$0xff] %vm97, %v1060
  %1125 = vst.msk [vmem:[#allocation2 + $0x38] sm:$0xff] %vm97, %v1061
  %1126 = vst.msk [vmem:[#allocation2 + $0x60] sm:$0xff] %vm97, %v1062
  %1127 = vst.msk [vmem:[#allocation2 + $0x88] sm:$0xff] %vm97, %v1063
  %1128 = vst.msk [vmem:[#allocation2 + $0xb0] sm:$0xff] %vm97, %v1064
  %1129 = vst.msk [vmem:[#allocation2 + $0xd8] sm:$0xff] %vm97, %v1065
  %1130 = vst.msk [vmem:[#allocation2 + $0x100] sm:$0xff] %vm97, %v1066
  %1131 = vst.msk [vmem:[#allocation2 + $0x128] sm:$0xff] %vm97, %v1067
  %1132 = vst.msk [vmem:[#allocation2 + $0x150] sm:$0xff] %vm97, %v1068
  %1133 = vst.msk [vmem:[#allocation2 + $0x178] sm:$0xff] %vm97, %v1069
  %1134 = vst.msk [vmem:[#allocation2 + $0x1a0] sm:$0xff] %vm97, %v1070
  %1135 = vst.msk [vmem:[#allocation2 + $0x1c8] sm:$0xff] %vm97, %v1071
  %1136 = vst.msk [vmem:[#allocation2 + $0x1f0] sm:$0xff] %vm97, %v1072
  %1137 = vst.msk [vmem:[#allocation2 + $0x218] sm:$0xff] %vm97, %v1073
  %1138 = vst.msk [vmem:[#allocation2 + $0x240] sm:$0xff] %vm97, %v1074
  %1139 = vst.msk [vmem:[#allocation2 + $0x268] sm:$0xff] %vm97, %v1075
  %1140 = vst.msk [vmem:[#allocation2 + $0x290] sm:$0xff] %vm97, %v1076
  %1141 = vst.msk [vmem:[#allocation2 + $0x2b8] sm:$0xff] %vm97, %v1077
  %1142 = vst.msk [vmem:[#allocation2 + $0x2e0] sm:$0xff] %vm97, %v1078
  %1143 = vst.msk [vmem:[#allocation2 + $0x308] sm:$0xff] %vm97, %v1079
  %1144 = vst.msk [vmem:[#allocation2 + $0x330] sm:$0xff] %vm97, %v1080
  %1145 = vst.msk [vmem:[#allocation2 + $0x358] sm:$0xff] %vm97, %v1081
  %1146 = vst.msk [vmem:[#allocation2 + $0x380] sm:$0xff] %vm97, %v1082
  %1147 = vst.msk [vmem:[#allocation2 + $0x3a8] sm:$0xff] %vm97, %v1083
  %1148 = vst.msk [vmem:[#allocation2 + $0x3d0] sm:$0xff] %vm97, %v1084
  %1149 = vst.msk [vmem:[#allocation2 + $0x3f8] sm:$0xff] %vm97, %v1085
  %1150 = vst.msk [vmem:[#allocation2 + $0x420] sm:$0xff] %vm97, %v1086
  %1151 = vst.msk [vmem:[#allocation2 + $0x448] sm:$0xff] %vm97, %v1087
  %1152 = vst.msk [vmem:[#allocation2 + $0x470] sm:$0xff] %vm97, %v1088
  %1153 = vst.msk [vmem:[#allocation2 + $0x498] sm:$0xff] %vm97, %v1089
  %1154 = vst.msk [vmem:[#allocation2 + $0x4c0] sm:$0xff] %vm97, %v1090
  %1155 = vst.msk [vmem:[#allocation2 + $0x4e8] sm:$0xff] %vm97, %v1091
  %1156 = vst.msk [vmem:[#allocation2 + $0x510] sm:$0xff] %vm97, %v1092
  %1157 = vst.msk [vmem:[#allocation2 + $0x538] sm:$0xff] %vm97, %v1093
  %1158 = vst.msk [vmem:[#allocation2 + $0x560] sm:$0xff] %vm97, %v1094
  %1159 = vst.msk [vmem:[#allocation2 + $0x588] sm:$0xff] %vm97, %v1095
  %1160 = vst.msk [vmem:[#allocation2 + $0x5b0] sm:$0xff] %vm97, %v1096
  %1161 = vst.msk [vmem:[#allocation2 + $0x5d8] sm:$0xff] %vm97, %v1097
  %1162 = vst.msk [vmem:[#allocation2 + $0x600] sm:$0xff] %vm97, %v1098
  %1163 = vst.msk [vmem:[#allocation2 + $0x628] sm:$0xff] %vm97, %v1099
  %1164 = vst.msk [vmem:[#allocation2 + $0x650] sm:$0xff] %vm97, %v1100
  %1165 = vst.msk [vmem:[#allocation2 + $0x678] sm:$0xff] %vm97, %v1101
  %1166 = vst.msk [vmem:[#allocation2 + $0x6a0] sm:$0xff] %vm97, %v1102
  %1167 = vst.msk [vmem:[#allocation2 + $0x6c8] sm:$0xff] %vm97, %v1103
  %1168 = vst.msk [vmem:[#allocation2 + $0x6f0] sm:$0xff] %vm97, %v1104
  %1169 = vst.msk [vmem:[#allocation2 + $0x718] sm:$0xff] %vm97, %v1105
  %1170 = vst.msk [vmem:[#allocation2 + $0x740] sm:$0xff] %vm97, %v1106
  %1171 = vst.msk [vmem:[#allocation2 + $0x768] sm:$0xff] %vm97, %v1107
  %1172 = vst.msk [vmem:[#allocation2 + $0x790] sm:$0xff] %vm97, %v1108
  %1173 = vst.msk [vmem:[#allocation2 + $0x7b8] sm:$0xff] %vm97, %v1109
  %1174 = vst.msk [vmem:[#allocation2 + $0x7e0] sm:$0xff] %vm97, %v1110
  %1175 = vst.msk [vmem:[#allocation2 + $0x808] sm:$0xff] %vm97, %v1111
  %1176 = vst.msk [vmem:[#allocation2 + $0x830] sm:$0xff] %vm97, %v1112
  %1177 = vst.msk [vmem:[#allocation2 + $0x858] sm:$0xff] %vm97, %v1113
  %1178 = vst.msk [vmem:[#allocation2 + $0x880] sm:$0xff] %vm97, %v1114
  %1179 = vst.msk [vmem:[#allocation2 + $0x8a8] sm:$0xff] %vm97, %v1115
  %1180 = vst.msk [vmem:[#allocation2 + $0x8d0] sm:$0xff] %vm97, %v1116
  %1181 = vst.msk [vmem:[#allocation2 + $0x8f8] sm:$0xff] %vm97, %v1117
  %1182 = vst.msk [vmem:[#allocation2 + $0x920] sm:$0xff] %vm97, %v1118
  %1183 = vst.msk [vmem:[#allocation2 + $0x948] sm:$0xff] %vm97, %v1119
  %1184 = vst.msk [vmem:[#allocation2 + $0x970] sm:$0xff] %vm97, %v1120
  %1185 = vst.msk [vmem:[#allocation2 + $0x998] sm:$0xff] %vm97, %v1121
  %1186 = vst.msk [vmem:[#allocation2 + $0x9c0] sm:$0xff] %vm97, %v1122
  %1187 = vst.msk [vmem:[#allocation2 + $0x9e8] sm:$0xff] %vm97, %v1123
  %v1188 = vld [vmem:[%s675 + $0x2] sm:$0xff]
  %v1189 = vld [vmem:[%s675 + $0xa] sm:$0xff]
  %v1190 = vld [vmem:[%s675 + $0x1a] sm:$0xff]
  %v1191 = vld [vmem:[%s675 + $0x22] sm:$0xff]
  %v1192 = vld [vmem:[%s675 + $0x32] sm:$0xff]
  %v1193 = vld [vmem:[%s675 + $0x3a] sm:$0xff]
  %v1194 = vld [vmem:[%s675 + $0x4a] sm:$0xff]
  %v1195 = vld [vmem:[%s675 + $0x52] sm:$0xff]
  %v1196 = vld [vmem:[%s675 + $0x62] sm:$0xff]
  %v1197 = vld [vmem:[%s675 + $0x6a] sm:$0xff]
  %v1198 = vld [vmem:[%s675 + $0x7a] sm:$0xff]
  %v1199 = vld [vmem:[%s675 + $0x82] sm:$0xff]
  %v1200 = vld [vmem:[%s675 + $0x92] sm:$0xff]
  %v1201 = vld [vmem:[%s675 + $0x9a] sm:$0xff]
  %v1202 = vld [vmem:[%s675 + $0xaa] sm:$0xff]
  %v1203 = vld [vmem:[%s675 + $0xb2] sm:$0xff]
  %v1204 = vld [vmem:[%s675 + $0xc2] sm:$0xff]
  %v1205 = vld [vmem:[%s675 + $0xca] sm:$0xff]
  %v1206 = vld [vmem:[%s675 + $0xda] sm:$0xff]
  %v1207 = vld [vmem:[%s675 + $0xe2] sm:$0xff]
  %v1208 = vld [vmem:[%s675 + $0xf2] sm:$0xff]
  %v1209 = vld [vmem:[%s675 + $0xfa] sm:$0xff]
  %v1210 = vld [vmem:[%s675 + $0x10a] sm:$0xff]
  %v1211 = vld [vmem:[%s675 + $0x112] sm:$0xff]
  %v1212 = vld [vmem:[%s675 + $0x122] sm:$0xff]
  %v1213 = vld [vmem:[%s675 + $0x12a] sm:$0xff]
  %v1214 = vld [vmem:[%s675 + $0x13a] sm:$0xff]
  %v1215 = vld [vmem:[%s675 + $0x142] sm:$0xff]
  %v1216 = vld [vmem:[%s675 + $0x152] sm:$0xff]
  %v1217 = vld [vmem:[%s675 + $0x15a] sm:$0xff]
  %v1218 = vld [vmem:[%s675 + $0x16a] sm:$0xff]
  %v1219 = vld [vmem:[%s675 + $0x172] sm:$0xff]
  %v1220 = vld [vmem:[%s675 + $0x1b2] sm:$0xff]
  %v1221 = vld [vmem:[%s675 + $0x1ba] sm:$0xff]
  %v1222 = vld [vmem:[%s675 + $0x1ca] sm:$0xff]
  %v1223 = vld [vmem:[%s675 + $0x1d2] sm:$0xff]
  %v1224 = vld [vmem:[%s675 + $0x1e2] sm:$0xff]
  %v1225 = vld [vmem:[%s675 + $0x1ea] sm:$0xff]
  %v1226 = vld [vmem:[%s675 + $0x1fa] sm:$0xff]
  %v1227 = vld [vmem:[%s675 + $0x202] sm:$0xff]
  %v1228 = vld [vmem:[%s675 + $0x212] sm:$0xff]
  %v1229 = vld [vmem:[%s675 + $0x21a] sm:$0xff]
  %v1230 = vld [vmem:[%s675 + $0x22a] sm:$0xff]
  %v1231 = vld [vmem:[%s675 + $0x232] sm:$0xff]
  %v1232 = vld [vmem:[%s675 + $0x242] sm:$0xff]
  %v1233 = vld [vmem:[%s675 + $0x24a] sm:$0xff]
  %v1234 = vld [vmem:[%s675 + $0x25a] sm:$0xff]
  %v1235 = vld [vmem:[%s675 + $0x262] sm:$0xff]
  %v1236 = vld [vmem:[%s675 + $0x272] sm:$0xff]
  %v1237 = vld [vmem:[%s675 + $0x27a] sm:$0xff]
  %v1238 = vld [vmem:[%s675 + $0x28a] sm:$0xff]
  %v1239 = vld [vmem:[%s675 + $0x292] sm:$0xff]
  %v1240 = vld [vmem:[%s675 + $0x2a2] sm:$0xff]
  %v1241 = vld [vmem:[%s675 + $0x2aa] sm:$0xff]
  %v1242 = vld [vmem:[%s675 + $0x2ba] sm:$0xff]
  %v1243 = vld [vmem:[%s675 + $0x2c2] sm:$0xff]
  %v1244 = vld [vmem:[%s675 + $0x2d2] sm:$0xff]
  %v1245 = vld [vmem:[%s675 + $0x2da] sm:$0xff]
  %v1246 = vld [vmem:[%s675 + $0x2ea] sm:$0xff]
  %v1247 = vld [vmem:[%s675 + $0x2f2] sm:$0xff]
  %v1248 = vld [vmem:[%s675 + $0x302] sm:$0xff]
  %v1249 = vld [vmem:[%s675 + $0x30a] sm:$0xff]
  %v1250 = vld [vmem:[%s675 + $0x31a] sm:$0xff]
  %v1251 = vld [vmem:[%s675 + $0x322] sm:$0xff]
  %1316 = vrot.lane.b32.xlu0 %v1188, 64
  %v1317 = vpop.permute.xlu0 %1316
  %1318 = vrot.lane.b32.xlu0 %v1189, 64
  %v1319 = vpop.permute.xlu0 %1318
  %1320 = vrot.lane.b32.xlu0 %v1190, 64
  %v1321 = vpop.permute.xlu0 %1320
  %1322 = vrot.lane.b32.xlu0 %v1191, 64
  %v1323 = vpop.permute.xlu0 %1322
  %1324 = vrot.lane.b32.xlu0 %v1192, 64
  %v1325 = vpop.permute.xlu0 %1324
  %1326 = vrot.lane.b32.xlu0 %v1193, 64
  %v1327 = vpop.permute.xlu0 %1326
  %1328 = vrot.lane.b32.xlu0 %v1194, 64
  %v1329 = vpop.permute.xlu0 %1328
  %1330 = vrot.lane.b32.xlu0 %v1195, 64
  %v1331 = vpop.permute.xlu0 %1330
  %1332 = vrot.lane.b32.xlu0 %v1196, 64
  %v1333 = vpop.permute.xlu0 %1332
  %1334 = vrot.lane.b32.xlu0 %v1197, 64
  %v1335 = vpop.permute.xlu0 %1334
  %1336 = vrot.lane.b32.xlu0 %v1198, 64
  %v1337 = vpop.permute.xlu0 %1336
  %1338 = vrot.lane.b32.xlu0 %v1199, 64
  %v1339 = vpop.permute.xlu0 %1338
  %1340 = vrot.lane.b32.xlu0 %v1200, 64
  %v1341 = vpop.permute.xlu0 %1340
  %1342 = vrot.lane.b32.xlu0 %v1201, 64
  %v1343 = vpop.permute.xlu0 %1342
  %1344 = vrot.lane.b32.xlu0 %v1202, 64
  %v1345 = vpop.permute.xlu0 %1344
  %1346 = vrot.lane.b32.xlu0 %v1203, 64
  %v1347 = vpop.permute.xlu0 %1346
  %1348 = vrot.lane.b32.xlu0 %v1204, 64
  %v1349 = vpop.permute.xlu0 %1348
  %1350 = vrot.lane.b32.xlu0 %v1205, 64
  %v1351 = vpop.permute.xlu0 %1350
  %1352 = vrot.lane.b32.xlu0 %v1206, 64
  %v1353 = vpop.permute.xlu0 %1352
  %1354 = vrot.lane.b32.xlu0 %v1207, 64
  %v1355 = vpop.permute.xlu0 %1354
  %1356 = vrot.lane.b32.xlu0 %v1208, 64
  %v1357 = vpop.permute.xlu0 %1356
  %1358 = vrot.lane.b32.xlu0 %v1209, 64
  %v1359 = vpop.permute.xlu0 %1358
  %1360 = vrot.lane.b32.xlu0 %v1210, 64
  %v1361 = vpop.permute.xlu0 %1360
  %1362 = vrot.lane.b32.xlu0 %v1211, 64
  %v1363 = vpop.permute.xlu0 %1362
  %1364 = vrot.lane.b32.xlu0 %v1212, 64
  %v1365 = vpop.permute.xlu0 %1364
  %1366 = vrot.lane.b32.xlu0 %v1213, 64
  %v1367 = vpop.permute.xlu0 %1366
  %1368 = vrot.lane.b32.xlu0 %v1214, 64
  %v1369 = vpop.permute.xlu0 %1368
  %1370 = vrot.lane.b32.xlu0 %v1215, 64
  %v1371 = vpop.permute.xlu0 %1370
  %1372 = vrot.lane.b32.xlu0 %v1216, 64
  %v1373 = vpop.permute.xlu0 %1372
  %1374 = vrot.lane.b32.xlu0 %v1217, 64
  %v1375 = vpop.permute.xlu0 %1374
  %1376 = vrot.lane.b32.xlu0 %v1218, 64
  %v1377 = vpop.permute.xlu0 %1376
  %1378 = vrot.lane.b32.xlu0 %v1219, 64
  %v1379 = vpop.permute.xlu0 %1378
  %1380 = vrot.lane.b32.xlu0 %v1220, 64
  %v1381 = vpop.permute.xlu0 %1380
  %1382 = vrot.lane.b32.xlu0 %v1221, 64
  %v1383 = vpop.permute.xlu0 %1382
  %1384 = vrot.lane.b32.xlu0 %v1222, 64
  %v1385 = vpop.permute.xlu0 %1384
  %1386 = vrot.lane.b32.xlu0 %v1223, 64
  %v1387 = vpop.permute.xlu0 %1386
  %1388 = vrot.lane.b32.xlu0 %v1224, 64
  %v1389 = vpop.permute.xlu0 %1388
  %1390 = vrot.lane.b32.xlu0 %v1225, 64
  %v1391 = vpop.permute.xlu0 %1390
  %1392 = vrot.lane.b32.xlu0 %v1226, 64
  %v1393 = vpop.permute.xlu0 %1392
  %1394 = vrot.lane.b32.xlu0 %v1227, 64
  %v1395 = vpop.permute.xlu0 %1394
  %1396 = vrot.lane.b32.xlu0 %v1228, 64
  %v1397 = vpop.permute.xlu0 %1396
  %1398 = vrot.lane.b32.xlu0 %v1229, 64
  %v1399 = vpop.permute.xlu0 %1398
  %1400 = vrot.lane.b32.xlu0 %v1230, 64
  %v1401 = vpop.permute.xlu0 %1400
  %1402 = vrot.lane.b32.xlu0 %v1231, 64
  %v1403 = vpop.permute.xlu0 %1402
  %1404 = vrot.lane.b32.xlu0 %v1232, 64
  %v1405 = vpop.permute.xlu0 %1404
  %1406 = vrot.lane.b32.xlu0 %v1233, 64
  %v1407 = vpop.permute.xlu0 %1406
  %1408 = vrot.lane.b32.xlu0 %v1234, 64
  %v1409 = vpop.permute.xlu0 %1408
  %1410 = vrot.lane.b32.xlu0 %v1235, 64
  %v1411 = vpop.permute.xlu0 %1410
  %1412 = vrot.lane.b32.xlu0 %v1236, 64
  %v1413 = vpop.permute.xlu0 %1412
  %1414 = vrot.lane.b32.xlu0 %v1237, 64
  %v1415 = vpop.permute.xlu0 %1414
  %1416 = vrot.lane.b32.xlu0 %v1238, 64
  %v1417 = vpop.permute.xlu0 %1416
  %1418 = vrot.lane.b32.xlu0 %v1239, 64
  %v1419 = vpop.permute.xlu0 %1418
  %1420 = vrot.lane.b32.xlu0 %v1240, 64
  %v1421 = vpop.permute.xlu0 %1420
  %1422 = vrot.lane.b32.xlu0 %v1241, 64
  %v1423 = vpop.permute.xlu0 %1422
  %1424 = vrot.lane.b32.xlu0 %v1242, 64
  %v1425 = vpop.permute.xlu0 %1424
  %1426 = vrot.lane.b32.xlu0 %v1243, 64
  %v1427 = vpop.permute.xlu0 %1426
  %1428 = vrot.lane.b32.xlu0 %v1244, 64
  %v1429 = vpop.permute.xlu0 %1428
  %1430 = vrot.lane.b32.xlu0 %v1245, 64
  %v1431 = vpop.permute.xlu0 %1430
  %1432 = vrot.lane.b32.xlu0 %v1246, 64
  %v1433 = vpop.permute.xlu0 %1432
  %1434 = vrot.lane.b32.xlu0 %v1247, 64
  %v1435 = vpop.permute.xlu0 %1434
  %1436 = vrot.lane.b32.xlu0 %v1248, 64
  %v1437 = vpop.permute.xlu0 %1436
  %1438 = vrot.lane.b32.xlu0 %v1249, 64
  %v1439 = vpop.permute.xlu0 %1438
  %1440 = vrot.lane.b32.xlu0 %v1250, 64
  %v1441 = vpop.permute.xlu0 %1440
  %1442 = vrot.lane.b32.xlu0 %v1251, 64
  %v1443 = vpop.permute.xlu0 %1442
  %1508 = vst.msk [vmem:[#allocation2 + $0x10] sm:$0xff] %vm482, %v1317
  %1509 = vst.msk [vmem:[#allocation2 + $0x38] sm:$0xff] %vm482, %v1319
  %1510 = vst.msk [vmem:[#allocation2 + $0x60] sm:$0xff] %vm482, %v1321
  %1511 = vst.msk [vmem:[#allocation2 + $0x88] sm:$0xff] %vm482, %v1323
  %1512 = vst.msk [vmem:[#allocation2 + $0xb0] sm:$0xff] %vm482, %v1325
  %1513 = vst.msk [vmem:[#allocation2 + $0xd8] sm:$0xff] %vm482, %v1327
  %1514 = vst.msk [vmem:[#allocation2 + $0x100] sm:$0xff] %vm482, %v1329
  %1515 = vst.msk [vmem:[#allocation2 + $0x128] sm:$0xff] %vm482, %v1331
  %1516 = vst.msk [vmem:[#allocation2 + $0x150] sm:$0xff] %vm482, %v1333
  %1517 = vst.msk [vmem:[#allocation2 + $0x178] sm:$0xff] %vm482, %v1335
  %1518 = vst.msk [vmem:[#allocation2 + $0x1a0] sm:$0xff] %vm482, %v1337
  %1519 = vst.msk [vmem:[#allocation2 + $0x1c8] sm:$0xff] %vm482, %v1339
  %1520 = vst.msk [vmem:[#allocation2 + $0x1f0] sm:$0xff] %vm482, %v1341
  %1521 = vst.msk [vmem:[#allocation2 + $0x218] sm:$0xff] %vm482, %v1343
  %1522 = vst.msk [vmem:[#allocation2 + $0x240] sm:$0xff] %vm482, %v1345
  %1523 = vst.msk [vmem:[#allocation2 + $0x268] sm:$0xff] %vm482, %v1347
  %1524 = vst.msk [vmem:[#allocation2 + $0x290] sm:$0xff] %vm482, %v1349
  %1525 = vst.msk [vmem:[#allocation2 + $0x2b8] sm:$0xff] %vm482, %v1351
  %1526 = vst.msk [vmem:[#allocation2 + $0x2e0] sm:$0xff] %vm482, %v1353
  %1527 = vst.msk [vmem:[#allocation2 + $0x308] sm:$0xff] %vm482, %v1355
  %1528 = vst.msk [vmem:[#allocation2 + $0x330] sm:$0xff] %vm482, %v1357
  %1529 = vst.msk [vmem:[#allocation2 + $0x358] sm:$0xff] %vm482, %v1359
  %1530 = vst.msk [vmem:[#allocation2 + $0x380] sm:$0xff] %vm482, %v1361
  %1531 = vst.msk [vmem:[#allocation2 + $0x3a8] sm:$0xff] %vm482, %v1363
  %1532 = vst.msk [vmem:[#allocation2 + $0x3d0] sm:$0xff] %vm482, %v1365
  %1533 = vst.msk [vmem:[#allocation2 + $0x3f8] sm:$0xff] %vm482, %v1367
  %1534 = vst.msk [vmem:[#allocation2 + $0x420] sm:$0xff] %vm482, %v1369
  %1535 = vst.msk [vmem:[#allocation2 + $0x448] sm:$0xff] %vm482, %v1371
  %1536 = vst.msk [vmem:[#allocation2 + $0x470] sm:$0xff] %vm482, %v1373
  %1537 = vst.msk [vmem:[#allocation2 + $0x498] sm:$0xff] %vm482, %v1375
  %1538 = vst.msk [vmem:[#allocation2 + $0x4c0] sm:$0xff] %vm482, %v1377
  %1539 = vst.msk [vmem:[#allocation2 + $0x4e8] sm:$0xff] %vm482, %v1379
  %1540 = vst.msk [vmem:[#allocation2 + $0x510] sm:$0xff] %vm482, %v1381
  %1541 = vst.msk [vmem:[#allocation2 + $0x538] sm:$0xff] %vm482, %v1383
  %1542 = vst.msk [vmem:[#allocation2 + $0x560] sm:$0xff] %vm482, %v1385
  %1543 = vst.msk [vmem:[#allocation2 + $0x588] sm:$0xff] %vm482, %v1387
  %1544 = vst.msk [vmem:[#allocation2 + $0x5b0] sm:$0xff] %vm482, %v1389
  %1545 = vst.msk [vmem:[#allocation2 + $0x5d8] sm:$0xff] %vm482, %v1391
  %1546 = vst.msk [vmem:[#allocation2 + $0x600] sm:$0xff] %vm482, %v1393
  %1547 = vst.msk [vmem:[#allocation2 + $0x628] sm:$0xff] %vm482, %v1395
  %1548 = vst.msk [vmem:[#allocation2 + $0x650] sm:$0xff] %vm482, %v1397
  %1549 = vst.msk [vmem:[#allocation2 + $0x678] sm:$0xff] %vm482, %v1399
  %1550 = vst.msk [vmem:[#allocation2 + $0x6a0] sm:$0xff] %vm482, %v1401
  %1551 = vst.msk [vmem:[#allocation2 + $0x6c8] sm:$0xff] %vm482, %v1403
  %1552 = vst.msk [vmem:[#allocation2 + $0x6f0] sm:$0xff] %vm482, %v1405
  %1553 = vst.msk [vmem:[#allocation2 + $0x718] sm:$0xff] %vm482, %v1407
  %1554 = vst.msk [vmem:[#allocation2 + $0x740] sm:$0xff] %vm482, %v1409
  %1555 = vst.msk [vmem:[#allocation2 + $0x768] sm:$0xff] %vm482, %v1411
  %1556 = vst.msk [vmem:[#allocation2 + $0x790] sm:$0xff] %vm482, %v1413
  %1557 = vst.msk [vmem:[#allocation2 + $0x7b8] sm:$0xff] %vm482, %v1415
  %1558 = vst.msk [vmem:[#allocation2 + $0x7e0] sm:$0xff] %vm482, %v1417
  %1559 = vst.msk [vmem:[#allocation2 + $0x808] sm:$0xff] %vm482, %v1419
  %1560 = vst.msk [vmem:[#allocation2 + $0x830] sm:$0xff] %vm482, %v1421
  %1561 = vst.msk [vmem:[#allocation2 + $0x858] sm:$0xff] %vm482, %v1423
  %1562 = vst.msk [vmem:[#allocation2 + $0x880] sm:$0xff] %vm482, %v1425
  %1563 = vst.msk [vmem:[#allocation2 + $0x8a8] sm:$0xff] %vm482, %v1427
  %1564 = vst.msk [vmem:[#allocation2 + $0x8d0] sm:$0xff] %vm482, %v1429
  %1565 = vst.msk [vmem:[#allocation2 + $0x8f8] sm:$0xff] %vm482, %v1431
  %1566 = vst.msk [vmem:[#allocation2 + $0x920] sm:$0xff] %vm482, %v1433
  %1567 = vst.msk [vmem:[#allocation2 + $0x948] sm:$0xff] %vm482, %v1435
  %1568 = vst.msk [vmem:[#allocation2 + $0x970] sm:$0xff] %vm482, %v1437
  %1569 = vst.msk [vmem:[#allocation2 + $0x998] sm:$0xff] %vm482, %v1439
  %1570 = vst.msk [vmem:[#allocation2 + $0x9c0] sm:$0xff] %vm482, %v1441
  %1571 = vst.msk [vmem:[#allocation2 + $0x9e8] sm:$0xff] %vm482, %v1443
  %s1572 = scalar_lea.vmem %s0, 48
  %v1573 = vld [vmem:[%s1572] sm:$0xff]
  %v1574 = vld [vmem:[%s1572 + $0x8] sm:$0xff]
  %v1575 = vld [vmem:[%s1572 + $0x18] sm:$0xff]
  %v1576 = vld [vmem:[%s1572 + $0x20] sm:$0xff]
  %v1577 = vld [vmem:[%s1572 + $0x30] sm:$0xff]
  %v1578 = vld [vmem:[%s1572 + $0x38] sm:$0xff]
  %v1579 = vld [vmem:[%s1572 + $0x48] sm:$0xff]
  %v1580 = vld [vmem:[%s1572 + $0x50] sm:$0xff]
  %v1581 = vld [vmem:[%s1572 + $0x60] sm:$0xff]
  %v1582 = vld [vmem:[%s1572 + $0x68] sm:$0xff]
  %v1583 = vld [vmem:[%s1572 + $0x78] sm:$0xff]
  %v1584 = vld [vmem:[%s1572 + $0x80] sm:$0xff]
  %v1585 = vld [vmem:[%s1572 + $0x90] sm:$0xff]
  %v1586 = vld [vmem:[%s1572 + $0x98] sm:$0xff]
  %v1587 = vld [vmem:[%s1572 + $0xa8] sm:$0xff]
  %v1588 = vld [vmem:[%s1572 + $0xb0] sm:$0xff]
  %v1589 = vld [vmem:[%s1572 + $0xc0] sm:$0xff]
  %v1590 = vld [vmem:[%s1572 + $0xc8] sm:$0xff]
  %v1591 = vld [vmem:[%s1572 + $0xd8] sm:$0xff]
  %v1592 = vld [vmem:[%s1572 + $0xe0] sm:$0xff]
  %v1593 = vld [vmem:[%s1572 + $0xf0] sm:$0xff]
  %v1594 = vld [vmem:[%s1572 + $0xf8] sm:$0xff]
  %v1595 = vld [vmem:[%s1572 + $0x108] sm:$0xff]
  %v1596 = vld [vmem:[%s1572 + $0x110] sm:$0xff]
  %v1597 = vld [vmem:[%s1572 + $0x120] sm:$0xff]
  %v1598 = vld [vmem:[%s1572 + $0x128] sm:$0xff]
  %v1599 = vld [vmem:[%s1572 + $0x138] sm:$0xff]
  %v1600 = vld [vmem:[%s1572 + $0x140] sm:$0xff]
  %v1601 = vld [vmem:[%s1572 + $0x150] sm:$0xff]
  %v1602 = vld [vmem:[%s1572 + $0x158] sm:$0xff]
  %v1603 = vld [vmem:[%s1572 + $0x168] sm:$0xff]
  %v1604 = vld [vmem:[%s1572 + $0x170] sm:$0xff]
  %v1605 = vld [vmem:[%s1572 + $0x1b0] sm:$0xff]
  %v1606 = vld [vmem:[%s1572 + $0x1b8] sm:$0xff]
  %v1607 = vld [vmem:[%s1572 + $0x1c8] sm:$0xff]
  %v1608 = vld [vmem:[%s1572 + $0x1d0] sm:$0xff]
  %v1609 = vld [vmem:[%s1572 + $0x1e0] sm:$0xff]
  %v1610 = vld [vmem:[%s1572 + $0x1e8] sm:$0xff]
  %v1611 = vld [vmem:[%s1572 + $0x1f8] sm:$0xff]
  %v1612 = vld [vmem:[%s1572 + $0x200] sm:$0xff]
  %v1613 = vld [vmem:[%s1572 + $0x210] sm:$0xff]
  %v1614 = vld [vmem:[%s1572 + $0x218] sm:$0xff]
  %v1615 = vld [vmem:[%s1572 + $0x228] sm:$0xff]
  %v1616 = vld [vmem:[%s1572 + $0x230] sm:$0xff]
  %v1617 = vld [vmem:[%s1572 + $0x240] sm:$0xff]
  %v1618 = vld [vmem:[%s1572 + $0x248] sm:$0xff]
  %v1619 = vld [vmem:[%s1572 + $0x258] sm:$0xff]
  %v1620 = vld [vmem:[%s1572 + $0x260] sm:$0xff]
  %v1621 = vld [vmem:[%s1572 + $0x270] sm:$0xff]
  %v1622 = vld [vmem:[%s1572 + $0x278] sm:$0xff]
  %v1623 = vld [vmem:[%s1572 + $0x288] sm:$0xff]
  %v1624 = vld [vmem:[%s1572 + $0x290] sm:$0xff]
  %v1625 = vld [vmem:[%s1572 + $0x2a0] sm:$0xff]
  %v1626 = vld [vmem:[%s1572 + $0x2a8] sm:$0xff]
  %v1627 = vld [vmem:[%s1572 + $0x2b8] sm:$0xff]
  %v1628 = vld [vmem:[%s1572 + $0x2c0] sm:$0xff]
  %v1629 = vld [vmem:[%s1572 + $0x2d0] sm:$0xff]
  %v1630 = vld [vmem:[%s1572 + $0x2d8] sm:$0xff]
  %v1631 = vld [vmem:[%s1572 + $0x2e8] sm:$0xff]
  %v1632 = vld [vmem:[%s1572 + $0x2f0] sm:$0xff]
  %v1633 = vld [vmem:[%s1572 + $0x300] sm:$0xff]
  %v1634 = vld [vmem:[%s1572 + $0x308] sm:$0xff]
  %v1635 = vld [vmem:[%s1572 + $0x318] sm:$0xff]
  %v1636 = vld [vmem:[%s1572 + $0x320] sm:$0xff]
  %1637 = vst.msk [vmem:[#allocation2 + $0x18] sm:$0xff] %vm97, %v1573
  %1638 = vst.msk [vmem:[#allocation2 + $0x40] sm:$0xff] %vm97, %v1574
  %1639 = vst.msk [vmem:[#allocation2 + $0x68] sm:$0xff] %vm97, %v1575
  %1640 = vst.msk [vmem:[#allocation2 + $0x90] sm:$0xff] %vm97, %v1576
  %1641 = vst.msk [vmem:[#allocation2 + $0xb8] sm:$0xff] %vm97, %v1577
  %1642 = vst.msk [vmem:[#allocation2 + $0xe0] sm:$0xff] %vm97, %v1578
  %1643 = vst.msk [vmem:[#allocation2 + $0x108] sm:$0xff] %vm97, %v1579
  %1644 = vst.msk [vmem:[#allocation2 + $0x130] sm:$0xff] %vm97, %v1580
  %1645 = vst.msk [vmem:[#allocation2 + $0x158] sm:$0xff] %vm97, %v1581
  %1646 = vst.msk [vmem:[#allocation2 + $0x180] sm:$0xff] %vm97, %v1582
  %1647 = vst.msk [vmem:[#allocation2 + $0x1a8] sm:$0xff] %vm97, %v1583
  %1648 = vst.msk [vmem:[#allocation2 + $0x1d0] sm:$0xff] %vm97, %v1584
  %1649 = vst.msk [vmem:[#allocation2 + $0x1f8] sm:$0xff] %vm97, %v1585
  %1650 = vst.msk [vmem:[#allocation2 + $0x220] sm:$0xff] %vm97, %v1586
  %1651 = vst.msk [vmem:[#allocation2 + $0x248] sm:$0xff] %vm97, %v1587
  %1652 = vst.msk [vmem:[#allocation2 + $0x270] sm:$0xff] %vm97, %v1588
  %1653 = vst.msk [vmem:[#allocation2 + $0x298] sm:$0xff] %vm97, %v1589
  %1654 = vst.msk [vmem:[#allocation2 + $0x2c0] sm:$0xff] %vm97, %v1590
  %1655 = vst.msk [vmem:[#allocation2 + $0x2e8] sm:$0xff] %vm97, %v1591
  %1656 = vst.msk [vmem:[#allocation2 + $0x310] sm:$0xff] %vm97, %v1592
  %1657 = vst.msk [vmem:[#allocation2 + $0x338] sm:$0xff] %vm97, %v1593
  %1658 = vst.msk [vmem:[#allocation2 + $0x360] sm:$0xff] %vm97, %v1594
  %1659 = vst.msk [vmem:[#allocation2 + $0x388] sm:$0xff] %vm97, %v1595
  %1660 = vst.msk [vmem:[#allocation2 + $0x3b0] sm:$0xff] %vm97, %v1596
  %1661 = vst.msk [vmem:[#allocation2 + $0x3d8] sm:$0xff] %vm97, %v1597
  %1662 = vst.msk [vmem:[#allocation2 + $0x400] sm:$0xff] %vm97, %v1598
  %1663 = vst.msk [vmem:[#allocation2 + $0x428] sm:$0xff] %vm97, %v1599
  %1664 = vst.msk [vmem:[#allocation2 + $0x450] sm:$0xff] %vm97, %v1600
  %1665 = vst.msk [vmem:[#allocation2 + $0x478] sm:$0xff] %vm97, %v1601
  %1666 = vst.msk [vmem:[#allocation2 + $0x4a0] sm:$0xff] %vm97, %v1602
  %1667 = vst.msk [vmem:[#allocation2 + $0x4c8] sm:$0xff] %vm97, %v1603
  %1668 = vst.msk [vmem:[#allocation2 + $0x4f0] sm:$0xff] %vm97, %v1604
  %1669 = vst.msk [vmem:[#allocation2 + $0x518] sm:$0xff] %vm97, %v1605
  %1670 = vst.msk [vmem:[#allocation2 + $0x540] sm:$0xff] %vm97, %v1606
  %1671 = vst.msk [vmem:[#allocation2 + $0x568] sm:$0xff] %vm97, %v1607
  %1672 = vst.msk [vmem:[#allocation2 + $0x590] sm:$0xff] %vm97, %v1608
  %1673 = vst.msk [vmem:[#allocation2 + $0x5b8] sm:$0xff] %vm97, %v1609
  %1674 = vst.msk [vmem:[#allocation2 + $0x5e0] sm:$0xff] %vm97, %v1610
  %1675 = vst.msk [vmem:[#allocation2 + $0x608] sm:$0xff] %vm97, %v1611
  %1676 = vst.msk [vmem:[#allocation2 + $0x630] sm:$0xff] %vm97, %v1612
  %1677 = vst.msk [vmem:[#allocation2 + $0x658] sm:$0xff] %vm97, %v1613
  %1678 = vst.msk [vmem:[#allocation2 + $0x680] sm:$0xff] %vm97, %v1614
  %1679 = vst.msk [vmem:[#allocation2 + $0x6a8] sm:$0xff] %vm97, %v1615
  %1680 = vst.msk [vmem:[#allocation2 + $0x6d0] sm:$0xff] %vm97, %v1616
  %1681 = vst.msk [vmem:[#allocation2 + $0x6f8] sm:$0xff] %vm97, %v1617
  %1682 = vst.msk [vmem:[#allocation2 + $0x720] sm:$0xff] %vm97, %v1618
  %1683 = vst.msk [vmem:[#allocation2 + $0x748] sm:$0xff] %vm97, %v1619
  %1684 = vst.msk [vmem:[#allocation2 + $0x770] sm:$0xff] %vm97, %v1620
  %1685 = vst.msk [vmem:[#allocation2 + $0x798] sm:$0xff] %vm97, %v1621
  %1686 = vst.msk [vmem:[#allocation2 + $0x7c0] sm:$0xff] %vm97, %v1622
  %1687 = vst.msk [vmem:[#allocation2 + $0x7e8] sm:$0xff] %vm97, %v1623
  %1688 = vst.msk [vmem:[#allocation2 + $0x810] sm:$0xff] %vm97, %v1624
  %1689 = vst.msk [vmem:[#allocation2 + $0x838] sm:$0xff] %vm97, %v1625
  %1690 = vst.msk [vmem:[#allocation2 + $0x860] sm:$0xff] %vm97, %v1626
  %1691 = vst.msk [vmem:[#allocation2 + $0x888] sm:$0xff] %vm97, %v1627
  %1692 = vst.msk [vmem:[#allocation2 + $0x8b0] sm:$0xff] %vm97, %v1628
  %1693 = vst.msk [vmem:[#allocation2 + $0x8d8] sm:$0xff] %vm97, %v1629
  %1694 = vst.msk [vmem:[#allocation2 + $0x900] sm:$0xff] %vm97, %v1630
  %1695 = vst.msk [vmem:[#allocation2 + $0x928] sm:$0xff] %vm97, %v1631
  %1696 = vst.msk [vmem:[#allocation2 + $0x950] sm:$0xff] %vm97, %v1632
  %1697 = vst.msk [vmem:[#allocation2 + $0x978] sm:$0xff] %vm97, %v1633
  %1698 = vst.msk [vmem:[#allocation2 + $0x9a0] sm:$0xff] %vm97, %v1634
  %1699 = vst.msk [vmem:[#allocation2 + $0x9c8] sm:$0xff] %vm97, %v1635
  %1700 = vst.msk [vmem:[#allocation2 + $0x9f0] sm:$0xff] %vm97, %v1636
  %v1701 = vld [vmem:[%s1572 + $0x1] sm:$0xff]
  %v1702 = vld [vmem:[%s1572 + $0x9] sm:$0xff]
  %v1703 = vld [vmem:[%s1572 + $0x19] sm:$0xff]
  %v1704 = vld [vmem:[%s1572 + $0x21] sm:$0xff]
  %v1705 = vld [vmem:[%s1572 + $0x31] sm:$0xff]
  %v1706 = vld [vmem:[%s1572 + $0x39] sm:$0xff]
  %v1707 = vld [vmem:[%s1572 + $0x49] sm:$0xff]
  %v1708 = vld [vmem:[%s1572 + $0x51] sm:$0xff]
  %v1709 = vld [vmem:[%s1572 + $0x61] sm:$0xff]
  %v1710 = vld [vmem:[%s1572 + $0x69] sm:$0xff]
  %v1711 = vld [vmem:[%s1572 + $0x79] sm:$0xff]
  %v1712 = vld [vmem:[%s1572 + $0x81] sm:$0xff]
  %v1713 = vld [vmem:[%s1572 + $0x91] sm:$0xff]
  %v1714 = vld [vmem:[%s1572 + $0x99] sm:$0xff]
  %v1715 = vld [vmem:[%s1572 + $0xa9] sm:$0xff]
  %v1716 = vld [vmem:[%s1572 + $0xb1] sm:$0xff]
  %v1717 = vld [vmem:[%s1572 + $0xc1] sm:$0xff]
  %v1718 = vld [vmem:[%s1572 + $0xc9] sm:$0xff]
  %v1719 = vld [vmem:[%s1572 + $0xd9] sm:$0xff]
  %v1720 = vld [vmem:[%s1572 + $0xe1] sm:$0xff]
  %v1721 = vld [vmem:[%s1572 + $0xf1] sm:$0xff]
  %v1722 = vld [vmem:[%s1572 + $0xf9] sm:$0xff]
  %v1723 = vld [vmem:[%s1572 + $0x109] sm:$0xff]
  %v1724 = vld [vmem:[%s1572 + $0x111] sm:$0xff]
  %v1725 = vld [vmem:[%s1572 + $0x121] sm:$0xff]
  %v1726 = vld [vmem:[%s1572 + $0x129] sm:$0xff]
  %v1727 = vld [vmem:[%s1572 + $0x139] sm:$0xff]
  %v1728 = vld [vmem:[%s1572 + $0x141] sm:$0xff]
  %v1729 = vld [vmem:[%s1572 + $0x151] sm:$0xff]
  %v1730 = vld [vmem:[%s1572 + $0x159] sm:$0xff]
  %v1731 = vld [vmem:[%s1572 + $0x169] sm:$0xff]
  %v1732 = vld [vmem:[%s1572 + $0x171] sm:$0xff]
  %v1733 = vld [vmem:[%s1572 + $0x1b1] sm:$0xff]
  %v1734 = vld [vmem:[%s1572 + $0x1b9] sm:$0xff]
  %v1735 = vld [vmem:[%s1572 + $0x1c9] sm:$0xff]
  %v1736 = vld [vmem:[%s1572 + $0x1d1] sm:$0xff]
  %v1737 = vld [vmem:[%s1572 + $0x1e1] sm:$0xff]
  %v1738 = vld [vmem:[%s1572 + $0x1e9] sm:$0xff]
  %v1739 = vld [vmem:[%s1572 + $0x1f9] sm:$0xff]
  %v1740 = vld [vmem:[%s1572 + $0x201] sm:$0xff]
  %v1741 = vld [vmem:[%s1572 + $0x211] sm:$0xff]
  %v1742 = vld [vmem:[%s1572 + $0x219] sm:$0xff]
  %v1743 = vld [vmem:[%s1572 + $0x229] sm:$0xff]
  %v1744 = vld [vmem:[%s1572 + $0x231] sm:$0xff]
  %v1745 = vld [vmem:[%s1572 + $0x241] sm:$0xff]
  %v1746 = vld [vmem:[%s1572 + $0x249] sm:$0xff]
  %v1747 = vld [vmem:[%s1572 + $0x259] sm:$0xff]
  %v1748 = vld [vmem:[%s1572 + $0x261] sm:$0xff]
  %v1749 = vld [vmem:[%s1572 + $0x271] sm:$0xff]
  %v1750 = vld [vmem:[%s1572 + $0x279] sm:$0xff]
  %v1751 = vld [vmem:[%s1572 + $0x289] sm:$0xff]
  %v1752 = vld [vmem:[%s1572 + $0x291] sm:$0xff]
  %v1753 = vld [vmem:[%s1572 + $0x2a1] sm:$0xff]
  %v1754 = vld [vmem:[%s1572 + $0x2a9] sm:$0xff]
  %v1755 = vld [vmem:[%s1572 + $0x2b9] sm:$0xff]
  %v1756 = vld [vmem:[%s1572 + $0x2c1] sm:$0xff]
  %v1757 = vld [vmem:[%s1572 + $0x2d1] sm:$0xff]
  %v1758 = vld [vmem:[%s1572 + $0x2d9] sm:$0xff]
  %v1759 = vld [vmem:[%s1572 + $0x2e9] sm:$0xff]
  %v1760 = vld [vmem:[%s1572 + $0x2f1] sm:$0xff]
  %v1761 = vld [vmem:[%s1572 + $0x301] sm:$0xff]
  %v1762 = vld [vmem:[%s1572 + $0x309] sm:$0xff]
  %v1763 = vld [vmem:[%s1572 + $0x319] sm:$0xff]
  %v1764 = vld [vmem:[%s1572 + $0x321] sm:$0xff]
  %1829 = vrot.lane.b32.xlu0 %v1701, 64
  %v1830 = vpop.permute.xlu0 %1829
  %1831 = vrot.lane.b32.xlu0 %v1702, 64
  %v1832 = vpop.permute.xlu0 %1831
  %1833 = vrot.lane.b32.xlu0 %v1703, 64
  %v1834 = vpop.permute.xlu0 %1833
  %1835 = vrot.lane.b32.xlu0 %v1704, 64
  %v1836 = vpop.permute.xlu0 %1835
  %1837 = vrot.lane.b32.xlu0 %v1705, 64
  %v1838 = vpop.permute.xlu0 %1837
  %1839 = vrot.lane.b32.xlu0 %v1706, 64
  %v1840 = vpop.permute.xlu0 %1839
  %1841 = vrot.lane.b32.xlu0 %v1707, 64
  %v1842 = vpop.permute.xlu0 %1841
  %1843 = vrot.lane.b32.xlu0 %v1708, 64
  %v1844 = vpop.permute.xlu0 %1843
  %1845 = vrot.lane.b32.xlu0 %v1709, 64
  %v1846 = vpop.permute.xlu0 %1845
  %1847 = vrot.lane.b32.xlu0 %v1710, 64
  %v1848 = vpop.permute.xlu0 %1847
  %1849 = vrot.lane.b32.xlu0 %v1711, 64
  %v1850 = vpop.permute.xlu0 %1849
  %1851 = vrot.lane.b32.xlu0 %v1712, 64
  %v1852 = vpop.permute.xlu0 %1851
  %1853 = vrot.lane.b32.xlu0 %v1713, 64
  %v1854 = vpop.permute.xlu0 %1853
  %1855 = vrot.lane.b32.xlu0 %v1714, 64
  %v1856 = vpop.permute.xlu0 %1855
  %1857 = vrot.lane.b32.xlu0 %v1715, 64
  %v1858 = vpop.permute.xlu0 %1857
  %1859 = vrot.lane.b32.xlu0 %v1716, 64
  %v1860 = vpop.permute.xlu0 %1859
  %1861 = vrot.lane.b32.xlu0 %v1717, 64
  %v1862 = vpop.permute.xlu0 %1861
  %1863 = vrot.lane.b32.xlu0 %v1718, 64
  %v1864 = vpop.permute.xlu0 %1863
  %1865 = vrot.lane.b32.xlu0 %v1719, 64
  %v1866 = vpop.permute.xlu0 %1865
  %1867 = vrot.lane.b32.xlu0 %v1720, 64
  %v1868 = vpop.permute.xlu0 %1867
  %1869 = vrot.lane.b32.xlu0 %v1721, 64
  %v1870 = vpop.permute.xlu0 %1869
  %1871 = vrot.lane.b32.xlu0 %v1722, 64
  %v1872 = vpop.permute.xlu0 %1871
  %1873 = vrot.lane.b32.xlu0 %v1723, 64
  %v1874 = vpop.permute.xlu0 %1873
  %1875 = vrot.lane.b32.xlu0 %v1724, 64
  %v1876 = vpop.permute.xlu0 %1875
  %1877 = vrot.lane.b32.xlu0 %v1725, 64
  %v1878 = vpop.permute.xlu0 %1877
  %1879 = vrot.lane.b32.xlu0 %v1726, 64
  %v1880 = vpop.permute.xlu0 %1879
  %1881 = vrot.lane.b32.xlu0 %v1727, 64
  %v1882 = vpop.permute.xlu0 %1881
  %1883 = vrot.lane.b32.xlu0 %v1728, 64
  %v1884 = vpop.permute.xlu0 %1883
  %1885 = vrot.lane.b32.xlu0 %v1729, 64
  %v1886 = vpop.permute.xlu0 %1885
  %1887 = vrot.lane.b32.xlu0 %v1730, 64
  %v1888 = vpop.permute.xlu0 %1887
  %1889 = vrot.lane.b32.xlu0 %v1731, 64
  %v1890 = vpop.permute.xlu0 %1889
  %1891 = vrot.lane.b32.xlu0 %v1732, 64
  %v1892 = vpop.permute.xlu0 %1891
  %1893 = vrot.lane.b32.xlu0 %v1733, 64
  %v1894 = vpop.permute.xlu0 %1893
  %1895 = vrot.lane.b32.xlu0 %v1734, 64
  %v1896 = vpop.permute.xlu0 %1895
  %1897 = vrot.lane.b32.xlu0 %v1735, 64
  %v1898 = vpop.permute.xlu0 %1897
  %1899 = vrot.lane.b32.xlu0 %v1736, 64
  %v1900 = vpop.permute.xlu0 %1899
  %1901 = vrot.lane.b32.xlu0 %v1737, 64
  %v1902 = vpop.permute.xlu0 %1901
  %1903 = vrot.lane.b32.xlu0 %v1738, 64
  %v1904 = vpop.permute.xlu0 %1903
  %1905 = vrot.lane.b32.xlu0 %v1739, 64
  %v1906 = vpop.permute.xlu0 %1905
  %1907 = vrot.lane.b32.xlu0 %v1740, 64
  %v1908 = vpop.permute.xlu0 %1907
  %1909 = vrot.lane.b32.xlu0 %v1741, 64
  %v1910 = vpop.permute.xlu0 %1909
  %1911 = vrot.lane.b32.xlu0 %v1742, 64
  %v1912 = vpop.permute.xlu0 %1911
  %1913 = vrot.lane.b32.xlu0 %v1743, 64
  %v1914 = vpop.permute.xlu0 %1913
  %1915 = vrot.lane.b32.xlu0 %v1744, 64
  %v1916 = vpop.permute.xlu0 %1915
  %1917 = vrot.lane.b32.xlu0 %v1745, 64
  %v1918 = vpop.permute.xlu0 %1917
  %1919 = vrot.lane.b32.xlu0 %v1746, 64
  %v1920 = vpop.permute.xlu0 %1919
  %1921 = vrot.lane.b32.xlu0 %v1747, 64
  %v1922 = vpop.permute.xlu0 %1921
  %1923 = vrot.lane.b32.xlu0 %v1748, 64
  %v1924 = vpop.permute.xlu0 %1923
  %1925 = vrot.lane.b32.xlu0 %v1749, 64
  %v1926 = vpop.permute.xlu0 %1925
  %1927 = vrot.lane.b32.xlu0 %v1750, 64
  %v1928 = vpop.permute.xlu0 %1927
  %1929 = vrot.lane.b32.xlu0 %v1751, 64
  %v1930 = vpop.permute.xlu0 %1929
  %1931 = vrot.lane.b32.xlu0 %v1752, 64
  %v1932 = vpop.permute.xlu0 %1931
  %1933 = vrot.lane.b32.xlu0 %v1753, 64
  %v1934 = vpop.permute.xlu0 %1933
  %1935 = vrot.lane.b32.xlu0 %v1754, 64
  %v1936 = vpop.permute.xlu0 %1935
  %1937 = vrot.lane.b32.xlu0 %v1755, 64
  %v1938 = vpop.permute.xlu0 %1937
  %1939 = vrot.lane.b32.xlu0 %v1756, 64
  %v1940 = vpop.permute.xlu0 %1939
  %1941 = vrot.lane.b32.xlu0 %v1757, 64
  %v1942 = vpop.permute.xlu0 %1941
  %1943 = vrot.lane.b32.xlu0 %v1758, 64
  %v1944 = vpop.permute.xlu0 %1943
  %1945 = vrot.lane.b32.xlu0 %v1759, 64
  %v1946 = vpop.permute.xlu0 %1945
  %1947 = vrot.lane.b32.xlu0 %v1760, 64
  %v1948 = vpop.permute.xlu0 %1947
  %1949 = vrot.lane.b32.xlu0 %v1761, 64
  %v1950 = vpop.permute.xlu0 %1949
  %1951 = vrot.lane.b32.xlu0 %v1762, 64
  %v1952 = vpop.permute.xlu0 %1951
  %1953 = vrot.lane.b32.xlu0 %v1763, 64
  %v1954 = vpop.permute.xlu0 %1953
  %1955 = vrot.lane.b32.xlu0 %v1764, 64
  %v1956 = vpop.permute.xlu0 %1955
  %2021 = vst.msk [vmem:[#allocation2 + $0x18] sm:$0xff] %vm482, %v1830
  %2022 = vst.msk [vmem:[#allocation2 + $0x40] sm:$0xff] %vm482, %v1832
  %2023 = vst.msk [vmem:[#allocation2 + $0x68] sm:$0xff] %vm482, %v1834
  %2024 = vst.msk [vmem:[#allocation2 + $0x90] sm:$0xff] %vm482, %v1836
  %2025 = vst.msk [vmem:[#allocation2 + $0xb8] sm:$0xff] %vm482, %v1838
  %2026 = vst.msk [vmem:[#allocation2 + $0xe0] sm:$0xff] %vm482, %v1840
  %2027 = vst.msk [vmem:[#allocation2 + $0x108] sm:$0xff] %vm482, %v1842
  %2028 = vst.msk [vmem:[#allocation2 + $0x130] sm:$0xff] %vm482, %v1844
  %2029 = vst.msk [vmem:[#allocation2 + $0x158] sm:$0xff] %vm482, %v1846
  %2030 = vst.msk [vmem:[#allocation2 + $0x180] sm:$0xff] %vm482, %v1848
  %2031 = vst.msk [vmem:[#allocation2 + $0x1a8] sm:$0xff] %vm482, %v1850
  %2032 = vst.msk [vmem:[#allocation2 + $0x1d0] sm:$0xff] %vm482, %v1852
  %2033 = vst.msk [vmem:[#allocation2 + $0x1f8] sm:$0xff] %vm482, %v1854
  %2034 = vst.msk [vmem:[#allocation2 + $0x220] sm:$0xff] %vm482, %v1856
  %2035 = vst.msk [vmem:[#allocation2 + $0x248] sm:$0xff] %vm482, %v1858
  %2036 = vst.msk [vmem:[#allocation2 + $0x270] sm:$0xff] %vm482, %v1860
  %2037 = vst.msk [vmem:[#allocation2 + $0x298] sm:$0xff] %vm482, %v1862
  %2038 = vst.msk [vmem:[#allocation2 + $0x2c0] sm:$0xff] %vm482, %v1864
  %2039 = vst.msk [vmem:[#allocation2 + $0x2e8] sm:$0xff] %vm482, %v1866
  %2040 = vst.msk [vmem:[#allocation2 + $0x310] sm:$0xff] %vm482, %v1868
  %2041 = vst.msk [vmem:[#allocation2 + $0x338] sm:$0xff] %vm482, %v1870
  %2042 = vst.msk [vmem:[#allocation2 + $0x360] sm:$0xff] %vm482, %v1872
  %2043 = vst.msk [vmem:[#allocation2 + $0x388] sm:$0xff] %vm482, %v1874
  %2044 = vst.msk [vmem:[#allocation2 + $0x3b0] sm:$0xff] %vm482, %v1876
  %2045 = vst.msk [vmem:[#allocation2 + $0x3d8] sm:$0xff] %vm482, %v1878
  %2046 = vst.msk [vmem:[#allocation2 + $0x400] sm:$0xff] %vm482, %v1880
  %2047 = vst.msk [vmem:[#allocation2 + $0x428] sm:$0xff] %vm482, %v1882
  %2048 = vst.msk [vmem:[#allocation2 + $0x450] sm:$0xff] %vm482, %v1884
  %2049 = vst.msk [vmem:[#allocation2 + $0x478] sm:$0xff] %vm482, %v1886
  %2050 = vst.msk [vmem:[#allocation2 + $0x4a0] sm:$0xff] %vm482, %v1888
  %2051 = vst.msk [vmem:[#allocation2 + $0x4c8] sm:$0xff] %vm482, %v1890
  %2052 = vst.msk [vmem:[#allocation2 + $0x4f0] sm:$0xff] %vm482, %v1892
  %2053 = vst.msk [vmem:[#allocation2 + $0x518] sm:$0xff] %vm482, %v1894
  %2054 = vst.msk [vmem:[#allocation2 + $0x540] sm:$0xff] %vm482, %v1896
  %2055 = vst.msk [vmem:[#allocation2 + $0x568] sm:$0xff] %vm482, %v1898
  %2056 = vst.msk [vmem:[#allocation2 + $0x590] sm:$0xff] %vm482, %v1900
  %2057 = vst.msk [vmem:[#allocation2 + $0x5b8] sm:$0xff] %vm482, %v1902
  %2058 = vst.msk [vmem:[#allocation2 + $0x5e0] sm:$0xff] %vm482, %v1904
  %2059 = vst.msk [vmem:[#allocation2 + $0x608] sm:$0xff] %vm482, %v1906
  %2060 = vst.msk [vmem:[#allocation2 + $0x630] sm:$0xff] %vm482, %v1908
  %2061 = vst.msk [vmem:[#allocation2 + $0x658] sm:$0xff] %vm482, %v1910
  %2062 = vst.msk [vmem:[#allocation2 + $0x680] sm:$0xff] %vm482, %v1912
  %2063 = vst.msk [vmem:[#allocation2 + $0x6a8] sm:$0xff] %vm482, %v1914
  %2064 = vst.msk [vmem:[#allocation2 + $0x6d0] sm:$0xff] %vm482, %v1916
  %2065 = vst.msk [vmem:[#allocation2 + $0x6f8] sm:$0xff] %vm482, %v1918
  %2066 = vst.msk [vmem:[#allocation2 + $0x720] sm:$0xff] %vm482, %v1920
  %2067 = vst.msk [vmem:[#allocation2 + $0x748] sm:$0xff] %vm482, %v1922
  %2068 = vst.msk [vmem:[#allocation2 + $0x770] sm:$0xff] %vm482, %v1924
  %2069 = vst.msk [vmem:[#allocation2 + $0x798] sm:$0xff] %vm482, %v1926
  %2070 = vst.msk [vmem:[#allocation2 + $0x7c0] sm:$0xff] %vm482, %v1928
  %2071 = vst.msk [vmem:[#allocation2 + $0x7e8] sm:$0xff] %vm482, %v1930
  %2072 = vst.msk [vmem:[#allocation2 + $0x810] sm:$0xff] %vm482, %v1932
  %2073 = vst.msk [vmem:[#allocation2 + $0x838] sm:$0xff] %vm482, %v1934
  %2074 = vst.msk [vmem:[#allocation2 + $0x860] sm:$0xff] %vm482, %v1936
  %2075 = vst.msk [vmem:[#allocation2 + $0x888] sm:$0xff] %vm482, %v1938
  %2076 = vst.msk [vmem:[#allocation2 + $0x8b0] sm:$0xff] %vm482, %v1940
  %2077 = vst.msk [vmem:[#allocation2 + $0x8d8] sm:$0xff] %vm482, %v1942
  %2078 = vst.msk [vmem:[#allocation2 + $0x900] sm:$0xff] %vm482, %v1944
  %2079 = vst.msk [vmem:[#allocation2 + $0x928] sm:$0xff] %vm482, %v1946
  %2080 = vst.msk [vmem:[#allocation2 + $0x950] sm:$0xff] %vm482, %v1948
  %2081 = vst.msk [vmem:[#allocation2 + $0x978] sm:$0xff] %vm482, %v1950
  %2082 = vst.msk [vmem:[#allocation2 + $0x9a0] sm:$0xff] %vm482, %v1952
  %2083 = vst.msk [vmem:[#allocation2 + $0x9c8] sm:$0xff] %vm482, %v1954
  %2084 = vst.msk [vmem:[#allocation2 + $0x9f0] sm:$0xff] %vm482, %v1956
  %v2085 = vld [vmem:[%s1572 + $0x2] sm:$0xff]
  %v2086 = vld [vmem:[%s1572 + $0xa] sm:$0xff]
  %v2087 = vld [vmem:[%s1572 + $0x1a] sm:$0xff]
  %v2088 = vld [vmem:[%s1572 + $0x22] sm:$0xff]
  %v2089 = vld [vmem:[%s1572 + $0x32] sm:$0xff]
  %v2090 = vld [vmem:[%s1572 + $0x3a] sm:$0xff]
  %v2091 = vld [vmem:[%s1572 + $0x4a] sm:$0xff]
  %v2092 = vld [vmem:[%s1572 + $0x52] sm:$0xff]
  %v2093 = vld [vmem:[%s1572 + $0x62] sm:$0xff]
  %v2094 = vld [vmem:[%s1572 + $0x6a] sm:$0xff]
  %v2095 = vld [vmem:[%s1572 + $0x7a] sm:$0xff]
  %v2096 = vld [vmem:[%s1572 + $0x82] sm:$0xff]
  %v2097 = vld [vmem:[%s1572 + $0x92] sm:$0xff]
  %v2098 = vld [vmem:[%s1572 + $0x9a] sm:$0xff]
  %v2099 = vld [vmem:[%s1572 + $0xaa] sm:$0xff]
  %v2100 = vld [vmem:[%s1572 + $0xb2] sm:$0xff]
  %v2101 = vld [vmem:[%s1572 + $0xc2] sm:$0xff]
  %v2102 = vld [vmem:[%s1572 + $0xca] sm:$0xff]
  %v2103 = vld [vmem:[%s1572 + $0xda] sm:$0xff]
  %v2104 = vld [vmem:[%s1572 + $0xe2] sm:$0xff]
  %v2105 = vld [vmem:[%s1572 + $0xf2] sm:$0xff]
  %v2106 = vld [vmem:[%s1572 + $0xfa] sm:$0xff]
  %v2107 = vld [vmem:[%s1572 + $0x10a] sm:$0xff]
  %v2108 = vld [vmem:[%s1572 + $0x112] sm:$0xff]
  %v2109 = vld [vmem:[%s1572 + $0x122] sm:$0xff]
  %v2110 = vld [vmem:[%s1572 + $0x12a] sm:$0xff]
  %v2111 = vld [vmem:[%s1572 + $0x13a] sm:$0xff]
  %v2112 = vld [vmem:[%s1572 + $0x142] sm:$0xff]
  %v2113 = vld [vmem:[%s1572 + $0x152] sm:$0xff]
  %v2114 = vld [vmem:[%s1572 + $0x15a] sm:$0xff]
  %v2115 = vld [vmem:[%s1572 + $0x16a] sm:$0xff]
  %v2116 = vld [vmem:[%s1572 + $0x172] sm:$0xff]
  %v2117 = vld [vmem:[%s1572 + $0x1b2] sm:$0xff]
  %v2118 = vld [vmem:[%s1572 + $0x1ba] sm:$0xff]
  %v2119 = vld [vmem:[%s1572 + $0x1ca] sm:$0xff]
  %v2120 = vld [vmem:[%s1572 + $0x1d2] sm:$0xff]
  %v2121 = vld [vmem:[%s1572 + $0x1e2] sm:$0xff]
  %v2122 = vld [vmem:[%s1572 + $0x1ea] sm:$0xff]
  %v2123 = vld [vmem:[%s1572 + $0x1fa] sm:$0xff]
  %v2124 = vld [vmem:[%s1572 + $0x202] sm:$0xff]
  %v2125 = vld [vmem:[%s1572 + $0x212] sm:$0xff]
  %v2126 = vld [vmem:[%s1572 + $0x21a] sm:$0xff]
  %v2127 = vld [vmem:[%s1572 + $0x22a] sm:$0xff]
  %v2128 = vld [vmem:[%s1572 + $0x232] sm:$0xff]
  %v2129 = vld [vmem:[%s1572 + $0x242] sm:$0xff]
  %v2130 = vld [vmem:[%s1572 + $0x24a] sm:$0xff]
  %v2131 = vld [vmem:[%s1572 + $0x25a] sm:$0xff]
  %v2132 = vld [vmem:[%s1572 + $0x262] sm:$0xff]
  %v2133 = vld [vmem:[%s1572 + $0x272] sm:$0xff]
  %v2134 = vld [vmem:[%s1572 + $0x27a] sm:$0xff]
  %v2135 = vld [vmem:[%s1572 + $0x28a] sm:$0xff]
  %v2136 = vld [vmem:[%s1572 + $0x292] sm:$0xff]
  %v2137 = vld [vmem:[%s1572 + $0x2a2] sm:$0xff]
  %v2138 = vld [vmem:[%s1572 + $0x2aa] sm:$0xff]
  %v2139 = vld [vmem:[%s1572 + $0x2ba] sm:$0xff]
  %v2140 = vld [vmem:[%s1572 + $0x2c2] sm:$0xff]
  %v2141 = vld [vmem:[%s1572 + $0x2d2] sm:$0xff]
  %v2142 = vld [vmem:[%s1572 + $0x2da] sm:$0xff]
  %v2143 = vld [vmem:[%s1572 + $0x2ea] sm:$0xff]
  %v2144 = vld [vmem:[%s1572 + $0x2f2] sm:$0xff]
  %v2145 = vld [vmem:[%s1572 + $0x302] sm:$0xff]
  %v2146 = vld [vmem:[%s1572 + $0x30a] sm:$0xff]
  %v2147 = vld [vmem:[%s1572 + $0x31a] sm:$0xff]
  %v2148 = vld [vmem:[%s1572 + $0x322] sm:$0xff]
  %2149 = vst.msk [vmem:[#allocation2 + $0x20] sm:$0xff] %vm97, %v2085
  %2150 = vst.msk [vmem:[#allocation2 + $0x48] sm:$0xff] %vm97, %v2086
  %2151 = vst.msk [vmem:[#allocation2 + $0x70] sm:$0xff] %vm97, %v2087
  %2152 = vst.msk [vmem:[#allocation2 + $0x98] sm:$0xff] %vm97, %v2088
  %2153 = vst.msk [vmem:[#allocation2 + $0xc0] sm:$0xff] %vm97, %v2089
  %2154 = vst.msk [vmem:[#allocation2 + $0xe8] sm:$0xff] %vm97, %v2090
  %2155 = vst.msk [vmem:[#allocation2 + $0x110] sm:$0xff] %vm97, %v2091
  %2156 = vst.msk [vmem:[#allocation2 + $0x138] sm:$0xff] %vm97, %v2092
  %2157 = vst.msk [vmem:[#allocation2 + $0x160] sm:$0xff] %vm97, %v2093
  %2158 = vst.msk [vmem:[#allocation2 + $0x188] sm:$0xff] %vm97, %v2094
  %2159 = vst.msk [vmem:[#allocation2 + $0x1b0] sm:$0xff] %vm97, %v2095
  %2160 = vst.msk [vmem:[#allocation2 + $0x1d8] sm:$0xff] %vm97, %v2096
  %2161 = vst.msk [vmem:[#allocation2 + $0x200] sm:$0xff] %vm97, %v2097
  %2162 = vst.msk [vmem:[#allocation2 + $0x228] sm:$0xff] %vm97, %v2098
  %2163 = vst.msk [vmem:[#allocation2 + $0x250] sm:$0xff] %vm97, %v2099
  %2164 = vst.msk [vmem:[#allocation2 + $0x278] sm:$0xff] %vm97, %v2100
  %2165 = vst.msk [vmem:[#allocation2 + $0x2a0] sm:$0xff] %vm97, %v2101
  %2166 = vst.msk [vmem:[#allocation2 + $0x2c8] sm:$0xff] %vm97, %v2102
  %2167 = vst.msk [vmem:[#allocation2 + $0x2f0] sm:$0xff] %vm97, %v2103
  %2168 = vst.msk [vmem:[#allocation2 + $0x318] sm:$0xff] %vm97, %v2104
  %2169 = vst.msk [vmem:[#allocation2 + $0x340] sm:$0xff] %vm97, %v2105
  %2170 = vst.msk [vmem:[#allocation2 + $0x368] sm:$0xff] %vm97, %v2106
  %2171 = vst.msk [vmem:[#allocation2 + $0x390] sm:$0xff] %vm97, %v2107
  %2172 = vst.msk [vmem:[#allocation2 + $0x3b8] sm:$0xff] %vm97, %v2108
  %2173 = vst.msk [vmem:[#allocation2 + $0x3e0] sm:$0xff] %vm97, %v2109
  %2174 = vst.msk [vmem:[#allocation2 + $0x408] sm:$0xff] %vm97, %v2110
  %2175 = vst.msk [vmem:[#allocation2 + $0x430] sm:$0xff] %vm97, %v2111
  %2176 = vst.msk [vmem:[#allocation2 + $0x458] sm:$0xff] %vm97, %v2112
  %2177 = vst.msk [vmem:[#allocation2 + $0x480] sm:$0xff] %vm97, %v2113
  %2178 = vst.msk [vmem:[#allocation2 + $0x4a8] sm:$0xff] %vm97, %v2114
  %2179 = vst.msk [vmem:[#allocation2 + $0x4d0] sm:$0xff] %vm97, %v2115
  %2180 = vst.msk [vmem:[#allocation2 + $0x4f8] sm:$0xff] %vm97, %v2116
  %2181 = vst.msk [vmem:[#allocation2 + $0x520] sm:$0xff] %vm97, %v2117
  %2182 = vst.msk [vmem:[#allocation2 + $0x548] sm:$0xff] %vm97, %v2118
  %2183 = vst.msk [vmem:[#allocation2 + $0x570] sm:$0xff] %vm97, %v2119
  %2184 = vst.msk [vmem:[#allocation2 + $0x598] sm:$0xff] %vm97, %v2120
  %2185 = vst.msk [vmem:[#allocation2 + $0x5c0] sm:$0xff] %vm97, %v2121
  %2186 = vst.msk [vmem:[#allocation2 + $0x5e8] sm:$0xff] %vm97, %v2122
  %2187 = vst.msk [vmem:[#allocation2 + $0x610] sm:$0xff] %vm97, %v2123
  %2188 = vst.msk [vmem:[#allocation2 + $0x638] sm:$0xff] %vm97, %v2124
  %2189 = vst.msk [vmem:[#allocation2 + $0x660] sm:$0xff] %vm97, %v2125
  %2190 = vst.msk [vmem:[#allocation2 + $0x688] sm:$0xff] %vm97, %v2126
  %2191 = vst.msk [vmem:[#allocation2 + $0x6b0] sm:$0xff] %vm97, %v2127
  %2192 = vst.msk [vmem:[#allocation2 + $0x6d8] sm:$0xff] %vm97, %v2128
  %2193 = vst.msk [vmem:[#allocation2 + $0x700] sm:$0xff] %vm97, %v2129
  %2194 = vst.msk [vmem:[#allocation2 + $0x728] sm:$0xff] %vm97, %v2130
  %2195 = vst.msk [vmem:[#allocation2 + $0x750] sm:$0xff] %vm97, %v2131
  %2196 = vst.msk [vmem:[#allocation2 + $0x778] sm:$0xff] %vm97, %v2132
  %2197 = vst.msk [vmem:[#allocation2 + $0x7a0] sm:$0xff] %vm97, %v2133
  %2198 = vst.msk [vmem:[#allocation2 + $0x7c8] sm:$0xff] %vm97, %v2134
  %2199 = vst.msk [vmem:[#allocation2 + $0x7f0] sm:$0xff] %vm97, %v2135
  %2200 = vst.msk [vmem:[#allocation2 + $0x818] sm:$0xff] %vm97, %v2136
  %2201 = vst.msk [vmem:[#allocation2 + $0x840] sm:$0xff] %vm97, %v2137
  %2202 = vst.msk [vmem:[#allocation2 + $0x868] sm:$0xff] %vm97, %v2138
  %2203 = vst.msk [vmem:[#allocation2 + $0x890] sm:$0xff] %vm97, %v2139
  %2204 = vst.msk [vmem:[#allocation2 + $0x8b8] sm:$0xff] %vm97, %v2140
  %2205 = vst.msk [vmem:[#allocation2 + $0x8e0] sm:$0xff] %vm97, %v2141
  %2206 = vst.msk [vmem:[#allocation2 + $0x908] sm:$0xff] %vm97, %v2142
  %2207 = vst.msk [vmem:[#allocation2 + $0x930] sm:$0xff] %vm97, %v2143
  %2208 = vst.msk [vmem:[#allocation2 + $0x958] sm:$0xff] %vm97, %v2144
  %2209 = vst.msk [vmem:[#allocation2 + $0x980] sm:$0xff] %vm97, %v2145
  %2210 = vst.msk [vmem:[#allocation2 + $0x9a8] sm:$0xff] %vm97, %v2146
  %2211 = vst.msk [vmem:[#allocation2 + $0x9d0] sm:$0xff] %vm97, %v2147
  %2212 = vst.msk [vmem:[#allocation2 + $0x9f8] sm:$0xff] %vm97, %v2148
  %v2213 = vld [vmem:[#allocation2] sm:$0xff]
  %v2214 = vld [vmem:[#allocation2 + $0x8] sm:$0xff]
  %v2215 = vld [vmem:[#allocation2 + $0x10] sm:$0xff]
  %v2216 = vld [vmem:[#allocation2 + $0x18] sm:$0xff]
  %v2217 = vld [vmem:[#allocation2 + $0x20] sm:$0xff]
  %v2218 = vld [vmem:[#allocation2 + $0x28] sm:$0xff]
  %v2219 = vld [vmem:[#allocation2 + $0x30] sm:$0xff]
  %v2220 = vld [vmem:[#allocation2 + $0x38] sm:$0xff]
  %v2221 = vld [vmem:[#allocation2 + $0x40] sm:$0xff]
  %v2222 = vld [vmem:[#allocation2 + $0x48] sm:$0xff]
  %v2223 = vld [vmem:[#allocation2 + $0x50] sm:$0xff]
  %v2224 = vld [vmem:[#allocation2 + $0x58] sm:$0xff]
  %v2225 = vld [vmem:[#allocation2 + $0x60] sm:$0xff]
  %v2226 = vld [vmem:[#allocation2 + $0x68] sm:$0xff]
  %v2227 = vld [vmem:[#allocation2 + $0x70] sm:$0xff]
  %v2228 = vld [vmem:[#allocation2 + $0x78] sm:$0xff]
  %v2229 = vld [vmem:[#allocation2 + $0x80] sm:$0xff]
  %v2230 = vld [vmem:[#allocation2 + $0x88] sm:$0xff]
  %v2231 = vld [vmem:[#allocation2 + $0x90] sm:$0xff]
  %v2232 = vld [vmem:[#allocation2 + $0x98] sm:$0xff]
  %v2233 = vld [vmem:[#allocation2 + $0xa0] sm:$0xff]
  %v2234 = vld [vmem:[#allocation2 + $0xa8] sm:$0xff]
  %v2235 = vld [vmem:[#allocation2 + $0xb0] sm:$0xff]
  %v2236 = vld [vmem:[#allocation2 + $0xb8] sm:$0xff]
  %v2237 = vld [vmem:[#allocation2 + $0xc0] sm:$0xff]
  %v2238 = vld [vmem:[#allocation2 + $0xc8] sm:$0xff]
  %v2239 = vld [vmem:[#allocation2 + $0xd0] sm:$0xff]
  %v2240 = vld [vmem:[#allocation2 + $0xd8] sm:$0xff]
  %v2241 = vld [vmem:[#allocation2 + $0xe0] sm:$0xff]
  %v2242 = vld [vmem:[#allocation2 + $0xe8] sm:$0xff]
  %v2243 = vld [vmem:[#allocation2 + $0xf0] sm:$0xff]
  %v2244 = vld [vmem:[#allocation2 + $0xf8] sm:$0xff]
  %v2245 = vld [vmem:[#allocation2 + $0x100] sm:$0xff]
  %v2246 = vld [vmem:[#allocation2 + $0x108] sm:$0xff]
  %v2247 = vld [vmem:[#allocation2 + $0x110] sm:$0xff]
  %v2248 = vld [vmem:[#allocation2 + $0x118] sm:$0xff]
  %v2249 = vld [vmem:[#allocation2 + $0x120] sm:$0xff]
  %v2250 = vld [vmem:[#allocation2 + $0x128] sm:$0xff]
  %v2251 = vld [vmem:[#allocation2 + $0x130] sm:$0xff]
  %v2252 = vld [vmem:[#allocation2 + $0x138] sm:$0xff]
  %v2253 = vld [vmem:[#allocation2 + $0x140] sm:$0xff]
  %v2254 = vld [vmem:[#allocation2 + $0x148] sm:$0xff]
  %v2255 = vld [vmem:[#allocation2 + $0x150] sm:$0xff]
  %v2256 = vld [vmem:[#allocation2 + $0x158] sm:$0xff]
  %v2257 = vld [vmem:[#allocation2 + $0x160] sm:$0xff]
  %v2258 = vld [vmem:[#allocation2 + $0x168] sm:$0xff]
  %v2259 = vld [vmem:[#allocation2 + $0x170] sm:$0xff]
  %v2260 = vld [vmem:[#allocation2 + $0x178] sm:$0xff]
  %v2261 = vld [vmem:[#allocation2 + $0x180] sm:$0xff]
  %v2262 = vld [vmem:[#allocation2 + $0x188] sm:$0xff]
  %v2263 = vld [vmem:[#allocation2 + $0x190] sm:$0xff]
  %v2264 = vld [vmem:[#allocation2 + $0x198] sm:$0xff]
  %v2265 = vld [vmem:[#allocation2 + $0x1a0] sm:$0xff]
  %v2266 = vld [vmem:[#allocation2 + $0x1a8] sm:$0xff]
  %v2267 = vld [vmem:[#allocation2 + $0x1b0] sm:$0xff]
  %v2268 = vld [vmem:[#allocation2 + $0x1b8] sm:$0xff]
  %v2269 = vld [vmem:[#allocation2 + $0x1c0] sm:$0xff]
  %v2270 = vld [vmem:[#allocation2 + $0x1c8] sm:$0xff]
  %v2271 = vld [vmem:[#allocation2 + $0x1d0] sm:$0xff]
  %v2272 = vld [vmem:[#allocation2 + $0x1d8] sm:$0xff]
  %v2273 = vld [vmem:[#allocation2 + $0x1e0] sm:$0xff]
  %v2274 = vld [vmem:[#allocation2 + $0x1e8] sm:$0xff]
  %v2275 = vld [vmem:[#allocation2 + $0x1f0] sm:$0xff]
  %v2276 = vld [vmem:[#allocation2 + $0x1f8] sm:$0xff]
  %v2277 = vld [vmem:[#allocation2 + $0x200] sm:$0xff]
  %v2278 = vld [vmem:[#allocation2 + $0x208] sm:$0xff]
  %v2279 = vld [vmem:[#allocation2 + $0x210] sm:$0xff]
  %v2280 = vld [vmem:[#allocation2 + $0x218] sm:$0xff]
  %v2281 = vld [vmem:[#allocation2 + $0x220] sm:$0xff]
  %v2282 = vld [vmem:[#allocation2 + $0x228] sm:$0xff]
  %v2283 = vld [vmem:[#allocation2 + $0x230] sm:$0xff]
  %v2284 = vld [vmem:[#allocation2 + $0x238] sm:$0xff]
  %v2285 = vld [vmem:[#allocation2 + $0x240] sm:$0xff]
  %v2286 = vld [vmem:[#allocation2 + $0x248] sm:$0xff]
  %v2287 = vld [vmem:[#allocation2 + $0x250] sm:$0xff]
  %v2288 = vld [vmem:[#allocation2 + $0x258] sm:$0xff]
  %v2289 = vld [vmem:[#allocation2 + $0x260] sm:$0xff]
  %v2290 = vld [vmem:[#allocation2 + $0x268] sm:$0xff]
  %v2291 = vld [vmem:[#allocation2 + $0x270] sm:$0xff]
  %v2292 = vld [vmem:[#allocation2 + $0x278] sm:$0xff]
  %v2293 = vld [vmem:[#allocation2 + $0x280] sm:$0xff]
  %v2294 = vld [vmem:[#allocation2 + $0x288] sm:$0xff]
  %v2295 = vld [vmem:[#allocation2 + $0x290] sm:$0xff]
  %v2296 = vld [vmem:[#allocation2 + $0x298] sm:$0xff]
  %v2297 = vld [vmem:[#allocation2 + $0x2a0] sm:$0xff]
  %v2298 = vld [vmem:[#allocation2 + $0x2a8] sm:$0xff]
  %v2299 = vld [vmem:[#allocation2 + $0x2b0] sm:$0xff]
  %v2300 = vld [vmem:[#allocation2 + $0x2b8] sm:$0xff]
  %v2301 = vld [vmem:[#allocation2 + $0x2c0] sm:$0xff]
  %v2302 = vld [vmem:[#allocation2 + $0x2c8] sm:$0xff]
  %v2303 = vld [vmem:[#allocation2 + $0x2d0] sm:$0xff]
  %v2304 = vld [vmem:[#allocation2 + $0x2d8] sm:$0xff]
  %v2305 = vld [vmem:[#allocation2 + $0x2e0] sm:$0xff]
  %v2306 = vld [vmem:[#allocation2 + $0x2e8] sm:$0xff]
  %v2307 = vld [vmem:[#allocation2 + $0x2f0] sm:$0xff]
  %v2308 = vld [vmem:[#allocation2 + $0x2f8] sm:$0xff]
  %v2309 = vld [vmem:[#allocation2 + $0x300] sm:$0xff]
  %v2310 = vld [vmem:[#allocation2 + $0x308] sm:$0xff]
  %v2311 = vld [vmem:[#allocation2 + $0x310] sm:$0xff]
  %v2312 = vld [vmem:[#allocation2 + $0x318] sm:$0xff]
  %v2313 = vld [vmem:[#allocation2 + $0x320] sm:$0xff]
  %v2314 = vld [vmem:[#allocation2 + $0x328] sm:$0xff]
  %v2315 = vld [vmem:[#allocation2 + $0x330] sm:$0xff]
  %v2316 = vld [vmem:[#allocation2 + $0x338] sm:$0xff]
  %v2317 = vld [vmem:[#allocation2 + $0x340] sm:$0xff]
  %v2318 = vld [vmem:[#allocation2 + $0x348] sm:$0xff]
  %v2319 = vld [vmem:[#allocation2 + $0x350] sm:$0xff]
  %v2320 = vld [vmem:[#allocation2 + $0x358] sm:$0xff]
  %v2321 = vld [vmem:[#allocation2 + $0x360] sm:$0xff]
  %v2322 = vld [vmem:[#allocation2 + $0x368] sm:$0xff]
  %v2323 = vld [vmem:[#allocation2 + $0x370] sm:$0xff]
  %v2324 = vld [vmem:[#allocation2 + $0x378] sm:$0xff]
  %v2325 = vld [vmem:[#allocation2 + $0x380] sm:$0xff]
  %v2326 = vld [vmem:[#allocation2 + $0x388] sm:$0xff]
  %v2327 = vld [vmem:[#allocation2 + $0x390] sm:$0xff]
  %v2328 = vld [vmem:[#allocation2 + $0x398] sm:$0xff]
  %v2329 = vld [vmem:[#allocation2 + $0x3a0] sm:$0xff]
  %v2330 = vld [vmem:[#allocation2 + $0x3a8] sm:$0xff]
  %v2331 = vld [vmem:[#allocation2 + $0x3b0] sm:$0xff]
  %v2332 = vld [vmem:[#allocation2 + $0x3b8] sm:$0xff]
  %v2333 = vld [vmem:[#allocation2 + $0x3c0] sm:$0xff]
  %v2334 = vld [vmem:[#allocation2 + $0x3c8] sm:$0xff]
  %v2335 = vld [vmem:[#allocation2 + $0x3d0] sm:$0xff]
  %v2336 = vld [vmem:[#allocation2 + $0x3d8] sm:$0xff]
  %v2337 = vld [vmem:[#allocation2 + $0x3e0] sm:$0xff]
  %v2338 = vld [vmem:[#allocation2 + $0x3e8] sm:$0xff]
  %v2339 = vld [vmem:[#allocation2 + $0x3f0] sm:$0xff]
  %v2340 = vld [vmem:[#allocation2 + $0x3f8] sm:$0xff]
  %v2341 = vld [vmem:[#allocation2 + $0x400] sm:$0xff]
  %v2342 = vld [vmem:[#allocation2 + $0x408] sm:$0xff]
  %v2343 = vld [vmem:[#allocation2 + $0x410] sm:$0xff]
  %v2344 = vld [vmem:[#allocation2 + $0x418] sm:$0xff]
  %v2345 = vld [vmem:[#allocation2 + $0x420] sm:$0xff]
  %v2346 = vld [vmem:[#allocation2 + $0x428] sm:$0xff]
  %v2347 = vld [vmem:[#allocation2 + $0x430] sm:$0xff]
  %v2348 = vld [vmem:[#allocation2 + $0x438] sm:$0xff]
  %v2349 = vld [vmem:[#allocation2 + $0x440] sm:$0xff]
  %v2350 = vld [vmem:[#allocation2 + $0x448] sm:$0xff]
  %v2351 = vld [vmem:[#allocation2 + $0x450] sm:$0xff]
  %v2352 = vld [vmem:[#allocation2 + $0x458] sm:$0xff]
  %v2353 = vld [vmem:[#allocation2 + $0x460] sm:$0xff]
  %v2354 = vld [vmem:[#allocation2 + $0x468] sm:$0xff]
  %v2355 = vld [vmem:[#allocation2 + $0x470] sm:$0xff]
  %v2356 = vld [vmem:[#allocation2 + $0x478] sm:$0xff]
  %v2357 = vld [vmem:[#allocation2 + $0x480] sm:$0xff]
  %v2358 = vld [vmem:[#allocation2 + $0x488] sm:$0xff]
  %v2359 = vld [vmem:[#allocation2 + $0x490] sm:$0xff]
  %v2360 = vld [vmem:[#allocation2 + $0x498] sm:$0xff]
  %v2361 = vld [vmem:[#allocation2 + $0x4a0] sm:$0xff]
  %v2362 = vld [vmem:[#allocation2 + $0x4a8] sm:$0xff]
  %v2363 = vld [vmem:[#allocation2 + $0x4b0] sm:$0xff]
  %v2364 = vld [vmem:[#allocation2 + $0x4b8] sm:$0xff]
  %v2365 = vld [vmem:[#allocation2 + $0x4c0] sm:$0xff]
  %v2366 = vld [vmem:[#allocation2 + $0x4c8] sm:$0xff]
  %v2367 = vld [vmem:[#allocation2 + $0x4d0] sm:$0xff]
  %v2368 = vld [vmem:[#allocation2 + $0x4d8] sm:$0xff]
  %v2369 = vld [vmem:[#allocation2 + $0x4e0] sm:$0xff]
  %v2370 = vld [vmem:[#allocation2 + $0x4e8] sm:$0xff]
  %v2371 = vld [vmem:[#allocation2 + $0x4f0] sm:$0xff]
  %v2372 = vld [vmem:[#allocation2 + $0x4f8] sm:$0xff]
  %v2373 = vld [vmem:[#allocation2 + $0x500] sm:$0xff]
  %v2374 = vld [vmem:[#allocation2 + $0x508] sm:$0xff]
  %v2375 = vld [vmem:[#allocation2 + $0x510] sm:$0xff]
  %v2376 = vld [vmem:[#allocation2 + $0x518] sm:$0xff]
  %v2377 = vld [vmem:[#allocation2 + $0x520] sm:$0xff]
  %v2378 = vld [vmem:[#allocation2 + $0x528] sm:$0xff]
  %v2379 = vld [vmem:[#allocation2 + $0x530] sm:$0xff]
  %v2380 = vld [vmem:[#allocation2 + $0x538] sm:$0xff]
  %v2381 = vld [vmem:[#allocation2 + $0x540] sm:$0xff]
  %v2382 = vld [vmem:[#allocation2 + $0x548] sm:$0xff]
  %v2383 = vld [vmem:[#allocation2 + $0x550] sm:$0xff]
  %v2384 = vld [vmem:[#allocation2 + $0x558] sm:$0xff]
  %v2385 = vld [vmem:[#allocation2 + $0x560] sm:$0xff]
  %v2386 = vld [vmem:[#allocation2 + $0x568] sm:$0xff]
  %v2387 = vld [vmem:[#allocation2 + $0x570] sm:$0xff]
  %v2388 = vld [vmem:[#allocation2 + $0x578] sm:$0xff]
  %v2389 = vld [vmem:[#allocation2 + $0x580] sm:$0xff]
  %v2390 = vld [vmem:[#allocation2 + $0x588] sm:$0xff]
  %v2391 = vld [vmem:[#allocation2 + $0x590] sm:$0xff]
  %v2392 = vld [vmem:[#allocation2 + $0x598] sm:$0xff]
  %v2393 = vld [vmem:[#allocation2 + $0x5a0] sm:$0xff]
  %v2394 = vld [vmem:[#allocation2 + $0x5a8] sm:$0xff]
  %v2395 = vld [vmem:[#allocation2 + $0x5b0] sm:$0xff]
  %v2396 = vld [vmem:[#allocation2 + $0x5b8] sm:$0xff]
  %v2397 = vld [vmem:[#allocation2 + $0x5c0] sm:$0xff]
  %v2398 = vld [vmem:[#allocation2 + $0x5c8] sm:$0xff]
  %v2399 = vld [vmem:[#allocation2 + $0x5d0] sm:$0xff]
  %v2400 = vld [vmem:[#allocation2 + $0x5d8] sm:$0xff]
  %v2401 = vld [vmem:[#allocation2 + $0x5e0] sm:$0xff]
  %v2402 = vld [vmem:[#allocation2 + $0x5e8] sm:$0xff]
  %v2403 = vld [vmem:[#allocation2 + $0x5f0] sm:$0xff]
  %v2404 = vld [vmem:[#allocation2 + $0x5f8] sm:$0xff]
  %v2405 = vld [vmem:[#allocation2 + $0x600] sm:$0xff]
  %v2406 = vld [vmem:[#allocation2 + $0x608] sm:$0xff]
  %v2407 = vld [vmem:[#allocation2 + $0x610] sm:$0xff]
  %v2408 = vld [vmem:[#allocation2 + $0x618] sm:$0xff]
  %v2409 = vld [vmem:[#allocation2 + $0x620] sm:$0xff]
  %v2410 = vld [vmem:[#allocation2 + $0x628] sm:$0xff]
  %v2411 = vld [vmem:[#allocation2 + $0x630] sm:$0xff]
  %v2412 = vld [vmem:[#allocation2 + $0x638] sm:$0xff]
  %v2413 = vld [vmem:[#allocation2 + $0x640] sm:$0xff]
  %v2414 = vld [vmem:[#allocation2 + $0x648] sm:$0xff]
  %v2415 = vld [vmem:[#allocation2 + $0x650] sm:$0xff]
  %v2416 = vld [vmem:[#allocation2 + $0x658] sm:$0xff]
  %v2417 = vld [vmem:[#allocation2 + $0x660] sm:$0xff]
  %v2418 = vld [vmem:[#allocation2 + $0x668] sm:$0xff]
  %v2419 = vld [vmem:[#allocation2 + $0x670] sm:$0xff]
  %v2420 = vld [vmem:[#allocation2 + $0x678] sm:$0xff]
  %v2421 = vld [vmem:[#allocation2 + $0x680] sm:$0xff]
  %v2422 = vld [vmem:[#allocation2 + $0x688] sm:$0xff]
  %v2423 = vld [vmem:[#allocation2 + $0x690] sm:$0xff]
  %v2424 = vld [vmem:[#allocation2 + $0x698] sm:$0xff]
  %v2425 = vld [vmem:[#allocation2 + $0x6a0] sm:$0xff]
  %v2426 = vld [vmem:[#allocation2 + $0x6a8] sm:$0xff]
  %v2427 = vld [vmem:[#allocation2 + $0x6b0] sm:$0xff]
  %v2428 = vld [vmem:[#allocation2 + $0x6b8] sm:$0xff]
  %v2429 = vld [vmem:[#allocation2 + $0x6c0] sm:$0xff]
  %v2430 = vld [vmem:[#allocation2 + $0x6c8] sm:$0xff]
  %v2431 = vld [vmem:[#allocation2 + $0x6d0] sm:$0xff]
  %v2432 = vld [vmem:[#allocation2 + $0x6d8] sm:$0xff]
  %v2433 = vld [vmem:[#allocation2 + $0x6e0] sm:$0xff]
  %v2434 = vld [vmem:[#allocation2 + $0x6e8] sm:$0xff]
  %v2435 = vld [vmem:[#allocation2 + $0x6f0] sm:$0xff]
  %v2436 = vld [vmem:[#allocation2 + $0x6f8] sm:$0xff]
  %v2437 = vld [vmem:[#allocation2 + $0x700] sm:$0xff]
  %v2438 = vld [vmem:[#allocation2 + $0x708] sm:$0xff]
  %v2439 = vld [vmem:[#allocation2 + $0x710] sm:$0xff]
  %v2440 = vld [vmem:[#allocation2 + $0x718] sm:$0xff]
  %v2441 = vld [vmem:[#allocation2 + $0x720] sm:$0xff]
  %v2442 = vld [vmem:[#allocation2 + $0x728] sm:$0xff]
  %v2443 = vld [vmem:[#allocation2 + $0x730] sm:$0xff]
  %v2444 = vld [vmem:[#allocation2 + $0x738] sm:$0xff]
  %v2445 = vld [vmem:[#allocation2 + $0x740] sm:$0xff]
  %v2446 = vld [vmem:[#allocation2 + $0x748] sm:$0xff]
  %v2447 = vld [vmem:[#allocation2 + $0x750] sm:$0xff]
  %v2448 = vld [vmem:[#allocation2 + $0x758] sm:$0xff]
  %v2449 = vld [vmem:[#allocation2 + $0x760] sm:$0xff]
  %v2450 = vld [vmem:[#allocation2 + $0x768] sm:$0xff]
  %v2451 = vld [vmem:[#allocation2 + $0x770] sm:$0xff]
  %v2452 = vld [vmem:[#allocation2 + $0x778] sm:$0xff]
  %v2453 = vld [vmem:[#allocation2 + $0x780] sm:$0xff]
  %v2454 = vld [vmem:[#allocation2 + $0x788] sm:$0xff]
  %v2455 = vld [vmem:[#allocation2 + $0x790] sm:$0xff]
  %v2456 = vld [vmem:[#allocation2 + $0x798] sm:$0xff]
  %v2457 = vld [vmem:[#allocation2 + $0x7a0] sm:$0xff]
  %v2458 = vld [vmem:[#allocation2 + $0x7a8] sm:$0xff]
  %v2459 = vld [vmem:[#allocation2 + $0x7b0] sm:$0xff]
  %v2460 = vld [vmem:[#allocation2 + $0x7b8] sm:$0xff]
  %v2461 = vld [vmem:[#allocation2 + $0x7c0] sm:$0xff]
  %v2462 = vld [vmem:[#allocation2 + $0x7c8] sm:$0xff]
  %v2463 = vld [vmem:[#allocation2 + $0x7d0] sm:$0xff]
  %v2464 = vld [vmem:[#allocation2 + $0x7d8] sm:$0xff]
  %v2465 = vld [vmem:[#allocation2 + $0x7e0] sm:$0xff]
  %v2466 = vld [vmem:[#allocation2 + $0x7e8] sm:$0xff]
  %v2467 = vld [vmem:[#allocation2 + $0x7f0] sm:$0xff]
  %v2468 = vld [vmem:[#allocation2 + $0x7f8] sm:$0xff]
  %v2469 = vld [vmem:[#allocation2 + $0x800] sm:$0xff]
  %v2470 = vld [vmem:[#allocation2 + $0x808] sm:$0xff]
  %v2471 = vld [vmem:[#allocation2 + $0x810] sm:$0xff]
  %v2472 = vld [vmem:[#allocation2 + $0x818] sm:$0xff]
  %v2473 = vld [vmem:[#allocation2 + $0x820] sm:$0xff]
  %v2474 = vld [vmem:[#allocation2 + $0x828] sm:$0xff]
  %v2475 = vld [vmem:[#allocation2 + $0x830] sm:$0xff]
  %v2476 = vld [vmem:[#allocation2 + $0x838] sm:$0xff]
  %v2477 = vld [vmem:[#allocation2 + $0x840] sm:$0xff]
  %v2478 = vld [vmem:[#allocation2 + $0x848] sm:$0xff]
  %v2479 = vld [vmem:[#allocation2 + $0x850] sm:$0xff]
  %v2480 = vld [vmem:[#allocation2 + $0x858] sm:$0xff]
  %v2481 = vld [vmem:[#allocation2 + $0x860] sm:$0xff]
  %v2482 = vld [vmem:[#allocation2 + $0x868] sm:$0xff]
  %v2483 = vld [vmem:[#allocation2 + $0x870] sm:$0xff]
  %v2484 = vld [vmem:[#allocation2 + $0x878] sm:$0xff]
  %v2485 = vld [vmem:[#allocation2 + $0x880] sm:$0xff]
  %v2486 = vld [vmem:[#allocation2 + $0x888] sm:$0xff]
  %v2487 = vld [vmem:[#allocation2 + $0x890] sm:$0xff]
  %v2488 = vld [vmem:[#allocation2 + $0x898] sm:$0xff]
  %v2489 = vld [vmem:[#allocation2 + $0x8a0] sm:$0xff]
  %v2490 = vld [vmem:[#allocation2 + $0x8a8] sm:$0xff]
  %v2491 = vld [vmem:[#allocation2 + $0x8b0] sm:$0xff]
  %v2492 = vld [vmem:[#allocation2 + $0x8b8] sm:$0xff]
  %v2493 = vld [vmem:[#allocation2 + $0x8c0] sm:$0xff]
  %v2494 = vld [vmem:[#allocation2 + $0x8c8] sm:$0xff]
  %v2495 = vld [vmem:[#allocation2 + $0x8d0] sm:$0xff]
  %v2496 = vld [vmem:[#allocation2 + $0x8d8] sm:$0xff]
  %v2497 = vld [vmem:[#allocation2 + $0x8e0] sm:$0xff]
  %v2498 = vld [vmem:[#allocation2 + $0x8e8] sm:$0xff]
  %v2499 = vld [vmem:[#allocation2 + $0x8f0] sm:$0xff]
  %v2500 = vld [vmem:[#allocation2 + $0x8f8] sm:$0xff]
  %v2501 = vld [vmem:[#allocation2 + $0x900] sm:$0xff]
  %v2502 = vld [vmem:[#allocation2 + $0x908] sm:$0xff]
  %v2503 = vld [vmem:[#allocation2 + $0x910] sm:$0xff]
  %v2504 = vld [vmem:[#allocation2 + $0x918] sm:$0xff]
  %v2505 = vld [vmem:[#allocation2 + $0x920] sm:$0xff]
  %v2506 = vld [vmem:[#allocation2 + $0x928] sm:$0xff]
  %v2507 = vld [vmem:[#allocation2 + $0x930] sm:$0xff]
  %v2508 = vld [vmem:[#allocation2 + $0x938] sm:$0xff]
  %v2509 = vld [vmem:[#allocation2 + $0x940] sm:$0xff]
  %v2510 = vld [vmem:[#allocation2 + $0x948] sm:$0xff]
  %v2511 = vld [vmem:[#allocation2 + $0x950] sm:$0xff]
  %v2512 = vld [vmem:[#allocation2 + $0x958] sm:$0xff]
  %v2513 = vld [vmem:[#allocation2 + $0x960] sm:$0xff]
  %v2514 = vld [vmem:[#allocation2 + $0x968] sm:$0xff]
  %v2515 = vld [vmem:[#allocation2 + $0x970] sm:$0xff]
  %v2516 = vld [vmem:[#allocation2 + $0x978] sm:$0xff]
  %v2517 = vld [vmem:[#allocation2 + $0x980] sm:$0xff]
  %v2518 = vld [vmem:[#allocation2 + $0x988] sm:$0xff]
  %v2519 = vld [vmem:[#allocation2 + $0x990] sm:$0xff]
  %v2520 = vld [vmem:[#allocation2 + $0x998] sm:$0xff]
  %v2521 = vld [vmem:[#allocation2 + $0x9a0] sm:$0xff]
  %v2522 = vld [vmem:[#allocation2 + $0x9a8] sm:$0xff]
  %v2523 = vld [vmem:[#allocation2 + $0x9b0] sm:$0xff]
  %v2524 = vld [vmem:[#allocation2 + $0x9b8] sm:$0xff]
  %v2525 = vld [vmem:[#allocation2 + $0x9c0] sm:$0xff]
  %v2526 = vld [vmem:[#allocation2 + $0x9c8] sm:$0xff]
  %v2527 = vld [vmem:[#allocation2 + $0x9d0] sm:$0xff]
  %v2528 = vld [vmem:[#allocation2 + $0x9d8] sm:$0xff]
  %v2529 = vld [vmem:[#allocation2 + $0x9e0] sm:$0xff]
  %v2530 = vld [vmem:[#allocation2 + $0x9e8] sm:$0xff]
  %v2531 = vld [vmem:[#allocation2 + $0x9f0] sm:$0xff]
  %v2532 = vld [vmem:[#allocation2 + $0x9f8] sm:$0xff]
  %v2533 = vpack.c.bf16 %v2218, %v2213
  %v2534 = vpack.c.bf16 %v2219, %v2214
  %v2535 = vpack.c.bf16 %v2220, %v2215
  %v2536 = vpack.c.bf16 %v2221, %v2216
  %v2537 = vpack.c.bf16 %v2222, %v2217
  %v2538 = vpack.c.bf16 %v2228, %v2223
  %v2539 = vpack.c.bf16 %v2229, %v2224
  %v2540 = vpack.c.bf16 %v2230, %v2225
  %v2541 = vpack.c.bf16 %v2231, %v2226
  %v2542 = vpack.c.bf16 %v2232, %v2227
  %v2543 = vpack.c.bf16 %v2238, %v2233
  %v2544 = vpack.c.bf16 %v2239, %v2234
  %v2545 = vpack.c.bf16 %v2240, %v2235
  %v2546 = vpack.c.bf16 %v2241, %v2236
  %v2547 = vpack.c.bf16 %v2242, %v2237
  %v2548 = vpack.c.bf16 %v2248, %v2243
  %v2549 = vpack.c.bf16 %v2249, %v2244
  %v2550 = vpack.c.bf16 %v2250, %v2245
  %v2551 = vpack.c.bf16 %v2251, %v2246
  %v2552 = vpack.c.bf16 %v2252, %v2247
  %v2553 = vpack.c.bf16 %v2258, %v2253
  %v2554 = vpack.c.bf16 %v2259, %v2254
  %v2555 = vpack.c.bf16 %v2260, %v2255
  %v2556 = vpack.c.bf16 %v2261, %v2256
  %v2557 = vpack.c.bf16 %v2262, %v2257
  %v2558 = vpack.c.bf16 %v2268, %v2263
  %v2559 = vpack.c.bf16 %v2269, %v2264
  %v2560 = vpack.c.bf16 %v2270, %v2265
  %v2561 = vpack.c.bf16 %v2271, %v2266
  %v2562 = vpack.c.bf16 %v2272, %v2267
  %v2563 = vpack.c.bf16 %v2278, %v2273
  %v2564 = vpack.c.bf16 %v2279, %v2274
  %v2565 = vpack.c.bf16 %v2280, %v2275
  %v2566 = vpack.c.bf16 %v2281, %v2276
  %v2567 = vpack.c.bf16 %v2282, %v2277
  %v2568 = vpack.c.bf16 %v2288, %v2283
  %v2569 = vpack.c.bf16 %v2289, %v2284
  %v2570 = vpack.c.bf16 %v2290, %v2285
  %v2571 = vpack.c.bf16 %v2291, %v2286
  %v2572 = vpack.c.bf16 %v2292, %v2287
  %v2573 = vpack.c.bf16 %v2298, %v2293
  %v2574 = vpack.c.bf16 %v2299, %v2294
  %v2575 = vpack.c.bf16 %v2300, %v2295
  %v2576 = vpack.c.bf16 %v2301, %v2296
  %v2577 = vpack.c.bf16 %v2302, %v2297
  %v2578 = vpack.c.bf16 %v2308, %v2303
  %v2579 = vpack.c.bf16 %v2309, %v2304
  %v2580 = vpack.c.bf16 %v2310, %v2305
  %v2581 = vpack.c.bf16 %v2311, %v2306
  %v2582 = vpack.c.bf16 %v2312, %v2307
  %v2583 = vpack.c.bf16 %v2318, %v2313
  %v2584 = vpack.c.bf16 %v2319, %v2314
  %v2585 = vpack.c.bf16 %v2320, %v2315
  %v2586 = vpack.c.bf16 %v2321, %v2316
  %v2587 = vpack.c.bf16 %v2322, %v2317
  %v2588 = vpack.c.bf16 %v2328, %v2323
  %v2589 = vpack.c.bf16 %v2329, %v2324
  %v2590 = vpack.c.bf16 %v2330, %v2325
  %v2591 = vpack.c.bf16 %v2331, %v2326
  %v2592 = vpack.c.bf16 %v2332, %v2327
  %v2593 = vpack.c.bf16 %v2338, %v2333
  %v2594 = vpack.c.bf16 %v2339, %v2334
  %v2595 = vpack.c.bf16 %v2340, %v2335
  %v2596 = vpack.c.bf16 %v2341, %v2336
  %v2597 = vpack.c.bf16 %v2342, %v2337
  %v2598 = vpack.c.bf16 %v2348, %v2343
  %v2599 = vpack.c.bf16 %v2349, %v2344
  %v2600 = vpack.c.bf16 %v2350, %v2345
  %v2601 = vpack.c.bf16 %v2351, %v2346
  %v2602 = vpack.c.bf16 %v2352, %v2347
  %v2603 = vpack.c.bf16 %v2358, %v2353
  %v2604 = vpack.c.bf16 %v2359, %v2354
  %v2605 = vpack.c.bf16 %v2360, %v2355
  %v2606 = vpack.c.bf16 %v2361, %v2356
  %v2607 = vpack.c.bf16 %v2362, %v2357
  %v2608 = vpack.c.bf16 %v2368, %v2363
  %v2609 = vpack.c.bf16 %v2369, %v2364
  %v2610 = vpack.c.bf16 %v2370, %v2365
  %v2611 = vpack.c.bf16 %v2371, %v2366
  %v2612 = vpack.c.bf16 %v2372, %v2367
  %v2613 = vpack.c.bf16 %v2378, %v2373
  %v2614 = vpack.c.bf16 %v2379, %v2374
  %v2615 = vpack.c.bf16 %v2380, %v2375
  %v2616 = vpack.c.bf16 %v2381, %v2376
  %v2617 = vpack.c.bf16 %v2382, %v2377
  %v2618 = vpack.c.bf16 %v2388, %v2383
  %v2619 = vpack.c.bf16 %v2389, %v2384
  %v2620 = vpack.c.bf16 %v2390, %v2385
  %v2621 = vpack.c.bf16 %v2391, %v2386
  %v2622 = vpack.c.bf16 %v2392, %v2387
  %v2623 = vpack.c.bf16 %v2398, %v2393
  %v2624 = vpack.c.bf16 %v2399, %v2394
  %v2625 = vpack.c.bf16 %v2400, %v2395
  %v2626 = vpack.c.bf16 %v2401, %v2396
  %v2627 = vpack.c.bf16 %v2402, %v2397
  %v2628 = vpack.c.bf16 %v2408, %v2403
  %v2629 = vpack.c.bf16 %v2409, %v2404
  %v2630 = vpack.c.bf16 %v2410, %v2405
  %v2631 = vpack.c.bf16 %v2411, %v2406
  %v2632 = vpack.c.bf16 %v2412, %v2407
  %v2633 = vpack.c.bf16 %v2418, %v2413
  %v2634 = vpack.c.bf16 %v2419, %v2414
  %v2635 = vpack.c.bf16 %v2420, %v2415
  %v2636 = vpack.c.bf16 %v2421, %v2416
  %v2637 = vpack.c.bf16 %v2422, %v2417
  %v2638 = vpack.c.bf16 %v2428, %v2423
  %v2639 = vpack.c.bf16 %v2429, %v2424
  %v2640 = vpack.c.bf16 %v2430, %v2425
  %v2641 = vpack.c.bf16 %v2431, %v2426
  %v2642 = vpack.c.bf16 %v2432, %v2427
  %v2643 = vpack.c.bf16 %v2438, %v2433
  %v2644 = vpack.c.bf16 %v2439, %v2434
  %v2645 = vpack.c.bf16 %v2440, %v2435
  %v2646 = vpack.c.bf16 %v2441, %v2436
  %v2647 = vpack.c.bf16 %v2442, %v2437
  %v2648 = vpack.c.bf16 %v2448, %v2443
  %v2649 = vpack.c.bf16 %v2449, %v2444
  %v2650 = vpack.c.bf16 %v2450, %v2445
  %v2651 = vpack.c.bf16 %v2451, %v2446
  %v2652 = vpack.c.bf16 %v2452, %v2447
  %v2653 = vpack.c.bf16 %v2458, %v2453
  %v2654 = vpack.c.bf16 %v2459, %v2454
  %v2655 = vpack.c.bf16 %v2460, %v2455
  %v2656 = vpack.c.bf16 %v2461, %v2456
  %v2657 = vpack.c.bf16 %v2462, %v2457
  %v2658 = vpack.c.bf16 %v2468, %v2463
  %v2659 = vpack.c.bf16 %v2469, %v2464
  %v2660 = vpack.c.bf16 %v2470, %v2465
  %v2661 = vpack.c.bf16 %v2471, %v2466
  %v2662 = vpack.c.bf16 %v2472, %v2467
  %v2663 = vpack.c.bf16 %v2478, %v2473
  %v2664 = vpack.c.bf16 %v2479, %v2474
  %v2665 = vpack.c.bf16 %v2480, %v2475
  %v2666 = vpack.c.bf16 %v2481, %v2476
  %v2667 = vpack.c.bf16 %v2482, %v2477
  %v2668 = vpack.c.bf16 %v2488, %v2483
  %v2669 = vpack.c.bf16 %v2489, %v2484
  %v2670 = vpack.c.bf16 %v2490, %v2485
  %v2671 = vpack.c.bf16 %v2491, %v2486
  %v2672 = vpack.c.bf16 %v2492, %v2487
  %v2673 = vpack.c.bf16 %v2498, %v2493
  %v2674 = vpack.c.bf16 %v2499, %v2494
  %v2675 = vpack.c.bf16 %v2500, %v2495
  %v2676 = vpack.c.bf16 %v2501, %v2496
  %v2677 = vpack.c.bf16 %v2502, %v2497
  %v2678 = vpack.c.bf16 %v2508, %v2503
  %v2679 = vpack.c.bf16 %v2509, %v2504
  %v2680 = vpack.c.bf16 %v2510, %v2505
  %v2681 = vpack.c.bf16 %v2511, %v2506
  %v2682 = vpack.c.bf16 %v2512, %v2507
  %v2683 = vpack.c.bf16 %v2518, %v2513
  %v2684 = vpack.c.bf16 %v2519, %v2514
  %v2685 = vpack.c.bf16 %v2520, %v2515
  %v2686 = vpack.c.bf16 %v2521, %v2516
  %v2687 = vpack.c.bf16 %v2522, %v2517
  %v2688 = vpack.c.bf16 %v2528, %v2523
  %v2689 = vpack.c.bf16 %v2529, %v2524
  %v2690 = vpack.c.bf16 %v2530, %v2525
  %v2691 = vpack.c.bf16 %v2531, %v2526
  %v2692 = vpack.c.bf16 %v2532, %v2527
  %v2693 = vld [vmem:[%s2] sm:$0xf]
  %v2694 = vld [vmem:[%s2 + $0x4] sm:$0xf]
  %v2695 = vld [vmem:[%s2 + $0x8] sm:$0xf]
  %v2696 = vld [vmem:[%s2 + $0xc] sm:$0xf]
  %v2697 = vld [vmem:[%s2 + $0x10] sm:$0xf]
  %v2698 = vld [vmem:[%s2 + $0x14] sm:$0xf]
  %v2699 = vld [vmem:[%s2 + $0x18] sm:$0xf]
  %v2700 = vld [vmem:[%s2 + $0x1c] sm:$0xf]
  %v2701 = vld [vmem:[%s2 + $0x20] sm:$0xf]
  %v2702 = vld [vmem:[%s2 + $0x24] sm:$0xf]
  %v2703 = vld [vmem:[%s2 + $0x28] sm:$0xf]
  %v2704 = vld [vmem:[%s2 + $0x2c] sm:$0xf]
  %v2705 = vld [vmem:[%s2 + $0x30] sm:$0xf]
  %v2706 = vld [vmem:[%s2 + $0x34] sm:$0xf]
  %v2707 = vld [vmem:[%s2 + $0x38] sm:$0xf]
  %v2708 = vld [vmem:[%s2 + $0x3c] sm:$0xf]
  %v2709 = vld [vmem:[%s2 + $0x40] sm:$0xf]
  %v2710 = vld [vmem:[%s2 + $0x44] sm:$0xf]
  %v2711 = vld [vmem:[%s2 + $0x48] sm:$0xf]
  %v2712 = vld [vmem:[%s2 + $0x4c] sm:$0xf]
  %v2713 = vld [vmem:[%s2 + $0x50] sm:$0xf]
  %v2714 = vld [vmem:[%s2 + $0x54] sm:$0xf]
  %v2715 = vld [vmem:[%s2 + $0x58] sm:$0xf]
  %v2716 = vld [vmem:[%s2 + $0x5c] sm:$0xf]
  %v2717 = vld [vmem:[%s2 + $0x60] sm:$0xf]
  %v2718 = vld [vmem:[%s2 + $0x64] sm:$0xf]
  %v2719 = vld [vmem:[%s2 + $0x68] sm:$0xf]
  %v2720 = vld [vmem:[%s2 + $0x6c] sm:$0xf]
  %v2721 = vld [vmem:[%s2 + $0x70] sm:$0xf]
  %v2722 = vld [vmem:[%s2 + $0x74] sm:$0xf]
  %v2723 = vld [vmem:[%s2 + $0x78] sm:$0xf]
  %v2724 = vld [vmem:[%s2 + $0x7c] sm:$0xf]
  %v2725 = vld [vmem:[%s2 + $0x80] sm:$0xf]
  %v2726 = vld [vmem:[%s2 + $0x84] sm:$0xf]
  %v2727 = vld [vmem:[%s2 + $0x88] sm:$0xf]
  %v2728 = vld [vmem:[%s2 + $0x8c] sm:$0xf]
  %v2729 = vld [vmem:[%s2 + $0x90] sm:$0xf]
  %v2730 = vld [vmem:[%s2 + $0x94] sm:$0xf]
  %v2731 = vld [vmem:[%s2 + $0x98] sm:$0xf]
  %v2732 = vld [vmem:[%s2 + $0x9c] sm:$0xf]
  %v2733 = vld [vmem:[%s2 + $0xa0] sm:$0xf]
  %v2734 = vld [vmem:[%s2 + $0xa4] sm:$0xf]
  %v2735 = vld [vmem:[%s2 + $0xa8] sm:$0xf]
  %v2736 = vld [vmem:[%s2 + $0xac] sm:$0xf]
  %v2737 = vld [vmem:[%s2 + $0xb0] sm:$0xf]
  %v2738 = vld [vmem:[%s2 + $0xb4] sm:$0xf]
  %v2739 = vld [vmem:[%s2 + $0xb8] sm:$0xf]
  %v2740 = vld [vmem:[%s2 + $0xbc] sm:$0xf]
  %v2741 = vld [vmem:[%s2 + $0xc0] sm:$0xf]
  %v2742 = vld [vmem:[%s2 + $0xc4] sm:$0xf]
  %v2743 = vld [vmem:[%s2 + $0xc8] sm:$0xf]
  %v2744 = vld [vmem:[%s2 + $0xcc] sm:$0xf]
  %v2745 = vld [vmem:[%s2 + $0xd0] sm:$0xf]
  %v2746 = vld [vmem:[%s2 + $0xd4] sm:$0xf]
  %v2747 = vld [vmem:[%s2 + $0xd8] sm:$0xf]
  %v2748 = vld [vmem:[%s2 + $0xdc] sm:$0xf]
  %v2749 = vld [vmem:[%s2 + $0xe0] sm:$0xf]
  %v2750 = vld [vmem:[%s2 + $0xe4] sm:$0xf]
  %v2751 = vld [vmem:[%s2 + $0xe8] sm:$0xf]
  %v2752 = vld [vmem:[%s2 + $0xec] sm:$0xf]
  %v2753 = vld [vmem:[%s2 + $0xf0] sm:$0xf]
  %v2754 = vld [vmem:[%s2 + $0xf4] sm:$0xf]
  %v2755 = vld [vmem:[%s2 + $0xf8] sm:$0xf]
  %v2756 = vld [vmem:[%s2 + $0xfc] sm:$0xf]
  %v2757 = vld [vmem:[%s2 + $0x100] sm:$0xf]
  %v2758 = vld [vmem:[%s2 + $0x104] sm:$0xf]
  %v2759 = vld [vmem:[%s2 + $0x108] sm:$0xf]
  %v2760 = vld [vmem:[%s2 + $0x10c] sm:$0xf]
  %v2761 = vld [vmem:[%s2 + $0x110] sm:$0xf]
  %v2762 = vld [vmem:[%s2 + $0x114] sm:$0xf]
  %v2763 = vld [vmem:[%s2 + $0x118] sm:$0xf]
  %v2764 = vld [vmem:[%s2 + $0x11c] sm:$0xf]
  %v2837 = vunpack.c.l.b16 %v2693
  %v2838 = vunpack.c.l.b16 %v2694
  %v2839 = vunpack.c.l.b16 %v2695
  %v2840 = vunpack.c.l.b16 %v2696
  %v2841 = vunpack.c.l.b16 %v2697
  %v2842 = vunpack.c.l.b16 %v2698
  %v2843 = vunpack.c.l.b16 %v2699
  %v2844 = vunpack.c.l.b16 %v2700
  %v2845 = vunpack.c.l.b16 %v2701
  %v2846 = vunpack.c.l.b16 %v2702
  %v2847 = vunpack.c.l.b16 %v2703
  %v2848 = vunpack.c.l.b16 %v2704
  %v2849 = vunpack.c.l.b16 %v2705
  %v2850 = vunpack.c.l.b16 %v2706
  %v2851 = vunpack.c.l.b16 %v2707
  %v2852 = vunpack.c.l.b16 %v2708
  %v2853 = vunpack.c.l.b16 %v2709
  %v2854 = vunpack.c.l.b16 %v2710
  %v2855 = vunpack.c.l.b16 %v2711
  %v2856 = vunpack.c.l.b16 %v2712
  %v2857 = vunpack.c.l.b16 %v2713
  %v2858 = vunpack.c.l.b16 %v2714
  %v2859 = vunpack.c.l.b16 %v2715
  %v2860 = vunpack.c.l.b16 %v2716
  %v2861 = vunpack.c.l.b16 %v2717
  %v2862 = vunpack.c.l.b16 %v2718
  %v2863 = vunpack.c.l.b16 %v2719
  %v2864 = vunpack.c.l.b16 %v2720
  %v2865 = vunpack.c.l.b16 %v2721
  %v2866 = vunpack.c.l.b16 %v2722
  %v2867 = vunpack.c.l.b16 %v2723
  %v2868 = vunpack.c.l.b16 %v2724
  %v2869 = vunpack.c.l.b16 %v2725
  %v2870 = vunpack.c.l.b16 %v2726
  %v2871 = vunpack.c.l.b16 %v2727
  %v2872 = vunpack.c.l.b16 %v2728
  %v2873 = vunpack.c.l.b16 %v2729
  %v2874 = vunpack.c.l.b16 %v2730
  %v2875 = vunpack.c.l.b16 %v2731
  %v2876 = vunpack.c.l.b16 %v2732
  %v2877 = vunpack.c.l.b16 %v2733
  %v2878 = vunpack.c.l.b16 %v2734
  %v2879 = vunpack.c.l.b16 %v2735
  %v2880 = vunpack.c.l.b16 %v2736
  %v2881 = vunpack.c.l.b16 %v2737
  %v2882 = vunpack.c.l.b16 %v2738
  %v2883 = vunpack.c.l.b16 %v2739
  %v2884 = vunpack.c.l.b16 %v2740
  %v2885 = vunpack.c.l.b16 %v2741
  %v2886 = vunpack.c.l.b16 %v2742
  %v2887 = vunpack.c.l.b16 %v2743
  %v2888 = vunpack.c.l.b16 %v2744
  %v2889 = vunpack.c.l.b16 %v2745
  %v2890 = vunpack.c.l.b16 %v2746
  %v2891 = vunpack.c.l.b16 %v2747
  %v2892 = vunpack.c.l.b16 %v2748
  %v2893 = vunpack.c.l.b16 %v2749
  %v2894 = vunpack.c.l.b16 %v2750
  %v2895 = vunpack.c.l.b16 %v2751
  %v2896 = vunpack.c.l.b16 %v2752
  %v2897 = vunpack.c.l.b16 %v2753
  %v2898 = vunpack.c.l.b16 %v2754
  %v2899 = vunpack.c.l.b16 %v2755
  %v2900 = vunpack.c.l.b16 %v2756
  %v2901 = vunpack.c.l.b16 %v2757
  %v2902 = vunpack.c.l.b16 %v2758
  %v2903 = vunpack.c.l.b16 %v2759
  %v2904 = vunpack.c.l.b16 %v2760
  %v2905 = vunpack.c.l.b16 %v2761
  %v2906 = vunpack.c.l.b16 %v2762
  %v2907 = vunpack.c.l.b16 %v2763
  %v2908 = vunpack.c.l.b16 %v2764
  %v2909 = vpack.c.b16 %v2838, %v2837
  %v2910 = vpack.c.b16 %v2840, %v2839
  %v2911 = vpack.c.b16 %v2842, %v2841
  %v2912 = vpack.c.b16 %v2844, %v2843
  %v2913 = vpack.c.b16 %v2846, %v2845
  %v2914 = vpack.c.b16 %v2848, %v2847
  %v2915 = vpack.c.b16 %v2850, %v2849
  %v2916 = vpack.c.b16 %v2852, %v2851
  %v2917 = vpack.c.b16 %v2854, %v2853
  %v2918 = vpack.c.b16 %v2856, %v2855
  %v2919 = vpack.c.b16 %v2858, %v2857
  %v2920 = vpack.c.b16 %v2860, %v2859
  %v2921 = vpack.c.b16 %v2862, %v2861
  %v2922 = vpack.c.b16 %v2864, %v2863
  %v2923 = vpack.c.b16 %v2866, %v2865
  %v2924 = vpack.c.b16 %v2868, %v2867
  %v2925 = vpack.c.b16 %v2870, %v2869
  %v2926 = vpack.c.b16 %v2872, %v2871
  %v2927 = vpack.c.b16 %v2874, %v2873
  %v2928 = vpack.c.b16 %v2876, %v2875
  %v2929 = vpack.c.b16 %v2878, %v2877
  %v2930 = vpack.c.b16 %v2880, %v2879
  %v2931 = vpack.c.b16 %v2882, %v2881
  %v2932 = vpack.c.b16 %v2884, %v2883
  %v2933 = vpack.c.b16 %v2886, %v2885
  %v2934 = vpack.c.b16 %v2888, %v2887
  %v2935 = vpack.c.b16 %v2890, %v2889
  %v2936 = vpack.c.b16 %v2892, %v2891
  %v2937 = vpack.c.b16 %v2894, %v2893
  %v2938 = vpack.c.b16 %v2896, %v2895
  %v2939 = vpack.c.b16 %v2898, %v2897
  %v2940 = vpack.c.b16 %v2900, %v2899
  %v2941 = vpack.c.b16 %v2902, %v2901
  %v2942 = vpack.c.b16 %v2904, %v2903
  %v2943 = vpack.c.b16 %v2906, %v2905
  %v2944 = vpack.c.b16 %v2908, %v2907
  %v2982 = vsel %vm97, %v2537, 0
  %v2985 = vsel %vm97, %v2542, 0
  %v2988 = vsel %vm97, %v2547, 0
  %v2991 = vsel %vm97, %v2552, 0
  %v2994 = vsel %vm97, %v2557, 0
  %v2997 = vsel %vm97, %v2562, 0
  %v3000 = vsel %vm97, %v2567, 0
  %v3003 = vsel %vm97, %v2572, 0
  %v3006 = vsel %vm97, %v2577, 0
  %v3009 = vsel %vm97, %v2582, 0
  %v3012 = vsel %vm97, %v2587, 0
  %v3015 = vsel %vm97, %v2592, 0
  %v3018 = vsel %vm97, %v2597, 0
  %v3021 = vsel %vm97, %v2602, 0
  %v3024 = vsel %vm97, %v2607, 0
  %v3027 = vsel %vm97, %v2612, 0
  %v3030 = vsel %vm97, %v2617, 0
  %v3033 = vsel %vm97, %v2622, 0
  %v3036 = vsel %vm97, %v2627, 0
  %v3039 = vsel %vm97, %v2632, 0
  %v3042 = vsel %vm97, %v2637, 0
  %v3045 = vsel %vm97, %v2642, 0
  %v3048 = vsel %vm97, %v2647, 0
  %v3051 = vsel %vm97, %v2652, 0
  %v3054 = vsel %vm97, %v2657, 0
  %v3057 = vsel %vm97, %v2662, 0
  %v3060 = vsel %vm97, %v2667, 0
  %v3063 = vsel %vm97, %v2672, 0
  %v3066 = vsel %vm97, %v2677, 0
  %v3069 = vsel %vm97, %v2682, 0
  %v3072 = vsel %vm97, %v2687, 0
  %v3075 = vsel %vm97, %v2692, 0
  %3077 = vmatpush.bf16.msra.mxu0 %v2916
  %3078 = vmatpush.bf16.msra.mxu0 %v2915
  %3079 = vmatpush.bf16.msra.mxu0 %v2914
  %3080 = vmatpush.bf16.msra.mxu0 %v2913
  %3081 = vmatpush.bf16.msra.mxu0 %v2912
  %3082 = vmatpush.bf16.msra.mxu0 %v2911
  %3083 = vmatpush.bf16.msra.mxu0 %v2910
  %3084 = vmatpush.bf16.msra.mxu0 %v2909
  %3085 = vmatmul.bf16.gmra.mxu0 %v2533
  %v3086 = vpop.f32.mrf.mxu0
  %v3087 = vadd.f32 0.0, %v3086
  %v3088 = vpop.f32.mrf.mxu0
  %v3089 = vadd.f32 0.0, %v3088
  %3090 = vmatmul.bf16.gmra.mxu0 %v2538
  %v3091 = vpop.f32.mrf.mxu0
  %v3092 = vadd.f32 0.0, %v3091
  %v3093 = vpop.f32.mrf.mxu0
  %v3094 = vadd.f32 0.0, %v3093
  %3095 = vmatmul.bf16.gmra.mxu0 %v2543
  %v3096 = vpop.f32.mrf.mxu0
  %v3097 = vadd.f32 0.0, %v3096
  %v3098 = vpop.f32.mrf.mxu0
  %v3099 = vadd.f32 0.0, %v3098
  %3100 = vmatmul.bf16.gmra.mxu0 %v2548
  %v3101 = vpop.f32.mrf.mxu0
  %v3102 = vadd.f32 0.0, %v3101
  %v3103 = vpop.f32.mrf.mxu0
  %v3104 = vadd.f32 0.0, %v3103
  %3105 = vmatmul.bf16.gmra.mxu0 %v2553
  %v3106 = vpop.f32.mrf.mxu0
  %v3107 = vadd.f32 0.0, %v3106
  %v3108 = vpop.f32.mrf.mxu0
  %v3109 = vadd.f32 0.0, %v3108
  %3110 = vmatmul.bf16.gmra.mxu0 %v2558
  %v3111 = vpop.f32.mrf.mxu0
  %v3112 = vadd.f32 0.0, %v3111
  %v3113 = vpop.f32.mrf.mxu0
  %v3114 = vadd.f32 0.0, %v3113
  %3115 = vmatmul.bf16.gmra.mxu0 %v2563
  %v3116 = vpop.f32.mrf.mxu0
  %v3117 = vadd.f32 0.0, %v3116
  %v3118 = vpop.f32.mrf.mxu0
  %v3119 = vadd.f32 0.0, %v3118
  %3120 = vmatmul.bf16.gmra.mxu0 %v2568
  %v3121 = vpop.f32.mrf.mxu0
  %v3122 = vadd.f32 0.0, %v3121
  %v3123 = vpop.f32.mrf.mxu0
  %v3124 = vadd.f32 0.0, %v3123
  %3125 = vmatmul.bf16.gmra.mxu0 %v2573
  %v3126 = vpop.f32.mrf.mxu0
  %v3127 = vadd.f32 0.0, %v3126
  %v3128 = vpop.f32.mrf.mxu0
  %v3129 = vadd.f32 0.0, %v3128
  %3130 = vmatmul.bf16.gmra.mxu0 %v2578
  %v3131 = vpop.f32.mrf.mxu0
  %v3132 = vadd.f32 0.0, %v3131
  %v3133 = vpop.f32.mrf.mxu0
  %v3134 = vadd.f32 0.0, %v3133
  %3135 = vmatmul.bf16.gmra.mxu0 %v2583
  %v3136 = vpop.f32.mrf.mxu0
  %v3137 = vadd.f32 0.0, %v3136
  %v3138 = vpop.f32.mrf.mxu0
  %v3139 = vadd.f32 0.0, %v3138
  %3140 = vmatmul.bf16.gmra.mxu0 %v2588
  %v3141 = vpop.f32.mrf.mxu0
  %v3142 = vadd.f32 0.0, %v3141
  %v3143 = vpop.f32.mrf.mxu0
  %v3144 = vadd.f32 0.0, %v3143
  %3145 = vmatmul.bf16.gmra.mxu0 %v2593
  %v3146 = vpop.f32.mrf.mxu0
  %v3147 = vadd.f32 0.0, %v3146
  %v3148 = vpop.f32.mrf.mxu0
  %v3149 = vadd.f32 0.0, %v3148
  %3150 = vmatmul.bf16.gmra.mxu0 %v2598
  %v3151 = vpop.f32.mrf.mxu0
  %v3152 = vadd.f32 0.0, %v3151
  %v3153 = vpop.f32.mrf.mxu0
  %v3154 = vadd.f32 0.0, %v3153
  %3155 = vmatmul.bf16.gmra.mxu0 %v2603
  %v3156 = vpop.f32.mrf.mxu0
  %v3157 = vadd.f32 0.0, %v3156
  %v3158 = vpop.f32.mrf.mxu0
  %v3159 = vadd.f32 0.0, %v3158
  %3160 = vmatmul.bf16.gmra.mxu0 %v2608
  %v3161 = vpop.f32.mrf.mxu0
  %v3162 = vadd.f32 0.0, %v3161
  %v3163 = vpop.f32.mrf.mxu0
  %v3164 = vadd.f32 0.0, %v3163
  %3165 = vmatmul.bf16.gmra.mxu0 %v2613
  %v3166 = vpop.f32.mrf.mxu0
  %v3167 = vadd.f32 0.0, %v3166
  %v3168 = vpop.f32.mrf.mxu0
  %v3169 = vadd.f32 0.0, %v3168
  %3170 = vmatmul.bf16.gmra.mxu0 %v2618
  %v3171 = vpop.f32.mrf.mxu0
  %v3172 = vadd.f32 0.0, %v3171
  %v3173 = vpop.f32.mrf.mxu0
  %v3174 = vadd.f32 0.0, %v3173
  %3175 = vmatmul.bf16.gmra.mxu0 %v2623
  %v3176 = vpop.f32.mrf.mxu0
  %v3177 = vadd.f32 0.0, %v3176
  %v3178 = vpop.f32.mrf.mxu0
  %v3179 = vadd.f32 0.0, %v3178
  %3180 = vmatmul.bf16.gmra.mxu0 %v2628
  %v3181 = vpop.f32.mrf.mxu0
  %v3182 = vadd.f32 0.0, %v3181
  %v3183 = vpop.f32.mrf.mxu0
  %v3184 = vadd.f32 0.0, %v3183
  %3185 = vmatmul.bf16.gmra.mxu0 %v2633
  %v3186 = vpop.f32.mrf.mxu0
  %v3187 = vadd.f32 0.0, %v3186
  %v3188 = vpop.f32.mrf.mxu0
  %v3189 = vadd.f32 0.0, %v3188
  %3190 = vmatmul.bf16.gmra.mxu0 %v2638
  %v3191 = vpop.f32.mrf.mxu0
  %v3192 = vadd.f32 0.0, %v3191
  %v3193 = vpop.f32.mrf.mxu0
  %v3194 = vadd.f32 0.0, %v3193
  %3195 = vmatmul.bf16.gmra.mxu0 %v2643
  %v3196 = vpop.f32.mrf.mxu0
  %v3197 = vadd.f32 0.0, %v3196
  %v3198 = vpop.f32.mrf.mxu0
  %v3199 = vadd.f32 0.0, %v3198
  %3200 = vmatmul.bf16.gmra.mxu0 %v2648
  %v3201 = vpop.f32.mrf.mxu0
  %v3202 = vadd.f32 0.0, %v3201
  %v3203 = vpop.f32.mrf.mxu0
  %v3204 = vadd.f32 0.0, %v3203
  %3205 = vmatmul.bf16.gmra.mxu0 %v2653
  %v3206 = vpop.f32.mrf.mxu0
  %v3207 = vadd.f32 0.0, %v3206
  %v3208 = vpop.f32.mrf.mxu0
  %v3209 = vadd.f32 0.0, %v3208
  %3210 = vmatmul.bf16.gmra.mxu0 %v2658
  %v3211 = vpop.f32.mrf.mxu0
  %v3212 = vadd.f32 0.0, %v3211
  %v3213 = vpop.f32.mrf.mxu0
  %v3214 = vadd.f32 0.0, %v3213
  %3215 = vmatmul.bf16.gmra.mxu0 %v2663
  %v3216 = vpop.f32.mrf.mxu0
  %v3217 = vadd.f32 0.0, %v3216
  %v3218 = vpop.f32.mrf.mxu0
  %v3219 = vadd.f32 0.0, %v3218
  %3220 = vmatmul.bf16.gmra.mxu0 %v2668
  %v3221 = vpop.f32.mrf.mxu0
  %v3222 = vadd.f32 0.0, %v3221
  %v3223 = vpop.f32.mrf.mxu0
  %v3224 = vadd.f32 0.0, %v3223
  %3225 = vmatmul.bf16.gmra.mxu0 %v2673
  %v3226 = vpop.f32.mrf.mxu0
  %v3227 = vadd.f32 0.0, %v3226
  %v3228 = vpop.f32.mrf.mxu0
  %v3229 = vadd.f32 0.0, %v3228
  %3230 = vmatmul.bf16.gmra.mxu0 %v2678
  %v3231 = vpop.f32.mrf.mxu0
  %v3232 = vadd.f32 0.0, %v3231
  %v3233 = vpop.f32.mrf.mxu0
  %v3234 = vadd.f32 0.0, %v3233
  %3235 = vmatmul.bf16.gmra.mxu0 %v2683
  %v3236 = vpop.f32.mrf.mxu0
  %v3237 = vadd.f32 0.0, %v3236
  %v3238 = vpop.f32.mrf.mxu0
  %v3239 = vadd.f32 0.0, %v3238
  %3240 = vmatmul.bf16.gmra.mxu0 %v2688
  %v3241 = vpop.f32.mrf.mxu0
  %v3242 = vadd.f32 0.0, %v3241
  %v3243 = vpop.f32.mrf.mxu0
  %v3244 = vadd.f32 0.0, %v3243
  %3245 = vdwg.mxu0
  %3246 = vmatpush.bf16.msra.mxu0 %v2924
  %3247 = vmatpush.bf16.msra.mxu0 %v2923
  %3248 = vmatpush.bf16.msra.mxu0 %v2922
  %3249 = vmatpush.bf16.msra.mxu0 %v2921
  %3250 = vmatpush.bf16.msra.mxu0 %v2920
  %3251 = vmatpush.bf16.msra.mxu0 %v2919
  %3252 = vmatpush.bf16.msra.mxu0 %v2918
  %3253 = vmatpush.bf16.msra.mxu0 %v2917
  %3254 = vmatmul.bf16.gmra.mxu0 %v2534
  %v3255 = vpop.f32.mrf.mxu0
  %v3256 = vadd.f32 %v3087, %v3255
  %v3257 = vpop.f32.mrf.mxu0
  %v3258 = vadd.f32 %v3089, %v3257
  %3259 = vmatmul.bf16.gmra.mxu0 %v2539
  %v3260 = vpop.f32.mrf.mxu0
  %v3261 = vadd.f32 %v3092, %v3260
  %v3262 = vpop.f32.mrf.mxu0
  %v3263 = vadd.f32 %v3094, %v3262
  %3264 = vmatmul.bf16.gmra.mxu0 %v2544
  %v3265 = vpop.f32.mrf.mxu0
  %v3266 = vadd.f32 %v3097, %v3265
  %v3267 = vpop.f32.mrf.mxu0
  %v3268 = vadd.f32 %v3099, %v3267
  %3269 = vmatmul.bf16.gmra.mxu0 %v2549
  %v3270 = vpop.f32.mrf.mxu0
  %v3271 = vadd.f32 %v3102, %v3270
  %v3272 = vpop.f32.mrf.mxu0
  %v3273 = vadd.f32 %v3104, %v3272
  %3274 = vmatmul.bf16.gmra.mxu0 %v2554
  %v3275 = vpop.f32.mrf.mxu0
  %v3276 = vadd.f32 %v3107, %v3275
  %v3277 = vpop.f32.mrf.mxu0
  %v3278 = vadd.f32 %v3109, %v3277
  %3279 = vmatmul.bf16.gmra.mxu0 %v2559
  %v3280 = vpop.f32.mrf.mxu0
  %v3281 = vadd.f32 %v3112, %v3280
  %v3282 = vpop.f32.mrf.mxu0
  %v3283 = vadd.f32 %v3114, %v3282
  %3284 = vmatmul.bf16.gmra.mxu0 %v2564
  %v3285 = vpop.f32.mrf.mxu0
  %v3286 = vadd.f32 %v3117, %v3285
  %v3287 = vpop.f32.mrf.mxu0
  %v3288 = vadd.f32 %v3119, %v3287
  %3289 = vmatmul.bf16.gmra.mxu0 %v2569
  %v3290 = vpop.f32.mrf.mxu0
  %v3291 = vadd.f32 %v3122, %v3290
  %v3292 = vpop.f32.mrf.mxu0
  %v3293 = vadd.f32 %v3124, %v3292
  %3294 = vmatmul.bf16.gmra.mxu0 %v2574
  %v3295 = vpop.f32.mrf.mxu0
  %v3296 = vadd.f32 %v3127, %v3295
  %v3297 = vpop.f32.mrf.mxu0
  %v3298 = vadd.f32 %v3129, %v3297
  %3299 = vmatmul.bf16.gmra.mxu0 %v2579
  %v3300 = vpop.f32.mrf.mxu0
  %v3301 = vadd.f32 %v3132, %v3300
  %v3302 = vpop.f32.mrf.mxu0
  %v3303 = vadd.f32 %v3134, %v3302
  %3304 = vmatmul.bf16.gmra.mxu0 %v2584
  %v3305 = vpop.f32.mrf.mxu0
  %v3306 = vadd.f32 %v3137, %v3305
  %v3307 = vpop.f32.mrf.mxu0
  %v3308 = vadd.f32 %v3139, %v3307
  %3309 = vmatmul.bf16.gmra.mxu0 %v2589
  %v3310 = vpop.f32.mrf.mxu0
  %v3311 = vadd.f32 %v3142, %v3310
  %v3312 = vpop.f32.mrf.mxu0
  %v3313 = vadd.f32 %v3144, %v3312
  %3314 = vmatmul.bf16.gmra.mxu0 %v2594
  %v3315 = vpop.f32.mrf.mxu0
  %v3316 = vadd.f32 %v3147, %v3315
  %v3317 = vpop.f32.mrf.mxu0
  %v3318 = vadd.f32 %v3149, %v3317
  %3319 = vmatmul.bf16.gmra.mxu0 %v2599
  %v3320 = vpop.f32.mrf.mxu0
  %v3321 = vadd.f32 %v3152, %v3320
  %v3322 = vpop.f32.mrf.mxu0
  %v3323 = vadd.f32 %v3154, %v3322
  %3324 = vmatmul.bf16.gmra.mxu0 %v2604
  %v3325 = vpop.f32.mrf.mxu0
  %v3326 = vadd.f32 %v3157, %v3325
  %v3327 = vpop.f32.mrf.mxu0
  %v3328 = vadd.f32 %v3159, %v3327
  %3329 = vmatmul.bf16.gmra.mxu0 %v2609
  %v3330 = vpop.f32.mrf.mxu0
  %v3331 = vadd.f32 %v3162, %v3330
  %v3332 = vpop.f32.mrf.mxu0
  %v3333 = vadd.f32 %v3164, %v3332
  %3334 = vmatmul.bf16.gmra.mxu0 %v2614
  %v3335 = vpop.f32.mrf.mxu0
  %v3336 = vadd.f32 %v3167, %v3335
  %v3337 = vpop.f32.mrf.mxu0
  %v3338 = vadd.f32 %v3169, %v3337
  %3339 = vmatmul.bf16.gmra.mxu0 %v2619
  %v3340 = vpop.f32.mrf.mxu0
  %v3341 = vadd.f32 %v3172, %v3340
  %v3342 = vpop.f32.mrf.mxu0
  %v3343 = vadd.f32 %v3174, %v3342
  %3344 = vmatmul.bf16.gmra.mxu0 %v2624
  %v3345 = vpop.f32.mrf.mxu0
  %v3346 = vadd.f32 %v3177, %v3345
  %v3347 = vpop.f32.mrf.mxu0
  %v3348 = vadd.f32 %v3179, %v3347
  %3349 = vmatmul.bf16.gmra.mxu0 %v2629
  %v3350 = vpop.f32.mrf.mxu0
  %v3351 = vadd.f32 %v3182, %v3350
  %v3352 = vpop.f32.mrf.mxu0
  %v3353 = vadd.f32 %v3184, %v3352
  %3354 = vmatmul.bf16.gmra.mxu0 %v2634
  %v3355 = vpop.f32.mrf.mxu0
  %v3356 = vadd.f32 %v3187, %v3355
  %v3357 = vpop.f32.mrf.mxu0
  %v3358 = vadd.f32 %v3189, %v3357
  %3359 = vmatmul.bf16.gmra.mxu0 %v2639
  %v3360 = vpop.f32.mrf.mxu0
  %v3361 = vadd.f32 %v3192, %v3360
  %v3362 = vpop.f32.mrf.mxu0
  %v3363 = vadd.f32 %v3194, %v3362
  %3364 = vmatmul.bf16.gmra.mxu0 %v2644
  %v3365 = vpop.f32.mrf.mxu0
  %v3366 = vadd.f32 %v3197, %v3365
  %v3367 = vpop.f32.mrf.mxu0
  %v3368 = vadd.f32 %v3199, %v3367
  %3369 = vmatmul.bf16.gmra.mxu0 %v2649
  %v3370 = vpop.f32.mrf.mxu0
  %v3371 = vadd.f32 %v3202, %v3370
  %v3372 = vpop.f32.mrf.mxu0
  %v3373 = vadd.f32 %v3204, %v3372
  %3374 = vmatmul.bf16.gmra.mxu0 %v2654
  %v3375 = vpop.f32.mrf.mxu0
  %v3376 = vadd.f32 %v3207, %v3375
  %v3377 = vpop.f32.mrf.mxu0
  %v3378 = vadd.f32 %v3209, %v3377
  %3379 = vmatmul.bf16.gmra.mxu0 %v2659
  %v3380 = vpop.f32.mrf.mxu0
  %v3381 = vadd.f32 %v3212, %v3380
  %v3382 = vpop.f32.mrf.mxu0
  %v3383 = vadd.f32 %v3214, %v3382
  %3384 = vmatmul.bf16.gmra.mxu0 %v2664
  %v3385 = vpop.f32.mrf.mxu0
  %v3386 = vadd.f32 %v3217, %v3385
  %v3387 = vpop.f32.mrf.mxu0
  %v3388 = vadd.f32 %v3219, %v3387
  %3389 = vmatmul.bf16.gmra.mxu0 %v2669
  %v3390 = vpop.f32.mrf.mxu0
  %v3391 = vadd.f32 %v3222, %v3390
  %v3392 = vpop.f32.mrf.mxu0
  %v3393 = vadd.f32 %v3224, %v3392
  %3394 = vmatmul.bf16.gmra.mxu0 %v2674
  %v3395 = vpop.f32.mrf.mxu0
  %v3396 = vadd.f32 %v3227, %v3395
  %v3397 = vpop.f32.mrf.mxu0
  %v3398 = vadd.f32 %v3229, %v3397
  %3399 = vmatmul.bf16.gmra.mxu0 %v2679
  %v3400 = vpop.f32.mrf.mxu0
  %v3401 = vadd.f32 %v3232, %v3400
  %v3402 = vpop.f32.mrf.mxu0
  %v3403 = vadd.f32 %v3234, %v3402
  %3404 = vmatmul.bf16.gmra.mxu0 %v2684
  %v3405 = vpop.f32.mrf.mxu0
  %v3406 = vadd.f32 %v3237, %v3405
  %v3407 = vpop.f32.mrf.mxu0
  %v3408 = vadd.f32 %v3239, %v3407
  %3409 = vmatmul.bf16.gmra.mxu0 %v2689
  %v3410 = vpop.f32.mrf.mxu0
  %v3411 = vadd.f32 %v3242, %v3410
  %v3412 = vpop.f32.mrf.mxu0
  %v3413 = vadd.f32 %v3244, %v3412
  %3414 = vdwg.mxu0
  %3415 = vmatpush.bf16.msra.mxu0 %v2932
  %3416 = vmatpush.bf16.msra.mxu0 %v2931
  %3417 = vmatpush.bf16.msra.mxu0 %v2930
  %3418 = vmatpush.bf16.msra.mxu0 %v2929
  %3419 = vmatpush.bf16.msra.mxu0 %v2928
  %3420 = vmatpush.bf16.msra.mxu0 %v2927
  %3421 = vmatpush.bf16.msra.mxu0 %v2926
  %3422 = vmatpush.bf16.msra.mxu0 %v2925
  %3423 = vmatmul.bf16.gmra.mxu0 %v2535
  %v3424 = vpop.f32.mrf.mxu0
  %v3425 = vadd.f32 %v3256, %v3424
  %v3426 = vpop.f32.mrf.mxu0
  %v3427 = vadd.f32 %v3258, %v3426
  %3428 = vmatmul.bf16.gmra.mxu0 %v2540
  %v3429 = vpop.f32.mrf.mxu0
  %v3430 = vadd.f32 %v3261, %v3429
  %v3431 = vpop.f32.mrf.mxu0
  %v3432 = vadd.f32 %v3263, %v3431
  %3433 = vmatmul.bf16.gmra.mxu0 %v2545
  %v3434 = vpop.f32.mrf.mxu0
  %v3435 = vadd.f32 %v3266, %v3434
  %v3436 = vpop.f32.mrf.mxu0
  %v3437 = vadd.f32 %v3268, %v3436
  %3438 = vmatmul.bf16.gmra.mxu0 %v2550
  %v3439 = vpop.f32.mrf.mxu0
  %v3440 = vadd.f32 %v3271, %v3439
  %v3441 = vpop.f32.mrf.mxu0
  %v3442 = vadd.f32 %v3273, %v3441
  %3443 = vmatmul.bf16.gmra.mxu0 %v2555
  %v3444 = vpop.f32.mrf.mxu0
  %v3445 = vadd.f32 %v3276, %v3444
  %v3446 = vpop.f32.mrf.mxu0
  %v3447 = vadd.f32 %v3278, %v3446
  %3448 = vmatmul.bf16.gmra.mxu0 %v2560
  %v3449 = vpop.f32.mrf.mxu0
  %v3450 = vadd.f32 %v3281, %v3449
  %v3451 = vpop.f32.mrf.mxu0
  %v3452 = vadd.f32 %v3283, %v3451
  %3453 = vmatmul.bf16.gmra.mxu0 %v2565
  %v3454 = vpop.f32.mrf.mxu0
  %v3455 = vadd.f32 %v3286, %v3454
  %v3456 = vpop.f32.mrf.mxu0
  %v3457 = vadd.f32 %v3288, %v3456
  %3458 = vmatmul.bf16.gmra.mxu0 %v2570
  %v3459 = vpop.f32.mrf.mxu0
  %v3460 = vadd.f32 %v3291, %v3459
  %v3461 = vpop.f32.mrf.mxu0
  %v3462 = vadd.f32 %v3293, %v3461
  %3463 = vmatmul.bf16.gmra.mxu0 %v2575
  %v3464 = vpop.f32.mrf.mxu0
  %v3465 = vadd.f32 %v3296, %v3464
  %v3466 = vpop.f32.mrf.mxu0
  %v3467 = vadd.f32 %v3298, %v3466
  %3468 = vmatmul.bf16.gmra.mxu0 %v2580
  %v3469 = vpop.f32.mrf.mxu0
  %v3470 = vadd.f32 %v3301, %v3469
  %v3471 = vpop.f32.mrf.mxu0
  %v3472 = vadd.f32 %v3303, %v3471
  %3473 = vmatmul.bf16.gmra.mxu0 %v2585
  %v3474 = vpop.f32.mrf.mxu0
  %v3475 = vadd.f32 %v3306, %v3474
  %v3476 = vpop.f32.mrf.mxu0
  %v3477 = vadd.f32 %v3308, %v3476
  %3478 = vmatmul.bf16.gmra.mxu0 %v2590
  %v3479 = vpop.f32.mrf.mxu0
  %v3480 = vadd.f32 %v3311, %v3479
  %v3481 = vpop.f32.mrf.mxu0
  %v3482 = vadd.f32 %v3313, %v3481
  %3483 = vmatmul.bf16.gmra.mxu0 %v2595
  %v3484 = vpop.f32.mrf.mxu0
  %v3485 = vadd.f32 %v3316, %v3484
  %v3486 = vpop.f32.mrf.mxu0
  %v3487 = vadd.f32 %v3318, %v3486
  %3488 = vmatmul.bf16.gmra.mxu0 %v2600
  %v3489 = vpop.f32.mrf.mxu0
  %v3490 = vadd.f32 %v3321, %v3489
  %v3491 = vpop.f32.mrf.mxu0
  %v3492 = vadd.f32 %v3323, %v3491
  %3493 = vmatmul.bf16.gmra.mxu0 %v2605
  %v3494 = vpop.f32.mrf.mxu0
  %v3495 = vadd.f32 %v3326, %v3494
  %v3496 = vpop.f32.mrf.mxu0
  %v3497 = vadd.f32 %v3328, %v3496
  %3498 = vmatmul.bf16.gmra.mxu0 %v2610
  %v3499 = vpop.f32.mrf.mxu0
  %v3500 = vadd.f32 %v3331, %v3499
  %v3501 = vpop.f32.mrf.mxu0
  %v3502 = vadd.f32 %v3333, %v3501
  %3503 = vmatmul.bf16.gmra.mxu0 %v2615
  %v3504 = vpop.f32.mrf.mxu0
  %v3505 = vadd.f32 %v3336, %v3504
  %v3506 = vpop.f32.mrf.mxu0
  %v3507 = vadd.f32 %v3338, %v3506
  %3508 = vmatmul.bf16.gmra.mxu0 %v2620
  %v3509 = vpop.f32.mrf.mxu0
  %v3510 = vadd.f32 %v3341, %v3509
  %v3511 = vpop.f32.mrf.mxu0
  %v3512 = vadd.f32 %v3343, %v3511
  %3513 = vmatmul.bf16.gmra.mxu0 %v2625
  %v3514 = vpop.f32.mrf.mxu0
  %v3515 = vadd.f32 %v3346, %v3514
  %v3516 = vpop.f32.mrf.mxu0
  %v3517 = vadd.f32 %v3348, %v3516
  %3518 = vmatmul.bf16.gmra.mxu0 %v2630
  %v3519 = vpop.f32.mrf.mxu0
  %v3520 = vadd.f32 %v3351, %v3519
  %v3521 = vpop.f32.mrf.mxu0
  %v3522 = vadd.f32 %v3353, %v3521
  %3523 = vmatmul.bf16.gmra.mxu0 %v2635
  %v3524 = vpop.f32.mrf.mxu0
  %v3525 = vadd.f32 %v3356, %v3524
  %v3526 = vpop.f32.mrf.mxu0
  %v3527 = vadd.f32 %v3358, %v3526
  %3528 = vmatmul.bf16.gmra.mxu0 %v2640
  %v3529 = vpop.f32.mrf.mxu0
  %v3530 = vadd.f32 %v3361, %v3529
  %v3531 = vpop.f32.mrf.mxu0
  %v3532 = vadd.f32 %v3363, %v3531
  %3533 = vmatmul.bf16.gmra.mxu0 %v2645
  %v3534 = vpop.f32.mrf.mxu0
  %v3535 = vadd.f32 %v3366, %v3534
  %v3536 = vpop.f32.mrf.mxu0
  %v3537 = vadd.f32 %v3368, %v3536
  %3538 = vmatmul.bf16.gmra.mxu0 %v2650
  %v3539 = vpop.f32.mrf.mxu0
  %v3540 = vadd.f32 %v3371, %v3539
  %v3541 = vpop.f32.mrf.mxu0
  %v3542 = vadd.f32 %v3373, %v3541
  %3543 = vmatmul.bf16.gmra.mxu0 %v2655
  %v3544 = vpop.f32.mrf.mxu0
  %v3545 = vadd.f32 %v3376, %v3544
  %v3546 = vpop.f32.mrf.mxu0
  %v3547 = vadd.f32 %v3378, %v3546
  %3548 = vmatmul.bf16.gmra.mxu0 %v2660
  %v3549 = vpop.f32.mrf.mxu0
  %v3550 = vadd.f32 %v3381, %v3549
  %v3551 = vpop.f32.mrf.mxu0
  %v3552 = vadd.f32 %v3383, %v3551
  %3553 = vmatmul.bf16.gmra.mxu0 %v2665
  %v3554 = vpop.f32.mrf.mxu0
  %v3555 = vadd.f32 %v3386, %v3554
  %v3556 = vpop.f32.mrf.mxu0
  %v3557 = vadd.f32 %v3388, %v3556
  %3558 = vmatmul.bf16.gmra.mxu0 %v2670
  %v3559 = vpop.f32.mrf.mxu0
  %v3560 = vadd.f32 %v3391, %v3559
  %v3561 = vpop.f32.mrf.mxu0
  %v3562 = vadd.f32 %v3393, %v3561
  %3563 = vmatmul.bf16.gmra.mxu0 %v2675
  %v3564 = vpop.f32.mrf.mxu0
  %v3565 = vadd.f32 %v3396, %v3564
  %v3566 = vpop.f32.mrf.mxu0
  %v3567 = vadd.f32 %v3398, %v3566
  %3568 = vmatmul.bf16.gmra.mxu0 %v2680
  %v3569 = vpop.f32.mrf.mxu0
  %v3570 = vadd.f32 %v3401, %v3569
  %v3571 = vpop.f32.mrf.mxu0
  %v3572 = vadd.f32 %v3403, %v3571
  %3573 = vmatmul.bf16.gmra.mxu0 %v2685
  %v3574 = vpop.f32.mrf.mxu0
  %v3575 = vadd.f32 %v3406, %v3574
  %v3576 = vpop.f32.mrf.mxu0
  %v3577 = vadd.f32 %v3408, %v3576
  %3578 = vmatmul.bf16.gmra.mxu0 %v2690
  %v3579 = vpop.f32.mrf.mxu0
  %v3580 = vadd.f32 %v3411, %v3579
  %v3581 = vpop.f32.mrf.mxu0
  %v3582 = vadd.f32 %v3413, %v3581
  %3583 = vdwg.mxu0
  %3584 = vmatpush.bf16.msra.mxu0 %v2940
  %3585 = vmatpush.bf16.msra.mxu0 %v2939
  %3586 = vmatpush.bf16.msra.mxu0 %v2938
  %3587 = vmatpush.bf16.msra.mxu0 %v2937
  %3588 = vmatpush.bf16.msra.mxu0 %v2936
  %3589 = vmatpush.bf16.msra.mxu0 %v2935
  %3590 = vmatpush.bf16.msra.mxu0 %v2934
  %3591 = vmatpush.bf16.msra.mxu0 %v2933
  %3592 = vmatmul.bf16.gmra.mxu0 %v2536
  %v3593 = vpop.f32.mrf.mxu0
  %v3594 = vadd.f32 %v3425, %v3593
  %v3595 = vpop.f32.mrf.mxu0
  %v3596 = vadd.f32 %v3427, %v3595
  %3597 = vmatmul.bf16.gmra.mxu0 %v2541
  %v3598 = vpop.f32.mrf.mxu0
  %v3599 = vadd.f32 %v3430, %v3598
  %v3600 = vpop.f32.mrf.mxu0
  %v3601 = vadd.f32 %v3432, %v3600
  %3602 = vmatmul.bf16.gmra.mxu0 %v2546
  %v3603 = vpop.f32.mrf.mxu0
  %v3604 = vadd.f32 %v3435, %v3603
  %v3605 = vpop.f32.mrf.mxu0
  %v3606 = vadd.f32 %v3437, %v3605
  %3607 = vmatmul.bf16.gmra.mxu0 %v2551
  %v3608 = vpop.f32.mrf.mxu0
  %v3609 = vadd.f32 %v3440, %v3608
  %v3610 = vpop.f32.mrf.mxu0
  %v3611 = vadd.f32 %v3442, %v3610
  %3612 = vmatmul.bf16.gmra.mxu0 %v2556
  %v3613 = vpop.f32.mrf.mxu0
  %v3614 = vadd.f32 %v3445, %v3613
  %v3615 = vpop.f32.mrf.mxu0
  %v3616 = vadd.f32 %v3447, %v3615
  %3617 = vmatmul.bf16.gmra.mxu0 %v2561
  %v3618 = vpop.f32.mrf.mxu0
  %v3619 = vadd.f32 %v3450, %v3618
  %v3620 = vpop.f32.mrf.mxu0
  %v3621 = vadd.f32 %v3452, %v3620
  %3622 = vmatmul.bf16.gmra.mxu0 %v2566
  %v3623 = vpop.f32.mrf.mxu0
  %v3624 = vadd.f32 %v3455, %v3623
  %v3625 = vpop.f32.mrf.mxu0
  %v3626 = vadd.f32 %v3457, %v3625
  %3627 = vmatmul.bf16.gmra.mxu0 %v2571
  %v3628 = vpop.f32.mrf.mxu0
  %v3629 = vadd.f32 %v3460, %v3628
  %v3630 = vpop.f32.mrf.mxu0
  %v3631 = vadd.f32 %v3462, %v3630
  %3632 = vmatmul.bf16.gmra.mxu0 %v2576
  %v3633 = vpop.f32.mrf.mxu0
  %v3634 = vadd.f32 %v3465, %v3633
  %v3635 = vpop.f32.mrf.mxu0
  %v3636 = vadd.f32 %v3467, %v3635
  %3637 = vmatmul.bf16.gmra.mxu0 %v2581
  %v3638 = vpop.f32.mrf.mxu0
  %v3639 = vadd.f32 %v3470, %v3638
  %v3640 = vpop.f32.mrf.mxu0
  %v3641 = vadd.f32 %v3472, %v3640
  %3642 = vmatmul.bf16.gmra.mxu0 %v2586
  %v3643 = vpop.f32.mrf.mxu0
  %v3644 = vadd.f32 %v3475, %v3643
  %v3645 = vpop.f32.mrf.mxu0
  %v3646 = vadd.f32 %v3477, %v3645
  %3647 = vmatmul.bf16.gmra.mxu0 %v2591
  %v3648 = vpop.f32.mrf.mxu0
  %v3649 = vadd.f32 %v3480, %v3648
  %v3650 = vpop.f32.mrf.mxu0
  %v3651 = vadd.f32 %v3482, %v3650
  %3652 = vmatmul.bf16.gmra.mxu0 %v2596
  %v3653 = vpop.f32.mrf.mxu0
  %v3654 = vadd.f32 %v3485, %v3653
  %v3655 = vpop.f32.mrf.mxu0
  %v3656 = vadd.f32 %v3487, %v3655
  %3657 = vmatmul.bf16.gmra.mxu0 %v2601
  %v3658 = vpop.f32.mrf.mxu0
  %v3659 = vadd.f32 %v3490, %v3658
  %v3660 = vpop.f32.mrf.mxu0
  %v3661 = vadd.f32 %v3492, %v3660
  %3662 = vmatmul.bf16.gmra.mxu0 %v2606
  %v3663 = vpop.f32.mrf.mxu0
  %v3664 = vadd.f32 %v3495, %v3663
  %v3665 = vpop.f32.mrf.mxu0
  %v3666 = vadd.f32 %v3497, %v3665
  %3667 = vmatmul.bf16.gmra.mxu0 %v2611
  %v3668 = vpop.f32.mrf.mxu0
  %v3669 = vadd.f32 %v3500, %v3668
  %v3670 = vpop.f32.mrf.mxu0
  %v3671 = vadd.f32 %v3502, %v3670
  %3672 = vmatmul.bf16.gmra.mxu0 %v2616
  %v3673 = vpop.f32.mrf.mxu0
  %v3674 = vadd.f32 %v3505, %v3673
  %v3675 = vpop.f32.mrf.mxu0
  %v3676 = vadd.f32 %v3507, %v3675
  %3677 = vmatmul.bf16.gmra.mxu0 %v2621
  %v3678 = vpop.f32.mrf.mxu0
  %v3679 = vadd.f32 %v3510, %v3678
  %v3680 = vpop.f32.mrf.mxu0
  %v3681 = vadd.f32 %v3512, %v3680
  %3682 = vmatmul.bf16.gmra.mxu0 %v2626
  %v3683 = vpop.f32.mrf.mxu0
  %v3684 = vadd.f32 %v3515, %v3683
  %v3685 = vpop.f32.mrf.mxu0
  %v3686 = vadd.f32 %v3517, %v3685
  %3687 = vmatmul.bf16.gmra.mxu0 %v2631
  %v3688 = vpop.f32.mrf.mxu0
  %v3689 = vadd.f32 %v3520, %v3688
  %v3690 = vpop.f32.mrf.mxu0
  %v3691 = vadd.f32 %v3522, %v3690
  %3692 = vmatmul.bf16.gmra.mxu0 %v2636
  %v3693 = vpop.f32.mrf.mxu0
  %v3694 = vadd.f32 %v3525, %v3693
  %v3695 = vpop.f32.mrf.mxu0
  %v3696 = vadd.f32 %v3527, %v3695
  %3697 = vmatmul.bf16.gmra.mxu0 %v2641
  %v3698 = vpop.f32.mrf.mxu0
  %v3699 = vadd.f32 %v3530, %v3698
  %v3700 = vpop.f32.mrf.mxu0
  %v3701 = vadd.f32 %v3532, %v3700
  %3702 = vmatmul.bf16.gmra.mxu0 %v2646
  %v3703 = vpop.f32.mrf.mxu0
  %v3704 = vadd.f32 %v3535, %v3703
  %v3705 = vpop.f32.mrf.mxu0
  %v3706 = vadd.f32 %v3537, %v3705
  %3707 = vmatmul.bf16.gmra.mxu0 %v2651
  %v3708 = vpop.f32.mrf.mxu0
  %v3709 = vadd.f32 %v3540, %v3708
  %v3710 = vpop.f32.mrf.mxu0
  %v3711 = vadd.f32 %v3542, %v3710
  %3712 = vmatmul.bf16.gmra.mxu0 %v2656
  %v3713 = vpop.f32.mrf.mxu0
  %v3714 = vadd.f32 %v3545, %v3713
  %v3715 = vpop.f32.mrf.mxu0
  %v3716 = vadd.f32 %v3547, %v3715
  %3717 = vmatmul.bf16.gmra.mxu0 %v2661
  %v3718 = vpop.f32.mrf.mxu0
  %v3719 = vadd.f32 %v3550, %v3718
  %v3720 = vpop.f32.mrf.mxu0
  %v3721 = vadd.f32 %v3552, %v3720
  %3722 = vmatmul.bf16.gmra.mxu0 %v2666
  %v3723 = vpop.f32.mrf.mxu0
  %v3724 = vadd.f32 %v3555, %v3723
  %v3725 = vpop.f32.mrf.mxu0
  %v3726 = vadd.f32 %v3557, %v3725
  %3727 = vmatmul.bf16.gmra.mxu0 %v2671
  %v3728 = vpop.f32.mrf.mxu0
  %v3729 = vadd.f32 %v3560, %v3728
  %v3730 = vpop.f32.mrf.mxu0
  %v3731 = vadd.f32 %v3562, %v3730
  %3732 = vmatmul.bf16.gmra.mxu0 %v2676
  %v3733 = vpop.f32.mrf.mxu0
  %v3734 = vadd.f32 %v3565, %v3733
  %v3735 = vpop.f32.mrf.mxu0
  %v3736 = vadd.f32 %v3567, %v3735
  %3737 = vmatmul.bf16.gmra.mxu0 %v2681
  %v3738 = vpop.f32.mrf.mxu0
  %v3739 = vadd.f32 %v3570, %v3738
  %v3740 = vpop.f32.mrf.mxu0
  %v3741 = vadd.f32 %v3572, %v3740
  %3742 = vmatmul.bf16.gmra.mxu0 %v2686
  %v3743 = vpop.f32.mrf.mxu0
  %v3744 = vadd.f32 %v3575, %v3743
  %v3745 = vpop.f32.mrf.mxu0
  %v3746 = vadd.f32 %v3577, %v3745
  %3747 = vmatmul.bf16.gmra.mxu0 %v2691
  %v3748 = vpop.f32.mrf.mxu0
  %v3749 = vadd.f32 %v3580, %v3748
  %v3750 = vpop.f32.mrf.mxu0
  %v3751 = vadd.f32 %v3582, %v3750
  %3752 = vdwg.mxu0
  %3753 = vmatpush.bf16.msra.mxu0 0
  %3754 = vmatpush.bf16.msra.mxu0 0
  %3755 = vmatpush.bf16.msra.mxu0 0
  %3756 = vmatpush.bf16.msra.mxu0 0
  %3757 = vmatpush.bf16.msra.mxu0 %v2944
  %3758 = vmatpush.bf16.msra.mxu0 %v2943
  %3759 = vmatpush.bf16.msra.mxu0 %v2942
  %3760 = vmatpush.bf16.msra.mxu0 %v2941
  %3761 = vmatmul.bf16.gmra.mxu0 %v2982
  %v3762 = vpop.f32.mrf.mxu0
  %v3763 = vadd.f32 %v3594, %v3762
  %v3764 = vpop.f32.mrf.mxu0
  %v3765 = vadd.f32 %v3596, %v3764
  %3766 = vmatmul.bf16.gmra.mxu0 %v2985
  %v3767 = vpop.f32.mrf.mxu0
  %v3768 = vadd.f32 %v3599, %v3767
  %v3769 = vpop.f32.mrf.mxu0
  %v3770 = vadd.f32 %v3601, %v3769
  %3771 = vmatmul.bf16.gmra.mxu0 %v2988
  %v3772 = vpop.f32.mrf.mxu0
  %v3773 = vadd.f32 %v3604, %v3772
  %v3774 = vpop.f32.mrf.mxu0
  %v3775 = vadd.f32 %v3606, %v3774
  %3776 = vmatmul.bf16.gmra.mxu0 %v2991
  %v3777 = vpop.f32.mrf.mxu0
  %v3778 = vadd.f32 %v3609, %v3777
  %v3779 = vpop.f32.mrf.mxu0
  %v3780 = vadd.f32 %v3611, %v3779
  %3781 = vmatmul.bf16.gmra.mxu0 %v2994
  %v3782 = vpop.f32.mrf.mxu0
  %v3783 = vadd.f32 %v3614, %v3782
  %v3784 = vpop.f32.mrf.mxu0
  %v3785 = vadd.f32 %v3616, %v3784
  %3786 = vmatmul.bf16.gmra.mxu0 %v2997
  %v3787 = vpop.f32.mrf.mxu0
  %v3788 = vadd.f32 %v3619, %v3787
  %v3789 = vpop.f32.mrf.mxu0
  %v3790 = vadd.f32 %v3621, %v3789
  %3791 = vmatmul.bf16.gmra.mxu0 %v3000
  %v3792 = vpop.f32.mrf.mxu0
  %v3793 = vadd.f32 %v3624, %v3792
  %v3794 = vpop.f32.mrf.mxu0
  %v3795 = vadd.f32 %v3626, %v3794
  %3796 = vmatmul.bf16.gmra.mxu0 %v3003
  %v3797 = vpop.f32.mrf.mxu0
  %v3798 = vadd.f32 %v3629, %v3797
  %v3799 = vpop.f32.mrf.mxu0
  %v3800 = vadd.f32 %v3631, %v3799
  %3801 = vmatmul.bf16.gmra.mxu0 %v3006
  %v3802 = vpop.f32.mrf.mxu0
  %v3803 = vadd.f32 %v3634, %v3802
  %v3804 = vpop.f32.mrf.mxu0
  %v3805 = vadd.f32 %v3636, %v3804
  %3806 = vmatmul.bf16.gmra.mxu0 %v3009
  %v3807 = vpop.f32.mrf.mxu0
  %v3808 = vadd.f32 %v3639, %v3807
  %v3809 = vpop.f32.mrf.mxu0
  %v3810 = vadd.f32 %v3641, %v3809
  %3811 = vmatmul.bf16.gmra.mxu0 %v3012
  %v3812 = vpop.f32.mrf.mxu0
  %v3813 = vadd.f32 %v3644, %v3812
  %v3814 = vpop.f32.mrf.mxu0
  %v3815 = vadd.f32 %v3646, %v3814
  %3816 = vmatmul.bf16.gmra.mxu0 %v3015
  %v3817 = vpop.f32.mrf.mxu0
  %v3818 = vadd.f32 %v3649, %v3817
  %v3819 = vpop.f32.mrf.mxu0
  %v3820 = vadd.f32 %v3651, %v3819
  %3821 = vmatmul.bf16.gmra.mxu0 %v3018
  %v3822 = vpop.f32.mrf.mxu0
  %v3823 = vadd.f32 %v3654, %v3822
  %v3824 = vpop.f32.mrf.mxu0
  %v3825 = vadd.f32 %v3656, %v3824
  %3826 = vmatmul.bf16.gmra.mxu0 %v3021
  %v3827 = vpop.f32.mrf.mxu0
  %v3828 = vadd.f32 %v3659, %v3827
  %v3829 = vpop.f32.mrf.mxu0
  %v3830 = vadd.f32 %v3661, %v3829
  %3831 = vmatmul.bf16.gmra.mxu0 %v3024
  %v3832 = vpop.f32.mrf.mxu0
  %v3833 = vadd.f32 %v3664, %v3832
  %v3834 = vpop.f32.mrf.mxu0
  %v3835 = vadd.f32 %v3666, %v3834
  %3836 = vmatmul.bf16.gmra.mxu0 %v3027
  %v3837 = vpop.f32.mrf.mxu0
  %v3838 = vadd.f32 %v3669, %v3837
  %v3839 = vpop.f32.mrf.mxu0
  %v3840 = vadd.f32 %v3671, %v3839
  %3841 = vmatmul.bf16.gmra.mxu0 %v3030
  %v3842 = vpop.f32.mrf.mxu0
  %v3843 = vadd.f32 %v3674, %v3842
  %v3844 = vpop.f32.mrf.mxu0
  %v3845 = vadd.f32 %v3676, %v3844
  %3846 = vmatmul.bf16.gmra.mxu0 %v3033
  %v3847 = vpop.f32.mrf.mxu0
  %v3848 = vadd.f32 %v3679, %v3847
  %v3849 = vpop.f32.mrf.mxu0
  %v3850 = vadd.f32 %v3681, %v3849
  %3851 = vmatmul.bf16.gmra.mxu0 %v3036
  %v3852 = vpop.f32.mrf.mxu0
  %v3853 = vadd.f32 %v3684, %v3852
  %v3854 = vpop.f32.mrf.mxu0
  %v3855 = vadd.f32 %v3686, %v3854
  %3856 = vmatmul.bf16.gmra.mxu0 %v3039
  %v3857 = vpop.f32.mrf.mxu0
  %v3858 = vadd.f32 %v3689, %v3857
  %v3859 = vpop.f32.mrf.mxu0
  %v3860 = vadd.f32 %v3691, %v3859
  %3861 = vmatmul.bf16.gmra.mxu0 %v3042
  %v3862 = vpop.f32.mrf.mxu0
  %v3863 = vadd.f32 %v3694, %v3862
  %v3864 = vpop.f32.mrf.mxu0
  %v3865 = vadd.f32 %v3696, %v3864
  %3866 = vmatmul.bf16.gmra.mxu0 %v3045
  %v3867 = vpop.f32.mrf.mxu0
  %v3868 = vadd.f32 %v3699, %v3867
  %v3869 = vpop.f32.mrf.mxu0
  %v3870 = vadd.f32 %v3701, %v3869
  %3871 = vmatmul.bf16.gmra.mxu0 %v3048
  %v3872 = vpop.f32.mrf.mxu0
  %v3873 = vadd.f32 %v3704, %v3872
  %v3874 = vpop.f32.mrf.mxu0
  %v3875 = vadd.f32 %v3706, %v3874
  %3876 = vmatmul.bf16.gmra.mxu0 %v3051
  %v3877 = vpop.f32.mrf.mxu0
  %v3878 = vadd.f32 %v3709, %v3877
  %v3879 = vpop.f32.mrf.mxu0
  %v3880 = vadd.f32 %v3711, %v3879
  %3881 = vmatmul.bf16.gmra.mxu0 %v3054
  %v3882 = vpop.f32.mrf.mxu0
  %v3883 = vadd.f32 %v3714, %v3882
  %v3884 = vpop.f32.mrf.mxu0
  %v3885 = vadd.f32 %v3716, %v3884
  %3886 = vmatmul.bf16.gmra.mxu0 %v3057
  %v3887 = vpop.f32.mrf.mxu0
  %v3888 = vadd.f32 %v3719, %v3887
  %v3889 = vpop.f32.mrf.mxu0
  %v3890 = vadd.f32 %v3721, %v3889
  %3891 = vmatmul.bf16.gmra.mxu0 %v3060
  %v3892 = vpop.f32.mrf.mxu0
  %v3893 = vadd.f32 %v3724, %v3892
  %v3894 = vpop.f32.mrf.mxu0
  %v3895 = vadd.f32 %v3726, %v3894
  %3896 = vmatmul.bf16.gmra.mxu0 %v3063
  %v3897 = vpop.f32.mrf.mxu0
  %v3898 = vadd.f32 %v3729, %v3897
  %v3899 = vpop.f32.mrf.mxu0
  %v3900 = vadd.f32 %v3731, %v3899
  %3901 = vmatmul.bf16.gmra.mxu0 %v3066
  %v3902 = vpop.f32.mrf.mxu0
  %v3903 = vadd.f32 %v3734, %v3902
  %v3904 = vpop.f32.mrf.mxu0
  %v3905 = vadd.f32 %v3736, %v3904
  %3906 = vmatmul.bf16.gmra.mxu0 %v3069
  %v3907 = vpop.f32.mrf.mxu0
  %v3908 = vadd.f32 %v3739, %v3907
  %v3909 = vpop.f32.mrf.mxu0
  %v3910 = vadd.f32 %v3741, %v3909
  %3911 = vmatmul.bf16.gmra.mxu0 %v3072
  %v3912 = vpop.f32.mrf.mxu0
  %v3913 = vadd.f32 %v3744, %v3912
  %v3914 = vpop.f32.mrf.mxu0
  %v3915 = vadd.f32 %v3746, %v3914
  %3916 = vmatmul.bf16.gmra.mxu0 %v3075
  %v3917 = vpop.f32.mrf.mxu0
  %v3918 = vadd.f32 %v3749, %v3917
  %v3919 = vpop.f32.mrf.mxu0
  %v3920 = vadd.f32 %v3751, %v3919
  %3921 = vdwg.mxu0
  %v3922 = vsel %vm97, %v3763, 0.0
  %v3923 = vsel %vm97, %v3765, 0.0
  %v3924 = vadd.f32 %v3922, %v3923
  %v3925 = vsel %vm97, %v3768, 0.0
  %v3926 = vadd.f32 %v3924, %v3925
  %v3927 = vsel %vm97, %v3770, 0.0
  %v3928 = vadd.f32 %v3926, %v3927
  %v3929 = vsel %vm97, %v3773, 0.0
  %v3930 = vadd.f32 %v3928, %v3929
  %v3931 = vsel %vm97, %v3775, 0.0
  %v3932 = vadd.f32 %v3930, %v3931
  %v3933 = vsel %vm97, %v3778, 0.0
  %v3934 = vadd.f32 %v3932, %v3933
  %v3935 = vsel %vm97, %v3780, 0.0
  %v3936 = vadd.f32 %v3934, %v3935
  %v3937 = vsel %vm97, %v3783, 0.0
  %v3938 = vadd.f32 %v3936, %v3937
  %v3939 = vsel %vm97, %v3785, 0.0
  %v3940 = vadd.f32 %v3938, %v3939
  %v3941 = vsel %vm97, %v3788, 0.0
  %v3942 = vadd.f32 %v3940, %v3941
  %v3943 = vsel %vm97, %v3790, 0.0
  %v3944 = vadd.f32 %v3942, %v3943
  %v3945 = vsel %vm97, %v3793, 0.0
  %v3946 = vadd.f32 %v3944, %v3945
  %v3947 = vsel %vm97, %v3795, 0.0
  %v3948 = vadd.f32 %v3946, %v3947
  %v3949 = vsel %vm97, %v3798, 0.0
  %v3950 = vadd.f32 %v3948, %v3949
  %v3951 = vsel %vm97, %v3800, 0.0
  %v3952 = vadd.f32 %v3950, %v3951
  %v3953 = vsel %vm97, %v3803, 0.0
  %v3954 = vadd.f32 %v3952, %v3953
  %v3955 = vsel %vm97, %v3805, 0.0
  %v3956 = vadd.f32 %v3954, %v3955
  %v3957 = vsel %vm97, %v3808, 0.0
  %v3958 = vadd.f32 %v3956, %v3957
  %v3959 = vsel %vm97, %v3810, 0.0
  %v3960 = vadd.f32 %v3958, %v3959
  %v3961 = vsel %vm97, %v3813, 0.0
  %v3962 = vadd.f32 %v3960, %v3961
  %v3963 = vsel %vm97, %v3815, 0.0
  %v3964 = vadd.f32 %v3962, %v3963
  %v3965 = vsel %vm97, %v3818, 0.0
  %v3966 = vadd.f32 %v3964, %v3965
  %v3967 = vsel %vm97, %v3820, 0.0
  %v3968 = vadd.f32 %v3966, %v3967
  %v3969 = vsel %vm97, %v3823, 0.0
  %v3970 = vadd.f32 %v3968, %v3969
  %v3971 = vsel %vm97, %v3825, 0.0
  %v3972 = vadd.f32 %v3970, %v3971
  %v3973 = vsel %vm97, %v3828, 0.0
  %v3974 = vadd.f32 %v3972, %v3973
  %v3975 = vsel %vm97, %v3830, 0.0
  %v3976 = vadd.f32 %v3974, %v3975
  %v3977 = vsel %vm97, %v3833, 0.0
  %v3978 = vadd.f32 %v3976, %v3977
  %v3979 = vsel %vm97, %v3835, 0.0
  %v3980 = vadd.f32 %v3978, %v3979
  %v3981 = vsel %vm97, %v3838, 0.0
  %v3982 = vadd.f32 %v3980, %v3981
  %v3983 = vsel %vm97, %v3840, 0.0
  %v3984 = vadd.f32 %v3982, %v3983
  %v3985 = vsel %vm97, %v3843, 0.0
  %v3986 = vadd.f32 %v3984, %v3985
  %v3987 = vsel %vm97, %v3845, 0.0
  %v3988 = vadd.f32 %v3986, %v3987
  %v3989 = vsel %vm97, %v3848, 0.0
  %v3990 = vadd.f32 %v3988, %v3989
  %v3991 = vsel %vm97, %v3850, 0.0
  %v3992 = vadd.f32 %v3990, %v3991
  %v3993 = vsel %vm97, %v3853, 0.0
  %v3994 = vadd.f32 %v3992, %v3993
  %v3995 = vsel %vm97, %v3855, 0.0
  %v3996 = vadd.f32 %v3994, %v3995
  %v3997 = vsel %vm97, %v3858, 0.0
  %v3998 = vadd.f32 %v3996, %v3997
  %v3999 = vsel %vm97, %v3860, 0.0
  %v4000 = vadd.f32 %v3998, %v3999
  %v4001 = vsel %vm97, %v3863, 0.0
  %v4002 = vadd.f32 %v4000, %v4001
  %v4003 = vsel %vm97, %v3865, 0.0
  %v4004 = vadd.f32 %v4002, %v4003
  %v4005 = vsel %vm97, %v3868, 0.0
  %v4006 = vadd.f32 %v4004, %v4005
  %v4007 = vsel %vm97, %v3870, 0.0
  %v4008 = vadd.f32 %v4006, %v4007
  %v4009 = vsel %vm97, %v3873, 0.0
  %v4010 = vadd.f32 %v4008, %v4009
  %v4011 = vsel %vm97, %v3875, 0.0
  %v4012 = vadd.f32 %v4010, %v4011
  %v4013 = vsel %vm97, %v3878, 0.0
  %v4014 = vadd.f32 %v4012, %v4013
  %v4015 = vsel %vm97, %v3880, 0.0
  %v4016 = vadd.f32 %v4014, %v4015
  %v4017 = vsel %vm97, %v3883, 0.0
  %v4018 = vadd.f32 %v4016, %v4017
  %v4019 = vsel %vm97, %v3885, 0.0
  %v4020 = vadd.f32 %v4018, %v4019
  %v4021 = vsel %vm97, %v3888, 0.0
  %v4022 = vadd.f32 %v4020, %v4021
  %v4023 = vsel %vm97, %v3890, 0.0
  %v4024 = vadd.f32 %v4022, %v4023
  %v4025 = vsel %vm97, %v3893, 0.0
  %v4026 = vadd.f32 %v4024, %v4025
  %v4027 = vsel %vm97, %v3895, 0.0
  %v4028 = vadd.f32 %v4026, %v4027
  %v4029 = vsel %vm97, %v3898, 0.0
  %v4030 = vadd.f32 %v4028, %v4029
  %v4031 = vsel %vm97, %v3900, 0.0
  %v4032 = vadd.f32 %v4030, %v4031
  %v4033 = vsel %vm97, %v3903, 0.0
  %v4034 = vadd.f32 %v4032, %v4033
  %v4035 = vsel %vm97, %v3905, 0.0
  %v4036 = vadd.f32 %v4034, %v4035
  %v4037 = vsel %vm97, %v3908, 0.0
  %v4038 = vadd.f32 %v4036, %v4037
  %v4039 = vsel %vm97, %v3910, 0.0
  %v4040 = vadd.f32 %v4038, %v4039
  %v4041 = vsel %vm97, %v3913, 0.0
  %v4042 = vadd.f32 %v4040, %v4041
  %v4043 = vsel %vm97, %v3915, 0.0
  %v4044 = vadd.f32 %v4042, %v4043
  %v4045 = vsel %vm97, %v3918, 0.0
  %v4046 = vadd.f32 %v4044, %v4045
  %v4047 = vsel %vm97, %v3920, 0.0
  %v4048 = vadd.f32 %v4046, %v4047
  %v4049 = vrot.slane %v4048, 4
  %v4050 = vadd.f32 %v4048, %v4049
  %v4051 = vrot.slane %v4050, 2
  %v4052 = vadd.f32 %v4050, %v4051
  %v4053 = vrot.slane %v4052, 1
  %v4054 = vadd.f32 %v4052, %v4053
  %v4055 = vmul.f32 %v4054, 0.001953125
  %v4056 = vmul.f32 %v3763, %v3763
  %v4057 = vmul.f32 %v3765, %v3765
  %v4058 = vmul.f32 %v3768, %v3768
  %v4059 = vmul.f32 %v3770, %v3770
  %v4060 = vmul.f32 %v3773, %v3773
  %v4061 = vmul.f32 %v3775, %v3775
  %v4062 = vmul.f32 %v3778, %v3778
  %v4063 = vmul.f32 %v3780, %v3780
  %v4064 = vmul.f32 %v3783, %v3783
  %v4065 = vmul.f32 %v3785, %v3785
  %v4066 = vmul.f32 %v3788, %v3788
  %v4067 = vmul.f32 %v3790, %v3790
  %v4068 = vmul.f32 %v3793, %v3793
  %v4069 = vmul.f32 %v3795, %v3795
  %v4070 = vmul.f32 %v3798, %v3798
  %v4071 = vmul.f32 %v3800, %v3800
  %v4072 = vmul.f32 %v3803, %v3803
  %v4073 = vmul.f32 %v3805, %v3805
  %v4074 = vmul.f32 %v3808, %v3808
  %v4075 = vmul.f32 %v3810, %v3810
  %v4076 = vmul.f32 %v3813, %v3813
  %v4077 = vmul.f32 %v3815, %v3815
  %v4078 = vmul.f32 %v3818, %v3818
  %v4079 = vmul.f32 %v3820, %v3820
  %v4080 = vmul.f32 %v3823, %v3823
  %v4081 = vmul.f32 %v3825, %v3825
  %v4082 = vmul.f32 %v3828, %v3828
  %v4083 = vmul.f32 %v3830, %v3830
  %v4084 = vmul.f32 %v3833, %v3833
  %v4085 = vmul.f32 %v3835, %v3835
  %v4086 = vmul.f32 %v3838, %v3838
  %v4087 = vmul.f32 %v3840, %v3840
  %v4088 = vmul.f32 %v3843, %v3843
  %v4089 = vmul.f32 %v3845, %v3845
  %v4090 = vmul.f32 %v3848, %v3848
  %v4091 = vmul.f32 %v3850, %v3850
  %v4092 = vmul.f32 %v3853, %v3853
  %v4093 = vmul.f32 %v3855, %v3855
  %v4094 = vmul.f32 %v3858, %v3858
  %v4095 = vmul.f32 %v3860, %v3860
  %v4096 = vmul.f32 %v3863, %v3863
  %v4097 = vmul.f32 %v3865, %v3865
  %v4098 = vmul.f32 %v3868, %v3868
  %v4099 = vmul.f32 %v3870, %v3870
  %v4100 = vmul.f32 %v3873, %v3873
  %v4101 = vmul.f32 %v3875, %v3875
  %v4102 = vmul.f32 %v3878, %v3878
  %v4103 = vmul.f32 %v3880, %v3880
  %v4104 = vmul.f32 %v3883, %v3883
  %v4105 = vmul.f32 %v3885, %v3885
  %v4106 = vmul.f32 %v3888, %v3888
  %v4107 = vmul.f32 %v3890, %v3890
  %v4108 = vmul.f32 %v3893, %v3893
  %v4109 = vmul.f32 %v3895, %v3895
  %v4110 = vmul.f32 %v3898, %v3898
  %v4111 = vmul.f32 %v3900, %v3900
  %v4112 = vmul.f32 %v3903, %v3903
  %v4113 = vmul.f32 %v3905, %v3905
  %v4114 = vmul.f32 %v3908, %v3908
  %v4115 = vmul.f32 %v3910, %v3910
  %v4116 = vmul.f32 %v3913, %v3913
  %v4117 = vmul.f32 %v3915, %v3915
  %v4118 = vmul.f32 %v3918, %v3918
  %v4119 = vmul.f32 %v3920, %v3920
  %v4120 = vsel %vm97, %v4056, 0.0
  %v4121 = vsel %vm97, %v4057, 0.0
  %v4122 = vadd.f32 %v4120, %v4121
  %v4123 = vsel %vm97, %v4058, 0.0
  %v4124 = vadd.f32 %v4122, %v4123
  %v4125 = vsel %vm97, %v4059, 0.0
  %v4126 = vadd.f32 %v4124, %v4125
  %v4127 = vsel %vm97, %v4060, 0.0
  %v4128 = vadd.f32 %v4126, %v4127
  %v4129 = vsel %vm97, %v4061, 0.0
  %v4130 = vadd.f32 %v4128, %v4129
  %v4131 = vsel %vm97, %v4062, 0.0
  %v4132 = vadd.f32 %v4130, %v4131
  %v4133 = vsel %vm97, %v4063, 0.0
  %v4134 = vadd.f32 %v4132, %v4133
  %v4135 = vsel %vm97, %v4064, 0.0
  %v4136 = vadd.f32 %v4134, %v4135
  %v4137 = vsel %vm97, %v4065, 0.0
  %v4138 = vadd.f32 %v4136, %v4137
  %v4139 = vsel %vm97, %v4066, 0.0
  %v4140 = vadd.f32 %v4138, %v4139
  %v4141 = vsel %vm97, %v4067, 0.0
  %v4142 = vadd.f32 %v4140, %v4141
  %v4143 = vsel %vm97, %v4068, 0.0
  %v4144 = vadd.f32 %v4142, %v4143
  %v4145 = vsel %vm97, %v4069, 0.0
  %v4146 = vadd.f32 %v4144, %v4145
  %v4147 = vsel %vm97, %v4070, 0.0
  %v4148 = vadd.f32 %v4146, %v4147
  %v4149 = vsel %vm97, %v4071, 0.0
  %v4150 = vadd.f32 %v4148, %v4149
  %v4151 = vsel %vm97, %v4072, 0.0
  %v4152 = vadd.f32 %v4150, %v4151
  %v4153 = vsel %vm97, %v4073, 0.0
  %v4154 = vadd.f32 %v4152, %v4153
  %v4155 = vsel %vm97, %v4074, 0.0
  %v4156 = vadd.f32 %v4154, %v4155
  %v4157 = vsel %vm97, %v4075, 0.0
  %v4158 = vadd.f32 %v4156, %v4157
  %v4159 = vsel %vm97, %v4076, 0.0
  %v4160 = vadd.f32 %v4158, %v4159
  %v4161 = vsel %vm97, %v4077, 0.0
  %v4162 = vadd.f32 %v4160, %v4161
  %v4163 = vsel %vm97, %v4078, 0.0
  %v4164 = vadd.f32 %v4162, %v4163
  %v4165 = vsel %vm97, %v4079, 0.0
  %v4166 = vadd.f32 %v4164, %v4165
  %v4167 = vsel %vm97, %v4080, 0.0
  %v4168 = vadd.f32 %v4166, %v4167
  %v4169 = vsel %vm97, %v4081, 0.0
  %v4170 = vadd.f32 %v4168, %v4169
  %v4171 = vsel %vm97, %v4082, 0.0
  %v4172 = vadd.f32 %v4170, %v4171
  %v4173 = vsel %vm97, %v4083, 0.0
  %v4174 = vadd.f32 %v4172, %v4173
  %v4175 = vsel %vm97, %v4084, 0.0
  %v4176 = vadd.f32 %v4174, %v4175
  %v4177 = vsel %vm97, %v4085, 0.0
  %v4178 = vadd.f32 %v4176, %v4177
  %v4179 = vsel %vm97, %v4086, 0.0
  %v4180 = vadd.f32 %v4178, %v4179
  %v4181 = vsel %vm97, %v4087, 0.0
  %v4182 = vadd.f32 %v4180, %v4181
  %v4183 = vsel %vm97, %v4088, 0.0
  %v4184 = vadd.f32 %v4182, %v4183
  %v4185 = vsel %vm97, %v4089, 0.0
  %v4186 = vadd.f32 %v4184, %v4185
  %v4187 = vsel %vm97, %v4090, 0.0
  %v4188 = vadd.f32 %v4186, %v4187
  %v4189 = vsel %vm97, %v4091, 0.0
  %v4190 = vadd.f32 %v4188, %v4189
  %v4191 = vsel %vm97, %v4092, 0.0
  %v4192 = vadd.f32 %v4190, %v4191
  %v4193 = vsel %vm97, %v4093, 0.0
  %v4194 = vadd.f32 %v4192, %v4193
  %v4195 = vsel %vm97, %v4094, 0.0
  %v4196 = vadd.f32 %v4194, %v4195
  %v4197 = vsel %vm97, %v4095, 0.0
  %v4198 = vadd.f32 %v4196, %v4197
  %v4199 = vsel %vm97, %v4096, 0.0
  %v4200 = vadd.f32 %v4198, %v4199
  %v4201 = vsel %vm97, %v4097, 0.0
  %v4202 = vadd.f32 %v4200, %v4201
  %v4203 = vsel %vm97, %v4098, 0.0
  %v4204 = vadd.f32 %v4202, %v4203
  %v4205 = vsel %vm97, %v4099, 0.0
  %v4206 = vadd.f32 %v4204, %v4205
  %v4207 = vsel %vm97, %v4100, 0.0
  %v4208 = vadd.f32 %v4206, %v4207
  %v4209 = vsel %vm97, %v4101, 0.0
  %v4210 = vadd.f32 %v4208, %v4209
  %v4211 = vsel %vm97, %v4102, 0.0
  %v4212 = vadd.f32 %v4210, %v4211
  %v4213 = vsel %vm97, %v4103, 0.0
  %v4214 = vadd.f32 %v4212, %v4213
  %v4215 = vsel %vm97, %v4104, 0.0
  %v4216 = vadd.f32 %v4214, %v4215
  %v4217 = vsel %vm97, %v4105, 0.0
  %v4218 = vadd.f32 %v4216, %v4217
  %v4219 = vsel %vm97, %v4106, 0.0
  %v4220 = vadd.f32 %v4218, %v4219
  %v4221 = vsel %vm97, %v4107, 0.0
  %v4222 = vadd.f32 %v4220, %v4221
  %v4223 = vsel %vm97, %v4108, 0.0
  %v4224 = vadd.f32 %v4222, %v4223
  %v4225 = vsel %vm97, %v4109, 0.0
  %v4226 = vadd.f32 %v4224, %v4225
  %v4227 = vsel %vm97, %v4110, 0.0
  %v4228 = vadd.f32 %v4226, %v4227
  %v4229 = vsel %vm97, %v4111, 0.0
  %v4230 = vadd.f32 %v4228, %v4229
  %v4231 = vsel %vm97, %v4112, 0.0
  %v4232 = vadd.f32 %v4230, %v4231
  %v4233 = vsel %vm97, %v4113, 0.0
  %v4234 = vadd.f32 %v4232, %v4233
  %v4235 = vsel %vm97, %v4114, 0.0
  %v4236 = vadd.f32 %v4234, %v4235
  %v4237 = vsel %vm97, %v4115, 0.0
  %v4238 = vadd.f32 %v4236, %v4237
  %v4239 = vsel %vm97, %v4116, 0.0
  %v4240 = vadd.f32 %v4238, %v4239
  %v4241 = vsel %vm97, %v4117, 0.0
  %v4242 = vadd.f32 %v4240, %v4241
  %v4243 = vsel %vm97, %v4118, 0.0
  %v4244 = vadd.f32 %v4242, %v4243
  %v4245 = vsel %vm97, %v4119, 0.0
  %v4246 = vadd.f32 %v4244, %v4245
  %v4247 = vrot.slane %v4246, 4
  %v4248 = vadd.f32 %v4246, %v4247
  %v4249 = vrot.slane %v4248, 2
  %v4250 = vadd.f32 %v4248, %v4249
  %v4251 = vrot.slane %v4250, 1
  %v4252 = vadd.f32 %v4250, %v4251
  %v4253 = vmul.f32 %v4252, 0.001953125
  %v4254 = vmul.f32 %v4055, %v4055
  %v4255 = vsub.f32 %v4253, %v4254
  %v4256 = vsub.f32 %v3763, %v4055
  %v4257 = vsub.f32 %v3765, %v4055
  %v4258 = vsub.f32 %v3768, %v4055
  %v4259 = vsub.f32 %v3770, %v4055
  %v4260 = vsub.f32 %v3773, %v4055
  %v4261 = vsub.f32 %v3775, %v4055
  %v4262 = vsub.f32 %v3778, %v4055
  %v4263 = vsub.f32 %v3780, %v4055
  %v4264 = vsub.f32 %v3783, %v4055
  %v4265 = vsub.f32 %v3785, %v4055
  %v4266 = vsub.f32 %v3788, %v4055
  %v4267 = vsub.f32 %v3790, %v4055
  %v4268 = vsub.f32 %v3793, %v4055
  %v4269 = vsub.f32 %v3795, %v4055
  %v4270 = vsub.f32 %v3798, %v4055
  %v4271 = vsub.f32 %v3800, %v4055
  %v4272 = vsub.f32 %v3803, %v4055
  %v4273 = vsub.f32 %v3805, %v4055
  %v4274 = vsub.f32 %v3808, %v4055
  %v4275 = vsub.f32 %v3810, %v4055
  %v4276 = vsub.f32 %v3813, %v4055
  %v4277 = vsub.f32 %v3815, %v4055
  %v4278 = vsub.f32 %v3818, %v4055
  %v4279 = vsub.f32 %v3820, %v4055
  %v4280 = vsub.f32 %v3823, %v4055
  %v4281 = vsub.f32 %v3825, %v4055
  %v4282 = vsub.f32 %v3828, %v4055
  %v4283 = vsub.f32 %v3830, %v4055
  %v4284 = vsub.f32 %v3833, %v4055
  %v4285 = vsub.f32 %v3835, %v4055
  %v4286 = vsub.f32 %v3838, %v4055
  %v4287 = vsub.f32 %v3840, %v4055
  %v4288 = vsub.f32 %v3843, %v4055
  %v4289 = vsub.f32 %v3845, %v4055
  %v4290 = vsub.f32 %v3848, %v4055
  %v4291 = vsub.f32 %v3850, %v4055
  %v4292 = vsub.f32 %v3853, %v4055
  %v4293 = vsub.f32 %v3855, %v4055
  %v4294 = vsub.f32 %v3858, %v4055
  %v4295 = vsub.f32 %v3860, %v4055
  %v4296 = vsub.f32 %v3863, %v4055
  %v4297 = vsub.f32 %v3865, %v4055
  %v4298 = vsub.f32 %v3868, %v4055
  %v4299 = vsub.f32 %v3870, %v4055
  %v4300 = vsub.f32 %v3873, %v4055
  %v4301 = vsub.f32 %v3875, %v4055
  %v4302 = vsub.f32 %v3878, %v4055
  %v4303 = vsub.f32 %v3880, %v4055
  %v4304 = vsub.f32 %v3883, %v4055
  %v4305 = vsub.f32 %v3885, %v4055
  %v4306 = vsub.f32 %v3888, %v4055
  %v4307 = vsub.f32 %v3890, %v4055
  %v4308 = vsub.f32 %v3893, %v4055
  %v4309 = vsub.f32 %v3895, %v4055
  %v4310 = vsub.f32 %v3898, %v4055
  %v4311 = vsub.f32 %v3900, %v4055
  %v4312 = vsub.f32 %v3903, %v4055
  %v4313 = vsub.f32 %v3905, %v4055
  %v4314 = vsub.f32 %v3908, %v4055
  %v4315 = vsub.f32 %v3910, %v4055
  %v4316 = vsub.f32 %v3913, %v4055
  %v4317 = vsub.f32 %v3915, %v4055
  %v4318 = vsub.f32 %v3918, %v4055
  %v4319 = vsub.f32 %v3920, %v4055
  %v4320 = vadd.f32 %v4255, 1e-05
  %v4321 = vrsqrt.pop %v4320
  %v4322 = vmul.f32 %v4321, %v4320
  %v4323 = vmul.f32 %v4322, %v4321
  %v4324 = vmul.f32 0.5, %v4323
  %v4325 = vsub.f32 1.5, %v4324
  %v4326 = vmul.f32 %v4321, %v4325
  %vm4327 = vweird.f32 %v4320
  %vm4328 = vweird.f32 %v4321
  %vm4329 = vmor %vm4327, %vm4328
  %v4330 = vsel %vm4329, %v4321, %v4326
  %v4331 = vld [vmem:[%s4] sm:$0x1]
  %v4332 = vmul.f32 %v4330, %v4331
  %v4333 = vperm.slane %v4332, 0
  %v4334 = vmul.f32 %v4256, %v4333
  %v4335 = vmul.f32 %v4257, %v4333
  %v4336 = vmul.f32 %v4258, %v4333
  %v4337 = vmul.f32 %v4259, %v4333
  %v4338 = vmul.f32 %v4260, %v4333
  %v4339 = vmul.f32 %v4261, %v4333
  %v4340 = vmul.f32 %v4262, %v4333
  %v4341 = vmul.f32 %v4263, %v4333
  %v4342 = vmul.f32 %v4264, %v4333
  %v4343 = vmul.f32 %v4265, %v4333
  %v4344 = vmul.f32 %v4266, %v4333
  %v4345 = vmul.f32 %v4267, %v4333
  %v4346 = vmul.f32 %v4268, %v4333
  %v4347 = vmul.f32 %v4269, %v4333
  %v4348 = vmul.f32 %v4270, %v4333
  %v4349 = vmul.f32 %v4271, %v4333
  %v4350 = vmul.f32 %v4272, %v4333
  %v4351 = vmul.f32 %v4273, %v4333
  %v4352 = vmul.f32 %v4274, %v4333
  %v4353 = vmul.f32 %v4275, %v4333
  %v4354 = vmul.f32 %v4276, %v4333
  %v4355 = vmul.f32 %v4277, %v4333
  %v4356 = vmul.f32 %v4278, %v4333
  %v4357 = vmul.f32 %v4279, %v4333
  %v4358 = vmul.f32 %v4280, %v4333
  %v4359 = vmul.f32 %v4281, %v4333
  %v4360 = vmul.f32 %v4282, %v4333
  %v4361 = vmul.f32 %v4283, %v4333
  %v4362 = vmul.f32 %v4284, %v4333
  %v4363 = vmul.f32 %v4285, %v4333
  %v4364 = vmul.f32 %v4286, %v4333
  %v4365 = vmul.f32 %v4287, %v4333
  %v4366 = vmul.f32 %v4288, %v4333
  %v4367 = vmul.f32 %v4289, %v4333
  %v4368 = vmul.f32 %v4290, %v4333
  %v4369 = vmul.f32 %v4291, %v4333
  %v4370 = vmul.f32 %v4292, %v4333
  %v4371 = vmul.f32 %v4293, %v4333
  %v4372 = vmul.f32 %v4294, %v4333
  %v4373 = vmul.f32 %v4295, %v4333
  %v4374 = vmul.f32 %v4296, %v4333
  %v4375 = vmul.f32 %v4297, %v4333
  %v4376 = vmul.f32 %v4298, %v4333
  %v4377 = vmul.f32 %v4299, %v4333
  %v4378 = vmul.f32 %v4300, %v4333
  %v4379 = vmul.f32 %v4301, %v4333
  %v4380 = vmul.f32 %v4302, %v4333
  %v4381 = vmul.f32 %v4303, %v4333
  %v4382 = vmul.f32 %v4304, %v4333
  %v4383 = vmul.f32 %v4305, %v4333
  %v4384 = vmul.f32 %v4306, %v4333
  %v4385 = vmul.f32 %v4307, %v4333
  %v4386 = vmul.f32 %v4308, %v4333
  %v4387 = vmul.f32 %v4309, %v4333
  %v4388 = vmul.f32 %v4310, %v4333
  %v4389 = vmul.f32 %v4311, %v4333
  %v4390 = vmul.f32 %v4312, %v4333
  %v4391 = vmul.f32 %v4313, %v4333
  %v4392 = vmul.f32 %v4314, %v4333
  %v4393 = vmul.f32 %v4315, %v4333
  %v4394 = vmul.f32 %v4316, %v4333
  %v4395 = vmul.f32 %v4317, %v4333
  %v4396 = vmul.f32 %v4318, %v4333
  %v4397 = vmul.f32 %v4319, %v4333
  %v4398 = vld [vmem:[%s5] sm:$0x1]
  %v4400 = vperm.slane %v4398, 0
  %v4402 = vadd.f32 %v4334, %v4400
  %v4403 = vadd.f32 %v4335, %v4400
  %v4404 = vadd.f32 %v4336, %v4400
  %v4405 = vadd.f32 %v4337, %v4400
  %v4406 = vadd.f32 %v4338, %v4400
  %v4407 = vadd.f32 %v4339, %v4400
  %v4408 = vadd.f32 %v4340, %v4400
  %v4409 = vadd.f32 %v4341, %v4400
  %v4410 = vadd.f32 %v4342, %v4400
  %v4411 = vadd.f32 %v4343, %v4400
  %v4412 = vadd.f32 %v4344, %v4400
  %v4413 = vadd.f32 %v4345, %v4400
  %v4414 = vadd.f32 %v4346, %v4400
  %v4415 = vadd.f32 %v4347, %v4400
  %v4416 = vadd.f32 %v4348, %v4400
  %v4417 = vadd.f32 %v4349, %v4400
  %v4418 = vadd.f32 %v4350, %v4400
  %v4419 = vadd.f32 %v4351, %v4400
  %v4420 = vadd.f32 %v4352, %v4400
  %v4421 = vadd.f32 %v4353, %v4400
  %v4422 = vadd.f32 %v4354, %v4400
  %v4423 = vadd.f32 %v4355, %v4400
  %v4424 = vadd.f32 %v4356, %v4400
  %v4425 = vadd.f32 %v4357, %v4400
  %v4426 = vadd.f32 %v4358, %v4400
  %v4427 = vadd.f32 %v4359, %v4400
  %v4428 = vadd.f32 %v4360, %v4400
  %v4429 = vadd.f32 %v4361, %v4400
  %v4430 = vadd.f32 %v4362, %v4400
  %v4431 = vadd.f32 %v4363, %v4400
  %v4432 = vadd.f32 %v4364, %v4400
  %v4433 = vadd.f32 %v4365, %v4400
  %v4434 = vadd.f32 %v4366, %v4400
  %v4435 = vadd.f32 %v4367, %v4400
  %v4436 = vadd.f32 %v4368, %v4400
  %v4437 = vadd.f32 %v4369, %v4400
  %v4438 = vadd.f32 %v4370, %v4400
  %v4439 = vadd.f32 %v4371, %v4400
  %v4440 = vadd.f32 %v4372, %v4400
  %v4441 = vadd.f32 %v4373, %v4400
  %v4442 = vadd.f32 %v4374, %v4400
  %v4443 = vadd.f32 %v4375, %v4400
  %v4444 = vadd.f32 %v4376, %v4400
  %v4445 = vadd.f32 %v4377, %v4400
  %v4446 = vadd.f32 %v4378, %v4400
  %v4447 = vadd.f32 %v4379, %v4400
  %v4448 = vadd.f32 %v4380, %v4400
  %v4449 = vadd.f32 %v4381, %v4400
  %v4450 = vadd.f32 %v4382, %v4400
  %v4451 = vadd.f32 %v4383, %v4400
  %v4452 = vadd.f32 %v4384, %v4400
  %v4453 = vadd.f32 %v4385, %v4400
  %v4454 = vadd.f32 %v4386, %v4400
  %v4455 = vadd.f32 %v4387, %v4400
  %v4456 = vadd.f32 %v4388, %v4400
  %v4457 = vadd.f32 %v4389, %v4400
  %v4458 = vadd.f32 %v4390, %v4400
  %v4459 = vadd.f32 %v4391, %v4400
  %v4460 = vadd.f32 %v4392, %v4400
  %v4461 = vadd.f32 %v4393, %v4400
  %v4462 = vadd.f32 %v4394, %v4400
  %v4463 = vadd.f32 %v4395, %v4400
  %v4464 = vadd.f32 %v4396, %v4400
  %v4465 = vadd.f32 %v4397, %v4400
  %vm4466 = vcmp.ge.f32.partialorder %v4402, 0.0
  %vm4467 = vcmp.ge.f32.partialorder %v4403, 0.0
  %vm4468 = vcmp.ge.f32.partialorder %v4404, 0.0
  %vm4469 = vcmp.ge.f32.partialorder %v4405, 0.0
  %vm4470 = vcmp.ge.f32.partialorder %v4406, 0.0
  %vm4471 = vcmp.ge.f32.partialorder %v4407, 0.0
  %vm4472 = vcmp.ge.f32.partialorder %v4408, 0.0
  %vm4473 = vcmp.ge.f32.partialorder %v4409, 0.0
  %vm4474 = vcmp.ge.f32.partialorder %v4410, 0.0
  %vm4475 = vcmp.ge.f32.partialorder %v4411, 0.0
  %vm4476 = vcmp.ge.f32.partialorder %v4412, 0.0
  %vm4477 = vcmp.ge.f32.partialorder %v4413, 0.0
  %vm4478 = vcmp.ge.f32.partialorder %v4414, 0.0
  %vm4479 = vcmp.ge.f32.partialorder %v4415, 0.0
  %vm4480 = vcmp.ge.f32.partialorder %v4416, 0.0
  %vm4481 = vcmp.ge.f32.partialorder %v4417, 0.0
  %vm4482 = vcmp.ge.f32.partialorder %v4418, 0.0
  %vm4483 = vcmp.ge.f32.partialorder %v4419, 0.0
  %vm4484 = vcmp.ge.f32.partialorder %v4420, 0.0
  %vm4485 = vcmp.ge.f32.partialorder %v4421, 0.0
  %vm4486 = vcmp.ge.f32.partialorder %v4422, 0.0
  %vm4487 = vcmp.ge.f32.partialorder %v4423, 0.0
  %vm4488 = vcmp.ge.f32.partialorder %v4424, 0.0
  %vm4489 = vcmp.ge.f32.partialorder %v4425, 0.0
  %vm4490 = vcmp.ge.f32.partialorder %v4426, 0.0
  %vm4491 = vcmp.ge.f32.partialorder %v4427, 0.0
  %vm4492 = vcmp.ge.f32.partialorder %v4428, 0.0
  %vm4493 = vcmp.ge.f32.partialorder %v4429, 0.0
  %vm4494 = vcmp.ge.f32.partialorder %v4430, 0.0
  %vm4495 = vcmp.ge.f32.partialorder %v4431, 0.0
  %vm4496 = vcmp.ge.f32.partialorder %v4432, 0.0
  %vm4497 = vcmp.ge.f32.partialorder %v4433, 0.0
  %vm4498 = vcmp.ge.f32.partialorder %v4434, 0.0
  %vm4499 = vcmp.ge.f32.partialorder %v4435, 0.0
  %vm4500 = vcmp.ge.f32.partialorder %v4436, 0.0
  %vm4501 = vcmp.ge.f32.partialorder %v4437, 0.0
  %vm4502 = vcmp.ge.f32.partialorder %v4438, 0.0
  %vm4503 = vcmp.ge.f32.partialorder %v4439, 0.0
  %vm4504 = vcmp.ge.f32.partialorder %v4440, 0.0
  %vm4505 = vcmp.ge.f32.partialorder %v4441, 0.0
  %vm4506 = vcmp.ge.f32.partialorder %v4442, 0.0
  %vm4507 = vcmp.ge.f32.partialorder %v4443, 0.0
  %vm4508 = vcmp.ge.f32.partialorder %v4444, 0.0
  %vm4509 = vcmp.ge.f32.partialorder %v4445, 0.0
  %vm4510 = vcmp.ge.f32.partialorder %v4446, 0.0
  %vm4511 = vcmp.ge.f32.partialorder %v4447, 0.0
  %vm4512 = vcmp.ge.f32.partialorder %v4448, 0.0
  %vm4513 = vcmp.ge.f32.partialorder %v4449, 0.0
  %vm4514 = vcmp.ge.f32.partialorder %v4450, 0.0
  %vm4515 = vcmp.ge.f32.partialorder %v4451, 0.0
  %vm4516 = vcmp.ge.f32.partialorder %v4452, 0.0
  %vm4517 = vcmp.ge.f32.partialorder %v4453, 0.0
  %vm4518 = vcmp.ge.f32.partialorder %v4454, 0.0
  %vm4519 = vcmp.ge.f32.partialorder %v4455, 0.0
  %vm4520 = vcmp.ge.f32.partialorder %v4456, 0.0
  %vm4521 = vcmp.ge.f32.partialorder %v4457, 0.0
  %vm4522 = vcmp.ge.f32.partialorder %v4458, 0.0
  %vm4523 = vcmp.ge.f32.partialorder %v4459, 0.0
  %vm4524 = vcmp.ge.f32.partialorder %v4460, 0.0
  %vm4525 = vcmp.ge.f32.partialorder %v4461, 0.0
  %vm4526 = vcmp.ge.f32.partialorder %v4462, 0.0
  %vm4527 = vcmp.ge.f32.partialorder %v4463, 0.0
  %vm4528 = vcmp.ge.f32.partialorder %v4464, 0.0
  %vm4529 = vcmp.ge.f32.partialorder %v4465, 0.0
  %v4530 = vld [vmem:[%s6] sm:$0x1]
  %v4532 = vperm.slane %v4530, 0
  %v4534 = vmul.f32 %v4532, %v4402
  %v4535 = vmul.f32 %v4532, %v4403
  %v4536 = vmul.f32 %v4532, %v4404
  %v4537 = vmul.f32 %v4532, %v4405
  %v4538 = vmul.f32 %v4532, %v4406
  %v4539 = vmul.f32 %v4532, %v4407
  %v4540 = vmul.f32 %v4532, %v4408
  %v4541 = vmul.f32 %v4532, %v4409
  %v4542 = vmul.f32 %v4532, %v4410
  %v4543 = vmul.f32 %v4532, %v4411
  %v4544 = vmul.f32 %v4532, %v4412
  %v4545 = vmul.f32 %v4532, %v4413
  %v4546 = vmul.f32 %v4532, %v4414
  %v4547 = vmul.f32 %v4532, %v4415
  %v4548 = vmul.f32 %v4532, %v4416
  %v4549 = vmul.f32 %v4532, %v4417
  %v4550 = vmul.f32 %v4532, %v4418
  %v4551 = vmul.f32 %v4532, %v4419
  %v4552 = vmul.f32 %v4532, %v4420
  %v4553 = vmul.f32 %v4532, %v4421
  %v4554 = vmul.f32 %v4532, %v4422
  %v4555 = vmul.f32 %v4532, %v4423
  %v4556 = vmul.f32 %v4532, %v4424
  %v4557 = vmul.f32 %v4532, %v4425
  %v4558 = vmul.f32 %v4532, %v4426
  %v4559 = vmul.f32 %v4532, %v4427
  %v4560 = vmul.f32 %v4532, %v4428
  %v4561 = vmul.f32 %v4532, %v4429
  %v4562 = vmul.f32 %v4532, %v4430
  %v4563 = vmul.f32 %v4532, %v4431
  %v4564 = vmul.f32 %v4532, %v4432
  %v4565 = vmul.f32 %v4532, %v4433
  %v4566 = vmul.f32 %v4532, %v4434
  %v4567 = vmul.f32 %v4532, %v4435
  %v4568 = vmul.f32 %v4532, %v4436
  %v4569 = vmul.f32 %v4532, %v4437
  %v4570 = vmul.f32 %v4532, %v4438
  %v4571 = vmul.f32 %v4532, %v4439
  %v4572 = vmul.f32 %v4532, %v4440
  %v4573 = vmul.f32 %v4532, %v4441
  %v4574 = vmul.f32 %v4532, %v4442
  %v4575 = vmul.f32 %v4532, %v4443
  %v4576 = vmul.f32 %v4532, %v4444
  %v4577 = vmul.f32 %v4532, %v4445
  %v4578 = vmul.f32 %v4532, %v4446
  %v4579 = vmul.f32 %v4532, %v4447
  %v4580 = vmul.f32 %v4532, %v4448
  %v4581 = vmul.f32 %v4532, %v4449
  %v4582 = vmul.f32 %v4532, %v4450
  %v4583 = vmul.f32 %v4532, %v4451
  %v4584 = vmul.f32 %v4532, %v4452
  %v4585 = vmul.f32 %v4532, %v4453
  %v4586 = vmul.f32 %v4532, %v4454
  %v4587 = vmul.f32 %v4532, %v4455
  %v4588 = vmul.f32 %v4532, %v4456
  %v4589 = vmul.f32 %v4532, %v4457
  %v4590 = vmul.f32 %v4532, %v4458
  %v4591 = vmul.f32 %v4532, %v4459
  %v4592 = vmul.f32 %v4532, %v4460
  %v4593 = vmul.f32 %v4532, %v4461
  %v4594 = vmul.f32 %v4532, %v4462
  %v4595 = vmul.f32 %v4532, %v4463
  %v4596 = vmul.f32 %v4532, %v4464
  %v4597 = vmul.f32 %v4532, %v4465
  %v4598 = vsel %vm4466, %v4402, %v4534
  %v4599 = vsel %vm4467, %v4403, %v4535
  %v4600 = vsel %vm4468, %v4404, %v4536
  %v4601 = vsel %vm4469, %v4405, %v4537
  %v4602 = vsel %vm4470, %v4406, %v4538
  %v4603 = vsel %vm4471, %v4407, %v4539
  %v4604 = vsel %vm4472, %v4408, %v4540
  %v4605 = vsel %vm4473, %v4409, %v4541
  %v4606 = vsel %vm4474, %v4410, %v4542
  %v4607 = vsel %vm4475, %v4411, %v4543
  %v4608 = vsel %vm4476, %v4412, %v4544
  %v4609 = vsel %vm4477, %v4413, %v4545
  %v4610 = vsel %vm4478, %v4414, %v4546
  %v4611 = vsel %vm4479, %v4415, %v4547
  %v4612 = vsel %vm4480, %v4416, %v4548
  %v4613 = vsel %vm4481, %v4417, %v4549
  %v4614 = vsel %vm4482, %v4418, %v4550
  %v4615 = vsel %vm4483, %v4419, %v4551
  %v4616 = vsel %vm4484, %v4420, %v4552
  %v4617 = vsel %vm4485, %v4421, %v4553
  %v4618 = vsel %vm4486, %v4422, %v4554
  %v4619 = vsel %vm4487, %v4423, %v4555
  %v4620 = vsel %vm4488, %v4424, %v4556
  %v4621 = vsel %vm4489, %v4425, %v4557
  %v4622 = vsel %vm4490, %v4426, %v4558
  %v4623 = vsel %vm4491, %v4427, %v4559
  %v4624 = vsel %vm4492, %v4428, %v4560
  %v4625 = vsel %vm4493, %v4429, %v4561
  %v4626 = vsel %vm4494, %v4430, %v4562
  %v4627 = vsel %vm4495, %v4431, %v4563
  %v4628 = vsel %vm4496, %v4432, %v4564
  %v4629 = vsel %vm4497, %v4433, %v4565
  %v4630 = vsel %vm4498, %v4434, %v4566
  %v4631 = vsel %vm4499, %v4435, %v4567
  %v4632 = vsel %vm4500, %v4436, %v4568
  %v4633 = vsel %vm4501, %v4437, %v4569
  %v4634 = vsel %vm4502, %v4438, %v4570
  %v4635 = vsel %vm4503, %v4439, %v4571
  %v4636 = vsel %vm4504, %v4440, %v4572
  %v4637 = vsel %vm4505, %v4441, %v4573
  %v4638 = vsel %vm4506, %v4442, %v4574
  %v4639 = vsel %vm4507, %v4443, %v4575
  %v4640 = vsel %vm4508, %v4444, %v4576
  %v4641 = vsel %vm4509, %v4445, %v4577
  %v4642 = vsel %vm4510, %v4446, %v4578
  %v4643 = vsel %vm4511, %v4447, %v4579
  %v4644 = vsel %vm4512, %v4448, %v4580
  %v4645 = vsel %vm4513, %v4449, %v4581
  %v4646 = vsel %vm4514, %v4450, %v4582
  %v4647 = vsel %vm4515, %v4451, %v4583
  %v4648 = vsel %vm4516, %v4452, %v4584
  %v4649 = vsel %vm4517, %v4453, %v4585
  %v4650 = vsel %vm4518, %v4454, %v4586
  %v4651 = vsel %vm4519, %v4455, %v4587
  %v4652 = vsel %vm4520, %v4456, %v4588
  %v4653 = vsel %vm4521, %v4457, %v4589
  %v4654 = vsel %vm4522, %v4458, %v4590
  %v4655 = vsel %vm4523, %v4459, %v4591
  %v4656 = vsel %vm4524, %v4460, %v4592
  %v4657 = vsel %vm4525, %v4461, %v4593
  %v4658 = vsel %vm4526, %v4462, %v4594
  %v4659 = vsel %vm4527, %v4463, %v4595
  %v4660 = vsel %vm4528, %v4464, %v4596
  %v4661 = vsel %vm4529, %v4465, %v4597
  %4662 = vst.msk [vmem:[#allocation3] sm:$0xff] %vm97, 0.0
  %4663 = vst.msk [vmem:[#allocation3 + $0x8] sm:$0xff] %vm97, 0.0
  %4664 = vst.msk [vmem:[#allocation3 + $0x10] sm:$0xff] %vm97, 0.0
  %4665 = vst.msk [vmem:[#allocation3 + $0x18] sm:$0xff] %vm97, 0.0
  %4666 = vst.msk [vmem:[#allocation3 + $0x20] sm:$0xff] %vm97, 0.0
  %4667 = vst.msk [vmem:[#allocation3 + $0x28] sm:$0xff] %vm97, 0.0
  %4668 = vst.msk [vmem:[#allocation3 + $0x30] sm:$0xff] %vm97, 0.0
  %4669 = vst.msk [vmem:[#allocation3 + $0x38] sm:$0xff] %vm97, 0.0
  %4670 = vst.msk [vmem:[#allocation3 + $0x40] sm:$0xff] %vm97, 0.0
  %4671 = vst.msk [vmem:[#allocation3 + $0x48] sm:$0xff] %vm97, 0.0
  %4672 = vst.msk [vmem:[#allocation3 + $0x50] sm:$0xff] %vm97, 0.0
  %4673 = vst.msk [vmem:[#allocation3 + $0x58] sm:$0xff] %vm97, 0.0
  %4674 = vst.msk [vmem:[#allocation3 + $0x60] sm:$0xff] %vm97, 0.0
  %4675 = vst.msk [vmem:[#allocation3 + $0x68] sm:$0xff] %vm97, 0.0
  %4676 = vst.msk [vmem:[#allocation3 + $0x70] sm:$0xff] %vm97, 0.0
  %4677 = vst.msk [vmem:[#allocation3 + $0x78] sm:$0xff] %vm97, 0.0
  %4678 = vst.msk [vmem:[#allocation3 + $0x80] sm:$0xff] %vm97, 0.0
  %4679 = vst.msk [vmem:[#allocation3 + $0x88] sm:$0xff] %vm97, 0.0
  %4680 = vst.msk [vmem:[#allocation3 + $0x90] sm:$0xff] %vm97, 0.0
  %4681 = vst.msk [vmem:[#allocation3 + $0x98] sm:$0xff] %vm97, 0.0
  %4682 = vst.msk [vmem:[#allocation3 + $0xa0] sm:$0xff] %vm97, 0.0
  %4683 = vst.msk [vmem:[#allocation3 + $0xa8] sm:$0xff] %vm97, 0.0
  %4684 = vst.msk [vmem:[#allocation3 + $0xb0] sm:$0xff] %vm97, 0.0
  %4685 = vst.msk [vmem:[#allocation3 + $0xb8] sm:$0xff] %vm97, 0.0
  %4686 = vst.msk [vmem:[#allocation3 + $0xc0] sm:$0xff] %vm97, 0.0
  %4687 = vst.msk [vmem:[#allocation3 + $0xc8] sm:$0xff] %vm97, 0.0
  %4688 = vst.msk [vmem:[#allocation3 + $0xd0] sm:$0xff] %vm97, 0.0
  %4689 = vst.msk [vmem:[#allocation3 + $0xd8] sm:$0xff] %vm97, 0.0
  %4690 = vst.msk [vmem:[#allocation3 + $0xe0] sm:$0xff] %vm97, 0.0
  %4691 = vst.msk [vmem:[#allocation3 + $0xe8] sm:$0xff] %vm97, 0.0
  %4692 = vst.msk [vmem:[#allocation3 + $0xf0] sm:$0xff] %vm97, 0.0
  %4693 = vst.msk [vmem:[#allocation3 + $0xf8] sm:$0xff] %vm97, 0.0
  %4694 = vst.msk [vmem:[#allocation3 + $0x100] sm:$0xff] %vm97, 0.0
  %4695 = vst.msk [vmem:[#allocation3 + $0x108] sm:$0xff] %vm97, 0.0
  %4696 = vst.msk [vmem:[#allocation3 + $0x110] sm:$0xff] %vm97, 0.0
  %4697 = vst.msk [vmem:[#allocation3 + $0x118] sm:$0xff] %vm97, 0.0
  %4698 = vst.msk [vmem:[#allocation3 + $0x120] sm:$0xff] %vm97, 0.0
  %4699 = vst.msk [vmem:[#allocation3 + $0x128] sm:$0xff] %vm97, 0.0
  %4700 = vst.msk [vmem:[#allocation3 + $0x130] sm:$0xff] %vm97, 0.0
  %4701 = vst.msk [vmem:[#allocation3 + $0x138] sm:$0xff] %vm97, 0.0
  %4702 = vst.msk [vmem:[#allocation3 + $0x140] sm:$0xff] %vm97, 0.0
  %4703 = vst.msk [vmem:[#allocation3 + $0x148] sm:$0xff] %vm97, 0.0
  %4704 = vst.msk [vmem:[#allocation3 + $0x150] sm:$0xff] %vm97, 0.0
  %4705 = vst.msk [vmem:[#allocation3 + $0x158] sm:$0xff] %vm97, 0.0
  %4706 = vst.msk [vmem:[#allocation3 + $0x160] sm:$0xff] %vm97, 0.0
  %4707 = vst.msk [vmem:[#allocation3 + $0x168] sm:$0xff] %vm97, 0.0
  %4708 = vst.msk [vmem:[#allocation3 + $0x170] sm:$0xff] %vm97, 0.0
  %4709 = vst.msk [vmem:[#allocation3 + $0x178] sm:$0xff] %vm97, 0.0
  %4710 = vst.msk [vmem:[#allocation3 + $0x180] sm:$0xff] %vm97, 0.0
  %4711 = vst.msk [vmem:[#allocation3 + $0x188] sm:$0xff] %vm97, 0.0
  %4712 = vst.msk [vmem:[#allocation3 + $0x190] sm:$0xff] %vm97, 0.0
  %4713 = vst.msk [vmem:[#allocation3 + $0x198] sm:$0xff] %vm97, 0.0
  %4714 = vst.msk [vmem:[#allocation3 + $0x1a0] sm:$0xff] %vm97, 0.0
  %4715 = vst.msk [vmem:[#allocation3 + $0x1a8] sm:$0xff] %vm97, 0.0
  %4716 = vst.msk [vmem:[#allocation3 + $0x1b0] sm:$0xff] %vm97, 0.0
  %4717 = vst.msk [vmem:[#allocation3 + $0x1b8] sm:$0xff] %vm97, 0.0
  %4718 = vst.msk [vmem:[#allocation3 + $0x1c0] sm:$0xff] %vm97, 0.0
  %4719 = vst.msk [vmem:[#allocation3 + $0x1c8] sm:$0xff] %vm97, 0.0
  %4720 = vst.msk [vmem:[#allocation3 + $0x1d0] sm:$0xff] %vm97, 0.0
  %4721 = vst.msk [vmem:[#allocation3 + $0x1d8] sm:$0xff] %vm97, 0.0
  %4722 = vst.msk [vmem:[#allocation3 + $0x1e0] sm:$0xff] %vm97, 0.0
  %4723 = vst.msk [vmem:[#allocation3 + $0x1e8] sm:$0xff] %vm97, 0.0
  %4724 = vst.msk [vmem:[#allocation3 + $0x1f0] sm:$0xff] %vm97, 0.0
  %4725 = vst.msk [vmem:[#allocation3 + $0x1f8] sm:$0xff] %vm97, 0.0
  %4726 = vst.msk [vmem:[#allocation3 + $0x200] sm:$0xff] %vm97, 0.0
  %4727 = vst.msk [vmem:[#allocation3 + $0x208] sm:$0xff] %vm97, 0.0
  %4728 = vst.msk [vmem:[#allocation3 + $0x210] sm:$0xff] %vm97, 0.0
  %4729 = vst.msk [vmem:[#allocation3 + $0x218] sm:$0xff] %vm97, 0.0
  %4730 = vst.msk [vmem:[#allocation3 + $0x220] sm:$0xff] %vm97, 0.0
  %4731 = vst.msk [vmem:[#allocation3 + $0x228] sm:$0xff] %vm97, 0.0
  %4732 = vst.msk [vmem:[#allocation3 + $0x230] sm:$0xff] %vm97, 0.0
  %4733 = vst.msk [vmem:[#allocation3 + $0x238] sm:$0xff] %vm97, 0.0
  %4734 = vst.msk [vmem:[#allocation3 + $0x240] sm:$0xff] %vm97, 0.0
  %4735 = vst.msk [vmem:[#allocation3 + $0x248] sm:$0xff] %vm97, 0.0
  %4736 = vst.msk [vmem:[#allocation3 + $0x250] sm:$0xff] %vm97, 0.0
  %4737 = vst.msk [vmem:[#allocation3 + $0x258] sm:$0xff] %vm97, 0.0
  %4738 = vst.msk [vmem:[#allocation3 + $0x260] sm:$0xff] %vm97, 0.0
  %4739 = vst.msk [vmem:[#allocation3 + $0x268] sm:$0xff] %vm97, 0.0
  %4740 = vst.msk [vmem:[#allocation3 + $0x270] sm:$0xff] %vm97, 0.0
  %4741 = vst.msk [vmem:[#allocation3 + $0x278] sm:$0xff] %vm97, 0.0
  %4742 = vst.msk [vmem:[#allocation3 + $0x280] sm:$0xff] %vm97, 0.0
  %4743 = vst.msk [vmem:[#allocation3 + $0x288] sm:$0xff] %vm97, 0.0
  %4744 = vst.msk [vmem:[#allocation3 + $0x290] sm:$0xff] %vm97, 0.0
  %4745 = vst.msk [vmem:[#allocation3 + $0x298] sm:$0xff] %vm97, 0.0
  %4746 = vst.msk [vmem:[#allocation3 + $0x2a0] sm:$0xff] %vm97, 0.0
  %4747 = vst.msk [vmem:[#allocation3 + $0x2a8] sm:$0xff] %vm97, 0.0
  %4748 = vst.msk [vmem:[#allocation3 + $0x2b0] sm:$0xff] %vm97, 0.0
  %4749 = vst.msk [vmem:[#allocation3 + $0x2b8] sm:$0xff] %vm97, 0.0
  %4750 = vst.msk [vmem:[#allocation3 + $0x2c0] sm:$0xff] %vm97, 0.0
  %4751 = vst.msk [vmem:[#allocation3 + $0x2c8] sm:$0xff] %vm97, 0.0
  %4752 = vst.msk [vmem:[#allocation3 + $0x2d0] sm:$0xff] %vm97, 0.0
  %4753 = vst.msk [vmem:[#allocation3 + $0x2d8] sm:$0xff] %vm97, 0.0
  %4754 = vst.msk [vmem:[#allocation3 + $0x2e0] sm:$0xff] %vm97, 0.0
  %4755 = vst.msk [vmem:[#allocation3 + $0x2e8] sm:$0xff] %vm97, 0.0
  %4756 = vst.msk [vmem:[#allocation3 + $0x2f0] sm:$0xff] %vm97, 0.0
  %4757 = vst.msk [vmem:[#allocation3 + $0x2f8] sm:$0xff] %vm97, 0.0
  %4758 = vst.msk [vmem:[#allocation3 + $0x300] sm:$0xff] %vm97, 0.0
  %4759 = vst.msk [vmem:[#allocation3 + $0x308] sm:$0xff] %vm97, 0.0
  %4760 = vst.msk [vmem:[#allocation3 + $0x310] sm:$0xff] %vm97, 0.0
  %4761 = vst.msk [vmem:[#allocation3 + $0x318] sm:$0xff] %vm97, 0.0
  %4762 = vst.msk [vmem:[#allocation3 + $0x320] sm:$0xff] %vm97, 0.0
  %4763 = vst.msk [vmem:[#allocation3 + $0x328] sm:$0xff] %vm97, 0.0
  %4764 = vst.msk [vmem:[#allocation3 + $0x330] sm:$0xff] %vm97, 0.0
  %4765 = vst.msk [vmem:[#allocation3 + $0x338] sm:$0xff] %vm97, 0.0
  %4766 = vst.msk [vmem:[#allocation3 + $0x340] sm:$0xff] %vm97, 0.0
  %4767 = vst.msk [vmem:[#allocation3 + $0x348] sm:$0xff] %vm97, 0.0
  %4768 = vst.msk [vmem:[#allocation3 + $0x350] sm:$0xff] %vm97, 0.0
  %4769 = vst.msk [vmem:[#allocation3 + $0x358] sm:$0xff] %vm97, 0.0
  %s4770 = scalar_lea.vmem [#allocation3], 24
  %4771 = vst.msk [vmem:[%s4770 + $0x1] sm:$0xff] %vm97, %v4598
  %4772 = vst.msk [vmem:[%s4770 + $0x9] sm:$0xff] %vm97, %v4599
  %4773 = vst.msk [vmem:[%s4770 + $0x19] sm:$0xff] %vm97, %v4600
  %4774 = vst.msk [vmem:[%s4770 + $0x21] sm:$0xff] %vm97, %v4601
  %4775 = vst.msk [vmem:[%s4770 + $0x31] sm:$0xff] %vm97, %v4602
  %4776 = vst.msk [vmem:[%s4770 + $0x39] sm:$0xff] %vm97, %v4603
  %4777 = vst.msk [vmem:[%s4770 + $0x49] sm:$0xff] %vm97, %v4604
  %4778 = vst.msk [vmem:[%s4770 + $0x51] sm:$0xff] %vm97, %v4605
  %4779 = vst.msk [vmem:[%s4770 + $0x61] sm:$0xff] %vm97, %v4606
  %4780 = vst.msk [vmem:[%s4770 + $0x69] sm:$0xff] %vm97, %v4607
  %4781 = vst.msk [vmem:[%s4770 + $0x79] sm:$0xff] %vm97, %v4608
  %4782 = vst.msk [vmem:[%s4770 + $0x81] sm:$0xff] %vm97, %v4609
  %4783 = vst.msk [vmem:[%s4770 + $0x91] sm:$0xff] %vm97, %v4610
  %4784 = vst.msk [vmem:[%s4770 + $0x99] sm:$0xff] %vm97, %v4611
  %4785 = vst.msk [vmem:[%s4770 + $0xa9] sm:$0xff] %vm97, %v4612
  %4786 = vst.msk [vmem:[%s4770 + $0xb1] sm:$0xff] %vm97, %v4613
  %4787 = vst.msk [vmem:[%s4770 + $0xc1] sm:$0xff] %vm97, %v4614
  %4788 = vst.msk [vmem:[%s4770 + $0xc9] sm:$0xff] %vm97, %v4615
  %4789 = vst.msk [vmem:[%s4770 + $0xd9] sm:$0xff] %vm97, %v4616
  %4790 = vst.msk [vmem:[%s4770 + $0xe1] sm:$0xff] %vm97, %v4617
  %4791 = vst.msk [vmem:[%s4770 + $0xf1] sm:$0xff] %vm97, %v4618
  %4792 = vst.msk [vmem:[%s4770 + $0xf9] sm:$0xff] %vm97, %v4619
  %4793 = vst.msk [vmem:[%s4770 + $0x109] sm:$0xff] %vm97, %v4620
  %4794 = vst.msk [vmem:[%s4770 + $0x111] sm:$0xff] %vm97, %v4621
  %4795 = vst.msk [vmem:[%s4770 + $0x121] sm:$0xff] %vm97, %v4622
  %4796 = vst.msk [vmem:[%s4770 + $0x129] sm:$0xff] %vm97, %v4623
  %4797 = vst.msk [vmem:[%s4770 + $0x139] sm:$0xff] %vm97, %v4624
  %4798 = vst.msk [vmem:[%s4770 + $0x141] sm:$0xff] %vm97, %v4625
  %4799 = vst.msk [vmem:[%s4770 + $0x151] sm:$0xff] %vm97, %v4626
  %4800 = vst.msk [vmem:[%s4770 + $0x159] sm:$0xff] %vm97, %v4627
  %4801 = vst.msk [vmem:[%s4770 + $0x169] sm:$0xff] %vm97, %v4628
  %4802 = vst.msk [vmem:[%s4770 + $0x171] sm:$0xff] %vm97, %v4629
  %4803 = vst.msk [vmem:[%s4770 + $0x1b1] sm:$0xff] %vm97, %v4630
  %4804 = vst.msk [vmem:[%s4770 + $0x1b9] sm:$0xff] %vm97, %v4631
  %4805 = vst.msk [vmem:[%s4770 + $0x1c9] sm:$0xff] %vm97, %v4632
  %4806 = vst.msk [vmem:[%s4770 + $0x1d1] sm:$0xff] %vm97, %v4633
  %4807 = vst.msk [vmem:[%s4770 + $0x1e1] sm:$0xff] %vm97, %v4634
  %4808 = vst.msk [vmem:[%s4770 + $0x1e9] sm:$0xff] %vm97, %v4635
  %4809 = vst.msk [vmem:[%s4770 + $0x1f9] sm:$0xff] %vm97, %v4636
  %4810 = vst.msk [vmem:[%s4770 + $0x201] sm:$0xff] %vm97, %v4637
  %4811 = vst.msk [vmem:[%s4770 + $0x211] sm:$0xff] %vm97, %v4638
  %4812 = vst.msk [vmem:[%s4770 + $0x219] sm:$0xff] %vm97, %v4639
  %4813 = vst.msk [vmem:[%s4770 + $0x229] sm:$0xff] %vm97, %v4640
  %4814 = vst.msk [vmem:[%s4770 + $0x231] sm:$0xff] %vm97, %v4641
  %4815 = vst.msk [vmem:[%s4770 + $0x241] sm:$0xff] %vm97, %v4642
  %4816 = vst.msk [vmem:[%s4770 + $0x249] sm:$0xff] %vm97, %v4643
  %4817 = vst.msk [vmem:[%s4770 + $0x259] sm:$0xff] %vm97, %v4644
  %4818 = vst.msk [vmem:[%s4770 + $0x261] sm:$0xff] %vm97, %v4645
  %4819 = vst.msk [vmem:[%s4770 + $0x271] sm:$0xff] %vm97, %v4646
  %4820 = vst.msk [vmem:[%s4770 + $0x279] sm:$0xff] %vm97, %v4647
  %4821 = vst.msk [vmem:[%s4770 + $0x289] sm:$0xff] %vm97, %v4648
  %4822 = vst.msk [vmem:[%s4770 + $0x291] sm:$0xff] %vm97, %v4649
  %4823 = vst.msk [vmem:[%s4770 + $0x2a1] sm:$0xff] %vm97, %v4650
  %4824 = vst.msk [vmem:[%s4770 + $0x2a9] sm:$0xff] %vm97, %v4651
  %4825 = vst.msk [vmem:[%s4770 + $0x2b9] sm:$0xff] %vm97, %v4652
  %4826 = vst.msk [vmem:[%s4770 + $0x2c1] sm:$0xff] %vm97, %v4653
  %4827 = vst.msk [vmem:[%s4770 + $0x2d1] sm:$0xff] %vm97, %v4654
  %4828 = vst.msk [vmem:[%s4770 + $0x2d9] sm:$0xff] %vm97, %v4655
  %4829 = vst.msk [vmem:[%s4770 + $0x2e9] sm:$0xff] %vm97, %v4656
  %4830 = vst.msk [vmem:[%s4770 + $0x2f1] sm:$0xff] %vm97, %v4657
  %4831 = vst.msk [vmem:[%s4770 + $0x301] sm:$0xff] %vm97, %v4658
  %4832 = vst.msk [vmem:[%s4770 + $0x309] sm:$0xff] %vm97, %v4659
  %4833 = vst.msk [vmem:[%s4770 + $0x319] sm:$0xff] %vm97, %v4660
  %4834 = vst.msk [vmem:[%s4770 + $0x321] sm:$0xff] %vm97, %v4661
  %v4835 = vld [vmem:[#allocation3] sm:$0xff]
  %v4836 = vld [vmem:[#allocation3 + $0x8] sm:$0xff]
  %v4837 = vld [vmem:[#allocation3 + $0x18] sm:$0xff]
  %v4838 = vld [vmem:[#allocation3 + $0x20] sm:$0xff]
  %v4839 = vld [vmem:[#allocation3 + $0x30] sm:$0xff]
  %v4840 = vld [vmem:[#allocation3 + $0x38] sm:$0xff]
  %v4841 = vld [vmem:[#allocation3 + $0x48] sm:$0xff]
  %v4842 = vld [vmem:[#allocation3 + $0x50] sm:$0xff]
  %v4843 = vld [vmem:[#allocation3 + $0x60] sm:$0xff]
  %v4844 = vld [vmem:[#allocation3 + $0x68] sm:$0xff]
  %v4845 = vld [vmem:[#allocation3 + $0x78] sm:$0xff]
  %v4846 = vld [vmem:[#allocation3 + $0x80] sm:$0xff]
  %v4847 = vld [vmem:[#allocation3 + $0x90] sm:$0xff]
  %v4848 = vld [vmem:[#allocation3 + $0x98] sm:$0xff]
  %v4849 = vld [vmem:[#allocation3 + $0xa8] sm:$0xff]
  %v4850 = vld [vmem:[#allocation3 + $0xb0] sm:$0xff]
  %v4851 = vld [vmem:[#allocation3 + $0xc0] sm:$0xff]
  %v4852 = vld [vmem:[#allocation3 + $0xc8] sm:$0xff]
  %v4853 = vld [vmem:[#allocation3 + $0xd8] sm:$0xff]
  %v4854 = vld [vmem:[#allocation3 + $0xe0] sm:$0xff]
  %v4855 = vld [vmem:[#allocation3 + $0xf0] sm:$0xff]
  %v4856 = vld [vmem:[#allocation3 + $0xf8] sm:$0xff]
  %v4857 = vld [vmem:[#allocation3 + $0x108] sm:$0xff]
  %v4858 = vld [vmem:[#allocation3 + $0x110] sm:$0xff]
  %v4859 = vld [vmem:[#allocation3 + $0x120] sm:$0xff]
  %v4860 = vld [vmem:[#allocation3 + $0x128] sm:$0xff]
  %v4861 = vld [vmem:[#allocation3 + $0x138] sm:$0xff]
  %v4862 = vld [vmem:[#allocation3 + $0x140] sm:$0xff]
  %v4863 = vld [vmem:[#allocation3 + $0x150] sm:$0xff]
  %v4864 = vld [vmem:[#allocation3 + $0x158] sm:$0xff]
  %v4865 = vld [vmem:[#allocation3 + $0x168] sm:$0xff]
  %v4866 = vld [vmem:[#allocation3 + $0x170] sm:$0xff]
  %v4867 = vld [vmem:[#allocation3 + $0x1b0] sm:$0xff]
  %v4868 = vld [vmem:[#allocation3 + $0x1b8] sm:$0xff]
  %v4869 = vld [vmem:[#allocation3 + $0x1c8] sm:$0xff]
  %v4870 = vld [vmem:[#allocation3 + $0x1d0] sm:$0xff]
  %v4871 = vld [vmem:[#allocation3 + $0x1e0] sm:$0xff]
  %v4872 = vld [vmem:[#allocation3 + $0x1e8] sm:$0xff]
  %v4873 = vld [vmem:[#allocation3 + $0x1f8] sm:$0xff]
  %v4874 = vld [vmem:[#allocation3 + $0x200] sm:$0xff]
  %v4875 = vld [vmem:[#allocation3 + $0x210] sm:$0xff]
  %v4876 = vld [vmem:[#allocation3 + $0x218] sm:$0xff]
  %v4877 = vld [vmem:[#allocation3 + $0x228] sm:$0xff]
  %v4878 = vld [vmem:[#allocation3 + $0x230] sm:$0xff]
  %v4879 = vld [vmem:[#allocation3 + $0x240] sm:$0xff]
  %v4880 = vld [vmem:[#allocation3 + $0x248] sm:$0xff]
  %v4881 = vld [vmem:[#allocation3 + $0x258] sm:$0xff]
  %v4882 = vld [vmem:[#allocation3 + $0x260] sm:$0xff]
  %v4883 = vld [vmem:[#allocation3 + $0x270] sm:$0xff]
  %v4884 = vld [vmem:[#allocation3 + $0x278] sm:$0xff]
  %v4885 = vld [vmem:[#allocation3 + $0x288] sm:$0xff]
  %v4886 = vld [vmem:[#allocation3 + $0x290] sm:$0xff]
  %v4887 = vld [vmem:[#allocation3 + $0x2a0] sm:$0xff]
  %v4888 = vld [vmem:[#allocation3 + $0x2a8] sm:$0xff]
  %v4889 = vld [vmem:[#allocation3 + $0x2b8] sm:$0xff]
  %v4890 = vld [vmem:[#allocation3 + $0x2c0] sm:$0xff]
  %v4891 = vld [vmem:[#allocation3 + $0x2d0] sm:$0xff]
  %v4892 = vld [vmem:[#allocation3 + $0x2d8] sm:$0xff]
  %v4893 = vld [vmem:[#allocation3 + $0x2e8] sm:$0xff]
  %v4894 = vld [vmem:[#allocation3 + $0x2f0] sm:$0xff]
  %v4895 = vld [vmem:[#allocation3 + $0x300] sm:$0xff]
  %v4896 = vld [vmem:[#allocation3 + $0x308] sm:$0xff]
  %v4897 = vld [vmem:[#allocation3 + $0x318] sm:$0xff]
  %v4898 = vld [vmem:[#allocation3 + $0x320] sm:$0xff]
  %4899 = vst.msk [vmem:[#allocation2] sm:$0xff] %vm97, %v4835
  %4900 = vst.msk [vmem:[#allocation2 + $0x28] sm:$0xff] %vm97, %v4836
  %4901 = vst.msk [vmem:[#allocation2 + $0x50] sm:$0xff] %vm97, %v4837
  %4902 = vst.msk [vmem:[#allocation2 + $0x78] sm:$0xff] %vm97, %v4838
  %4903 = vst.msk [vmem:[#allocation2 + $0xa0] sm:$0xff] %vm97, %v4839
  %4904 = vst.msk [vmem:[#allocation2 + $0xc8] sm:$0xff] %vm97, %v4840
  %4905 = vst.msk [vmem:[#allocation2 + $0xf0] sm:$0xff] %vm97, %v4841
  %4906 = vst.msk [vmem:[#allocation2 + $0x118] sm:$0xff] %vm97, %v4842
  %4907 = vst.msk [vmem:[#allocation2 + $0x140] sm:$0xff] %vm97, %v4843
  %4908 = vst.msk [vmem:[#allocation2 + $0x168] sm:$0xff] %vm97, %v4844
  %4909 = vst.msk [vmem:[#allocation2 + $0x190] sm:$0xff] %vm97, %v4845
  %4910 = vst.msk [vmem:[#allocation2 + $0x1b8] sm:$0xff] %vm97, %v4846
  %4911 = vst.msk [vmem:[#allocation2 + $0x1e0] sm:$0xff] %vm97, %v4847
  %4912 = vst.msk [vmem:[#allocation2 + $0x208] sm:$0xff] %vm97, %v4848
  %4913 = vst.msk [vmem:[#allocation2 + $0x230] sm:$0xff] %vm97, %v4849
  %4914 = vst.msk [vmem:[#allocation2 + $0x258] sm:$0xff] %vm97, %v4850
  %4915 = vst.msk [vmem:[#allocation2 + $0x280] sm:$0xff] %vm97, %v4851
  %4916 = vst.msk [vmem:[#allocation2 + $0x2a8] sm:$0xff] %vm97, %v4852
  %4917 = vst.msk [vmem:[#allocation2 + $0x2d0] sm:$0xff] %vm97, %v4853
  %4918 = vst.msk [vmem:[#allocation2 + $0x2f8] sm:$0xff] %vm97, %v4854
  %4919 = vst.msk [vmem:[#allocation2 + $0x320] sm:$0xff] %vm97, %v4855
  %4920 = vst.msk [vmem:[#allocation2 + $0x348] sm:$0xff] %vm97, %v4856
  %4921 = vst.msk [vmem:[#allocation2 + $0x370] sm:$0xff] %vm97, %v4857
  %4922 = vst.msk [vmem:[#allocation2 + $0x398] sm:$0xff] %vm97, %v4858
  %4923 = vst.msk [vmem:[#allocation2 + $0x3c0] sm:$0xff] %vm97, %v4859
  %4924 = vst.msk [vmem:[#allocation2 + $0x3e8] sm:$0xff] %vm97, %v4860
  %4925 = vst.msk [vmem:[#allocation2 + $0x410] sm:$0xff] %vm97, %v4861
  %4926 = vst.msk [vmem:[#allocation2 + $0x438] sm:$0xff] %vm97, %v4862
  %4927 = vst.msk [vmem:[#allocation2 + $0x460] sm:$0xff] %vm97, %v4863
  %4928 = vst.msk [vmem:[#allocation2 + $0x488] sm:$0xff] %vm97, %v4864
  %4929 = vst.msk [vmem:[#allocation2 + $0x4b0] sm:$0xff] %vm97, %v4865
  %4930 = vst.msk [vmem:[#allocation2 + $0x4d8] sm:$0xff] %vm97, %v4866
  %4931 = vst.msk [vmem:[#allocation2 + $0x500] sm:$0xff] %vm97, %v4867
  %4932 = vst.msk [vmem:[#allocation2 + $0x528] sm:$0xff] %vm97, %v4868
  %4933 = vst.msk [vmem:[#allocation2 + $0x550] sm:$0xff] %vm97, %v4869
  %4934 = vst.msk [vmem:[#allocation2 + $0x578] sm:$0xff] %vm97, %v4870
  %4935 = vst.msk [vmem:[#allocation2 + $0x5a0] sm:$0xff] %vm97, %v4871
  %4936 = vst.msk [vmem:[#allocation2 + $0x5c8] sm:$0xff] %vm97, %v4872
  %4937 = vst.msk [vmem:[#allocation2 + $0x5f0] sm:$0xff] %vm97, %v4873
  %4938 = vst.msk [vmem:[#allocation2 + $0x618] sm:$0xff] %vm97, %v4874
  %4939 = vst.msk [vmem:[#allocation2 + $0x640] sm:$0xff] %vm97, %v4875
  %4940 = vst.msk [vmem:[#allocation2 + $0x668] sm:$0xff] %vm97, %v4876
  %4941 = vst.msk [vmem:[#allocation2 + $0x690] sm:$0xff] %vm97, %v4877
  %4942 = vst.msk [vmem:[#allocation2 + $0x6b8] sm:$0xff] %vm97, %v4878
  %4943 = vst.msk [vmem:[#allocation2 + $0x6e0] sm:$0xff] %vm97, %v4879
  %4944 = vst.msk [vmem:[#allocation2 + $0x708] sm:$0xff] %vm97, %v4880
  %4945 = vst.msk [vmem:[#allocation2 + $0x730] sm:$0xff] %vm97, %v4881
  %4946 = vst.msk [vmem:[#allocation2 + $0x758] sm:$0xff] %vm97, %v4882
  %4947 = vst.msk [vmem:[#allocation2 + $0x780] sm:$0xff] %vm97, %v4883
  %4948 = vst.msk [vmem:[#allocation2 + $0x7a8] sm:$0xff] %vm97, %v4884
  %4949 = vst.msk [vmem:[#allocation2 + $0x7d0] sm:$0xff] %vm97, %v4885
  %4950 = vst.msk [vmem:[#allocation2 + $0x7f8] sm:$0xff] %vm97, %v4886
  %4951 = vst.msk [vmem:[#allocation2 + $0x820] sm:$0xff] %vm97, %v4887
  %4952 = vst.msk [vmem:[#allocation2 + $0x848] sm:$0xff] %vm97, %v4888
  %4953 = vst.msk [vmem:[#allocation2 + $0x870] sm:$0xff] %vm97, %v4889
  %4954 = vst.msk [vmem:[#allocation2 + $0x898] sm:$0xff] %vm97, %v4890
  %4955 = vst.msk [vmem:[#allocation2 + $0x8c0] sm:$0xff] %vm97, %v4891
  %4956 = vst.msk [vmem:[#allocation2 + $0x8e8] sm:$0xff] %vm97, %v4892
  %4957 = vst.msk [vmem:[#allocation2 + $0x910] sm:$0xff] %vm97, %v4893
  %4958 = vst.msk [vmem:[#allocation2 + $0x938] sm:$0xff] %vm97, %v4894
  %4959 = vst.msk [vmem:[#allocation2 + $0x960] sm:$0xff] %vm97, %v4895
  %4960 = vst.msk [vmem:[#allocation2 + $0x988] sm:$0xff] %vm97, %v4896
  %4961 = vst.msk [vmem:[#allocation2 + $0x9b0] sm:$0xff] %vm97, %v4897
  %4962 = vst.msk [vmem:[#allocation2 + $0x9d8] sm:$0xff] %vm97, %v4898
  %v4963 = vld [vmem:[#allocation3 + $0x1] sm:$0xff]
  %v4964 = vld [vmem:[#allocation3 + $0x9] sm:$0xff]
  %v4965 = vld [vmem:[#allocation3 + $0x19] sm:$0xff]
  %v4966 = vld [vmem:[#allocation3 + $0x21] sm:$0xff]
  %v4967 = vld [vmem:[#allocation3 + $0x31] sm:$0xff]
  %v4968 = vld [vmem:[#allocation3 + $0x39] sm:$0xff]
  %v4969 = vld [vmem:[#allocation3 + $0x49] sm:$0xff]
  %v4970 = vld [vmem:[#allocation3 + $0x51] sm:$0xff]
  %v4971 = vld [vmem:[#allocation3 + $0x61] sm:$0xff]
  %v4972 = vld [vmem:[#allocation3 + $0x69] sm:$0xff]
  %v4973 = vld [vmem:[#allocation3 + $0x79] sm:$0xff]
  %v4974 = vld [vmem:[#allocation3 + $0x81] sm:$0xff]
  %v4975 = vld [vmem:[#allocation3 + $0x91] sm:$0xff]
  %v4976 = vld [vmem:[#allocation3 + $0x99] sm:$0xff]
  %v4977 = vld [vmem:[#allocation3 + $0xa9] sm:$0xff]
  %v4978 = vld [vmem:[#allocation3 + $0xb1] sm:$0xff]
  %v4979 = vld [vmem:[#allocation3 + $0xc1] sm:$0xff]
  %v4980 = vld [vmem:[#allocation3 + $0xc9] sm:$0xff]
  %v4981 = vld [vmem:[#allocation3 + $0xd9] sm:$0xff]
  %v4982 = vld [vmem:[#allocation3 + $0xe1] sm:$0xff]
  %v4983 = vld [vmem:[#allocation3 + $0xf1] sm:$0xff]
  %v4984 = vld [vmem:[#allocation3 + $0xf9] sm:$0xff]
  %v4985 = vld [vmem:[#allocation3 + $0x109] sm:$0xff]
  %v4986 = vld [vmem:[#allocation3 + $0x111] sm:$0xff]
  %v4987 = vld [vmem:[#allocation3 + $0x121] sm:$0xff]
  %v4988 = vld [vmem:[#allocation3 + $0x129] sm:$0xff]
  %v4989 = vld [vmem:[#allocation3 + $0x139] sm:$0xff]
  %v4990 = vld [vmem:[#allocation3 + $0x141] sm:$0xff]
  %v4991 = vld [vmem:[#allocation3 + $0x151] sm:$0xff]
  %v4992 = vld [vmem:[#allocation3 + $0x159] sm:$0xff]
  %v4993 = vld [vmem:[#allocation3 + $0x169] sm:$0xff]
  %v4994 = vld [vmem:[#allocation3 + $0x171] sm:$0xff]
  %v4995 = vld [vmem:[#allocation3 + $0x1b1] sm:$0xff]
  %v4996 = vld [vmem:[#allocation3 + $0x1b9] sm:$0xff]
  %v4997 = vld [vmem:[#allocation3 + $0x1c9] sm:$0xff]
  %v4998 = vld [vmem:[#allocation3 + $0x1d1] sm:$0xff]
  %v4999 = vld [vmem:[#allocation3 + $0x1e1] sm:$0xff]
  %v5000 = vld [vmem:[#allocation3 + $0x1e9] sm:$0xff]
  %v5001 = vld [vmem:[#allocation3 + $0x1f9] sm:$0xff]
  %v5002 = vld [vmem:[#allocation3 + $0x201] sm:$0xff]
  %v5003 = vld [vmem:[#allocation3 + $0x211] sm:$0xff]
  %v5004 = vld [vmem:[#allocation3 + $0x219] sm:$0xff]
  %v5005 = vld [vmem:[#allocation3 + $0x229] sm:$0xff]
  %v5006 = vld [vmem:[#allocation3 + $0x231] sm:$0xff]
  %v5007 = vld [vmem:[#allocation3 + $0x241] sm:$0xff]
  %v5008 = vld [vmem:[#allocation3 + $0x249] sm:$0xff]
  %v5009 = vld [vmem:[#allocation3 + $0x259] sm:$0xff]
  %v5010 = vld [vmem:[#allocation3 + $0x261] sm:$0xff]
  %v5011 = vld [vmem:[#allocation3 + $0x271] sm:$0xff]
  %v5012 = vld [vmem:[#allocation3 + $0x279] sm:$0xff]
  %v5013 = vld [vmem:[#allocation3 + $0x289] sm:$0xff]
  %v5014 = vld [vmem:[#allocation3 + $0x291] sm:$0xff]
  %v5015 = vld [vmem:[#allocation3 + $0x2a1] sm:$0xff]
  %v5016 = vld [vmem:[#allocation3 + $0x2a9] sm:$0xff]
  %v5017 = vld [vmem:[#allocation3 + $0x2b9] sm:$0xff]
  %v5018 = vld [vmem:[#allocation3 + $0x2c1] sm:$0xff]
  %v5019 = vld [vmem:[#allocation3 + $0x2d1] sm:$0xff]
  %v5020 = vld [vmem:[#allocation3 + $0x2d9] sm:$0xff]
  %v5021 = vld [vmem:[#allocation3 + $0x2e9] sm:$0xff]
  %v5022 = vld [vmem:[#allocation3 + $0x2f1] sm:$0xff]
  %v5023 = vld [vmem:[#allocation3 + $0x301] sm:$0xff]
  %v5024 = vld [vmem:[#allocation3 + $0x309] sm:$0xff]
  %v5025 = vld [vmem:[#allocation3 + $0x319] sm:$0xff]
  %v5026 = vld [vmem:[#allocation3 + $0x321] sm:$0xff]
  %5091 = vrot.lane.b32.xlu0 %v4963, 64
  %v5092 = vpop.permute.xlu0 %5091
  %5093 = vrot.lane.b32.xlu0 %v4964, 64
  %v5094 = vpop.permute.xlu0 %5093
  %5095 = vrot.lane.b32.xlu0 %v4965, 64
  %v5096 = vpop.permute.xlu0 %5095
  %5097 = vrot.lane.b32.xlu0 %v4966, 64
  %v5098 = vpop.permute.xlu0 %5097
  %5099 = vrot.lane.b32.xlu0 %v4967, 64
  %v5100 = vpop.permute.xlu0 %5099
  %5101 = vrot.lane.b32.xlu0 %v4968, 64
  %v5102 = vpop.permute.xlu0 %5101
  %5103 = vrot.lane.b32.xlu0 %v4969, 64
  %v5104 = vpop.permute.xlu0 %5103
  %5105 = vrot.lane.b32.xlu0 %v4970, 64
  %v5106 = vpop.permute.xlu0 %5105
  %5107 = vrot.lane.b32.xlu0 %v4971, 64
  %v5108 = vpop.permute.xlu0 %5107
  %5109 = vrot.lane.b32.xlu0 %v4972, 64
  %v5110 = vpop.permute.xlu0 %5109
  %5111 = vrot.lane.b32.xlu0 %v4973, 64
  %v5112 = vpop.permute.xlu0 %5111
  %5113 = vrot.lane.b32.xlu0 %v4974, 64
  %v5114 = vpop.permute.xlu0 %5113
  %5115 = vrot.lane.b32.xlu0 %v4975, 64
  %v5116 = vpop.permute.xlu0 %5115
  %5117 = vrot.lane.b32.xlu0 %v4976, 64
  %v5118 = vpop.permute.xlu0 %5117
  %5119 = vrot.lane.b32.xlu0 %v4977, 64
  %v5120 = vpop.permute.xlu0 %5119
  %5121 = vrot.lane.b32.xlu0 %v4978, 64
  %v5122 = vpop.permute.xlu0 %5121
  %5123 = vrot.lane.b32.xlu0 %v4979, 64
  %v5124 = vpop.permute.xlu0 %5123
  %5125 = vrot.lane.b32.xlu0 %v4980, 64
  %v5126 = vpop.permute.xlu0 %5125
  %5127 = vrot.lane.b32.xlu0 %v4981, 64
  %v5128 = vpop.permute.xlu0 %5127
  %5129 = vrot.lane.b32.xlu0 %v4982, 64
  %v5130 = vpop.permute.xlu0 %5129
  %5131 = vrot.lane.b32.xlu0 %v4983, 64
  %v5132 = vpop.permute.xlu0 %5131
  %5133 = vrot.lane.b32.xlu0 %v4984, 64
  %v5134 = vpop.permute.xlu0 %5133
  %5135 = vrot.lane.b32.xlu0 %v4985, 64
  %v5136 = vpop.permute.xlu0 %5135
  %5137 = vrot.lane.b32.xlu0 %v4986, 64
  %v5138 = vpop.permute.xlu0 %5137
  %5139 = vrot.lane.b32.xlu0 %v4987, 64
  %v5140 = vpop.permute.xlu0 %5139
  %5141 = vrot.lane.b32.xlu0 %v4988, 64
  %v5142 = vpop.permute.xlu0 %5141
  %5143 = vrot.lane.b32.xlu0 %v4989, 64
  %v5144 = vpop.permute.xlu0 %5143
  %5145 = vrot.lane.b32.xlu0 %v4990, 64
  %v5146 = vpop.permute.xlu0 %5145
  %5147 = vrot.lane.b32.xlu0 %v4991, 64
  %v5148 = vpop.permute.xlu0 %5147
  %5149 = vrot.lane.b32.xlu0 %v4992, 64
  %v5150 = vpop.permute.xlu0 %5149
  %5151 = vrot.lane.b32.xlu0 %v4993, 64
  %v5152 = vpop.permute.xlu0 %5151
  %5153 = vrot.lane.b32.xlu0 %v4994, 64
  %v5154 = vpop.permute.xlu0 %5153
  %5155 = vrot.lane.b32.xlu0 %v4995, 64
  %v5156 = vpop.permute.xlu0 %5155
  %5157 = vrot.lane.b32.xlu0 %v4996, 64
  %v5158 = vpop.permute.xlu0 %5157
  %5159 = vrot.lane.b32.xlu0 %v4997, 64
  %v5160 = vpop.permute.xlu0 %5159
  %5161 = vrot.lane.b32.xlu0 %v4998, 64
  %v5162 = vpop.permute.xlu0 %5161
  %5163 = vrot.lane.b32.xlu0 %v4999, 64
  %v5164 = vpop.permute.xlu0 %5163
  %5165 = vrot.lane.b32.xlu0 %v5000, 64
  %v5166 = vpop.permute.xlu0 %5165
  %5167 = vrot.lane.b32.xlu0 %v5001, 64
  %v5168 = vpop.permute.xlu0 %5167
  %5169 = vrot.lane.b32.xlu0 %v5002, 64
  %v5170 = vpop.permute.xlu0 %5169
  %5171 = vrot.lane.b32.xlu0 %v5003, 64
  %v5172 = vpop.permute.xlu0 %5171
  %5173 = vrot.lane.b32.xlu0 %v5004, 64
  %v5174 = vpop.permute.xlu0 %5173
  %5175 = vrot.lane.b32.xlu0 %v5005, 64
  %v5176 = vpop.permute.xlu0 %5175
  %5177 = vrot.lane.b32.xlu0 %v5006, 64
  %v5178 = vpop.permute.xlu0 %5177
  %5179 = vrot.lane.b32.xlu0 %v5007, 64
  %v5180 = vpop.permute.xlu0 %5179
  %5181 = vrot.lane.b32.xlu0 %v5008, 64
  %v5182 = vpop.permute.xlu0 %5181
  %5183 = vrot.lane.b32.xlu0 %v5009, 64
  %v5184 = vpop.permute.xlu0 %5183
  %5185 = vrot.lane.b32.xlu0 %v5010, 64
  %v5186 = vpop.permute.xlu0 %5185
  %5187 = vrot.lane.b32.xlu0 %v5011, 64
  %v5188 = vpop.permute.xlu0 %5187
  %5189 = vrot.lane.b32.xlu0 %v5012, 64
  %v5190 = vpop.permute.xlu0 %5189
  %5191 = vrot.lane.b32.xlu0 %v5013, 64
  %v5192 = vpop.permute.xlu0 %5191
  %5193 = vrot.lane.b32.xlu0 %v5014, 64
  %v5194 = vpop.permute.xlu0 %5193
  %5195 = vrot.lane.b32.xlu0 %v5015, 64
  %v5196 = vpop.permute.xlu0 %5195
  %5197 = vrot.lane.b32.xlu0 %v5016, 64
  %v5198 = vpop.permute.xlu0 %5197
  %5199 = vrot.lane.b32.xlu0 %v5017, 64
  %v5200 = vpop.permute.xlu0 %5199
  %5201 = vrot.lane.b32.xlu0 %v5018, 64
  %v5202 = vpop.permute.xlu0 %5201
  %5203 = vrot.lane.b32.xlu0 %v5019, 64
  %v5204 = vpop.permute.xlu0 %5203
  %5205 = vrot.lane.b32.xlu0 %v5020, 64
  %v5206 = vpop.permute.xlu0 %5205
  %5207 = vrot.lane.b32.xlu0 %v5021, 64
  %v5208 = vpop.permute.xlu0 %5207
  %5209 = vrot.lane.b32.xlu0 %v5022, 64
  %v5210 = vpop.permute.xlu0 %5209
  %5211 = vrot.lane.b32.xlu0 %v5023, 64
  %v5212 = vpop.permute.xlu0 %5211
  %5213 = vrot.lane.b32.xlu0 %v5024, 64
  %v5214 = vpop.permute.xlu0 %5213
  %5215 = vrot.lane.b32.xlu0 %v5025, 64
  %v5216 = vpop.permute.xlu0 %5215
  %5217 = vrot.lane.b32.xlu0 %v5026, 64
  %v5218 = vpop.permute.xlu0 %5217
  %5283 = vst.msk [vmem:[#allocation2] sm:$0xff] %vm482, %v5092
  %5284 = vst.msk [vmem:[#allocation2 + $0x28] sm:$0xff] %vm482, %v5094
  %5285 = vst.msk [vmem:[#allocation2 + $0x50] sm:$0xff] %vm482, %v5096
  %5286 = vst.msk [vmem:[#allocation2 + $0x78] sm:$0xff] %vm482, %v5098
  %5287 = vst.msk [vmem:[#allocation2 + $0xa0] sm:$0xff] %vm482, %v5100
  %5288 = vst.msk [vmem:[#allocation2 + $0xc8] sm:$0xff] %vm482, %v5102
  %5289 = vst.msk [vmem:[#allocation2 + $0xf0] sm:$0xff] %vm482, %v5104
  %5290 = vst.msk [vmem:[#allocation2 + $0x118] sm:$0xff] %vm482, %v5106
  %5291 = vst.msk [vmem:[#allocation2 + $0x140] sm:$0xff] %vm482, %v5108
  %5292 = vst.msk [vmem:[#allocation2 + $0x168] sm:$0xff] %vm482, %v5110
  %5293 = vst.msk [vmem:[#allocation2 + $0x190] sm:$0xff] %vm482, %v5112
  %5294 = vst.msk [vmem:[#allocation2 + $0x1b8] sm:$0xff] %vm482, %v5114
  %5295 = vst.msk [vmem:[#allocation2 + $0x1e0] sm:$0xff] %vm482, %v5116
  %5296 = vst.msk [vmem:[#allocation2 + $0x208] sm:$0xff] %vm482, %v5118
  %5297 = vst.msk [vmem:[#allocation2 + $0x230] sm:$0xff] %vm482, %v5120
  %5298 = vst.msk [vmem:[#allocation2 + $0x258] sm:$0xff] %vm482, %v5122
  %5299 = vst.msk [vmem:[#allocation2 + $0x280] sm:$0xff] %vm482, %v5124
  %5300 = vst.msk [vmem:[#allocation2 + $0x2a8] sm:$0xff] %vm482, %v5126
  %5301 = vst.msk [vmem:[#allocation2 + $0x2d0] sm:$0xff] %vm482, %v5128
  %5302 = vst.msk [vmem:[#allocation2 + $0x2f8] sm:$0xff] %vm482, %v5130
  %5303 = vst.msk [vmem:[#allocation2 + $0x320] sm:$0xff] %vm482, %v5132
  %5304 = vst.msk [vmem:[#allocation2 + $0x348] sm:$0xff] %vm482, %v5134
  %5305 = vst.msk [vmem:[#allocation2 + $0x370] sm:$0xff] %vm482, %v5136
  %5306 = vst.msk [vmem:[#allocation2 + $0x398] sm:$0xff] %vm482, %v5138
  %5307 = vst.msk [vmem:[#allocation2 + $0x3c0] sm:$0xff] %vm482, %v5140
  %5308 = vst.msk [vmem:[#allocation2 + $0x3e8] sm:$0xff] %vm482, %v5142
  %5309 = vst.msk [vmem:[#allocation2 + $0x410] sm:$0xff] %vm482, %v5144
  %5310 = vst.msk [vmem:[#allocation2 + $0x438] sm:$0xff] %vm482, %v5146
  %5311 = vst.msk [vmem:[#allocation2 + $0x460] sm:$0xff] %vm482, %v5148
  %5312 = vst.msk [vmem:[#allocation2 + $0x488] sm:$0xff] %vm482, %v5150
  %5313 = vst.msk [vmem:[#allocation2 + $0x4b0] sm:$0xff] %vm482, %v5152
  %5314 = vst.msk [vmem:[#allocation2 + $0x4d8] sm:$0xff] %vm482, %v5154
  %5315 = vst.msk [vmem:[#allocation2 + $0x500] sm:$0xff] %vm482, %v5156
  %5316 = vst.msk [vmem:[#allocation2 + $0x528] sm:$0xff] %vm482, %v5158
  %5317 = vst.msk [vmem:[#allocation2 + $0x550] sm:$0xff] %vm482, %v5160
  %5318 = vst.msk [vmem:[#allocation2 + $0x578] sm:$0xff] %vm482, %v5162
  %5319 = vst.msk [vmem:[#allocation2 + $0x5a0] sm:$0xff] %vm482, %v5164
  %5320 = vst.msk [vmem:[#allocation2 + $0x5c8] sm:$0xff] %vm482, %v5166
  %5321 = vst.msk [vmem:[#allocation2 + $0x5f0] sm:$0xff] %vm482, %v5168
  %5322 = vst.msk [vmem:[#allocation2 + $0x618] sm:$0xff] %vm482, %v5170
  %5323 = vst.msk [vmem:[#allocation2 + $0x640] sm:$0xff] %vm482, %v5172
  %5324 = vst.msk [vmem:[#allocation2 + $0x668] sm:$0xff] %vm482, %v5174
  %5325 = vst.msk [vmem:[#allocation2 + $0x690] sm:$0xff] %vm482, %v5176
  %5326 = vst.msk [vmem:[#allocation2 + $0x6b8] sm:$0xff] %vm482, %v5178
  %5327 = vst.msk [vmem:[#allocation2 + $0x6e0] sm:$0xff] %vm482, %v5180
  %5328 = vst.msk [vmem:[#allocation2 + $0x708] sm:$0xff] %vm482, %v5182
  %5329 = vst.msk [vmem:[#allocation2 + $0x730] sm:$0xff] %vm482, %v5184
  %5330 = vst.msk [vmem:[#allocation2 + $0x758] sm:$0xff] %vm482, %v5186
  %5331 = vst.msk [vmem:[#allocation2 + $0x780] sm:$0xff] %vm482, %v5188
  %5332 = vst.msk [vmem:[#allocation2 + $0x7a8] sm:$0xff] %vm482, %v5190
  %5333 = vst.msk [vmem:[#allocation2 + $0x7d0] sm:$0xff] %vm482, %v5192
  %5334 = vst.msk [vmem:[#allocation2 + $0x7f8] sm:$0xff] %vm482, %v5194
  %5335 = vst.msk [vmem:[#allocation2 + $0x820] sm:$0xff] %vm482, %v5196
  %5336 = vst.msk [vmem:[#allocation2 + $0x848] sm:$0xff] %vm482, %v5198
  %5337 = vst.msk [vmem:[#allocation2 + $0x870] sm:$0xff] %vm482, %v5200
  %5338 = vst.msk [vmem:[#allocation2 + $0x898] sm:$0xff] %vm482, %v5202
  %5339 = vst.msk [vmem:[#allocation2 + $0x8c0] sm:$0xff] %vm482, %v5204
  %5340 = vst.msk [vmem:[#allocation2 + $0x8e8] sm:$0xff] %vm482, %v5206
  %5341 = vst.msk [vmem:[#allocation2 + $0x910] sm:$0xff] %vm482, %v5208
  %5342 = vst.msk [vmem:[#allocation2 + $0x938] sm:$0xff] %vm482, %v5210
  %5343 = vst.msk [vmem:[#allocation2 + $0x960] sm:$0xff] %vm482, %v5212
  %5344 = vst.msk [vmem:[#allocation2 + $0x988] sm:$0xff] %vm482, %v5214
  %5345 = vst.msk [vmem:[#allocation2 + $0x9b0] sm:$0xff] %vm482, %v5216
  %5346 = vst.msk [vmem:[#allocation2 + $0x9d8] sm:$0xff] %vm482, %v5218
  %v5347 = vld [vmem:[#allocation3 + $0x2] sm:$0xff]
  %v5348 = vld [vmem:[#allocation3 + $0xa] sm:$0xff]
  %v5349 = vld [vmem:[#allocation3 + $0x1a] sm:$0xff]
  %v5350 = vld [vmem:[#allocation3 + $0x22] sm:$0xff]
  %v5351 = vld [vmem:[#allocation3 + $0x32] sm:$0xff]
  %v5352 = vld [vmem:[#allocation3 + $0x3a] sm:$0xff]
  %v5353 = vld [vmem:[#allocation3 + $0x4a] sm:$0xff]
  %v5354 = vld [vmem:[#allocation3 + $0x52] sm:$0xff]
  %v5355 = vld [vmem:[#allocation3 + $0x62] sm:$0xff]
  %v5356 = vld [vmem:[#allocation3 + $0x6a] sm:$0xff]
  %v5357 = vld [vmem:[#allocation3 + $0x7a] sm:$0xff]
  %v5358 = vld [vmem:[#allocation3 + $0x82] sm:$0xff]
  %v5359 = vld [vmem:[#allocation3 + $0x92] sm:$0xff]
  %v5360 = vld [vmem:[#allocation3 + $0x9a] sm:$0xff]
  %v5361 = vld [vmem:[#allocation3 + $0xaa] sm:$0xff]
  %v5362 = vld [vmem:[#allocation3 + $0xb2] sm:$0xff]
  %v5363 = vld [vmem:[#allocation3 + $0xc2] sm:$0xff]
  %v5364 = vld [vmem:[#allocation3 + $0xca] sm:$0xff]
  %v5365 = vld [vmem:[#allocation3 + $0xda] sm:$0xff]
  %v5366 = vld [vmem:[#allocation3 + $0xe2] sm:$0xff]
  %v5367 = vld [vmem:[#allocation3 + $0xf2] sm:$0xff]
  %v5368 = vld [vmem:[#allocation3 + $0xfa] sm:$0xff]
  %v5369 = vld [vmem:[#allocation3 + $0x10a] sm:$0xff]
  %v5370 = vld [vmem:[#allocation3 + $0x112] sm:$0xff]
  %v5371 = vld [vmem:[#allocation3 + $0x122] sm:$0xff]
  %v5372 = vld [vmem:[#allocation3 + $0x12a] sm:$0xff]
  %v5373 = vld [vmem:[#allocation3 + $0x13a] sm:$0xff]
  %v5374 = vld [vmem:[#allocation3 + $0x142] sm:$0xff]
  %v5375 = vld [vmem:[#allocation3 + $0x152] sm:$0xff]
  %v5376 = vld [vmem:[#allocation3 + $0x15a] sm:$0xff]
  %v5377 = vld [vmem:[#allocation3 + $0x16a] sm:$0xff]
  %v5378 = vld [vmem:[#allocation3 + $0x172] sm:$0xff]
  %v5379 = vld [vmem:[#allocation3 + $0x1b2] sm:$0xff]
  %v5380 = vld [vmem:[#allocation3 + $0x1ba] sm:$0xff]
  %v5381 = vld [vmem:[#allocation3 + $0x1ca] sm:$0xff]
  %v5382 = vld [vmem:[#allocation3 + $0x1d2] sm:$0xff]
  %v5383 = vld [vmem:[#allocation3 + $0x1e2] sm:$0xff]
  %v5384 = vld [vmem:[#allocation3 + $0x1ea] sm:$0xff]
  %v5385 = vld [vmem:[#allocation3 + $0x1fa] sm:$0xff]
  %v5386 = vld [vmem:[#allocation3 + $0x202] sm:$0xff]
  %v5387 = vld [vmem:[#allocation3 + $0x212] sm:$0xff]
  %v5388 = vld [vmem:[#allocation3 + $0x21a] sm:$0xff]
  %v5389 = vld [vmem:[#allocation3 + $0x22a] sm:$0xff]
  %v5390 = vld [vmem:[#allocation3 + $0x232] sm:$0xff]
  %v5391 = vld [vmem:[#allocation3 + $0x242] sm:$0xff]
  %v5392 = vld [vmem:[#allocation3 + $0x24a] sm:$0xff]
  %v5393 = vld [vmem:[#allocation3 + $0x25a] sm:$0xff]
  %v5394 = vld [vmem:[#allocation3 + $0x262] sm:$0xff]
  %v5395 = vld [vmem:[#allocation3 + $0x272] sm:$0xff]
  %v5396 = vld [vmem:[#allocation3 + $0x27a] sm:$0xff]
  %v5397 = vld [vmem:[#allocation3 + $0x28a] sm:$0xff]
  %v5398 = vld [vmem:[#allocation3 + $0x292] sm:$0xff]
  %v5399 = vld [vmem:[#allocation3 + $0x2a2] sm:$0xff]
  %v5400 = vld [vmem:[#allocation3 + $0x2aa] sm:$0xff]
  %v5401 = vld [vmem:[#allocation3 + $0x2ba] sm:$0xff]
  %v5402 = vld [vmem:[#allocation3 + $0x2c2] sm:$0xff]
  %v5403 = vld [vmem:[#allocation3 + $0x2d2] sm:$0xff]
  %v5404 = vld [vmem:[#allocation3 + $0x2da] sm:$0xff]
  %v5405 = vld [vmem:[#allocation3 + $0x2ea] sm:$0xff]
  %v5406 = vld [vmem:[#allocation3 + $0x2f2] sm:$0xff]
  %v5407 = vld [vmem:[#allocation3 + $0x302] sm:$0xff]
  %v5408 = vld [vmem:[#allocation3 + $0x30a] sm:$0xff]
  %v5409 = vld [vmem:[#allocation3 + $0x31a] sm:$0xff]
  %v5410 = vld [vmem:[#allocation3 + $0x322] sm:$0xff]
  %5411 = vst.msk [vmem:[#allocation2 + $0x8] sm:$0xff] %vm97, %v5347
  %5412 = vst.msk [vmem:[#allocation2 + $0x30] sm:$0xff] %vm97, %v5348
  %5413 = vst.msk [vmem:[#allocation2 + $0x58] sm:$0xff] %vm97, %v5349
  %5414 = vst.msk [vmem:[#allocation2 + $0x80] sm:$0xff] %vm97, %v5350
  %5415 = vst.msk [vmem:[#allocation2 + $0xa8] sm:$0xff] %vm97, %v5351
  %5416 = vst.msk [vmem:[#allocation2 + $0xd0] sm:$0xff] %vm97, %v5352
  %5417 = vst.msk [vmem:[#allocation2 + $0xf8] sm:$0xff] %vm97, %v5353
  %5418 = vst.msk [vmem:[#allocation2 + $0x120] sm:$0xff] %vm97, %v5354
  %5419 = vst.msk [vmem:[#allocation2 + $0x148] sm:$0xff] %vm97, %v5355
  %5420 = vst.msk [vmem:[#allocation2 + $0x170] sm:$0xff] %vm97, %v5356
  %5421 = vst.msk [vmem:[#allocation2 + $0x198] sm:$0xff] %vm97, %v5357
  %5422 = vst.msk [vmem:[#allocation2 + $0x1c0] sm:$0xff] %vm97, %v5358
  %5423 = vst.msk [vmem:[#allocation2 + $0x1e8] sm:$0xff] %vm97, %v5359
  %5424 = vst.msk [vmem:[#allocation2 + $0x210] sm:$0xff] %vm97, %v5360
  %5425 = vst.msk [vmem:[#allocation2 + $0x238] sm:$0xff] %vm97, %v5361
  %5426 = vst.msk [vmem:[#allocation2 + $0x260] sm:$0xff] %vm97, %v5362
  %5427 = vst.msk [vmem:[#allocation2 + $0x288] sm:$0xff] %vm97, %v5363
  %5428 = vst.msk [vmem:[#allocation2 + $0x2b0] sm:$0xff] %vm97, %v5364
  %5429 = vst.msk [vmem:[#allocation2 + $0x2d8] sm:$0xff] %vm97, %v5365
  %5430 = vst.msk [vmem:[#allocation2 + $0x300] sm:$0xff] %vm97, %v5366
  %5431 = vst.msk [vmem:[#allocation2 + $0x328] sm:$0xff] %vm97, %v5367
  %5432 = vst.msk [vmem:[#allocation2 + $0x350] sm:$0xff] %vm97, %v5368
  %5433 = vst.msk [vmem:[#allocation2 + $0x378] sm:$0xff] %vm97, %v5369
  %5434 = vst.msk [vmem:[#allocation2 + $0x3a0] sm:$0xff] %vm97, %v5370
  %5435 = vst.msk [vmem:[#allocation2 + $0x3c8] sm:$0xff] %vm97, %v5371
  %5436 = vst.msk [vmem:[#allocation2 + $0x3f0] sm:$0xff] %vm97, %v5372
  %5437 = vst.msk [vmem:[#allocation2 + $0x418] sm:$0xff] %vm97, %v5373
  %5438 = vst.msk [vmem:[#allocation2 + $0x440] sm:$0xff] %vm97, %v5374
  %5439 = vst.msk [vmem:[#allocation2 + $0x468] sm:$0xff] %vm97, %v5375
  %5440 = vst.msk [vmem:[#allocation2 + $0x490] sm:$0xff] %vm97, %v5376
  %5441 = vst.msk [vmem:[#allocation2 + $0x4b8] sm:$0xff] %vm97, %v5377
  %5442 = vst.msk [vmem:[#allocation2 + $0x4e0] sm:$0xff] %vm97, %v5378
  %5443 = vst.msk [vmem:[#allocation2 + $0x508] sm:$0xff] %vm97, %v5379
  %5444 = vst.msk [vmem:[#allocation2 + $0x530] sm:$0xff] %vm97, %v5380
  %5445 = vst.msk [vmem:[#allocation2 + $0x558] sm:$0xff] %vm97, %v5381
  %5446 = vst.msk [vmem:[#allocation2 + $0x580] sm:$0xff] %vm97, %v5382
  %5447 = vst.msk [vmem:[#allocation2 + $0x5a8] sm:$0xff] %vm97, %v5383
  %5448 = vst.msk [vmem:[#allocation2 + $0x5d0] sm:$0xff] %vm97, %v5384
  %5449 = vst.msk [vmem:[#allocation2 + $0x5f8] sm:$0xff] %vm97, %v5385
  %5450 = vst.msk [vmem:[#allocation2 + $0x620] sm:$0xff] %vm97, %v5386
  %5451 = vst.msk [vmem:[#allocation2 + $0x648] sm:$0xff] %vm97, %v5387
  %5452 = vst.msk [vmem:[#allocation2 + $0x670] sm:$0xff] %vm97, %v5388
  %5453 = vst.msk [vmem:[#allocation2 + $0x698] sm:$0xff] %vm97, %v5389
  %5454 = vst.msk [vmem:[#allocation2 + $0x6c0] sm:$0xff] %vm97, %v5390
  %5455 = vst.msk [vmem:[#allocation2 + $0x6e8] sm:$0xff] %vm97, %v5391
  %5456 = vst.msk [vmem:[#allocation2 + $0x710] sm:$0xff] %vm97, %v5392
  %5457 = vst.msk [vmem:[#allocation2 + $0x738] sm:$0xff] %vm97, %v5393
  %5458 = vst.msk [vmem:[#allocation2 + $0x760] sm:$0xff] %vm97, %v5394
  %5459 = vst.msk [vmem:[#allocation2 + $0x788] sm:$0xff] %vm97, %v5395
  %5460 = vst.msk [vmem:[#allocation2 + $0x7b0] sm:$0xff] %vm97, %v5396
  %5461 = vst.msk [vmem:[#allocation2 + $0x7d8] sm:$0xff] %vm97, %v5397
  %5462 = vst.msk [vmem:[#allocation2 + $0x800] sm:$0xff] %vm97, %v5398
  %5463 = vst.msk [vmem:[#allocation2 + $0x828] sm:$0xff] %vm97, %v5399
  %5464 = vst.msk [vmem:[#allocation2 + $0x850] sm:$0xff] %vm97, %v5400
  %5465 = vst.msk [vmem:[#allocation2 + $0x878] sm:$0xff] %vm97, %v5401
  %5466 = vst.msk [vmem:[#allocation2 + $0x8a0] sm:$0xff] %vm97, %v5402
  %5467 = vst.msk [vmem:[#allocation2 + $0x8c8] sm:$0xff] %vm97, %v5403
  %5468 = vst.msk [vmem:[#allocation2 + $0x8f0] sm:$0xff] %vm97, %v5404
  %5469 = vst.msk [vmem:[#allocation2 + $0x918] sm:$0xff] %vm97, %v5405
  %5470 = vst.msk [vmem:[#allocation2 + $0x940] sm:$0xff] %vm97, %v5406
  %5471 = vst.msk [vmem:[#allocation2 + $0x968] sm:$0xff] %vm97, %v5407
  %5472 = vst.msk [vmem:[#allocation2 + $0x990] sm:$0xff] %vm97, %v5408
  %5473 = vst.msk [vmem:[#allocation2 + $0x9b8] sm:$0xff] %vm97, %v5409
  %5474 = vst.msk [vmem:[#allocation2 + $0x9e0] sm:$0xff] %vm97, %v5410
  %v5475 = vld [vmem:[%s4770] sm:$0xff]
  %v5476 = vld [vmem:[%s4770 + $0x8] sm:$0xff]
  %v5477 = vld [vmem:[%s4770 + $0x18] sm:$0xff]
  %v5478 = vld [vmem:[%s4770 + $0x20] sm:$0xff]
  %v5479 = vld [vmem:[%s4770 + $0x30] sm:$0xff]
  %v5480 = vld [vmem:[%s4770 + $0x38] sm:$0xff]
  %v5481 = vld [vmem:[%s4770 + $0x48] sm:$0xff]
  %v5482 = vld [vmem:[%s4770 + $0x50] sm:$0xff]
  %v5483 = vld [vmem:[%s4770 + $0x60] sm:$0xff]
  %v5484 = vld [vmem:[%s4770 + $0x68] sm:$0xff]
  %v5485 = vld [vmem:[%s4770 + $0x78] sm:$0xff]
  %v5486 = vld [vmem:[%s4770 + $0x80] sm:$0xff]
  %v5487 = vld [vmem:[%s4770 + $0x90] sm:$0xff]
  %v5488 = vld [vmem:[%s4770 + $0x98] sm:$0xff]
  %v5489 = vld [vmem:[%s4770 + $0xa8] sm:$0xff]
  %v5490 = vld [vmem:[%s4770 + $0xb0] sm:$0xff]
  %v5491 = vld [vmem:[%s4770 + $0xc0] sm:$0xff]
  %v5492 = vld [vmem:[%s4770 + $0xc8] sm:$0xff]
  %v5493 = vld [vmem:[%s4770 + $0xd8] sm:$0xff]
  %v5494 = vld [vmem:[%s4770 + $0xe0] sm:$0xff]
  %v5495 = vld [vmem:[%s4770 + $0xf0] sm:$0xff]
  %v5496 = vld [vmem:[%s4770 + $0xf8] sm:$0xff]
  %v5497 = vld [vmem:[%s4770 + $0x108] sm:$0xff]
  %v5498 = vld [vmem:[%s4770 + $0x110] sm:$0xff]
  %v5499 = vld [vmem:[%s4770 + $0x120] sm:$0xff]
  %v5500 = vld [vmem:[%s4770 + $0x128] sm:$0xff]
  %v5501 = vld [vmem:[%s4770 + $0x138] sm:$0xff]
  %v5502 = vld [vmem:[%s4770 + $0x140] sm:$0xff]
  %v5503 = vld [vmem:[%s4770 + $0x150] sm:$0xff]
  %v5504 = vld [vmem:[%s4770 + $0x158] sm:$0xff]
  %v5505 = vld [vmem:[%s4770 + $0x168] sm:$0xff]
  %v5506 = vld [vmem:[%s4770 + $0x170] sm:$0xff]
  %v5507 = vld [vmem:[%s4770 + $0x1b0] sm:$0xff]
  %v5508 = vld [vmem:[%s4770 + $0x1b8] sm:$0xff]
  %v5509 = vld [vmem:[%s4770 + $0x1c8] sm:$0xff]
  %v5510 = vld [vmem:[%s4770 + $0x1d0] sm:$0xff]
  %v5511 = vld [vmem:[%s4770 + $0x1e0] sm:$0xff]
  %v5512 = vld [vmem:[%s4770 + $0x1e8] sm:$0xff]
  %v5513 = vld [vmem:[%s4770 + $0x1f8] sm:$0xff]
  %v5514 = vld [vmem:[%s4770 + $0x200] sm:$0xff]
  %v5515 = vld [vmem:[%s4770 + $0x210] sm:$0xff]
  %v5516 = vld [vmem:[%s4770 + $0x218] sm:$0xff]
  %v5517 = vld [vmem:[%s4770 + $0x228] sm:$0xff]
  %v5518 = vld [vmem:[%s4770 + $0x230] sm:$0xff]
  %v5519 = vld [vmem:[%s4770 + $0x240] sm:$0xff]
  %v5520 = vld [vmem:[%s4770 + $0x248] sm:$0xff]
  %v5521 = vld [vmem:[%s4770 + $0x258] sm:$0xff]
  %v5522 = vld [vmem:[%s4770 + $0x260] sm:$0xff]
  %v5523 = vld [vmem:[%s4770 + $0x270] sm:$0xff]
  %v5524 = vld [vmem:[%s4770 + $0x278] sm:$0xff]
  %v5525 = vld [vmem:[%s4770 + $0x288] sm:$0xff]
  %v5526 = vld [vmem:[%s4770 + $0x290] sm:$0xff]
  %v5527 = vld [vmem:[%s4770 + $0x2a0] sm:$0xff]
  %v5528 = vld [vmem:[%s4770 + $0x2a8] sm:$0xff]
  %v5529 = vld [vmem:[%s4770 + $0x2b8] sm:$0xff]
  %v5530 = vld [vmem:[%s4770 + $0x2c0] sm:$0xff]
  %v5531 = vld [vmem:[%s4770 + $0x2d0] sm:$0xff]
  %v5532 = vld [vmem:[%s4770 + $0x2d8] sm:$0xff]
  %v5533 = vld [vmem:[%s4770 + $0x2e8] sm:$0xff]
  %v5534 = vld [vmem:[%s4770 + $0x2f0] sm:$0xff]
  %v5535 = vld [vmem:[%s4770 + $0x300] sm:$0xff]
  %v5536 = vld [vmem:[%s4770 + $0x308] sm:$0xff]
  %v5537 = vld [vmem:[%s4770 + $0x318] sm:$0xff]
  %v5538 = vld [vmem:[%s4770 + $0x320] sm:$0xff]
  %5603 = vrot.lane.b32.xlu0 %v5475, 64
  %v5604 = vpop.permute.xlu0 %5603
  %5605 = vrot.lane.b32.xlu0 %v5476, 64
  %v5606 = vpop.permute.xlu0 %5605
  %5607 = vrot.lane.b32.xlu0 %v5477, 64
  %v5608 = vpop.permute.xlu0 %5607
  %5609 = vrot.lane.b32.xlu0 %v5478, 64
  %v5610 = vpop.permute.xlu0 %5609
  %5611 = vrot.lane.b32.xlu0 %v5479, 64
  %v5612 = vpop.permute.xlu0 %5611
  %5613 = vrot.lane.b32.xlu0 %v5480, 64
  %v5614 = vpop.permute.xlu0 %5613
  %5615 = vrot.lane.b32.xlu0 %v5481, 64
  %v5616 = vpop.permute.xlu0 %5615
  %5617 = vrot.lane.b32.xlu0 %v5482, 64
  %v5618 = vpop.permute.xlu0 %5617
  %5619 = vrot.lane.b32.xlu0 %v5483, 64
  %v5620 = vpop.permute.xlu0 %5619
  %5621 = vrot.lane.b32.xlu0 %v5484, 64
  %v5622 = vpop.permute.xlu0 %5621
  %5623 = vrot.lane.b32.xlu0 %v5485, 64
  %v5624 = vpop.permute.xlu0 %5623
  %5625 = vrot.lane.b32.xlu0 %v5486, 64
  %v5626 = vpop.permute.xlu0 %5625
  %5627 = vrot.lane.b32.xlu0 %v5487, 64
  %v5628 = vpop.permute.xlu0 %5627
  %5629 = vrot.lane.b32.xlu0 %v5488, 64
  %v5630 = vpop.permute.xlu0 %5629
  %5631 = vrot.lane.b32.xlu0 %v5489, 64
  %v5632 = vpop.permute.xlu0 %5631
  %5633 = vrot.lane.b32.xlu0 %v5490, 64
  %v5634 = vpop.permute.xlu0 %5633
  %5635 = vrot.lane.b32.xlu0 %v5491, 64
  %v5636 = vpop.permute.xlu0 %5635
  %5637 = vrot.lane.b32.xlu0 %v5492, 64
  %v5638 = vpop.permute.xlu0 %5637
  %5639 = vrot.lane.b32.xlu0 %v5493, 64
  %v5640 = vpop.permute.xlu0 %5639
  %5641 = vrot.lane.b32.xlu0 %v5494, 64
  %v5642 = vpop.permute.xlu0 %5641
  %5643 = vrot.lane.b32.xlu0 %v5495, 64
  %v5644 = vpop.permute.xlu0 %5643
  %5645 = vrot.lane.b32.xlu0 %v5496, 64
  %v5646 = vpop.permute.xlu0 %5645
  %5647 = vrot.lane.b32.xlu0 %v5497, 64
  %v5648 = vpop.permute.xlu0 %5647
  %5649 = vrot.lane.b32.xlu0 %v5498, 64
  %v5650 = vpop.permute.xlu0 %5649
  %5651 = vrot.lane.b32.xlu0 %v5499, 64
  %v5652 = vpop.permute.xlu0 %5651
  %5653 = vrot.lane.b32.xlu0 %v5500, 64
  %v5654 = vpop.permute.xlu0 %5653
  %5655 = vrot.lane.b32.xlu0 %v5501, 64
  %v5656 = vpop.permute.xlu0 %5655
  %5657 = vrot.lane.b32.xlu0 %v5502, 64
  %v5658 = vpop.permute.xlu0 %5657
  %5659 = vrot.lane.b32.xlu0 %v5503, 64
  %v5660 = vpop.permute.xlu0 %5659
  %5661 = vrot.lane.b32.xlu0 %v5504, 64
  %v5662 = vpop.permute.xlu0 %5661
  %5663 = vrot.lane.b32.xlu0 %v5505, 64
  %v5664 = vpop.permute.xlu0 %5663
  %5665 = vrot.lane.b32.xlu0 %v5506, 64
  %v5666 = vpop.permute.xlu0 %5665
  %5667 = vrot.lane.b32.xlu0 %v5507, 64
  %v5668 = vpop.permute.xlu0 %5667
  %5669 = vrot.lane.b32.xlu0 %v5508, 64
  %v5670 = vpop.permute.xlu0 %5669
  %5671 = vrot.lane.b32.xlu0 %v5509, 64
  %v5672 = vpop.permute.xlu0 %5671
  %5673 = vrot.lane.b32.xlu0 %v5510, 64
  %v5674 = vpop.permute.xlu0 %5673
  %5675 = vrot.lane.b32.xlu0 %v5511, 64
  %v5676 = vpop.permute.xlu0 %5675
  %5677 = vrot.lane.b32.xlu0 %v5512, 64
  %v5678 = vpop.permute.xlu0 %5677
  %5679 = vrot.lane.b32.xlu0 %v5513, 64
  %v5680 = vpop.permute.xlu0 %5679
  %5681 = vrot.lane.b32.xlu0 %v5514, 64
  %v5682 = vpop.permute.xlu0 %5681
  %5683 = vrot.lane.b32.xlu0 %v5515, 64
  %v5684 = vpop.permute.xlu0 %5683
  %5685 = vrot.lane.b32.xlu0 %v5516, 64
  %v5686 = vpop.permute.xlu0 %5685
  %5687 = vrot.lane.b32.xlu0 %v5517, 64
  %v5688 = vpop.permute.xlu0 %5687
  %5689 = vrot.lane.b32.xlu0 %v5518, 64
  %v5690 = vpop.permute.xlu0 %5689
  %5691 = vrot.lane.b32.xlu0 %v5519, 64
  %v5692 = vpop.permute.xlu0 %5691
  %5693 = vrot.lane.b32.xlu0 %v5520, 64
  %v5694 = vpop.permute.xlu0 %5693
  %5695 = vrot.lane.b32.xlu0 %v5521, 64
  %v5696 = vpop.permute.xlu0 %5695
  %5697 = vrot.lane.b32.xlu0 %v5522, 64
  %v5698 = vpop.permute.xlu0 %5697
  %5699 = vrot.lane.b32.xlu0 %v5523, 64
  %v5700 = vpop.permute.xlu0 %5699
  %5701 = vrot.lane.b32.xlu0 %v5524, 64
  %v5702 = vpop.permute.xlu0 %5701
  %5703 = vrot.lane.b32.xlu0 %v5525, 64
  %v5704 = vpop.permute.xlu0 %5703
  %5705 = vrot.lane.b32.xlu0 %v5526, 64
  %v5706 = vpop.permute.xlu0 %5705
  %5707 = vrot.lane.b32.xlu0 %v5527, 64
  %v5708 = vpop.permute.xlu0 %5707
  %5709 = vrot.lane.b32.xlu0 %v5528, 64
  %v5710 = vpop.permute.xlu0 %5709
  %5711 = vrot.lane.b32.xlu0 %v5529, 64
  %v5712 = vpop.permute.xlu0 %5711
  %5713 = vrot.lane.b32.xlu0 %v5530, 64
  %v5714 = vpop.permute.xlu0 %5713
  %5715 = vrot.lane.b32.xlu0 %v5531, 64
  %v5716 = vpop.permute.xlu0 %5715
  %5717 = vrot.lane.b32.xlu0 %v5532, 64
  %v5718 = vpop.permute.xlu0 %5717
  %5719 = vrot.lane.b32.xlu0 %v5533, 64
  %v5720 = vpop.permute.xlu0 %5719
  %5721 = vrot.lane.b32.xlu0 %v5534, 64
  %v5722 = vpop.permute.xlu0 %5721
  %5723 = vrot.lane.b32.xlu0 %v5535, 64
  %v5724 = vpop.permute.xlu0 %5723
  %5725 = vrot.lane.b32.xlu0 %v5536, 64
  %v5726 = vpop.permute.xlu0 %5725
  %5727 = vrot.lane.b32.xlu0 %v5537, 64
  %v5728 = vpop.permute.xlu0 %5727
  %5729 = vrot.lane.b32.xlu0 %v5538, 64
  %v5730 = vpop.permute.xlu0 %5729
  %5795 = vst.msk [vmem:[#allocation2 + $0x8] sm:$0xff] %vm482, %v5604
  %5796 = vst.msk [vmem:[#allocation2 + $0x30] sm:$0xff] %vm482, %v5606
  %5797 = vst.msk [vmem:[#allocation2 + $0x58] sm:$0xff] %vm482, %v5608
  %5798 = vst.msk [vmem:[#allocation2 + $0x80] sm:$0xff] %vm482, %v5610
  %5799 = vst.msk [vmem:[#allocation2 + $0xa8] sm:$0xff] %vm482, %v5612
  %5800 = vst.msk [vmem:[#allocation2 + $0xd0] sm:$0xff] %vm482, %v5614
  %5801 = vst.msk [vmem:[#allocation2 + $0xf8] sm:$0xff] %vm482, %v5616
  %5802 = vst.msk [vmem:[#allocation2 + $0x120] sm:$0xff] %vm482, %v5618
  %5803 = vst.msk [vmem:[#allocation2 + $0x148] sm:$0xff] %vm482, %v5620
  %5804 = vst.msk [vmem:[#allocation2 + $0x170] sm:$0xff] %vm482, %v5622
  %5805 = vst.msk [vmem:[#allocation2 + $0x198] sm:$0xff] %vm482, %v5624
  %5806 = vst.msk [vmem:[#allocation2 + $0x1c0] sm:$0xff] %vm482, %v5626
  %5807 = vst.msk [vmem:[#allocation2 + $0x1e8] sm:$0xff] %vm482, %v5628
  %5808 = vst.msk [vmem:[#allocation2 + $0x210] sm:$0xff] %vm482, %v5630
  %5809 = vst.msk [vmem:[#allocation2 + $0x238] sm:$0xff] %vm482, %v5632
  %5810 = vst.msk [vmem:[#allocation2 + $0x260] sm:$0xff] %vm482, %v5634
  %5811 = vst.msk [vmem:[#allocation2 + $0x288] sm:$0xff] %vm482, %v5636
  %5812 = vst.msk [vmem:[#allocation2 + $0x2b0] sm:$0xff] %vm482, %v5638
  %5813 = vst.msk [vmem:[#allocation2 + $0x2d8] sm:$0xff] %vm482, %v5640
  %5814 = vst.msk [vmem:[#allocation2 + $0x300] sm:$0xff] %vm482, %v5642
  %5815 = vst.msk [vmem:[#allocation2 + $0x328] sm:$0xff] %vm482, %v5644
  %5816 = vst.msk [vmem:[#allocation2 + $0x350] sm:$0xff] %vm482, %v5646
  %5817 = vst.msk [vmem:[#allocation2 + $0x378] sm:$0xff] %vm482, %v5648
  %5818 = vst.msk [vmem:[#allocation2 + $0x3a0] sm:$0xff] %vm482, %v5650
  %5819 = vst.msk [vmem:[#allocation2 + $0x3c8] sm:$0xff] %vm482, %v5652
  %5820 = vst.msk [vmem:[#allocation2 + $0x3f0] sm:$0xff] %vm482, %v5654
  %5821 = vst.msk [vmem:[#allocation2 + $0x418] sm:$0xff] %vm482, %v5656
  %5822 = vst.msk [vmem:[#allocation2 + $0x440] sm:$0xff] %vm482, %v5658
  %5823 = vst.msk [vmem:[#allocation2 + $0x468] sm:$0xff] %vm482, %v5660
  %5824 = vst.msk [vmem:[#allocation2 + $0x490] sm:$0xff] %vm482, %v5662
  %5825 = vst.msk [vmem:[#allocation2 + $0x4b8] sm:$0xff] %vm482, %v5664
  %5826 = vst.msk [vmem:[#allocation2 + $0x4e0] sm:$0xff] %vm482, %v5666
  %5827 = vst.msk [vmem:[#allocation2 + $0x508] sm:$0xff] %vm482, %v5668
  %5828 = vst.msk [vmem:[#allocation2 + $0x530] sm:$0xff] %vm482, %v5670
  %5829 = vst.msk [vmem:[#allocation2 + $0x558] sm:$0xff] %vm482, %v5672
  %5830 = vst.msk [vmem:[#allocation2 + $0x580] sm:$0xff] %vm482, %v5674
  %5831 = vst.msk [vmem:[#allocation2 + $0x5a8] sm:$0xff] %vm482, %v5676
  %5832 = vst.msk [vmem:[#allocation2 + $0x5d0] sm:$0xff] %vm482, %v5678
  %5833 = vst.msk [vmem:[#allocation2 + $0x5f8] sm:$0xff] %vm482, %v5680
  %5834 = vst.msk [vmem:[#allocation2 + $0x620] sm:$0xff] %vm482, %v5682
  %5835 = vst.msk [vmem:[#allocation2 + $0x648] sm:$0xff] %vm482, %v5684
  %5836 = vst.msk [vmem:[#allocation2 + $0x670] sm:$0xff] %vm482, %v5686
  %5837 = vst.msk [vmem:[#allocation2 + $0x698] sm:$0xff] %vm482, %v5688
  %5838 = vst.msk [vmem:[#allocation2 + $0x6c0] sm:$0xff] %vm482, %v5690
  %5839 = vst.msk [vmem:[#allocation2 + $0x6e8] sm:$0xff] %vm482, %v5692
  %5840 = vst.msk [vmem:[#allocation2 + $0x710] sm:$0xff] %vm482, %v5694
  %5841 = vst.msk [vmem:[#allocation2 + $0x738] sm:$0xff] %vm482, %v5696
  %5842 = vst.msk [vmem:[#allocation2 + $0x760] sm:$0xff] %vm482, %v5698
  %5843 = vst.msk [vmem:[#allocation2 + $0x788] sm:$0xff] %vm482, %v5700
  %5844 = vst.msk [vmem:[#allocation2 + $0x7b0] sm:$0xff] %vm482, %v5702
  %5845 = vst.msk [vmem:[#allocation2 + $0x7d8] sm:$0xff] %vm482, %v5704
  %5846 = vst.msk [vmem:[#allocation2 + $0x800] sm:$0xff] %vm482, %v5706
  %5847 = vst.msk [vmem:[#allocation2 + $0x828] sm:$0xff] %vm482, %v5708
  %5848 = vst.msk [vmem:[#allocation2 + $0x850] sm:$0xff] %vm482, %v5710
  %5849 = vst.msk [vmem:[#allocation2 + $0x878] sm:$0xff] %vm482, %v5712
  %5850 = vst.msk [vmem:[#allocation2 + $0x8a0] sm:$0xff] %vm482, %v5714
  %5851 = vst.msk [vmem:[#allocation2 + $0x8c8] sm:$0xff] %vm482, %v5716
  %5852 = vst.msk [vmem:[#allocation2 + $0x8f0] sm:$0xff] %vm482, %v5718
  %5853 = vst.msk [vmem:[#allocation2 + $0x918] sm:$0xff] %vm482, %v5720
  %5854 = vst.msk [vmem:[#allocation2 + $0x940] sm:$0xff] %vm482, %v5722
  %5855 = vst.msk [vmem:[#allocation2 + $0x968] sm:$0xff] %vm482, %v5724
  %5856 = vst.msk [vmem:[#allocation2 + $0x990] sm:$0xff] %vm482, %v5726
  %5857 = vst.msk [vmem:[#allocation2 + $0x9b8] sm:$0xff] %vm482, %v5728
  %5858 = vst.msk [vmem:[#allocation2 + $0x9e0] sm:$0xff] %vm482, %v5730
  %v5859 = vld [vmem:[%s4770 + $0x1] sm:$0xff]
  %v5860 = vld [vmem:[%s4770 + $0x9] sm:$0xff]
  %v5861 = vld [vmem:[%s4770 + $0x19] sm:$0xff]
  %v5862 = vld [vmem:[%s4770 + $0x21] sm:$0xff]
  %v5863 = vld [vmem:[%s4770 + $0x31] sm:$0xff]
  %v5864 = vld [vmem:[%s4770 + $0x39] sm:$0xff]
  %v5865 = vld [vmem:[%s4770 + $0x49] sm:$0xff]
  %v5866 = vld [vmem:[%s4770 + $0x51] sm:$0xff]
  %v5867 = vld [vmem:[%s4770 + $0x61] sm:$0xff]
  %v5868 = vld [vmem:[%s4770 + $0x69] sm:$0xff]
  %v5869 = vld [vmem:[%s4770 + $0x79] sm:$0xff]
  %v5870 = vld [vmem:[%s4770 + $0x81] sm:$0xff]
  %v5871 = vld [vmem:[%s4770 + $0x91] sm:$0xff]
  %v5872 = vld [vmem:[%s4770 + $0x99] sm:$0xff]
  %v5873 = vld [vmem:[%s4770 + $0xa9] sm:$0xff]
  %v5874 = vld [vmem:[%s4770 + $0xb1] sm:$0xff]
  %v5875 = vld [vmem:[%s4770 + $0xc1] sm:$0xff]
  %v5876 = vld [vmem:[%s4770 + $0xc9] sm:$0xff]
  %v5877 = vld [vmem:[%s4770 + $0xd9] sm:$0xff]
  %v5878 = vld [vmem:[%s4770 + $0xe1] sm:$0xff]
  %v5879 = vld [vmem:[%s4770 + $0xf1] sm:$0xff]
  %v5880 = vld [vmem:[%s4770 + $0xf9] sm:$0xff]
  %v5881 = vld [vmem:[%s4770 + $0x109] sm:$0xff]
  %v5882 = vld [vmem:[%s4770 + $0x111] sm:$0xff]
  %v5883 = vld [vmem:[%s4770 + $0x121] sm:$0xff]
  %v5884 = vld [vmem:[%s4770 + $0x129] sm:$0xff]
  %v5885 = vld [vmem:[%s4770 + $0x139] sm:$0xff]
  %v5886 = vld [vmem:[%s4770 + $0x141] sm:$0xff]
  %v5887 = vld [vmem:[%s4770 + $0x151] sm:$0xff]
  %v5888 = vld [vmem:[%s4770 + $0x159] sm:$0xff]
  %v5889 = vld [vmem:[%s4770 + $0x169] sm:$0xff]
  %v5890 = vld [vmem:[%s4770 + $0x171] sm:$0xff]
  %v5891 = vld [vmem:[%s4770 + $0x1b1] sm:$0xff]
  %v5892 = vld [vmem:[%s4770 + $0x1b9] sm:$0xff]
  %v5893 = vld [vmem:[%s4770 + $0x1c9] sm:$0xff]
  %v5894 = vld [vmem:[%s4770 + $0x1d1] sm:$0xff]
  %v5895 = vld [vmem:[%s4770 + $0x1e1] sm:$0xff]
  %v5896 = vld [vmem:[%s4770 + $0x1e9] sm:$0xff]
  %v5897 = vld [vmem:[%s4770 + $0x1f9] sm:$0xff]
  %v5898 = vld [vmem:[%s4770 + $0x201] sm:$0xff]
  %v5899 = vld [vmem:[%s4770 + $0x211] sm:$0xff]
  %v5900 = vld [vmem:[%s4770 + $0x219] sm:$0xff]
  %v5901 = vld [vmem:[%s4770 + $0x229] sm:$0xff]
  %v5902 = vld [vmem:[%s4770 + $0x231] sm:$0xff]
  %v5903 = vld [vmem:[%s4770 + $0x241] sm:$0xff]
  %v5904 = vld [vmem:[%s4770 + $0x249] sm:$0xff]
  %v5905 = vld [vmem:[%s4770 + $0x259] sm:$0xff]
  %v5906 = vld [vmem:[%s4770 + $0x261] sm:$0xff]
  %v5907 = vld [vmem:[%s4770 + $0x271] sm:$0xff]
  %v5908 = vld [vmem:[%s4770 + $0x279] sm:$0xff]
  %v5909 = vld [vmem:[%s4770 + $0x289] sm:$0xff]
  %v5910 = vld [vmem:[%s4770 + $0x291] sm:$0xff]
  %v5911 = vld [vmem:[%s4770 + $0x2a1] sm:$0xff]
  %v5912 = vld [vmem:[%s4770 + $0x2a9] sm:$0xff]
  %v5913 = vld [vmem:[%s4770 + $0x2b9] sm:$0xff]
  %v5914 = vld [vmem:[%s4770 + $0x2c1] sm:$0xff]
  %v5915 = vld [vmem:[%s4770 + $0x2d1] sm:$0xff]
  %v5916 = vld [vmem:[%s4770 + $0x2d9] sm:$0xff]
  %v5917 = vld [vmem:[%s4770 + $0x2e9] sm:$0xff]
  %v5918 = vld [vmem:[%s4770 + $0x2f1] sm:$0xff]
  %v5919 = vld [vmem:[%s4770 + $0x301] sm:$0xff]
  %v5920 = vld [vmem:[%s4770 + $0x309] sm:$0xff]
  %v5921 = vld [vmem:[%s4770 + $0x319] sm:$0xff]
  %v5922 = vld [vmem:[%s4770 + $0x321] sm:$0xff]
  %5923 = vst.msk [vmem:[#allocation2 + $0x10] sm:$0xff] %vm97, %v5859
  %5924 = vst.msk [vmem:[#allocation2 + $0x38] sm:$0xff] %vm97, %v5860
  %5925 = vst.msk [vmem:[#allocation2 + $0x60] sm:$0xff] %vm97, %v5861
  %5926 = vst.msk [vmem:[#allocation2 + $0x88] sm:$0xff] %vm97, %v5862
  %5927 = vst.msk [vmem:[#allocation2 + $0xb0] sm:$0xff] %vm97, %v5863
  %5928 = vst.msk [vmem:[#allocation2 + $0xd8] sm:$0xff] %vm97, %v5864
  %5929 = vst.msk [vmem:[#allocation2 + $0x100] sm:$0xff] %vm97, %v5865
  %5930 = vst.msk [vmem:[#allocation2 + $0x128] sm:$0xff] %vm97, %v5866
  %5931 = vst.msk [vmem:[#allocation2 + $0x150] sm:$0xff] %vm97, %v5867
  %5932 = vst.msk [vmem:[#allocation2 + $0x178] sm:$0xff] %vm97, %v5868
  %5933 = vst.msk [vmem:[#allocation2 + $0x1a0] sm:$0xff] %vm97, %v5869
  %5934 = vst.msk [vmem:[#allocation2 + $0x1c8] sm:$0xff] %vm97, %v5870
  %5935 = vst.msk [vmem:[#allocation2 + $0x1f0] sm:$0xff] %vm97, %v5871
  %5936 = vst.msk [vmem:[#allocation2 + $0x218] sm:$0xff] %vm97, %v5872
  %5937 = vst.msk [vmem:[#allocation2 + $0x240] sm:$0xff] %vm97, %v5873
  %5938 = vst.msk [vmem:[#allocation2 + $0x268] sm:$0xff] %vm97, %v5874
  %5939 = vst.msk [vmem:[#allocation2 + $0x290] sm:$0xff] %vm97, %v5875
  %5940 = vst.msk [vmem:[#allocation2 + $0x2b8] sm:$0xff] %vm97, %v5876
  %5941 = vst.msk [vmem:[#allocation2 + $0x2e0] sm:$0xff] %vm97, %v5877
  %5942 = vst.msk [vmem:[#allocation2 + $0x308] sm:$0xff] %vm97, %v5878
  %5943 = vst.msk [vmem:[#allocation2 + $0x330] sm:$0xff] %vm97, %v5879
  %5944 = vst.msk [vmem:[#allocation2 + $0x358] sm:$0xff] %vm97, %v5880
  %5945 = vst.msk [vmem:[#allocation2 + $0x380] sm:$0xff] %vm97, %v5881
  %5946 = vst.msk [vmem:[#allocation2 + $0x3a8] sm:$0xff] %vm97, %v5882
  %5947 = vst.msk [vmem:[#allocation2 + $0x3d0] sm:$0xff] %vm97, %v5883
  %5948 = vst.msk [vmem:[#allocation2 + $0x3f8] sm:$0xff] %vm97, %v5884
  %5949 = vst.msk [vmem:[#allocation2 + $0x420] sm:$0xff] %vm97, %v5885
  %5950 = vst.msk [vmem:[#allocation2 + $0x448] sm:$0xff] %vm97, %v5886
  %5951 = vst.msk [vmem:[#allocation2 + $0x470] sm:$0xff] %vm97, %v5887
  %5952 = vst.msk [vmem:[#allocation2 + $0x498] sm:$0xff] %vm97, %v5888
  %5953 = vst.msk [vmem:[#allocation2 + $0x4c0] sm:$0xff] %vm97, %v5889
  %5954 = vst.msk [vmem:[#allocation2 + $0x4e8] sm:$0xff] %vm97, %v5890
  %5955 = vst.msk [vmem:[#allocation2 + $0x510] sm:$0xff] %vm97, %v5891
  %5956 = vst.msk [vmem:[#allocation2 + $0x538] sm:$0xff] %vm97, %v5892
  %5957 = vst.msk [vmem:[#allocation2 + $0x560] sm:$0xff] %vm97, %v5893
  %5958 = vst.msk [vmem:[#allocation2 + $0x588] sm:$0xff] %vm97, %v5894
  %5959 = vst.msk [vmem:[#allocation2 + $0x5b0] sm:$0xff] %vm97, %v5895
  %5960 = vst.msk [vmem:[#allocation2 + $0x5d8] sm:$0xff] %vm97, %v5896
  %5961 = vst.msk [vmem:[#allocation2 + $0x600] sm:$0xff] %vm97, %v5897
  %5962 = vst.msk [vmem:[#allocation2 + $0x628] sm:$0xff] %vm97, %v5898
  %5963 = vst.msk [vmem:[#allocation2 + $0x650] sm:$0xff] %vm97, %v5899
  %5964 = vst.msk [vmem:[#allocation2 + $0x678] sm:$0xff] %vm97, %v5900
  %5965 = vst.msk [vmem:[#allocation2 + $0x6a0] sm:$0xff] %vm97, %v5901
  %5966 = vst.msk [vmem:[#allocation2 + $0x6c8] sm:$0xff] %vm97, %v5902
  %5967 = vst.msk [vmem:[#allocation2 + $0x6f0] sm:$0xff] %vm97, %v5903
  %5968 = vst.msk [vmem:[#allocation2 + $0x718] sm:$0xff] %vm97, %v5904
  %5969 = vst.msk [vmem:[#allocation2 + $0x740] sm:$0xff] %vm97, %v5905
  %5970 = vst.msk [vmem:[#allocation2 + $0x768] sm:$0xff] %vm97, %v5906
  %5971 = vst.msk [vmem:[#allocation2 + $0x790] sm:$0xff] %vm97, %v5907
  %5972 = vst.msk [vmem:[#allocation2 + $0x7b8] sm:$0xff] %vm97, %v5908
  %5973 = vst.msk [vmem:[#allocation2 + $0x7e0] sm:$0xff] %vm97, %v5909
  %5974 = vst.msk [vmem:[#allocation2 + $0x808] sm:$0xff] %vm97, %v5910
  %5975 = vst.msk [vmem:[#allocation2 + $0x830] sm:$0xff] %vm97, %v5911
  %5976 = vst.msk [vmem:[#allocation2 + $0x858] sm:$0xff] %vm97, %v5912
  %5977 = vst.msk [vmem:[#allocation2 + $0x880] sm:$0xff] %vm97, %v5913
  %5978 = vst.msk [vmem:[#allocation2 + $0x8a8] sm:$0xff] %vm97, %v5914
  %5979 = vst.msk [vmem:[#allocation2 + $0x8d0] sm:$0xff] %vm97, %v5915
  %5980 = vst.msk [vmem:[#allocation2 + $0x8f8] sm:$0xff] %vm97, %v5916
  %5981 = vst.msk [vmem:[#allocation2 + $0x920] sm:$0xff] %vm97, %v5917
  %5982 = vst.msk [vmem:[#allocation2 + $0x948] sm:$0xff] %vm97, %v5918
  %5983 = vst.msk [vmem:[#allocation2 + $0x970] sm:$0xff] %vm97, %v5919
  %5984 = vst.msk [vmem:[#allocation2 + $0x998] sm:$0xff] %vm97, %v5920
  %5985 = vst.msk [vmem:[#allocation2 + $0x9c0] sm:$0xff] %vm97, %v5921
  %5986 = vst.msk [vmem:[#allocation2 + $0x9e8] sm:$0xff] %vm97, %v5922
  %v5987 = vld [vmem:[%s4770 + $0x2] sm:$0xff]
  %v5988 = vld [vmem:[%s4770 + $0xa] sm:$0xff]
  %v5989 = vld [vmem:[%s4770 + $0x1a] sm:$0xff]
  %v5990 = vld [vmem:[%s4770 + $0x22] sm:$0xff]
  %v5991 = vld [vmem:[%s4770 + $0x32] sm:$0xff]
  %v5992 = vld [vmem:[%s4770 + $0x3a] sm:$0xff]
  %v5993 = vld [vmem:[%s4770 + $0x4a] sm:$0xff]
  %v5994 = vld [vmem:[%s4770 + $0x52] sm:$0xff]
  %v5995 = vld [vmem:[%s4770 + $0x62] sm:$0xff]
  %v5996 = vld [vmem:[%s4770 + $0x6a] sm:$0xff]
  %v5997 = vld [vmem:[%s4770 + $0x7a] sm:$0xff]
  %v5998 = vld [vmem:[%s4770 + $0x82] sm:$0xff]
  %v5999 = vld [vmem:[%s4770 + $0x92] sm:$0xff]
  %v6000 = vld [vmem:[%s4770 + $0x9a] sm:$0xff]
  %v6001 = vld [vmem:[%s4770 + $0xaa] sm:$0xff]
  %v6002 = vld [vmem:[%s4770 + $0xb2] sm:$0xff]
  %v6003 = vld [vmem:[%s4770 + $0xc2] sm:$0xff]
  %v6004 = vld [vmem:[%s4770 + $0xca] sm:$0xff]
  %v6005 = vld [vmem:[%s4770 + $0xda] sm:$0xff]
  %v6006 = vld [vmem:[%s4770 + $0xe2] sm:$0xff]
  %v6007 = vld [vmem:[%s4770 + $0xf2] sm:$0xff]
  %v6008 = vld [vmem:[%s4770 + $0xfa] sm:$0xff]
  %v6009 = vld [vmem:[%s4770 + $0x10a] sm:$0xff]
  %v6010 = vld [vmem:[%s4770 + $0x112] sm:$0xff]
  %v6011 = vld [vmem:[%s4770 + $0x122] sm:$0xff]
  %v6012 = vld [vmem:[%s4770 + $0x12a] sm:$0xff]
  %v6013 = vld [vmem:[%s4770 + $0x13a] sm:$0xff]
  %v6014 = vld [vmem:[%s4770 + $0x142] sm:$0xff]
  %v6015 = vld [vmem:[%s4770 + $0x152] sm:$0xff]
  %v6016 = vld [vmem:[%s4770 + $0x15a] sm:$0xff]
  %v6017 = vld [vmem:[%s4770 + $0x16a] sm:$0xff]
  %v6018 = vld [vmem:[%s4770 + $0x172] sm:$0xff]
  %v6019 = vld [vmem:[%s4770 + $0x1b2] sm:$0xff]
  %v6020 = vld [vmem:[%s4770 + $0x1ba] sm:$0xff]
  %v6021 = vld [vmem:[%s4770 + $0x1ca] sm:$0xff]
  %v6022 = vld [vmem:[%s4770 + $0x1d2] sm:$0xff]
  %v6023 = vld [vmem:[%s4770 + $0x1e2] sm:$0xff]
  %v6024 = vld [vmem:[%s4770 + $0x1ea] sm:$0xff]
  %v6025 = vld [vmem:[%s4770 + $0x1fa] sm:$0xff]
  %v6026 = vld [vmem:[%s4770 + $0x202] sm:$0xff]
  %v6027 = vld [vmem:[%s4770 + $0x212] sm:$0xff]
  %v6028 = vld [vmem:[%s4770 + $0x21a] sm:$0xff]
  %v6029 = vld [vmem:[%s4770 + $0x22a] sm:$0xff]
  %v6030 = vld [vmem:[%s4770 + $0x232] sm:$0xff]
  %v6031 = vld [vmem:[%s4770 + $0x242] sm:$0xff]
  %v6032 = vld [vmem:[%s4770 + $0x24a] sm:$0xff]
  %v6033 = vld [vmem:[%s4770 + $0x25a] sm:$0xff]
  %v6034 = vld [vmem:[%s4770 + $0x262] sm:$0xff]
  %v6035 = vld [vmem:[%s4770 + $0x272] sm:$0xff]
  %v6036 = vld [vmem:[%s4770 + $0x27a] sm:$0xff]
  %v6037 = vld [vmem:[%s4770 + $0x28a] sm:$0xff]
  %v6038 = vld [vmem:[%s4770 + $0x292] sm:$0xff]
  %v6039 = vld [vmem:[%s4770 + $0x2a2] sm:$0xff]
  %v6040 = vld [vmem:[%s4770 + $0x2aa] sm:$0xff]
  %v6041 = vld [vmem:[%s4770 + $0x2ba] sm:$0xff]
  %v6042 = vld [vmem:[%s4770 + $0x2c2] sm:$0xff]
  %v6043 = vld [vmem:[%s4770 + $0x2d2] sm:$0xff]
  %v6044 = vld [vmem:[%s4770 + $0x2da] sm:$0xff]
  %v6045 = vld [vmem:[%s4770 + $0x2ea] sm:$0xff]
  %v6046 = vld [vmem:[%s4770 + $0x2f2] sm:$0xff]
  %v6047 = vld [vmem:[%s4770 + $0x302] sm:$0xff]
  %v6048 = vld [vmem:[%s4770 + $0x30a] sm:$0xff]
  %v6049 = vld [vmem:[%s4770 + $0x31a] sm:$0xff]
  %v6050 = vld [vmem:[%s4770 + $0x322] sm:$0xff]
  %6115 = vrot.lane.b32.xlu0 %v5987, 64
  %v6116 = vpop.permute.xlu0 %6115
  %6117 = vrot.lane.b32.xlu0 %v5988, 64
  %v6118 = vpop.permute.xlu0 %6117
  %6119 = vrot.lane.b32.xlu0 %v5989, 64
  %v6120 = vpop.permute.xlu0 %6119
  %6121 = vrot.lane.b32.xlu0 %v5990, 64
  %v6122 = vpop.permute.xlu0 %6121
  %6123 = vrot.lane.b32.xlu0 %v5991, 64
  %v6124 = vpop.permute.xlu0 %6123
  %6125 = vrot.lane.b32.xlu0 %v5992, 64
  %v6126 = vpop.permute.xlu0 %6125
  %6127 = vrot.lane.b32.xlu0 %v5993, 64
  %v6128 = vpop.permute.xlu0 %6127
  %6129 = vrot.lane.b32.xlu0 %v5994, 64
  %v6130 = vpop.permute.xlu0 %6129
  %6131 = vrot.lane.b32.xlu0 %v5995, 64
  %v6132 = vpop.permute.xlu0 %6131
  %6133 = vrot.lane.b32.xlu0 %v5996, 64
  %v6134 = vpop.permute.xlu0 %6133
  %6135 = vrot.lane.b32.xlu0 %v5997, 64
  %v6136 = vpop.permute.xlu0 %6135
  %6137 = vrot.lane.b32.xlu0 %v5998, 64
  %v6138 = vpop.permute.xlu0 %6137
  %6139 = vrot.lane.b32.xlu0 %v5999, 64
  %v6140 = vpop.permute.xlu0 %6139
  %6141 = vrot.lane.b32.xlu0 %v6000, 64
  %v6142 = vpop.permute.xlu0 %6141
  %6143 = vrot.lane.b32.xlu0 %v6001, 64
  %v6144 = vpop.permute.xlu0 %6143
  %6145 = vrot.lane.b32.xlu0 %v6002, 64
  %v6146 = vpop.permute.xlu0 %6145
  %6147 = vrot.lane.b32.xlu0 %v6003, 64
  %v6148 = vpop.permute.xlu0 %6147
  %6149 = vrot.lane.b32.xlu0 %v6004, 64
  %v6150 = vpop.permute.xlu0 %6149
  %6151 = vrot.lane.b32.xlu0 %v6005, 64
  %v6152 = vpop.permute.xlu0 %6151
  %6153 = vrot.lane.b32.xlu0 %v6006, 64
  %v6154 = vpop.permute.xlu0 %6153
  %6155 = vrot.lane.b32.xlu0 %v6007, 64
  %v6156 = vpop.permute.xlu0 %6155
  %6157 = vrot.lane.b32.xlu0 %v6008, 64
  %v6158 = vpop.permute.xlu0 %6157
  %6159 = vrot.lane.b32.xlu0 %v6009, 64
  %v6160 = vpop.permute.xlu0 %6159
  %6161 = vrot.lane.b32.xlu0 %v6010, 64
  %v6162 = vpop.permute.xlu0 %6161
  %6163 = vrot.lane.b32.xlu0 %v6011, 64
  %v6164 = vpop.permute.xlu0 %6163
  %6165 = vrot.lane.b32.xlu0 %v6012, 64
  %v6166 = vpop.permute.xlu0 %6165
  %6167 = vrot.lane.b32.xlu0 %v6013, 64
  %v6168 = vpop.permute.xlu0 %6167
  %6169 = vrot.lane.b32.xlu0 %v6014, 64
  %v6170 = vpop.permute.xlu0 %6169
  %6171 = vrot.lane.b32.xlu0 %v6015, 64
  %v6172 = vpop.permute.xlu0 %6171
  %6173 = vrot.lane.b32.xlu0 %v6016, 64
  %v6174 = vpop.permute.xlu0 %6173
  %6175 = vrot.lane.b32.xlu0 %v6017, 64
  %v6176 = vpop.permute.xlu0 %6175
  %6177 = vrot.lane.b32.xlu0 %v6018, 64
  %v6178 = vpop.permute.xlu0 %6177
  %6179 = vrot.lane.b32.xlu0 %v6019, 64
  %v6180 = vpop.permute.xlu0 %6179
  %6181 = vrot.lane.b32.xlu0 %v6020, 64
  %v6182 = vpop.permute.xlu0 %6181
  %6183 = vrot.lane.b32.xlu0 %v6021, 64
  %v6184 = vpop.permute.xlu0 %6183
  %6185 = vrot.lane.b32.xlu0 %v6022, 64
  %v6186 = vpop.permute.xlu0 %6185
  %6187 = vrot.lane.b32.xlu0 %v6023, 64
  %v6188 = vpop.permute.xlu0 %6187
  %6189 = vrot.lane.b32.xlu0 %v6024, 64
  %v6190 = vpop.permute.xlu0 %6189
  %6191 = vrot.lane.b32.xlu0 %v6025, 64
  %v6192 = vpop.permute.xlu0 %6191
  %6193 = vrot.lane.b32.xlu0 %v6026, 64
  %v6194 = vpop.permute.xlu0 %6193
  %6195 = vrot.lane.b32.xlu0 %v6027, 64
  %v6196 = vpop.permute.xlu0 %6195
  %6197 = vrot.lane.b32.xlu0 %v6028, 64
  %v6198 = vpop.permute.xlu0 %6197
  %6199 = vrot.lane.b32.xlu0 %v6029, 64
  %v6200 = vpop.permute.xlu0 %6199
  %6201 = vrot.lane.b32.xlu0 %v6030, 64
  %v6202 = vpop.permute.xlu0 %6201
  %6203 = vrot.lane.b32.xlu0 %v6031, 64
  %v6204 = vpop.permute.xlu0 %6203
  %6205 = vrot.lane.b32.xlu0 %v6032, 64
  %v6206 = vpop.permute.xlu0 %6205
  %6207 = vrot.lane.b32.xlu0 %v6033, 64
  %v6208 = vpop.permute.xlu0 %6207
  %6209 = vrot.lane.b32.xlu0 %v6034, 64
  %v6210 = vpop.permute.xlu0 %6209
  %6211 = vrot.lane.b32.xlu0 %v6035, 64
  %v6212 = vpop.permute.xlu0 %6211
  %6213 = vrot.lane.b32.xlu0 %v6036, 64
  %v6214 = vpop.permute.xlu0 %6213
  %6215 = vrot.lane.b32.xlu0 %v6037, 64
  %v6216 = vpop.permute.xlu0 %6215
  %6217 = vrot.lane.b32.xlu0 %v6038, 64
  %v6218 = vpop.permute.xlu0 %6217
  %6219 = vrot.lane.b32.xlu0 %v6039, 64
  %v6220 = vpop.permute.xlu0 %6219
  %6221 = vrot.lane.b32.xlu0 %v6040, 64
  %v6222 = vpop.permute.xlu0 %6221
  %6223 = vrot.lane.b32.xlu0 %v6041, 64
  %v6224 = vpop.permute.xlu0 %6223
  %6225 = vrot.lane.b32.xlu0 %v6042, 64
  %v6226 = vpop.permute.xlu0 %6225
  %6227 = vrot.lane.b32.xlu0 %v6043, 64
  %v6228 = vpop.permute.xlu0 %6227
  %6229 = vrot.lane.b32.xlu0 %v6044, 64
  %v6230 = vpop.permute.xlu0 %6229
  %6231 = vrot.lane.b32.xlu0 %v6045, 64
  %v6232 = vpop.permute.xlu0 %6231
  %6233 = vrot.lane.b32.xlu0 %v6046, 64
  %v6234 = vpop.permute.xlu0 %6233
  %6235 = vrot.lane.b32.xlu0 %v6047, 64
  %v6236 = vpop.permute.xlu0 %6235
  %6237 = vrot.lane.b32.xlu0 %v6048, 64
  %v6238 = vpop.permute.xlu0 %6237
  %6239 = vrot.lane.b32.xlu0 %v6049, 64
  %v6240 = vpop.permute.xlu0 %6239
  %6241 = vrot.lane.b32.xlu0 %v6050, 64
  %v6242 = vpop.permute.xlu0 %6241
  %6307 = vst.msk [vmem:[#allocation2 + $0x10] sm:$0xff] %vm482, %v6116
  %6308 = vst.msk [vmem:[#allocation2 + $0x38] sm:$0xff] %vm482, %v6118
  %6309 = vst.msk [vmem:[#allocation2 + $0x60] sm:$0xff] %vm482, %v6120
  %6310 = vst.msk [vmem:[#allocation2 + $0x88] sm:$0xff] %vm482, %v6122
  %6311 = vst.msk [vmem:[#allocation2 + $0xb0] sm:$0xff] %vm482, %v6124
  %6312 = vst.msk [vmem:[#allocation2 + $0xd8] sm:$0xff] %vm482, %v6126
  %6313 = vst.msk [vmem:[#allocation2 + $0x100] sm:$0xff] %vm482, %v6128
  %6314 = vst.msk [vmem:[#allocation2 + $0x128] sm:$0xff] %vm482, %v6130
  %6315 = vst.msk [vmem:[#allocation2 + $0x150] sm:$0xff] %vm482, %v6132
  %6316 = vst.msk [vmem:[#allocation2 + $0x178] sm:$0xff] %vm482, %v6134
  %6317 = vst.msk [vmem:[#allocation2 + $0x1a0] sm:$0xff] %vm482, %v6136
  %6318 = vst.msk [vmem:[#allocation2 + $0x1c8] sm:$0xff] %vm482, %v6138
  %6319 = vst.msk [vmem:[#allocation2 + $0x1f0] sm:$0xff] %vm482, %v6140
  %6320 = vst.msk [vmem:[#allocation2 + $0x218] sm:$0xff] %vm482, %v6142
  %6321 = vst.msk [vmem:[#allocation2 + $0x240] sm:$0xff] %vm482, %v6144
  %6322 = vst.msk [vmem:[#allocation2 + $0x268] sm:$0xff] %vm482, %v6146
  %6323 = vst.msk [vmem:[#allocation2 + $0x290] sm:$0xff] %vm482, %v6148
  %6324 = vst.msk [vmem:[#allocation2 + $0x2b8] sm:$0xff] %vm482, %v6150
  %6325 = vst.msk [vmem:[#allocation2 + $0x2e0] sm:$0xff] %vm482, %v6152
  %6326 = vst.msk [vmem:[#allocation2 + $0x308] sm:$0xff] %vm482, %v6154
  %6327 = vst.msk [vmem:[#allocation2 + $0x330] sm:$0xff] %vm482, %v6156
  %6328 = vst.msk [vmem:[#allocation2 + $0x358] sm:$0xff] %vm482, %v6158
  %6329 = vst.msk [vmem:[#allocation2 + $0x380] sm:$0xff] %vm482, %v6160
  %6330 = vst.msk [vmem:[#allocation2 + $0x3a8] sm:$0xff] %vm482, %v6162
  %6331 = vst.msk [vmem:[#allocation2 + $0x3d0] sm:$0xff] %vm482, %v6164
  %6332 = vst.msk [vmem:[#allocation2 + $0x3f8] sm:$0xff] %vm482, %v6166
  %6333 = vst.msk [vmem:[#allocation2 + $0x420] sm:$0xff] %vm482, %v6168
  %6334 = vst.msk [vmem:[#allocation2 + $0x448] sm:$0xff] %vm482, %v6170
  %6335 = vst.msk [vmem:[#allocation2 + $0x470] sm:$0xff] %vm482, %v6172
  %6336 = vst.msk [vmem:[#allocation2 + $0x498] sm:$0xff] %vm482, %v6174
  %6337 = vst.msk [vmem:[#allocation2 + $0x4c0] sm:$0xff] %vm482, %v6176
  %6338 = vst.msk [vmem:[#allocation2 + $0x4e8] sm:$0xff] %vm482, %v6178
  %6339 = vst.msk [vmem:[#allocation2 + $0x510] sm:$0xff] %vm482, %v6180
  %6340 = vst.msk [vmem:[#allocation2 + $0x538] sm:$0xff] %vm482, %v6182
  %6341 = vst.msk [vmem:[#allocation2 + $0x560] sm:$0xff] %vm482, %v6184
  %6342 = vst.msk [vmem:[#allocation2 + $0x588] sm:$0xff] %vm482, %v6186
  %6343 = vst.msk [vmem:[#allocation2 + $0x5b0] sm:$0xff] %vm482, %v6188
  %6344 = vst.msk [vmem:[#allocation2 + $0x5d8] sm:$0xff] %vm482, %v6190
  %6345 = vst.msk [vmem:[#allocation2 + $0x600] sm:$0xff] %vm482, %v6192
  %6346 = vst.msk [vmem:[#allocation2 + $0x628] sm:$0xff] %vm482, %v6194
  %6347 = vst.msk [vmem:[#allocation2 + $0x650] sm:$0xff] %vm482, %v6196
  %6348 = vst.msk [vmem:[#allocation2 + $0x678] sm:$0xff] %vm482, %v6198
  %6349 = vst.msk [vmem:[#allocation2 + $0x6a0] sm:$0xff] %vm482, %v6200
  %6350 = vst.msk [vmem:[#allocation2 + $0x6c8] sm:$0xff] %vm482, %v6202
  %6351 = vst.msk [vmem:[#allocation2 + $0x6f0] sm:$0xff] %vm482, %v6204
  %6352 = vst.msk [vmem:[#allocation2 + $0x718] sm:$0xff] %vm482, %v6206
  %6353 = vst.msk [vmem:[#allocation2 + $0x740] sm:$0xff] %vm482, %v6208
  %6354 = vst.msk [vmem:[#allocation2 + $0x768] sm:$0xff] %vm482, %v6210
  %6355 = vst.msk [vmem:[#allocation2 + $0x790] sm:$0xff] %vm482, %v6212
  %6356 = vst.msk [vmem:[#allocation2 + $0x7b8] sm:$0xff] %vm482, %v6214
  %6357 = vst.msk [vmem:[#allocation2 + $0x7e0] sm:$0xff] %vm482, %v6216
  %6358 = vst.msk [vmem:[#allocation2 + $0x808] sm:$0xff] %vm482, %v6218
  %6359 = vst.msk [vmem:[#allocation2 + $0x830] sm:$0xff] %vm482, %v6220
  %6360 = vst.msk [vmem:[#allocation2 + $0x858] sm:$0xff] %vm482, %v6222
  %6361 = vst.msk [vmem:[#allocation2 + $0x880] sm:$0xff] %vm482, %v6224
  %6362 = vst.msk [vmem:[#allocation2 + $0x8a8] sm:$0xff] %vm482, %v6226
  %6363 = vst.msk [vmem:[#allocation2 + $0x8d0] sm:$0xff] %vm482, %v6228
  %6364 = vst.msk [vmem:[#allocation2 + $0x8f8] sm:$0xff] %vm482, %v6230
  %6365 = vst.msk [vmem:[#allocation2 + $0x920] sm:$0xff] %vm482, %v6232
  %6366 = vst.msk [vmem:[#allocation2 + $0x948] sm:$0xff] %vm482, %v6234
  %6367 = vst.msk [vmem:[#allocation2 + $0x970] sm:$0xff] %vm482, %v6236
  %6368 = vst.msk [vmem:[#allocation2 + $0x998] sm:$0xff] %vm482, %v6238
  %6369 = vst.msk [vmem:[#allocation2 + $0x9c0] sm:$0xff] %vm482, %v6240
  %6370 = vst.msk [vmem:[#allocation2 + $0x9e8] sm:$0xff] %vm482, %v6242
  %s6371 = scalar_lea.vmem [#allocation3], 48
  %v6372 = vld [vmem:[%s6371] sm:$0xff]
  %v6373 = vld [vmem:[%s6371 + $0x8] sm:$0xff]
  %v6374 = vld [vmem:[%s6371 + $0x18] sm:$0xff]
  %v6375 = vld [vmem:[%s6371 + $0x20] sm:$0xff]
  %v6376 = vld [vmem:[%s6371 + $0x30] sm:$0xff]
  %v6377 = vld [vmem:[%s6371 + $0x38] sm:$0xff]
  %v6378 = vld [vmem:[%s6371 + $0x48] sm:$0xff]
  %v6379 = vld [vmem:[%s6371 + $0x50] sm:$0xff]
  %v6380 = vld [vmem:[%s6371 + $0x60] sm:$0xff]
  %v6381 = vld [vmem:[%s6371 + $0x68] sm:$0xff]
  %v6382 = vld [vmem:[%s6371 + $0x78] sm:$0xff]
  %v6383 = vld [vmem:[%s6371 + $0x80] sm:$0xff]
  %v6384 = vld [vmem:[%s6371 + $0x90] sm:$0xff]
  %v6385 = vld [vmem:[%s6371 + $0x98] sm:$0xff]
  %v6386 = vld [vmem:[%s6371 + $0xa8] sm:$0xff]
  %v6387 = vld [vmem:[%s6371 + $0xb0] sm:$0xff]
  %v6388 = vld [vmem:[%s6371 + $0xc0] sm:$0xff]
  %v6389 = vld [vmem:[%s6371 + $0xc8] sm:$0xff]
  %v6390 = vld [vmem:[%s6371 + $0xd8] sm:$0xff]
  %v6391 = vld [vmem:[%s6371 + $0xe0] sm:$0xff]
  %v6392 = vld [vmem:[%s6371 + $0xf0] sm:$0xff]
  %v6393 = vld [vmem:[%s6371 + $0xf8] sm:$0xff]
  %v6394 = vld [vmem:[%s6371 + $0x108] sm:$0xff]
  %v6395 = vld [vmem:[%s6371 + $0x110] sm:$0xff]
  %v6396 = vld [vmem:[%s6371 + $0x120] sm:$0xff]
  %v6397 = vld [vmem:[%s6371 + $0x128] sm:$0xff]
  %v6398 = vld [vmem:[%s6371 + $0x138] sm:$0xff]
  %v6399 = vld [vmem:[%s6371 + $0x140] sm:$0xff]
  %v6400 = vld [vmem:[%s6371 + $0x150] sm:$0xff]
  %v6401 = vld [vmem:[%s6371 + $0x158] sm:$0xff]
  %v6402 = vld [vmem:[%s6371 + $0x168] sm:$0xff]
  %v6403 = vld [vmem:[%s6371 + $0x170] sm:$0xff]
  %v6404 = vld [vmem:[%s6371 + $0x1b0] sm:$0xff]
  %v6405 = vld [vmem:[%s6371 + $0x1b8] sm:$0xff]
  %v6406 = vld [vmem:[%s6371 + $0x1c8] sm:$0xff]
  %v6407 = vld [vmem:[%s6371 + $0x1d0] sm:$0xff]
  %v6408 = vld [vmem:[%s6371 + $0x1e0] sm:$0xff]
  %v6409 = vld [vmem:[%s6371 + $0x1e8] sm:$0xff]
  %v6410 = vld [vmem:[%s6371 + $0x1f8] sm:$0xff]
  %v6411 = vld [vmem:[%s6371 + $0x200] sm:$0xff]
  %v6412 = vld [vmem:[%s6371 + $0x210] sm:$0xff]
  %v6413 = vld [vmem:[%s6371 + $0x218] sm:$0xff]
  %v6414 = vld [vmem:[%s6371 + $0x228] sm:$0xff]
  %v6415 = vld [vmem:[%s6371 + $0x230] sm:$0xff]
  %v6416 = vld [vmem:[%s6371 + $0x240] sm:$0xff]
  %v6417 = vld [vmem:[%s6371 + $0x248] sm:$0xff]
  %v6418 = vld [vmem:[%s6371 + $0x258] sm:$0xff]
  %v6419 = vld [vmem:[%s6371 + $0x260] sm:$0xff]
  %v6420 = vld [vmem:[%s6371 + $0x270] sm:$0xff]
  %v6421 = vld [vmem:[%s6371 + $0x278] sm:$0xff]
  %v6422 = vld [vmem:[%s6371 + $0x288] sm:$0xff]
  %v6423 = vld [vmem:[%s6371 + $0x290] sm:$0xff]
  %v6424 = vld [vmem:[%s6371 + $0x2a0] sm:$0xff]
  %v6425 = vld [vmem:[%s6371 + $0x2a8] sm:$0xff]
  %v6426 = vld [vmem:[%s6371 + $0x2b8] sm:$0xff]
  %v6427 = vld [vmem:[%s6371 + $0x2c0] sm:$0xff]
  %v6428 = vld [vmem:[%s6371 + $0x2d0] sm:$0xff]
  %v6429 = vld [vmem:[%s6371 + $0x2d8] sm:$0xff]
  %v6430 = vld [vmem:[%s6371 + $0x2e8] sm:$0xff]
  %v6431 = vld [vmem:[%s6371 + $0x2f0] sm:$0xff]
  %v6432 = vld [vmem:[%s6371 + $0x300] sm:$0xff]
  %v6433 = vld [vmem:[%s6371 + $0x308] sm:$0xff]
  %v6434 = vld [vmem:[%s6371 + $0x318] sm:$0xff]
  %v6435 = vld [vmem:[%s6371 + $0x320] sm:$0xff]
  %6436 = vst.msk [vmem:[#allocation2 + $0x18] sm:$0xff] %vm97, %v6372
  %6437 = vst.msk [vmem:[#allocation2 + $0x40] sm:$0xff] %vm97, %v6373
  %6438 = vst.msk [vmem:[#allocation2 + $0x68] sm:$0xff] %vm97, %v6374
  %6439 = vst.msk [vmem:[#allocation2 + $0x90] sm:$0xff] %vm97, %v6375
  %6440 = vst.msk [vmem:[#allocation2 + $0xb8] sm:$0xff] %vm97, %v6376
  %6441 = vst.msk [vmem:[#allocation2 + $0xe0] sm:$0xff] %vm97, %v6377
  %6442 = vst.msk [vmem:[#allocation2 + $0x108] sm:$0xff] %vm97, %v6378
  %6443 = vst.msk [vmem:[#allocation2 + $0x130] sm:$0xff] %vm97, %v6379
  %6444 = vst.msk [vmem:[#allocation2 + $0x158] sm:$0xff] %vm97, %v6380
  %6445 = vst.msk [vmem:[#allocation2 + $0x180] sm:$0xff] %vm97, %v6381
  %6446 = vst.msk [vmem:[#allocation2 + $0x1a8] sm:$0xff] %vm97, %v6382
  %6447 = vst.msk [vmem:[#allocation2 + $0x1d0] sm:$0xff] %vm97, %v6383
  %6448 = vst.msk [vmem:[#allocation2 + $0x1f8] sm:$0xff] %vm97, %v6384
  %6449 = vst.msk [vmem:[#allocation2 + $0x220] sm:$0xff] %vm97, %v6385
  %6450 = vst.msk [vmem:[#allocation2 + $0x248] sm:$0xff] %vm97, %v6386
  %6451 = vst.msk [vmem:[#allocation2 + $0x270] sm:$0xff] %vm97, %v6387
  %6452 = vst.msk [vmem:[#allocation2 + $0x298] sm:$0xff] %vm97, %v6388
  %6453 = vst.msk [vmem:[#allocation2 + $0x2c0] sm:$0xff] %vm97, %v6389
  %6454 = vst.msk [vmem:[#allocation2 + $0x2e8] sm:$0xff] %vm97, %v6390
  %6455 = vst.msk [vmem:[#allocation2 + $0x310] sm:$0xff] %vm97, %v6391
  %6456 = vst.msk [vmem:[#allocation2 + $0x338] sm:$0xff] %vm97, %v6392
  %6457 = vst.msk [vmem:[#allocation2 + $0x360] sm:$0xff] %vm97, %v6393
  %6458 = vst.msk [vmem:[#allocation2 + $0x388] sm:$0xff] %vm97, %v6394
  %6459 = vst.msk [vmem:[#allocation2 + $0x3b0] sm:$0xff] %vm97, %v6395
  %6460 = vst.msk [vmem:[#allocation2 + $0x3d8] sm:$0xff] %vm97, %v6396
  %6461 = vst.msk [vmem:[#allocation2 + $0x400] sm:$0xff] %vm97, %v6397
  %6462 = vst.msk [vmem:[#allocation2 + $0x428] sm:$0xff] %vm97, %v6398
  %6463 = vst.msk [vmem:[#allocation2 + $0x450] sm:$0xff] %vm97, %v6399
  %6464 = vst.msk [vmem:[#allocation2 + $0x478] sm:$0xff] %vm97, %v6400
  %6465 = vst.msk [vmem:[#allocation2 + $0x4a0] sm:$0xff] %vm97, %v6401
  %6466 = vst.msk [vmem:[#allocation2 + $0x4c8] sm:$0xff] %vm97, %v6402
  %6467 = vst.msk [vmem:[#allocation2 + $0x4f0] sm:$0xff] %vm97, %v6403
  %6468 = vst.msk [vmem:[#allocation2 + $0x518] sm:$0xff] %vm97, %v6404
  %6469 = vst.msk [vmem:[#allocation2 + $0x540] sm:$0xff] %vm97, %v6405
  %6470 = vst.msk [vmem:[#allocation2 + $0x568] sm:$0xff] %vm97, %v6406
  %6471 = vst.msk [vmem:[#allocation2 + $0x590] sm:$0xff] %vm97, %v6407
  %6472 = vst.msk [vmem:[#allocation2 + $0x5b8] sm:$0xff] %vm97, %v6408
  %6473 = vst.msk [vmem:[#allocation2 + $0x5e0] sm:$0xff] %vm97, %v6409
  %6474 = vst.msk [vmem:[#allocation2 + $0x608] sm:$0xff] %vm97, %v6410
  %6475 = vst.msk [vmem:[#allocation2 + $0x630] sm:$0xff] %vm97, %v6411
  %6476 = vst.msk [vmem:[#allocation2 + $0x658] sm:$0xff] %vm97, %v6412
  %6477 = vst.msk [vmem:[#allocation2 + $0x680] sm:$0xff] %vm97, %v6413
  %6478 = vst.msk [vmem:[#allocation2 + $0x6a8] sm:$0xff] %vm97, %v6414
  %6479 = vst.msk [vmem:[#allocation2 + $0x6d0] sm:$0xff] %vm97, %v6415
  %6480 = vst.msk [vmem:[#allocation2 + $0x6f8] sm:$0xff] %vm97, %v6416
  %6481 = vst.msk [vmem:[#allocation2 + $0x720] sm:$0xff] %vm97, %v6417
  %6482 = vst.msk [vmem:[#allocation2 + $0x748] sm:$0xff] %vm97, %v6418
  %6483 = vst.msk [vmem:[#allocation2 + $0x770] sm:$0xff] %vm97, %v6419
  %6484 = vst.msk [vmem:[#allocation2 + $0x798] sm:$0xff] %vm97, %v6420
  %6485 = vst.msk [vmem:[#allocation2 + $0x7c0] sm:$0xff] %vm97, %v6421
  %6486 = vst.msk [vmem:[#allocation2 + $0x7e8] sm:$0xff] %vm97, %v6422
  %6487 = vst.msk [vmem:[#allocation2 + $0x810] sm:$0xff] %vm97, %v6423
  %6488 = vst.msk [vmem:[#allocation2 + $0x838] sm:$0xff] %vm97, %v6424
  %6489 = vst.msk [vmem:[#allocation2 + $0x860] sm:$0xff] %vm97, %v6425
  %6490 = vst.msk [vmem:[#allocation2 + $0x888] sm:$0xff] %vm97, %v6426
  %6491 = vst.msk [vmem:[#allocation2 + $0x8b0] sm:$0xff] %vm97, %v6427
  %6492 = vst.msk [vmem:[#allocation2 + $0x8d8] sm:$0xff] %vm97, %v6428
  %6493 = vst.msk [vmem:[#allocation2 + $0x900] sm:$0xff] %vm97, %v6429
  %6494 = vst.msk [vmem:[#allocation2 + $0x928] sm:$0xff] %vm97, %v6430
  %6495 = vst.msk [vmem:[#allocation2 + $0x950] sm:$0xff] %vm97, %v6431
  %6496 = vst.msk [vmem:[#allocation2 + $0x978] sm:$0xff] %vm97, %v6432
  %6497 = vst.msk [vmem:[#allocation2 + $0x9a0] sm:$0xff] %vm97, %v6433
  %6498 = vst.msk [vmem:[#allocation2 + $0x9c8] sm:$0xff] %vm97, %v6434
  %6499 = vst.msk [vmem:[#allocation2 + $0x9f0] sm:$0xff] %vm97, %v6435
  %v6500 = vld [vmem:[%s6371 + $0x1] sm:$0xff]
  %v6501 = vld [vmem:[%s6371 + $0x9] sm:$0xff]
  %v6502 = vld [vmem:[%s6371 + $0x19] sm:$0xff]
  %v6503 = vld [vmem:[%s6371 + $0x21] sm:$0xff]
  %v6504 = vld [vmem:[%s6371 + $0x31] sm:$0xff]
  %v6505 = vld [vmem:[%s6371 + $0x39] sm:$0xff]
  %v6506 = vld [vmem:[%s6371 + $0x49] sm:$0xff]
  %v6507 = vld [vmem:[%s6371 + $0x51] sm:$0xff]
  %v6508 = vld [vmem:[%s6371 + $0x61] sm:$0xff]
  %v6509 = vld [vmem:[%s6371 + $0x69] sm:$0xff]
  %v6510 = vld [vmem:[%s6371 + $0x79] sm:$0xff]
  %v6511 = vld [vmem:[%s6371 + $0x81] sm:$0xff]
  %v6512 = vld [vmem:[%s6371 + $0x91] sm:$0xff]
  %v6513 = vld [vmem:[%s6371 + $0x99] sm:$0xff]
  %v6514 = vld [vmem:[%s6371 + $0xa9] sm:$0xff]
  %v6515 = vld [vmem:[%s6371 + $0xb1] sm:$0xff]
  %v6516 = vld [vmem:[%s6371 + $0xc1] sm:$0xff]
  %v6517 = vld [vmem:[%s6371 + $0xc9] sm:$0xff]
  %v6518 = vld [vmem:[%s6371 + $0xd9] sm:$0xff]
  %v6519 = vld [vmem:[%s6371 + $0xe1] sm:$0xff]
  %v6520 = vld [vmem:[%s6371 + $0xf1] sm:$0xff]
  %v6521 = vld [vmem:[%s6371 + $0xf9] sm:$0xff]
  %v6522 = vld [vmem:[%s6371 + $0x109] sm:$0xff]
  %v6523 = vld [vmem:[%s6371 + $0x111] sm:$0xff]
  %v6524 = vld [vmem:[%s6371 + $0x121] sm:$0xff]
  %v6525 = vld [vmem:[%s6371 + $0x129] sm:$0xff]
  %v6526 = vld [vmem:[%s6371 + $0x139] sm:$0xff]
  %v6527 = vld [vmem:[%s6371 + $0x141] sm:$0xff]
  %v6528 = vld [vmem:[%s6371 + $0x151] sm:$0xff]
  %v6529 = vld [vmem:[%s6371 + $0x159] sm:$0xff]
  %v6530 = vld [vmem:[%s6371 + $0x169] sm:$0xff]
  %v6531 = vld [vmem:[%s6371 + $0x171] sm:$0xff]
  %v6532 = vld [vmem:[%s6371 + $0x1b1] sm:$0xff]
  %v6533 = vld [vmem:[%s6371 + $0x1b9] sm:$0xff]
  %v6534 = vld [vmem:[%s6371 + $0x1c9] sm:$0xff]
  %v6535 = vld [vmem:[%s6371 + $0x1d1] sm:$0xff]
  %v6536 = vld [vmem:[%s6371 + $0x1e1] sm:$0xff]
  %v6537 = vld [vmem:[%s6371 + $0x1e9] sm:$0xff]
  %v6538 = vld [vmem:[%s6371 + $0x1f9] sm:$0xff]
  %v6539 = vld [vmem:[%s6371 + $0x201] sm:$0xff]
  %v6540 = vld [vmem:[%s6371 + $0x211] sm:$0xff]
  %v6541 = vld [vmem:[%s6371 + $0x219] sm:$0xff]
  %v6542 = vld [vmem:[%s6371 + $0x229] sm:$0xff]
  %v6543 = vld [vmem:[%s6371 + $0x231] sm:$0xff]
  %v6544 = vld [vmem:[%s6371 + $0x241] sm:$0xff]
  %v6545 = vld [vmem:[%s6371 + $0x249] sm:$0xff]
  %v6546 = vld [vmem:[%s6371 + $0x259] sm:$0xff]
  %v6547 = vld [vmem:[%s6371 + $0x261] sm:$0xff]
  %v6548 = vld [vmem:[%s6371 + $0x271] sm:$0xff]
  %v6549 = vld [vmem:[%s6371 + $0x279] sm:$0xff]
  %v6550 = vld [vmem:[%s6371 + $0x289] sm:$0xff]
  %v6551 = vld [vmem:[%s6371 + $0x291] sm:$0xff]
  %v6552 = vld [vmem:[%s6371 + $0x2a1] sm:$0xff]
  %v6553 = vld [vmem:[%s6371 + $0x2a9] sm:$0xff]
  %v6554 = vld [vmem:[%s6371 + $0x2b9] sm:$0xff]
  %v6555 = vld [vmem:[%s6371 + $0x2c1] sm:$0xff]
  %v6556 = vld [vmem:[%s6371 + $0x2d1] sm:$0xff]
  %v6557 = vld [vmem:[%s6371 + $0x2d9] sm:$0xff]
  %v6558 = vld [vmem:[%s6371 + $0x2e9] sm:$0xff]
  %v6559 = vld [vmem:[%s6371 + $0x2f1] sm:$0xff]
  %v6560 = vld [vmem:[%s6371 + $0x301] sm:$0xff]
  %v6561 = vld [vmem:[%s6371 + $0x309] sm:$0xff]
  %v6562 = vld [vmem:[%s6371 + $0x319] sm:$0xff]
  %v6563 = vld [vmem:[%s6371 + $0x321] sm:$0xff]
  %6628 = vrot.lane.b32.xlu0 %v6500, 64
  %v6629 = vpop.permute.xlu0 %6628
  %6630 = vrot.lane.b32.xlu0 %v6501, 64
  %v6631 = vpop.permute.xlu0 %6630
  %6632 = vrot.lane.b32.xlu0 %v6502, 64
  %v6633 = vpop.permute.xlu0 %6632
  %6634 = vrot.lane.b32.xlu0 %v6503, 64
  %v6635 = vpop.permute.xlu0 %6634
  %6636 = vrot.lane.b32.xlu0 %v6504, 64
  %v6637 = vpop.permute.xlu0 %6636
  %6638 = vrot.lane.b32.xlu0 %v6505, 64
  %v6639 = vpop.permute.xlu0 %6638
  %6640 = vrot.lane.b32.xlu0 %v6506, 64
  %v6641 = vpop.permute.xlu0 %6640
  %6642 = vrot.lane.b32.xlu0 %v6507, 64
  %v6643 = vpop.permute.xlu0 %6642
  %6644 = vrot.lane.b32.xlu0 %v6508, 64
  %v6645 = vpop.permute.xlu0 %6644
  %6646 = vrot.lane.b32.xlu0 %v6509, 64
  %v6647 = vpop.permute.xlu0 %6646
  %6648 = vrot.lane.b32.xlu0 %v6510, 64
  %v6649 = vpop.permute.xlu0 %6648
  %6650 = vrot.lane.b32.xlu0 %v6511, 64
  %v6651 = vpop.permute.xlu0 %6650
  %6652 = vrot.lane.b32.xlu0 %v6512, 64
  %v6653 = vpop.permute.xlu0 %6652
  %6654 = vrot.lane.b32.xlu0 %v6513, 64
  %v6655 = vpop.permute.xlu0 %6654
  %6656 = vrot.lane.b32.xlu0 %v6514, 64
  %v6657 = vpop.permute.xlu0 %6656
  %6658 = vrot.lane.b32.xlu0 %v6515, 64
  %v6659 = vpop.permute.xlu0 %6658
  %6660 = vrot.lane.b32.xlu0 %v6516, 64
  %v6661 = vpop.permute.xlu0 %6660
  %6662 = vrot.lane.b32.xlu0 %v6517, 64
  %v6663 = vpop.permute.xlu0 %6662
  %6664 = vrot.lane.b32.xlu0 %v6518, 64
  %v6665 = vpop.permute.xlu0 %6664
  %6666 = vrot.lane.b32.xlu0 %v6519, 64
  %v6667 = vpop.permute.xlu0 %6666
  %6668 = vrot.lane.b32.xlu0 %v6520, 64
  %v6669 = vpop.permute.xlu0 %6668
  %6670 = vrot.lane.b32.xlu0 %v6521, 64
  %v6671 = vpop.permute.xlu0 %6670
  %6672 = vrot.lane.b32.xlu0 %v6522, 64
  %v6673 = vpop.permute.xlu0 %6672
  %6674 = vrot.lane.b32.xlu0 %v6523, 64
  %v6675 = vpop.permute.xlu0 %6674
  %6676 = vrot.lane.b32.xlu0 %v6524, 64
  %v6677 = vpop.permute.xlu0 %6676
  %6678 = vrot.lane.b32.xlu0 %v6525, 64
  %v6679 = vpop.permute.xlu0 %6678
  %6680 = vrot.lane.b32.xlu0 %v6526, 64
  %v6681 = vpop.permute.xlu0 %6680
  %6682 = vrot.lane.b32.xlu0 %v6527, 64
  %v6683 = vpop.permute.xlu0 %6682
  %6684 = vrot.lane.b32.xlu0 %v6528, 64
  %v6685 = vpop.permute.xlu0 %6684
  %6686 = vrot.lane.b32.xlu0 %v6529, 64
  %v6687 = vpop.permute.xlu0 %6686
  %6688 = vrot.lane.b32.xlu0 %v6530, 64
  %v6689 = vpop.permute.xlu0 %6688
  %6690 = vrot.lane.b32.xlu0 %v6531, 64
  %v6691 = vpop.permute.xlu0 %6690
  %6692 = vrot.lane.b32.xlu0 %v6532, 64
  %v6693 = vpop.permute.xlu0 %6692
  %6694 = vrot.lane.b32.xlu0 %v6533, 64
  %v6695 = vpop.permute.xlu0 %6694
  %6696 = vrot.lane.b32.xlu0 %v6534, 64
  %v6697 = vpop.permute.xlu0 %6696
  %6698 = vrot.lane.b32.xlu0 %v6535, 64
  %v6699 = vpop.permute.xlu0 %6698
  %6700 = vrot.lane.b32.xlu0 %v6536, 64
  %v6701 = vpop.permute.xlu0 %6700
  %6702 = vrot.lane.b32.xlu0 %v6537, 64
  %v6703 = vpop.permute.xlu0 %6702
  %6704 = vrot.lane.b32.xlu0 %v6538, 64
  %v6705 = vpop.permute.xlu0 %6704
  %6706 = vrot.lane.b32.xlu0 %v6539, 64
  %v6707 = vpop.permute.xlu0 %6706
  %6708 = vrot.lane.b32.xlu0 %v6540, 64
  %v6709 = vpop.permute.xlu0 %6708
  %6710 = vrot.lane.b32.xlu0 %v6541, 64
  %v6711 = vpop.permute.xlu0 %6710
  %6712 = vrot.lane.b32.xlu0 %v6542, 64
  %v6713 = vpop.permute.xlu0 %6712
  %6714 = vrot.lane.b32.xlu0 %v6543, 64
  %v6715 = vpop.permute.xlu0 %6714
  %6716 = vrot.lane.b32.xlu0 %v6544, 64
  %v6717 = vpop.permute.xlu0 %6716
  %6718 = vrot.lane.b32.xlu0 %v6545, 64
  %v6719 = vpop.permute.xlu0 %6718
  %6720 = vrot.lane.b32.xlu0 %v6546, 64
  %v6721 = vpop.permute.xlu0 %6720
  %6722 = vrot.lane.b32.xlu0 %v6547, 64
  %v6723 = vpop.permute.xlu0 %6722
  %6724 = vrot.lane.b32.xlu0 %v6548, 64
  %v6725 = vpop.permute.xlu0 %6724
  %6726 = vrot.lane.b32.xlu0 %v6549, 64
  %v6727 = vpop.permute.xlu0 %6726
  %6728 = vrot.lane.b32.xlu0 %v6550, 64
  %v6729 = vpop.permute.xlu0 %6728
  %6730 = vrot.lane.b32.xlu0 %v6551, 64
  %v6731 = vpop.permute.xlu0 %6730
  %6732 = vrot.lane.b32.xlu0 %v6552, 64
  %v6733 = vpop.permute.xlu0 %6732
  %6734 = vrot.lane.b32.xlu0 %v6553, 64
  %v6735 = vpop.permute.xlu0 %6734
  %6736 = vrot.lane.b32.xlu0 %v6554, 64
  %v6737 = vpop.permute.xlu0 %6736
  %6738 = vrot.lane.b32.xlu0 %v6555, 64
  %v6739 = vpop.permute.xlu0 %6738
  %6740 = vrot.lane.b32.xlu0 %v6556, 64
  %v6741 = vpop.permute.xlu0 %6740
  %6742 = vrot.lane.b32.xlu0 %v6557, 64
  %v6743 = vpop.permute.xlu0 %6742
  %6744 = vrot.lane.b32.xlu0 %v6558, 64
  %v6745 = vpop.permute.xlu0 %6744
  %6746 = vrot.lane.b32.xlu0 %v6559, 64
  %v6747 = vpop.permute.xlu0 %6746
  %6748 = vrot.lane.b32.xlu0 %v6560, 64
  %v6749 = vpop.permute.xlu0 %6748
  %6750 = vrot.lane.b32.xlu0 %v6561, 64
  %v6751 = vpop.permute.xlu0 %6750
  %6752 = vrot.lane.b32.xlu0 %v6562, 64
  %v6753 = vpop.permute.xlu0 %6752
  %6754 = vrot.lane.b32.xlu0 %v6563, 64
  %v6755 = vpop.permute.xlu0 %6754
  %6820 = vst.msk [vmem:[#allocation2 + $0x18] sm:$0xff] %vm482, %v6629
  %6821 = vst.msk [vmem:[#allocation2 + $0x40] sm:$0xff] %vm482, %v6631
  %6822 = vst.msk [vmem:[#allocation2 + $0x68] sm:$0xff] %vm482, %v6633
  %6823 = vst.msk [vmem:[#allocation2 + $0x90] sm:$0xff] %vm482, %v6635
  %6824 = vst.msk [vmem:[#allocation2 + $0xb8] sm:$0xff] %vm482, %v6637
  %6825 = vst.msk [vmem:[#allocation2 + $0xe0] sm:$0xff] %vm482, %v6639
  %6826 = vst.msk [vmem:[#allocation2 + $0x108] sm:$0xff] %vm482, %v6641
  %6827 = vst.msk [vmem:[#allocation2 + $0x130] sm:$0xff] %vm482, %v6643
  %6828 = vst.msk [vmem:[#allocation2 + $0x158] sm:$0xff] %vm482, %v6645
  %6829 = vst.msk [vmem:[#allocation2 + $0x180] sm:$0xff] %vm482, %v6647
  %6830 = vst.msk [vmem:[#allocation2 + $0x1a8] sm:$0xff] %vm482, %v6649
  %6831 = vst.msk [vmem:[#allocation2 + $0x1d0] sm:$0xff] %vm482, %v6651
  %6832 = vst.msk [vmem:[#allocation2 + $0x1f8] sm:$0xff] %vm482, %v6653
  %6833 = vst.msk [vmem:[#allocation2 + $0x220] sm:$0xff] %vm482, %v6655
  %6834 = vst.msk [vmem:[#allocation2 + $0x248] sm:$0xff] %vm482, %v6657
  %6835 = vst.msk [vmem:[#allocation2 + $0x270] sm:$0xff] %vm482, %v6659
  %6836 = vst.msk [vmem:[#allocation2 + $0x298] sm:$0xff] %vm482, %v6661
  %6837 = vst.msk [vmem:[#allocation2 + $0x2c0] sm:$0xff] %vm482, %v6663
  %6838 = vst.msk [vmem:[#allocation2 + $0x2e8] sm:$0xff] %vm482, %v6665
  %6839 = vst.msk [vmem:[#allocation2 + $0x310] sm:$0xff] %vm482, %v6667
  %6840 = vst.msk [vmem:[#allocation2 + $0x338] sm:$0xff] %vm482, %v6669
  %6841 = vst.msk [vmem:[#allocation2 + $0x360] sm:$0xff] %vm482, %v6671
  %6842 = vst.msk [vmem:[#allocation2 + $0x388] sm:$0xff] %vm482, %v6673
  %6843 = vst.msk [vmem:[#allocation2 + $0x3b0] sm:$0xff] %vm482, %v6675
  %6844 = vst.msk [vmem:[#allocation2 + $0x3d8] sm:$0xff] %vm482, %v6677
  %6845 = vst.msk [vmem:[#allocation2 + $0x400] sm:$0xff] %vm482, %v6679
  %6846 = vst.msk [vmem:[#allocation2 + $0x428] sm:$0xff] %vm482, %v6681
  %6847 = vst.msk [vmem:[#allocation2 + $0x450] sm:$0xff] %vm482, %v6683
  %6848 = vst.msk [vmem:[#allocation2 + $0x478] sm:$0xff] %vm482, %v6685
  %6849 = vst.msk [vmem:[#allocation2 + $0x4a0] sm:$0xff] %vm482, %v6687
  %6850 = vst.msk [vmem:[#allocation2 + $0x4c8] sm:$0xff] %vm482, %v6689
  %6851 = vst.msk [vmem:[#allocation2 + $0x4f0] sm:$0xff] %vm482, %v6691
  %6852 = vst.msk [vmem:[#allocation2 + $0x518] sm:$0xff] %vm482, %v6693
  %6853 = vst.msk [vmem:[#allocation2 + $0x540] sm:$0xff] %vm482, %v6695
  %6854 = vst.msk [vmem:[#allocation2 + $0x568] sm:$0xff] %vm482, %v6697
  %6855 = vst.msk [vmem:[#allocation2 + $0x590] sm:$0xff] %vm482, %v6699
  %6856 = vst.msk [vmem:[#allocation2 + $0x5b8] sm:$0xff] %vm482, %v6701
  %6857 = vst.msk [vmem:[#allocation2 + $0x5e0] sm:$0xff] %vm482, %v6703
  %6858 = vst.msk [vmem:[#allocation2 + $0x608] sm:$0xff] %vm482, %v6705
  %6859 = vst.msk [vmem:[#allocation2 + $0x630] sm:$0xff] %vm482, %v6707
  %6860 = vst.msk [vmem:[#allocation2 + $0x658] sm:$0xff] %vm482, %v6709
  %6861 = vst.msk [vmem:[#allocation2 + $0x680] sm:$0xff] %vm482, %v6711
  %6862 = vst.msk [vmem:[#allocation2 + $0x6a8] sm:$0xff] %vm482, %v6713
  %6863 = vst.msk [vmem:[#allocation2 + $0x6d0] sm:$0xff] %vm482, %v6715
  %6864 = vst.msk [vmem:[#allocation2 + $0x6f8] sm:$0xff] %vm482, %v6717
  %6865 = vst.msk [vmem:[#allocation2 + $0x720] sm:$0xff] %vm482, %v6719
  %6866 = vst.msk [vmem:[#allocation2 + $0x748] sm:$0xff] %vm482, %v6721
  %6867 = vst.msk [vmem:[#allocation2 + $0x770] sm:$0xff] %vm482, %v6723
  %6868 = vst.msk [vmem:[#allocation2 + $0x798] sm:$0xff] %vm482, %v6725
  %6869 = vst.msk [vmem:[#allocation2 + $0x7c0] sm:$0xff] %vm482, %v6727
  %6870 = vst.msk [vmem:[#allocation2 + $0x7e8] sm:$0xff] %vm482, %v6729
  %6871 = vst.msk [vmem:[#allocation2 + $0x810] sm:$0xff] %vm482, %v6731
  %6872 = vst.msk [vmem:[#allocation2 + $0x838] sm:$0xff] %vm482, %v6733
  %6873 = vst.msk [vmem:[#allocation2 + $0x860] sm:$0xff] %vm482, %v6735
  %6874 = vst.msk [vmem:[#allocation2 + $0x888] sm:$0xff] %vm482, %v6737
  %6875 = vst.msk [vmem:[#allocation2 + $0x8b0] sm:$0xff] %vm482, %v6739
  %6876 = vst.msk [vmem:[#allocation2 + $0x8d8] sm:$0xff] %vm482, %v6741
  %6877 = vst.msk [vmem:[#allocation2 + $0x900] sm:$0xff] %vm482, %v6743
  %6878 = vst.msk [vmem:[#allocation2 + $0x928] sm:$0xff] %vm482, %v6745
  %6879 = vst.msk [vmem:[#allocation2 + $0x950] sm:$0xff] %vm482, %v6747
  %6880 = vst.msk [vmem:[#allocation2 + $0x978] sm:$0xff] %vm482, %v6749
  %6881 = vst.msk [vmem:[#allocation2 + $0x9a0] sm:$0xff] %vm482, %v6751
  %6882 = vst.msk [vmem:[#allocation2 + $0x9c8] sm:$0xff] %vm482, %v6753
  %6883 = vst.msk [vmem:[#allocation2 + $0x9f0] sm:$0xff] %vm482, %v6755
  %v6884 = vld [vmem:[%s6371 + $0x2] sm:$0xff]
  %v6885 = vld [vmem:[%s6371 + $0xa] sm:$0xff]
  %v6886 = vld [vmem:[%s6371 + $0x1a] sm:$0xff]
  %v6887 = vld [vmem:[%s6371 + $0x22] sm:$0xff]
  %v6888 = vld [vmem:[%s6371 + $0x32] sm:$0xff]
  %v6889 = vld [vmem:[%s6371 + $0x3a] sm:$0xff]
  %v6890 = vld [vmem:[%s6371 + $0x4a] sm:$0xff]
  %v6891 = vld [vmem:[%s6371 + $0x52] sm:$0xff]
  %v6892 = vld [vmem:[%s6371 + $0x62] sm:$0xff]
  %v6893 = vld [vmem:[%s6371 + $0x6a] sm:$0xff]
  %v6894 = vld [vmem:[%s6371 + $0x7a] sm:$0xff]
  %v6895 = vld [vmem:[%s6371 + $0x82] sm:$0xff]
  %v6896 = vld [vmem:[%s6371 + $0x92] sm:$0xff]
  %v6897 = vld [vmem:[%s6371 + $0x9a] sm:$0xff]
  %v6898 = vld [vmem:[%s6371 + $0xaa] sm:$0xff]
  %v6899 = vld [vmem:[%s6371 + $0xb2] sm:$0xff]
  %v6900 = vld [vmem:[%s6371 + $0xc2] sm:$0xff]
  %v6901 = vld [vmem:[%s6371 + $0xca] sm:$0xff]
  %v6902 = vld [vmem:[%s6371 + $0xda] sm:$0xff]
  %v6903 = vld [vmem:[%s6371 + $0xe2] sm:$0xff]
  %v6904 = vld [vmem:[%s6371 + $0xf2] sm:$0xff]
  %v6905 = vld [vmem:[%s6371 + $0xfa] sm:$0xff]
  %v6906 = vld [vmem:[%s6371 + $0x10a] sm:$0xff]
  %v6907 = vld [vmem:[%s6371 + $0x112] sm:$0xff]
  %v6908 = vld [vmem:[%s6371 + $0x122] sm:$0xff]
  %v6909 = vld [vmem:[%s6371 + $0x12a] sm:$0xff]
  %v6910 = vld [vmem:[%s6371 + $0x13a] sm:$0xff]
  %v6911 = vld [vmem:[%s6371 + $0x142] sm:$0xff]
  %v6912 = vld [vmem:[%s6371 + $0x152] sm:$0xff]
  %v6913 = vld [vmem:[%s6371 + $0x15a] sm:$0xff]
  %v6914 = vld [vmem:[%s6371 + $0x16a] sm:$0xff]
  %v6915 = vld [vmem:[%s6371 + $0x172] sm:$0xff]
  %v6916 = vld [vmem:[%s6371 + $0x1b2] sm:$0xff]
  %v6917 = vld [vmem:[%s6371 + $0x1ba] sm:$0xff]
  %v6918 = vld [vmem:[%s6371 + $0x1ca] sm:$0xff]
  %v6919 = vld [vmem:[%s6371 + $0x1d2] sm:$0xff]
  %v6920 = vld [vmem:[%s6371 + $0x1e2] sm:$0xff]
  %v6921 = vld [vmem:[%s6371 + $0x1ea] sm:$0xff]
  %v6922 = vld [vmem:[%s6371 + $0x1fa] sm:$0xff]
  %v6923 = vld [vmem:[%s6371 + $0x202] sm:$0xff]
  %v6924 = vld [vmem:[%s6371 + $0x212] sm:$0xff]
  %v6925 = vld [vmem:[%s6371 + $0x21a] sm:$0xff]
  %v6926 = vld [vmem:[%s6371 + $0x22a] sm:$0xff]
  %v6927 = vld [vmem:[%s6371 + $0x232] sm:$0xff]
  %v6928 = vld [vmem:[%s6371 + $0x242] sm:$0xff]
  %v6929 = vld [vmem:[%s6371 + $0x24a] sm:$0xff]
  %v6930 = vld [vmem:[%s6371 + $0x25a] sm:$0xff]
  %v6931 = vld [vmem:[%s6371 + $0x262] sm:$0xff]
  %v6932 = vld [vmem:[%s6371 + $0x272] sm:$0xff]
  %v6933 = vld [vmem:[%s6371 + $0x27a] sm:$0xff]
  %v6934 = vld [vmem:[%s6371 + $0x28a] sm:$0xff]
  %v6935 = vld [vmem:[%s6371 + $0x292] sm:$0xff]
  %v6936 = vld [vmem:[%s6371 + $0x2a2] sm:$0xff]
  %v6937 = vld [vmem:[%s6371 + $0x2aa] sm:$0xff]
  %v6938 = vld [vmem:[%s6371 + $0x2ba] sm:$0xff]
  %v6939 = vld [vmem:[%s6371 + $0x2c2] sm:$0xff]
  %v6940 = vld [vmem:[%s6371 + $0x2d2] sm:$0xff]
  %v6941 = vld [vmem:[%s6371 + $0x2da] sm:$0xff]
  %v6942 = vld [vmem:[%s6371 + $0x2ea] sm:$0xff]
  %v6943 = vld [vmem:[%s6371 + $0x2f2] sm:$0xff]
  %v6944 = vld [vmem:[%s6371 + $0x302] sm:$0xff]
  %v6945 = vld [vmem:[%s6371 + $0x30a] sm:$0xff]
  %v6946 = vld [vmem:[%s6371 + $0x31a] sm:$0xff]
  %v6947 = vld [vmem:[%s6371 + $0x322] sm:$0xff]
  %6948 = vst.msk [vmem:[#allocation2 + $0x20] sm:$0xff] %vm97, %v6884
  %6949 = vst.msk [vmem:[#allocation2 + $0x48] sm:$0xff] %vm97, %v6885
  %6950 = vst.msk [vmem:[#allocation2 + $0x70] sm:$0xff] %vm97, %v6886
  %6951 = vst.msk [vmem:[#allocation2 + $0x98] sm:$0xff] %vm97, %v6887
  %6952 = vst.msk [vmem:[#allocation2 + $0xc0] sm:$0xff] %vm97, %v6888
  %6953 = vst.msk [vmem:[#allocation2 + $0xe8] sm:$0xff] %vm97, %v6889
  %6954 = vst.msk [vmem:[#allocation2 + $0x110] sm:$0xff] %vm97, %v6890
  %6955 = vst.msk [vmem:[#allocation2 + $0x138] sm:$0xff] %vm97, %v6891
  %6956 = vst.msk [vmem:[#allocation2 + $0x160] sm:$0xff] %vm97, %v6892
  %6957 = vst.msk [vmem:[#allocation2 + $0x188] sm:$0xff] %vm97, %v6893
  %6958 = vst.msk [vmem:[#allocation2 + $0x1b0] sm:$0xff] %vm97, %v6894
  %6959 = vst.msk [vmem:[#allocation2 + $0x1d8] sm:$0xff] %vm97, %v6895
  %6960 = vst.msk [vmem:[#allocation2 + $0x200] sm:$0xff] %vm97, %v6896
  %6961 = vst.msk [vmem:[#allocation2 + $0x228] sm:$0xff] %vm97, %v6897
  %6962 = vst.msk [vmem:[#allocation2 + $0x250] sm:$0xff] %vm97, %v6898
  %6963 = vst.msk [vmem:[#allocation2 + $0x278] sm:$0xff] %vm97, %v6899
  %6964 = vst.msk [vmem:[#allocation2 + $0x2a0] sm:$0xff] %vm97, %v6900
  %6965 = vst.msk [vmem:[#allocation2 + $0x2c8] sm:$0xff] %vm97, %v6901
  %6966 = vst.msk [vmem:[#allocation2 + $0x2f0] sm:$0xff] %vm97, %v6902
  %6967 = vst.msk [vmem:[#allocation2 + $0x318] sm:$0xff] %vm97, %v6903
  %6968 = vst.msk [vmem:[#allocation2 + $0x340] sm:$0xff] %vm97, %v6904
  %6969 = vst.msk [vmem:[#allocation2 + $0x368] sm:$0xff] %vm97, %v6905
  %6970 = vst.msk [vmem:[#allocation2 + $0x390] sm:$0xff] %vm97, %v6906
  %6971 = vst.msk [vmem:[#allocation2 + $0x3b8] sm:$0xff] %vm97, %v6907
  %6972 = vst.msk [vmem:[#allocation2 + $0x3e0] sm:$0xff] %vm97, %v6908
  %6973 = vst.msk [vmem:[#allocation2 + $0x408] sm:$0xff] %vm97, %v6909
  %6974 = vst.msk [vmem:[#allocation2 + $0x430] sm:$0xff] %vm97, %v6910
  %6975 = vst.msk [vmem:[#allocation2 + $0x458] sm:$0xff] %vm97, %v6911
  %6976 = vst.msk [vmem:[#allocation2 + $0x480] sm:$0xff] %vm97, %v6912
  %6977 = vst.msk [vmem:[#allocation2 + $0x4a8] sm:$0xff] %vm97, %v6913
  %6978 = vst.msk [vmem:[#allocation2 + $0x4d0] sm:$0xff] %vm97, %v6914
  %6979 = vst.msk [vmem:[#allocation2 + $0x4f8] sm:$0xff] %vm97, %v6915
  %6980 = vst.msk [vmem:[#allocation2 + $0x520] sm:$0xff] %vm97, %v6916
  %6981 = vst.msk [vmem:[#allocation2 + $0x548] sm:$0xff] %vm97, %v6917
  %6982 = vst.msk [vmem:[#allocation2 + $0x570] sm:$0xff] %vm97, %v6918
  %6983 = vst.msk [vmem:[#allocation2 + $0x598] sm:$0xff] %vm97, %v6919
  %6984 = vst.msk [vmem:[#allocation2 + $0x5c0] sm:$0xff] %vm97, %v6920
  %6985 = vst.msk [vmem:[#allocation2 + $0x5e8] sm:$0xff] %vm97, %v6921
  %6986 = vst.msk [vmem:[#allocation2 + $0x610] sm:$0xff] %vm97, %v6922
  %6987 = vst.msk [vmem:[#allocation2 + $0x638] sm:$0xff] %vm97, %v6923
  %6988 = vst.msk [vmem:[#allocation2 + $0x660] sm:$0xff] %vm97, %v6924
  %6989 = vst.msk [vmem:[#allocation2 + $0x688] sm:$0xff] %vm97, %v6925
  %6990 = vst.msk [vmem:[#allocation2 + $0x6b0] sm:$0xff] %vm97, %v6926
  %6991 = vst.msk [vmem:[#allocation2 + $0x6d8] sm:$0xff] %vm97, %v6927
  %6992 = vst.msk [vmem:[#allocation2 + $0x700] sm:$0xff] %vm97, %v6928
  %6993 = vst.msk [vmem:[#allocation2 + $0x728] sm:$0xff] %vm97, %v6929
  %6994 = vst.msk [vmem:[#allocation2 + $0x750] sm:$0xff] %vm97, %v6930
  %6995 = vst.msk [vmem:[#allocation2 + $0x778] sm:$0xff] %vm97, %v6931
  %6996 = vst.msk [vmem:[#allocation2 + $0x7a0] sm:$0xff] %vm97, %v6932
  %6997 = vst.msk [vmem:[#allocation2 + $0x7c8] sm:$0xff] %vm97, %v6933
  %6998 = vst.msk [vmem:[#allocation2 + $0x7f0] sm:$0xff] %vm97, %v6934
  %6999 = vst.msk [vmem:[#allocation2 + $0x818] sm:$0xff] %vm97, %v6935
  %7000 = vst.msk [vmem:[#allocation2 + $0x840] sm:$0xff] %vm97, %v6936
  %7001 = vst.msk [vmem:[#allocation2 + $0x868] sm:$0xff] %vm97, %v6937
  %7002 = vst.msk [vmem:[#allocation2 + $0x890] sm:$0xff] %vm97, %v6938
  %7003 = vst.msk [vmem:[#allocation2 + $0x8b8] sm:$0xff] %vm97, %v6939
  %7004 = vst.msk [vmem:[#allocation2 + $0x8e0] sm:$0xff] %vm97, %v6940
  %7005 = vst.msk [vmem:[#allocation2 + $0x908] sm:$0xff] %vm97, %v6941
  %7006 = vst.msk [vmem:[#allocation2 + $0x930] sm:$0xff] %vm97, %v6942
  %7007 = vst.msk [vmem:[#allocation2 + $0x958] sm:$0xff] %vm97, %v6943
  %7008 = vst.msk [vmem:[#allocation2 + $0x980] sm:$0xff] %vm97, %v6944
  %7009 = vst.msk [vmem:[#allocation2 + $0x9a8] sm:$0xff] %vm97, %v6945
  %7010 = vst.msk [vmem:[#allocation2 + $0x9d0] sm:$0xff] %vm97, %v6946
  %7011 = vst.msk [vmem:[#allocation2 + $0x9f8] sm:$0xff] %vm97, %v6947
  %v7012 = vld [vmem:[#allocation2] sm:$0xff]
  %v7013 = vld [vmem:[#allocation2 + $0x8] sm:$0xff]
  %v7014 = vld [vmem:[#allocation2 + $0x10] sm:$0xff]
  %v7015 = vld [vmem:[#allocation2 + $0x18] sm:$0xff]
  %v7016 = vld [vmem:[#allocation2 + $0x20] sm:$0xff]
  %v7017 = vld [vmem:[#allocation2 + $0x28] sm:$0xff]
  %v7018 = vld [vmem:[#allocation2 + $0x30] sm:$0xff]
  %v7019 = vld [vmem:[#allocation2 + $0x38] sm:$0xff]
  %v7020 = vld [vmem:[#allocation2 + $0x40] sm:$0xff]
  %v7021 = vld [vmem:[#allocation2 + $0x48] sm:$0xff]
  %v7022 = vld [vmem:[#allocation2 + $0x50] sm:$0xff]
  %v7023 = vld [vmem:[#allocation2 + $0x58] sm:$0xff]
  %v7024 = vld [vmem:[#allocation2 + $0x60] sm:$0xff]
  %v7025 = vld [vmem:[#allocation2 + $0x68] sm:$0xff]
  %v7026 = vld [vmem:[#allocation2 + $0x70] sm:$0xff]
  %v7027 = vld [vmem:[#allocation2 + $0x78] sm:$0xff]
  %v7028 = vld [vmem:[#allocation2 + $0x80] sm:$0xff]
  %v7029 = vld [vmem:[#allocation2 + $0x88] sm:$0xff]
  %v7030 = vld [vmem:[#allocation2 + $0x90] sm:$0xff]
  %v7031 = vld [vmem:[#allocation2 + $0x98] sm:$0xff]
  %v7032 = vld [vmem:[#allocation2 + $0xa0] sm:$0xff]
  %v7033 = vld [vmem:[#allocation2 + $0xa8] sm:$0xff]
  %v7034 = vld [vmem:[#allocation2 + $0xb0] sm:$0xff]
  %v7035 = vld [vmem:[#allocation2 + $0xb8] sm:$0xff]
  %v7036 = vld [vmem:[#allocation2 + $0xc0] sm:$0xff]
  %v7037 = vld [vmem:[#allocation2 + $0xc8] sm:$0xff]
  %v7038 = vld [vmem:[#allocation2 + $0xd0] sm:$0xff]
  %v7039 = vld [vmem:[#allocation2 + $0xd8] sm:$0xff]
  %v7040 = vld [vmem:[#allocation2 + $0xe0] sm:$0xff]
  %v7041 = vld [vmem:[#allocation2 + $0xe8] sm:$0xff]
  %v7042 = vld [vmem:[#allocation2 + $0xf0] sm:$0xff]
  %v7043 = vld [vmem:[#allocation2 + $0xf8] sm:$0xff]
  %v7044 = vld [vmem:[#allocation2 + $0x100] sm:$0xff]
  %v7045 = vld [vmem:[#allocation2 + $0x108] sm:$0xff]
  %v7046 = vld [vmem:[#allocation2 + $0x110] sm:$0xff]
  %v7047 = vld [vmem:[#allocation2 + $0x118] sm:$0xff]
  %v7048 = vld [vmem:[#allocation2 + $0x120] sm:$0xff]
  %v7049 = vld [vmem:[#allocation2 + $0x128] sm:$0xff]
  %v7050 = vld [vmem:[#allocation2 + $0x130] sm:$0xff]
  %v7051 = vld [vmem:[#allocation2 + $0x138] sm:$0xff]
  %v7052 = vld [vmem:[#allocation2 + $0x140] sm:$0xff]
  %v7053 = vld [vmem:[#allocation2 + $0x148] sm:$0xff]
  %v7054 = vld [vmem:[#allocation2 + $0x150] sm:$0xff]
  %v7055 = vld [vmem:[#allocation2 + $0x158] sm:$0xff]
  %v7056 = vld [vmem:[#allocation2 + $0x160] sm:$0xff]
  %v7057 = vld [vmem:[#allocation2 + $0x168] sm:$0xff]
  %v7058 = vld [vmem:[#allocation2 + $0x170] sm:$0xff]
  %v7059 = vld [vmem:[#allocation2 + $0x178] sm:$0xff]
  %v7060 = vld [vmem:[#allocation2 + $0x180] sm:$0xff]
  %v7061 = vld [vmem:[#allocation2 + $0x188] sm:$0xff]
  %v7062 = vld [vmem:[#allocation2 + $0x190] sm:$0xff]
  %v7063 = vld [vmem:[#allocation2 + $0x198] sm:$0xff]
  %v7064 = vld [vmem:[#allocation2 + $0x1a0] sm:$0xff]
  %v7065 = vld [vmem:[#allocation2 + $0x1a8] sm:$0xff]
  %v7066 = vld [vmem:[#allocation2 + $0x1b0] sm:$0xff]
  %v7067 = vld [vmem:[#allocation2 + $0x1b8] sm:$0xff]
  %v7068 = vld [vmem:[#allocation2 + $0x1c0] sm:$0xff]
  %v7069 = vld [vmem:[#allocation2 + $0x1c8] sm:$0xff]
  %v7070 = vld [vmem:[#allocation2 + $0x1d0] sm:$0xff]
  %v7071 = vld [vmem:[#allocation2 + $0x1d8] sm:$0xff]
  %v7072 = vld [vmem:[#allocation2 + $0x1e0] sm:$0xff]
  %v7073 = vld [vmem:[#allocation2 + $0x1e8] sm:$0xff]
  %v7074 = vld [vmem:[#allocation2 + $0x1f0] sm:$0xff]
  %v7075 = vld [vmem:[#allocation2 + $0x1f8] sm:$0xff]
  %v7076 = vld [vmem:[#allocation2 + $0x200] sm:$0xff]
  %v7077 = vld [vmem:[#allocation2 + $0x208] sm:$0xff]
  %v7078 = vld [vmem:[#allocation2 + $0x210] sm:$0xff]
  %v7079 = vld [vmem:[#allocation2 + $0x218] sm:$0xff]
  %v7080 = vld [vmem:[#allocation2 + $0x220] sm:$0xff]
  %v7081 = vld [vmem:[#allocation2 + $0x228] sm:$0xff]
  %v7082 = vld [vmem:[#allocation2 + $0x230] sm:$0xff]
  %v7083 = vld [vmem:[#allocation2 + $0x238] sm:$0xff]
  %v7084 = vld [vmem:[#allocation2 + $0x240] sm:$0xff]
  %v7085 = vld [vmem:[#allocation2 + $0x248] sm:$0xff]
  %v7086 = vld [vmem:[#allocation2 + $0x250] sm:$0xff]
  %v7087 = vld [vmem:[#allocation2 + $0x258] sm:$0xff]
  %v7088 = vld [vmem:[#allocation2 + $0x260] sm:$0xff]
  %v7089 = vld [vmem:[#allocation2 + $0x268] sm:$0xff]
  %v7090 = vld [vmem:[#allocation2 + $0x270] sm:$0xff]
  %v7091 = vld [vmem:[#allocation2 + $0x278] sm:$0xff]
  %v7092 = vld [vmem:[#allocation2 + $0x280] sm:$0xff]
  %v7093 = vld [vmem:[#allocation2 + $0x288] sm:$0xff]
  %v7094 = vld [vmem:[#allocation2 + $0x290] sm:$0xff]
  %v7095 = vld [vmem:[#allocation2 + $0x298] sm:$0xff]
  %v7096 = vld [vmem:[#allocation2 + $0x2a0] sm:$0xff]
  %v7097 = vld [vmem:[#allocation2 + $0x2a8] sm:$0xff]
  %v7098 = vld [vmem:[#allocation2 + $0x2b0] sm:$0xff]
  %v7099 = vld [vmem:[#allocation2 + $0x2b8] sm:$0xff]
  %v7100 = vld [vmem:[#allocation2 + $0x2c0] sm:$0xff]
  %v7101 = vld [vmem:[#allocation2 + $0x2c8] sm:$0xff]
  %v7102 = vld [vmem:[#allocation2 + $0x2d0] sm:$0xff]
  %v7103 = vld [vmem:[#allocation2 + $0x2d8] sm:$0xff]
  %v7104 = vld [vmem:[#allocation2 + $0x2e0] sm:$0xff]
  %v7105 = vld [vmem:[#allocation2 + $0x2e8] sm:$0xff]
  %v7106 = vld [vmem:[#allocation2 + $0x2f0] sm:$0xff]
  %v7107 = vld [vmem:[#allocation2 + $0x2f8] sm:$0xff]
  %v7108 = vld [vmem:[#allocation2 + $0x300] sm:$0xff]
  %v7109 = vld [vmem:[#allocation2 + $0x308] sm:$0xff]
  %v7110 = vld [vmem:[#allocation2 + $0x310] sm:$0xff]
  %v7111 = vld [vmem:[#allocation2 + $0x318] sm:$0xff]
  %v7112 = vld [vmem:[#allocation2 + $0x320] sm:$0xff]
  %v7113 = vld [vmem:[#allocation2 + $0x328] sm:$0xff]
  %v7114 = vld [vmem:[#allocation2 + $0x330] sm:$0xff]
  %v7115 = vld [vmem:[#allocation2 + $0x338] sm:$0xff]
  %v7116 = vld [vmem:[#allocation2 + $0x340] sm:$0xff]
  %v7117 = vld [vmem:[#allocation2 + $0x348] sm:$0xff]
  %v7118 = vld [vmem:[#allocation2 + $0x350] sm:$0xff]
  %v7119 = vld [vmem:[#allocation2 + $0x358] sm:$0xff]
  %v7120 = vld [vmem:[#allocation2 + $0x360] sm:$0xff]
  %v7121 = vld [vmem:[#allocation2 + $0x368] sm:$0xff]
  %v7122 = vld [vmem:[#allocation2 + $0x370] sm:$0xff]
  %v7123 = vld [vmem:[#allocation2 + $0x378] sm:$0xff]
  %v7124 = vld [vmem:[#allocation2 + $0x380] sm:$0xff]
  %v7125 = vld [vmem:[#allocation2 + $0x388] sm:$0xff]
  %v7126 = vld [vmem:[#allocation2 + $0x390] sm:$0xff]
  %v7127 = vld [vmem:[#allocation2 + $0x398] sm:$0xff]
  %v7128 = vld [vmem:[#allocation2 + $0x3a0] sm:$0xff]
  %v7129 = vld [vmem:[#allocation2 + $0x3a8] sm:$0xff]
  %v7130 = vld [vmem:[#allocation2 + $0x3b0] sm:$0xff]
  %v7131 = vld [vmem:[#allocation2 + $0x3b8] sm:$0xff]
  %v7132 = vld [vmem:[#allocation2 + $0x3c0] sm:$0xff]
  %v7133 = vld [vmem:[#allocation2 + $0x3c8] sm:$0xff]
  %v7134 = vld [vmem:[#allocation2 + $0x3d0] sm:$0xff]
  %v7135 = vld [vmem:[#allocation2 + $0x3d8] sm:$0xff]
  %v7136 = vld [vmem:[#allocation2 + $0x3e0] sm:$0xff]
  %v7137 = vld [vmem:[#allocation2 + $0x3e8] sm:$0xff]
  %v7138 = vld [vmem:[#allocation2 + $0x3f0] sm:$0xff]
  %v7139 = vld [vmem:[#allocation2 + $0x3f8] sm:$0xff]
  %v7140 = vld [vmem:[#allocation2 + $0x400] sm:$0xff]
  %v7141 = vld [vmem:[#allocation2 + $0x408] sm:$0xff]
  %v7142 = vld [vmem:[#allocation2 + $0x410] sm:$0xff]
  %v7143 = vld [vmem:[#allocation2 + $0x418] sm:$0xff]
  %v7144 = vld [vmem:[#allocation2 + $0x420] sm:$0xff]
  %v7145 = vld [vmem:[#allocation2 + $0x428] sm:$0xff]
  %v7146 = vld [vmem:[#allocation2 + $0x430] sm:$0xff]
  %v7147 = vld [vmem:[#allocation2 + $0x438] sm:$0xff]
  %v7148 = vld [vmem:[#allocation2 + $0x440] sm:$0xff]
  %v7149 = vld [vmem:[#allocation2 + $0x448] sm:$0xff]
  %v7150 = vld [vmem:[#allocation2 + $0x450] sm:$0xff]
  %v7151 = vld [vmem:[#allocation2 + $0x458] sm:$0xff]
  %v7152 = vld [vmem:[#allocation2 + $0x460] sm:$0xff]
  %v7153 = vld [vmem:[#allocation2 + $0x468] sm:$0xff]
  %v7154 = vld [vmem:[#allocation2 + $0x470] sm:$0xff]
  %v7155 = vld [vmem:[#allocation2 + $0x478] sm:$0xff]
  %v7156 = vld [vmem:[#allocation2 + $0x480] sm:$0xff]
  %v7157 = vld [vmem:[#allocation2 + $0x488] sm:$0xff]
  %v7158 = vld [vmem:[#allocation2 + $0x490] sm:$0xff]
  %v7159 = vld [vmem:[#allocation2 + $0x498] sm:$0xff]
  %v7160 = vld [vmem:[#allocation2 + $0x4a0] sm:$0xff]
  %v7161 = vld [vmem:[#allocation2 + $0x4a8] sm:$0xff]
  %v7162 = vld [vmem:[#allocation2 + $0x4b0] sm:$0xff]
  %v7163 = vld [vmem:[#allocation2 + $0x4b8] sm:$0xff]
  %v7164 = vld [vmem:[#allocation2 + $0x4c0] sm:$0xff]
  %v7165 = vld [vmem:[#allocation2 + $0x4c8] sm:$0xff]
  %v7166 = vld [vmem:[#allocation2 + $0x4d0] sm:$0xff]
  %v7167 = vld [vmem:[#allocation2 + $0x4d8] sm:$0xff]
  %v7168 = vld [vmem:[#allocation2 + $0x4e0] sm:$0xff]
  %v7169 = vld [vmem:[#allocation2 + $0x4e8] sm:$0xff]
  %v7170 = vld [vmem:[#allocation2 + $0x4f0] sm:$0xff]
  %v7171 = vld [vmem:[#allocation2 + $0x4f8] sm:$0xff]
  %v7172 = vld [vmem:[#allocation2 + $0x500] sm:$0xff]
  %v7173 = vld [vmem:[#allocation2 + $0x508] sm:$0xff]
  %v7174 = vld [vmem:[#allocation2 + $0x510] sm:$0xff]
  %v7175 = vld [vmem:[#allocation2 + $0x518] sm:$0xff]
  %v7176 = vld [vmem:[#allocation2 + $0x520] sm:$0xff]
  %v7177 = vld [vmem:[#allocation2 + $0x528] sm:$0xff]
  %v7178 = vld [vmem:[#allocation2 + $0x530] sm:$0xff]
  %v7179 = vld [vmem:[#allocation2 + $0x538] sm:$0xff]
  %v7180 = vld [vmem:[#allocation2 + $0x540] sm:$0xff]
  %v7181 = vld [vmem:[#allocation2 + $0x548] sm:$0xff]
  %v7182 = vld [vmem:[#allocation2 + $0x550] sm:$0xff]
  %v7183 = vld [vmem:[#allocation2 + $0x558] sm:$0xff]
  %v7184 = vld [vmem:[#allocation2 + $0x560] sm:$0xff]
  %v7185 = vld [vmem:[#allocation2 + $0x568] sm:$0xff]
  %v7186 = vld [vmem:[#allocation2 + $0x570] sm:$0xff]
  %v7187 = vld [vmem:[#allocation2 + $0x578] sm:$0xff]
  %v7188 = vld [vmem:[#allocation2 + $0x580] sm:$0xff]
  %v7189 = vld [vmem:[#allocation2 + $0x588] sm:$0xff]
  %v7190 = vld [vmem:[#allocation2 + $0x590] sm:$0xff]
  %v7191 = vld [vmem:[#allocation2 + $0x598] sm:$0xff]
  %v7192 = vld [vmem:[#allocation2 + $0x5a0] sm:$0xff]
  %v7193 = vld [vmem:[#allocation2 + $0x5a8] sm:$0xff]
  %v7194 = vld [vmem:[#allocation2 + $0x5b0] sm:$0xff]
  %v7195 = vld [vmem:[#allocation2 + $0x5b8] sm:$0xff]
  %v7196 = vld [vmem:[#allocation2 + $0x5c0] sm:$0xff]
  %v7197 = vld [vmem:[#allocation2 + $0x5c8] sm:$0xff]
  %v7198 = vld [vmem:[#allocation2 + $0x5d0] sm:$0xff]
  %v7199 = vld [vmem:[#allocation2 + $0x5d8] sm:$0xff]
  %v7200 = vld [vmem:[#allocation2 + $0x5e0] sm:$0xff]
  %v7201 = vld [vmem:[#allocation2 + $0x5e8] sm:$0xff]
  %v7202 = vld [vmem:[#allocation2 + $0x5f0] sm:$0xff]
  %v7203 = vld [vmem:[#allocation2 + $0x5f8] sm:$0xff]
  %v7204 = vld [vmem:[#allocation2 + $0x600] sm:$0xff]
  %v7205 = vld [vmem:[#allocation2 + $0x608] sm:$0xff]
  %v7206 = vld [vmem:[#allocation2 + $0x610] sm:$0xff]
  %v7207 = vld [vmem:[#allocation2 + $0x618] sm:$0xff]
  %v7208 = vld [vmem:[#allocation2 + $0x620] sm:$0xff]
  %v7209 = vld [vmem:[#allocation2 + $0x628] sm:$0xff]
  %v7210 = vld [vmem:[#allocation2 + $0x630] sm:$0xff]
  %v7211 = vld [vmem:[#allocation2 + $0x638] sm:$0xff]
  %v7212 = vld [vmem:[#allocation2 + $0x640] sm:$0xff]
  %v7213 = vld [vmem:[#allocation2 + $0x648] sm:$0xff]
  %v7214 = vld [vmem:[#allocation2 + $0x650] sm:$0xff]
  %v7215 = vld [vmem:[#allocation2 + $0x658] sm:$0xff]
  %v7216 = vld [vmem:[#allocation2 + $0x660] sm:$0xff]
  %v7217 = vld [vmem:[#allocation2 + $0x668] sm:$0xff]
  %v7218 = vld [vmem:[#allocation2 + $0x670] sm:$0xff]
  %v7219 = vld [vmem:[#allocation2 + $0x678] sm:$0xff]
  %v7220 = vld [vmem:[#allocation2 + $0x680] sm:$0xff]
  %v7221 = vld [vmem:[#allocation2 + $0x688] sm:$0xff]
  %v7222 = vld [vmem:[#allocation2 + $0x690] sm:$0xff]
  %v7223 = vld [vmem:[#allocation2 + $0x698] sm:$0xff]
  %v7224 = vld [vmem:[#allocation2 + $0x6a0] sm:$0xff]
  %v7225 = vld [vmem:[#allocation2 + $0x6a8] sm:$0xff]
  %v7226 = vld [vmem:[#allocation2 + $0x6b0] sm:$0xff]
  %v7227 = vld [vmem:[#allocation2 + $0x6b8] sm:$0xff]
  %v7228 = vld [vmem:[#allocation2 + $0x6c0] sm:$0xff]
  %v7229 = vld [vmem:[#allocation2 + $0x6c8] sm:$0xff]
  %v7230 = vld [vmem:[#allocation2 + $0x6d0] sm:$0xff]
  %v7231 = vld [vmem:[#allocation2 + $0x6d8] sm:$0xff]
  %v7232 = vld [vmem:[#allocation2 + $0x6e0] sm:$0xff]
  %v7233 = vld [vmem:[#allocation2 + $0x6e8] sm:$0xff]
  %v7234 = vld [vmem:[#allocation2 + $0x6f0] sm:$0xff]
  %v7235 = vld [vmem:[#allocation2 + $0x6f8] sm:$0xff]
  %v7236 = vld [vmem:[#allocation2 + $0x700] sm:$0xff]
  %v7237 = vld [vmem:[#allocation2 + $0x708] sm:$0xff]
  %v7238 = vld [vmem:[#allocation2 + $0x710] sm:$0xff]
  %v7239 = vld [vmem:[#allocation2 + $0x718] sm:$0xff]
  %v7240 = vld [vmem:[#allocation2 + $0x720] sm:$0xff]
  %v7241 = vld [vmem:[#allocation2 + $0x728] sm:$0xff]
  %v7242 = vld [vmem:[#allocation2 + $0x730] sm:$0xff]
  %v7243 = vld [vmem:[#allocation2 + $0x738] sm:$0xff]
  %v7244 = vld [vmem:[#allocation2 + $0x740] sm:$0xff]
  %v7245 = vld [vmem:[#allocation2 + $0x748] sm:$0xff]
  %v7246 = vld [vmem:[#allocation2 + $0x750] sm:$0xff]
  %v7247 = vld [vmem:[#allocation2 + $0x758] sm:$0xff]
  %v7248 = vld [vmem:[#allocation2 + $0x760] sm:$0xff]
  %v7249 = vld [vmem:[#allocation2 + $0x768] sm:$0xff]
  %v7250 = vld [vmem:[#allocation2 + $0x770] sm:$0xff]
  %v7251 = vld [vmem:[#allocation2 + $0x778] sm:$0xff]
  %v7252 = vld [vmem:[#allocation2 + $0x780] sm:$0xff]
  %v7253 = vld [vmem:[#allocation2 + $0x788] sm:$0xff]
  %v7254 = vld [vmem:[#allocation2 + $0x790] sm:$0xff]
  %v7255 = vld [vmem:[#allocation2 + $0x798] sm:$0xff]
  %v7256 = vld [vmem:[#allocation2 + $0x7a0] sm:$0xff]
  %v7257 = vld [vmem:[#allocation2 + $0x7a8] sm:$0xff]
  %v7258 = vld [vmem:[#allocation2 + $0x7b0] sm:$0xff]
  %v7259 = vld [vmem:[#allocation2 + $0x7b8] sm:$0xff]
  %v7260 = vld [vmem:[#allocation2 + $0x7c0] sm:$0xff]
  %v7261 = vld [vmem:[#allocation2 + $0x7c8] sm:$0xff]
  %v7262 = vld [vmem:[#allocation2 + $0x7d0] sm:$0xff]
  %v7263 = vld [vmem:[#allocation2 + $0x7d8] sm:$0xff]
  %v7264 = vld [vmem:[#allocation2 + $0x7e0] sm:$0xff]
  %v7265 = vld [vmem:[#allocation2 + $0x7e8] sm:$0xff]
  %v7266 = vld [vmem:[#allocation2 + $0x7f0] sm:$0xff]
  %v7267 = vld [vmem:[#allocation2 + $0x7f8] sm:$0xff]
  %v7268 = vld [vmem:[#allocation2 + $0x800] sm:$0xff]
  %v7269 = vld [vmem:[#allocation2 + $0x808] sm:$0xff]
  %v7270 = vld [vmem:[#allocation2 + $0x810] sm:$0xff]
  %v7271 = vld [vmem:[#allocation2 + $0x818] sm:$0xff]
  %v7272 = vld [vmem:[#allocation2 + $0x820] sm:$0xff]
  %v7273 = vld [vmem:[#allocation2 + $0x828] sm:$0xff]
  %v7274 = vld [vmem:[#allocation2 + $0x830] sm:$0xff]
  %v7275 = vld [vmem:[#allocation2 + $0x838] sm:$0xff]
  %v7276 = vld [vmem:[#allocation2 + $0x840] sm:$0xff]
  %v7277 = vld [vmem:[#allocation2 + $0x848] sm:$0xff]
  %v7278 = vld [vmem:[#allocation2 + $0x850] sm:$0xff]
  %v7279 = vld [vmem:[#allocation2 + $0x858] sm:$0xff]
  %v7280 = vld [vmem:[#allocation2 + $0x860] sm:$0xff]
  %v7281 = vld [vmem:[#allocation2 + $0x868] sm:$0xff]
  %v7282 = vld [vmem:[#allocation2 + $0x870] sm:$0xff]
  %v7283 = vld [vmem:[#allocation2 + $0x878] sm:$0xff]
  %v7284 = vld [vmem:[#allocation2 + $0x880] sm:$0xff]
  %v7285 = vld [vmem:[#allocation2 + $0x888] sm:$0xff]
  %v7286 = vld [vmem:[#allocation2 + $0x890] sm:$0xff]
  %v7287 = vld [vmem:[#allocation2 + $0x898] sm:$0xff]
  %v7288 = vld [vmem:[#allocation2 + $0x8a0] sm:$0xff]
  %v7289 = vld [vmem:[#allocation2 + $0x8a8] sm:$0xff]
  %v7290 = vld [vmem:[#allocation2 + $0x8b0] sm:$0xff]
  %v7291 = vld [vmem:[#allocation2 + $0x8b8] sm:$0xff]
  %v7292 = vld [vmem:[#allocation2 + $0x8c0] sm:$0xff]
  %v7293 = vld [vmem:[#allocation2 + $0x8c8] sm:$0xff]
  %v7294 = vld [vmem:[#allocation2 + $0x8d0] sm:$0xff]
  %v7295 = vld [vmem:[#allocation2 + $0x8d8] sm:$0xff]
  %v7296 = vld [vmem:[#allocation2 + $0x8e0] sm:$0xff]
  %v7297 = vld [vmem:[#allocation2 + $0x8e8] sm:$0xff]
  %v7298 = vld [vmem:[#allocation2 + $0x8f0] sm:$0xff]
  %v7299 = vld [vmem:[#allocation2 + $0x8f8] sm:$0xff]
  %v7300 = vld [vmem:[#allocation2 + $0x900] sm:$0xff]
  %v7301 = vld [vmem:[#allocation2 + $0x908] sm:$0xff]
  %v7302 = vld [vmem:[#allocation2 + $0x910] sm:$0xff]
  %v7303 = vld [vmem:[#allocation2 + $0x918] sm:$0xff]
  %v7304 = vld [vmem:[#allocation2 + $0x920] sm:$0xff]
  %v7305 = vld [vmem:[#allocation2 + $0x928] sm:$0xff]
  %v7306 = vld [vmem:[#allocation2 + $0x930] sm:$0xff]
  %v7307 = vld [vmem:[#allocation2 + $0x938] sm:$0xff]
  %v7308 = vld [vmem:[#allocation2 + $0x940] sm:$0xff]
  %v7309 = vld [vmem:[#allocation2 + $0x948] sm:$0xff]
  %v7310 = vld [vmem:[#allocation2 + $0x950] sm:$0xff]
  %v7311 = vld [vmem:[#allocation2 + $0x958] sm:$0xff]
  %v7312 = vld [vmem:[#allocation2 + $0x960] sm:$0xff]
  %v7313 = vld [vmem:[#allocation2 + $0x968] sm:$0xff]
  %v7314 = vld [vmem:[#allocation2 + $0x970] sm:$0xff]
  %v7315 = vld [vmem:[#allocation2 + $0x978] sm:$0xff]
  %v7316 = vld [vmem:[#allocation2 + $0x980] sm:$0xff]
  %v7317 = vld [vmem:[#allocation2 + $0x988] sm:$0xff]
  %v7318 = vld [vmem:[#allocation2 + $0x990] sm:$0xff]
  %v7319 = vld [vmem:[#allocation2 + $0x998] sm:$0xff]
  %v7320 = vld [vmem:[#allocation2 + $0x9a0] sm:$0xff]
  %v7321 = vld [vmem:[#allocation2 + $0x9a8] sm:$0xff]
  %v7322 = vld [vmem:[#allocation2 + $0x9b0] sm:$0xff]
  %v7323 = vld [vmem:[#allocation2 + $0x9b8] sm:$0xff]
  %v7324 = vld [vmem:[#allocation2 + $0x9c0] sm:$0xff]
  %v7325 = vld [vmem:[#allocation2 + $0x9c8] sm:$0xff]
  %v7326 = vld [vmem:[#allocation2 + $0x9d0] sm:$0xff]
  %v7327 = vld [vmem:[#allocation2 + $0x9d8] sm:$0xff]
  %v7328 = vld [vmem:[#allocation2 + $0x9e0] sm:$0xff]
  %v7329 = vld [vmem:[#allocation2 + $0x9e8] sm:$0xff]
  %v7330 = vld [vmem:[#allocation2 + $0x9f0] sm:$0xff]
  %v7331 = vld [vmem:[#allocation2 + $0x9f8] sm:$0xff]
  %v7332 = vpack.c.bf16 %v7017, %v7012
  %v7333 = vpack.c.bf16 %v7018, %v7013
  %v7334 = vpack.c.bf16 %v7019, %v7014
  %v7335 = vpack.c.bf16 %v7020, %v7015
  %v7336 = vpack.c.bf16 %v7021, %v7016
  %v7337 = vpack.c.bf16 %v7027, %v7022
  %v7338 = vpack.c.bf16 %v7028, %v7023
  %v7339 = vpack.c.bf16 %v7029, %v7024
  %v7340 = vpack.c.bf16 %v7030, %v7025
  %v7341 = vpack.c.bf16 %v7031, %v7026
  %v7342 = vpack.c.bf16 %v7037, %v7032
  %v7343 = vpack.c.bf16 %v7038, %v7033
  %v7344 = vpack.c.bf16 %v7039, %v7034
  %v7345 = vpack.c.bf16 %v7040, %v7035
  %v7346 = vpack.c.bf16 %v7041, %v7036
  %v7347 = vpack.c.bf16 %v7047, %v7042
  %v7348 = vpack.c.bf16 %v7048, %v7043
  %v7349 = vpack.c.bf16 %v7049, %v7044
  %v7350 = vpack.c.bf16 %v7050, %v7045
  %v7351 = vpack.c.bf16 %v7051, %v7046
  %v7352 = vpack.c.bf16 %v7057, %v7052
  %v7353 = vpack.c.bf16 %v7058, %v7053
  %v7354 = vpack.c.bf16 %v7059, %v7054
  %v7355 = vpack.c.bf16 %v7060, %v7055
  %v7356 = vpack.c.bf16 %v7061, %v7056
  %v7357 = vpack.c.bf16 %v7067, %v7062
  %v7358 = vpack.c.bf16 %v7068, %v7063
  %v7359 = vpack.c.bf16 %v7069, %v7064
  %v7360 = vpack.c.bf16 %v7070, %v7065
  %v7361 = vpack.c.bf16 %v7071, %v7066
  %v7362 = vpack.c.bf16 %v7077, %v7072
  %v7363 = vpack.c.bf16 %v7078, %v7073
  %v7364 = vpack.c.bf16 %v7079, %v7074
  %v7365 = vpack.c.bf16 %v7080, %v7075
  %v7366 = vpack.c.bf16 %v7081, %v7076
  %v7367 = vpack.c.bf16 %v7087, %v7082
  %v7368 = vpack.c.bf16 %v7088, %v7083
  %v7369 = vpack.c.bf16 %v7089, %v7084
  %v7370 = vpack.c.bf16 %v7090, %v7085
  %v7371 = vpack.c.bf16 %v7091, %v7086
  %v7372 = vpack.c.bf16 %v7097, %v7092
  %v7373 = vpack.c.bf16 %v7098, %v7093
  %v7374 = vpack.c.bf16 %v7099, %v7094
  %v7375 = vpack.c.bf16 %v7100, %v7095
  %v7376 = vpack.c.bf16 %v7101, %v7096
  %v7377 = vpack.c.bf16 %v7107, %v7102
  %v7378 = vpack.c.bf16 %v7108, %v7103
  %v7379 = vpack.c.bf16 %v7109, %v7104
  %v7380 = vpack.c.bf16 %v7110, %v7105
  %v7381 = vpack.c.bf16 %v7111, %v7106
  %v7382 = vpack.c.bf16 %v7117, %v7112
  %v7383 = vpack.c.bf16 %v7118, %v7113
  %v7384 = vpack.c.bf16 %v7119, %v7114
  %v7385 = vpack.c.bf16 %v7120, %v7115
  %v7386 = vpack.c.bf16 %v7121, %v7116
  %v7387 = vpack.c.bf16 %v7127, %v7122
  %v7388 = vpack.c.bf16 %v7128, %v7123
  %v7389 = vpack.c.bf16 %v7129, %v7124
  %v7390 = vpack.c.bf16 %v7130, %v7125
  %v7391 = vpack.c.bf16 %v7131, %v7126
  %v7392 = vpack.c.bf16 %v7137, %v7132
  %v7393 = vpack.c.bf16 %v7138, %v7133
  %v7394 = vpack.c.bf16 %v7139, %v7134
  %v7395 = vpack.c.bf16 %v7140, %v7135
  %v7396 = vpack.c.bf16 %v7141, %v7136
  %v7397 = vpack.c.bf16 %v7147, %v7142
  %v7398 = vpack.c.bf16 %v7148, %v7143
  %v7399 = vpack.c.bf16 %v7149, %v7144
  %v7400 = vpack.c.bf16 %v7150, %v7145
  %v7401 = vpack.c.bf16 %v7151, %v7146
  %v7402 = vpack.c.bf16 %v7157, %v7152
  %v7403 = vpack.c.bf16 %v7158, %v7153
  %v7404 = vpack.c.bf16 %v7159, %v7154
  %v7405 = vpack.c.bf16 %v7160, %v7155
  %v7406 = vpack.c.bf16 %v7161, %v7156
  %v7407 = vpack.c.bf16 %v7167, %v7162
  %v7408 = vpack.c.bf16 %v7168, %v7163
  %v7409 = vpack.c.bf16 %v7169, %v7164
  %v7410 = vpack.c.bf16 %v7170, %v7165
  %v7411 = vpack.c.bf16 %v7171, %v7166
  %v7412 = vpack.c.bf16 %v7177, %v7172
  %v7413 = vpack.c.bf16 %v7178, %v7173
  %v7414 = vpack.c.bf16 %v7179, %v7174
  %v7415 = vpack.c.bf16 %v7180, %v7175
  %v7416 = vpack.c.bf16 %v7181, %v7176
  %v7417 = vpack.c.bf16 %v7187, %v7182
  %v7418 = vpack.c.bf16 %v7188, %v7183
  %v7419 = vpack.c.bf16 %v7189, %v7184
  %v7420 = vpack.c.bf16 %v7190, %v7185
  %v7421 = vpack.c.bf16 %v7191, %v7186
  %v7422 = vpack.c.bf16 %v7197, %v7192
  %v7423 = vpack.c.bf16 %v7198, %v7193
  %v7424 = vpack.c.bf16 %v7199, %v7194
  %v7425 = vpack.c.bf16 %v7200, %v7195
  %v7426 = vpack.c.bf16 %v7201, %v7196
  %v7427 = vpack.c.bf16 %v7207, %v7202
  %v7428 = vpack.c.bf16 %v7208, %v7203
  %v7429 = vpack.c.bf16 %v7209, %v7204
  %v7430 = vpack.c.bf16 %v7210, %v7205
  %v7431 = vpack.c.bf16 %v7211, %v7206
  %v7432 = vpack.c.bf16 %v7217, %v7212
  %v7433 = vpack.c.bf16 %v7218, %v7213
  %v7434 = vpack.c.bf16 %v7219, %v7214
  %v7435 = vpack.c.bf16 %v7220, %v7215
  %v7436 = vpack.c.bf16 %v7221, %v7216
  %v7437 = vpack.c.bf16 %v7227, %v7222
  %v7438 = vpack.c.bf16 %v7228, %v7223
  %v7439 = vpack.c.bf16 %v7229, %v7224
  %v7440 = vpack.c.bf16 %v7230, %v7225
  %v7441 = vpack.c.bf16 %v7231, %v7226
  %v7442 = vpack.c.bf16 %v7237, %v7232
  %v7443 = vpack.c.bf16 %v7238, %v7233
  %v7444 = vpack.c.bf16 %v7239, %v7234
  %v7445 = vpack.c.bf16 %v7240, %v7235
  %v7446 = vpack.c.bf16 %v7241, %v7236
  %v7447 = vpack.c.bf16 %v7247, %v7242
  %v7448 = vpack.c.bf16 %v7248, %v7243
  %v7449 = vpack.c.bf16 %v7249, %v7244
  %v7450 = vpack.c.bf16 %v7250, %v7245
  %v7451 = vpack.c.bf16 %v7251, %v7246
  %v7452 = vpack.c.bf16 %v7257, %v7252
  %v7453 = vpack.c.bf16 %v7258, %v7253
  %v7454 = vpack.c.bf16 %v7259, %v7254
  %v7455 = vpack.c.bf16 %v7260, %v7255
  %v7456 = vpack.c.bf16 %v7261, %v7256
  %v7457 = vpack.c.bf16 %v7267, %v7262
  %v7458 = vpack.c.bf16 %v7268, %v7263
  %v7459 = vpack.c.bf16 %v7269, %v7264
  %v7460 = vpack.c.bf16 %v7270, %v7265
  %v7461 = vpack.c.bf16 %v7271, %v7266
  %v7462 = vpack.c.bf16 %v7277, %v7272
  %v7463 = vpack.c.bf16 %v7278, %v7273
  %v7464 = vpack.c.bf16 %v7279, %v7274
  %v7465 = vpack.c.bf16 %v7280, %v7275
  %v7466 = vpack.c.bf16 %v7281, %v7276
  %v7467 = vpack.c.bf16 %v7287, %v7282
  %v7468 = vpack.c.bf16 %v7288, %v7283
  %v7469 = vpack.c.bf16 %v7289, %v7284
  %v7470 = vpack.c.bf16 %v7290, %v7285
  %v7471 = vpack.c.bf16 %v7291, %v7286
  %v7472 = vpack.c.bf16 %v7297, %v7292
  %v7473 = vpack.c.bf16 %v7298, %v7293
  %v7474 = vpack.c.bf16 %v7299, %v7294
  %v7475 = vpack.c.bf16 %v7300, %v7295
  %v7476 = vpack.c.bf16 %v7301, %v7296
  %v7477 = vpack.c.bf16 %v7307, %v7302
  %v7478 = vpack.c.bf16 %v7308, %v7303
  %v7479 = vpack.c.bf16 %v7309, %v7304
  %v7480 = vpack.c.bf16 %v7310, %v7305
  %v7481 = vpack.c.bf16 %v7311, %v7306
  %v7482 = vpack.c.bf16 %v7317, %v7312
  %v7483 = vpack.c.bf16 %v7318, %v7313
  %v7484 = vpack.c.bf16 %v7319, %v7314
  %v7485 = vpack.c.bf16 %v7320, %v7315
  %v7486 = vpack.c.bf16 %v7321, %v7316
  %v7487 = vpack.c.bf16 %v7327, %v7322
  %v7488 = vpack.c.bf16 %v7328, %v7323
  %v7489 = vpack.c.bf16 %v7329, %v7324
  %v7490 = vpack.c.bf16 %v7330, %v7325
  %v7491 = vpack.c.bf16 %v7331, %v7326
  %v7492 = vld [vmem:[%s3] sm:$0xf]
  %v7493 = vld [vmem:[%s3 + $0x4] sm:$0xf]
  %v7494 = vld [vmem:[%s3 + $0x8] sm:$0xf]
  %v7495 = vld [vmem:[%s3 + $0xc] sm:$0xf]
  %v7496 = vld [vmem:[%s3 + $0x10] sm:$0xf]
  %v7497 = vld [vmem:[%s3 + $0x14] sm:$0xf]
  %v7498 = vld [vmem:[%s3 + $0x18] sm:$0xf]
  %v7499 = vld [vmem:[%s3 + $0x1c] sm:$0xf]
  %v7500 = vld [vmem:[%s3 + $0x20] sm:$0xf]
  %v7501 = vld [vmem:[%s3 + $0x24] sm:$0xf]
  %v7502 = vld [vmem:[%s3 + $0x28] sm:$0xf]
  %v7503 = vld [vmem:[%s3 + $0x2c] sm:$0xf]
  %v7504 = vld [vmem:[%s3 + $0x30] sm:$0xf]
  %v7505 = vld [vmem:[%s3 + $0x34] sm:$0xf]
  %v7506 = vld [vmem:[%s3 + $0x38] sm:$0xf]
  %v7507 = vld [vmem:[%s3 + $0x3c] sm:$0xf]
  %v7508 = vld [vmem:[%s3 + $0x40] sm:$0xf]
  %v7509 = vld [vmem:[%s3 + $0x44] sm:$0xf]
  %v7510 = vld [vmem:[%s3 + $0x48] sm:$0xf]
  %v7511 = vld [vmem:[%s3 + $0x4c] sm:$0xf]
  %v7512 = vld [vmem:[%s3 + $0x50] sm:$0xf]
  %v7513 = vld [vmem:[%s3 + $0x54] sm:$0xf]
  %v7514 = vld [vmem:[%s3 + $0x58] sm:$0xf]
  %v7515 = vld [vmem:[%s3 + $0x5c] sm:$0xf]
  %v7516 = vld [vmem:[%s3 + $0x60] sm:$0xf]
  %v7517 = vld [vmem:[%s3 + $0x64] sm:$0xf]
  %v7518 = vld [vmem:[%s3 + $0x68] sm:$0xf]
  %v7519 = vld [vmem:[%s3 + $0x6c] sm:$0xf]
  %v7520 = vld [vmem:[%s3 + $0x70] sm:$0xf]
  %v7521 = vld [vmem:[%s3 + $0x74] sm:$0xf]
  %v7522 = vld [vmem:[%s3 + $0x78] sm:$0xf]
  %v7523 = vld [vmem:[%s3 + $0x7c] sm:$0xf]
  %v7524 = vld [vmem:[%s3 + $0x80] sm:$0xf]
  %v7525 = vld [vmem:[%s3 + $0x84] sm:$0xf]
  %v7526 = vld [vmem:[%s3 + $0x88] sm:$0xf]
  %v7527 = vld [vmem:[%s3 + $0x8c] sm:$0xf]
  %v7528 = vld [vmem:[%s3 + $0x90] sm:$0xf]
  %v7529 = vld [vmem:[%s3 + $0x94] sm:$0xf]
  %v7530 = vld [vmem:[%s3 + $0x98] sm:$0xf]
  %v7531 = vld [vmem:[%s3 + $0x9c] sm:$0xf]
  %v7532 = vld [vmem:[%s3 + $0xa0] sm:$0xf]
  %v7533 = vld [vmem:[%s3 + $0xa4] sm:$0xf]
  %v7534 = vld [vmem:[%s3 + $0xa8] sm:$0xf]
  %v7535 = vld [vmem:[%s3 + $0xac] sm:$0xf]
  %v7536 = vld [vmem:[%s3 + $0xb0] sm:$0xf]
  %v7537 = vld [vmem:[%s3 + $0xb4] sm:$0xf]
  %v7538 = vld [vmem:[%s3 + $0xb8] sm:$0xf]
  %v7539 = vld [vmem:[%s3 + $0xbc] sm:$0xf]
  %v7540 = vld [vmem:[%s3 + $0xc0] sm:$0xf]
  %v7541 = vld [vmem:[%s3 + $0xc4] sm:$0xf]
  %v7542 = vld [vmem:[%s3 + $0xc8] sm:$0xf]
  %v7543 = vld [vmem:[%s3 + $0xcc] sm:$0xf]
  %v7544 = vld [vmem:[%s3 + $0xd0] sm:$0xf]
  %v7545 = vld [vmem:[%s3 + $0xd4] sm:$0xf]
  %v7546 = vld [vmem:[%s3 + $0xd8] sm:$0xf]
  %v7547 = vld [vmem:[%s3 + $0xdc] sm:$0xf]
  %v7548 = vld [vmem:[%s3 + $0xe0] sm:$0xf]
  %v7549 = vld [vmem:[%s3 + $0xe4] sm:$0xf]
  %v7550 = vld [vmem:[%s3 + $0xe8] sm:$0xf]
  %v7551 = vld [vmem:[%s3 + $0xec] sm:$0xf]
  %v7552 = vld [vmem:[%s3 + $0xf0] sm:$0xf]
  %v7553 = vld [vmem:[%s3 + $0xf4] sm:$0xf]
  %v7554 = vld [vmem:[%s3 + $0xf8] sm:$0xf]
  %v7555 = vld [vmem:[%s3 + $0xfc] sm:$0xf]
  %v7556 = vld [vmem:[%s3 + $0x100] sm:$0xf]
  %v7557 = vld [vmem:[%s3 + $0x104] sm:$0xf]
  %v7558 = vld [vmem:[%s3 + $0x108] sm:$0xf]
  %v7559 = vld [vmem:[%s3 + $0x10c] sm:$0xf]
  %v7560 = vld [vmem:[%s3 + $0x110] sm:$0xf]
  %v7561 = vld [vmem:[%s3 + $0x114] sm:$0xf]
  %v7562 = vld [vmem:[%s3 + $0x118] sm:$0xf]
  %v7563 = vld [vmem:[%s3 + $0x11c] sm:$0xf]
  %v7636 = vunpack.c.l.b16 %v7492
  %v7637 = vunpack.c.l.b16 %v7493
  %v7638 = vunpack.c.l.b16 %v7494
  %v7639 = vunpack.c.l.b16 %v7495
  %v7640 = vunpack.c.l.b16 %v7496
  %v7641 = vunpack.c.l.b16 %v7497
  %v7642 = vunpack.c.l.b16 %v7498
  %v7643 = vunpack.c.l.b16 %v7499
  %v7644 = vunpack.c.l.b16 %v7500
  %v7645 = vunpack.c.l.b16 %v7501
  %v7646 = vunpack.c.l.b16 %v7502
  %v7647 = vunpack.c.l.b16 %v7503
  %v7648 = vunpack.c.l.b16 %v7504
  %v7649 = vunpack.c.l.b16 %v7505
  %v7650 = vunpack.c.l.b16 %v7506
  %v7651 = vunpack.c.l.b16 %v7507
  %v7652 = vunpack.c.l.b16 %v7508
  %v7653 = vunpack.c.l.b16 %v7509
  %v7654 = vunpack.c.l.b16 %v7510
  %v7655 = vunpack.c.l.b16 %v7511
  %v7656 = vunpack.c.l.b16 %v7512
  %v7657 = vunpack.c.l.b16 %v7513
  %v7658 = vunpack.c.l.b16 %v7514
  %v7659 = vunpack.c.l.b16 %v7515
  %v7660 = vunpack.c.l.b16 %v7516
  %v7661 = vunpack.c.l.b16 %v7517
  %v7662 = vunpack.c.l.b16 %v7518
  %v7663 = vunpack.c.l.b16 %v7519
  %v7664 = vunpack.c.l.b16 %v7520
  %v7665 = vunpack.c.l.b16 %v7521
  %v7666 = vunpack.c.l.b16 %v7522
  %v7667 = vunpack.c.l.b16 %v7523
  %v7668 = vunpack.c.l.b16 %v7524
  %v7669 = vunpack.c.l.b16 %v7525
  %v7670 = vunpack.c.l.b16 %v7526
  %v7671 = vunpack.c.l.b16 %v7527
  %v7672 = vunpack.c.l.b16 %v7528
  %v7673 = vunpack.c.l.b16 %v7529
  %v7674 = vunpack.c.l.b16 %v7530
  %v7675 = vunpack.c.l.b16 %v7531
  %v7676 = vunpack.c.l.b16 %v7532
  %v7677 = vunpack.c.l.b16 %v7533
  %v7678 = vunpack.c.l.b16 %v7534
  %v7679 = vunpack.c.l.b16 %v7535
  %v7680 = vunpack.c.l.b16 %v7536
  %v7681 = vunpack.c.l.b16 %v7537
  %v7682 = vunpack.c.l.b16 %v7538
  %v7683 = vunpack.c.l.b16 %v7539
  %v7684 = vunpack.c.l.b16 %v7540
  %v7685 = vunpack.c.l.b16 %v7541
  %v7686 = vunpack.c.l.b16 %v7542
  %v7687 = vunpack.c.l.b16 %v7543
  %v7688 = vunpack.c.l.b16 %v7544
  %v7689 = vunpack.c.l.b16 %v7545
  %v7690 = vunpack.c.l.b16 %v7546
  %v7691 = vunpack.c.l.b16 %v7547
  %v7692 = vunpack.c.l.b16 %v7548
  %v7693 = vunpack.c.l.b16 %v7549
  %v7694 = vunpack.c.l.b16 %v7550
  %v7695 = vunpack.c.l.b16 %v7551
  %v7696 = vunpack.c.l.b16 %v7552
  %v7697 = vunpack.c.l.b16 %v7553
  %v7698 = vunpack.c.l.b16 %v7554
  %v7699 = vunpack.c.l.b16 %v7555
  %v7700 = vunpack.c.l.b16 %v7556
  %v7701 = vunpack.c.l.b16 %v7557
  %v7702 = vunpack.c.l.b16 %v7558
  %v7703 = vunpack.c.l.b16 %v7559
  %v7704 = vunpack.c.l.b16 %v7560
  %v7705 = vunpack.c.l.b16 %v7561
  %v7706 = vunpack.c.l.b16 %v7562
  %v7707 = vunpack.c.l.b16 %v7563
  %v7708 = vpack.c.b16 %v7637, %v7636
  %v7709 = vpack.c.b16 %v7639, %v7638
  %v7710 = vpack.c.b16 %v7641, %v7640
  %v7711 = vpack.c.b16 %v7643, %v7642
  %v7712 = vpack.c.b16 %v7645, %v7644
  %v7713 = vpack.c.b16 %v7647, %v7646
  %v7714 = vpack.c.b16 %v7649, %v7648
  %v7715 = vpack.c.b16 %v7651, %v7650
  %v7716 = vpack.c.b16 %v7653, %v7652
  %v7717 = vpack.c.b16 %v7655, %v7654
  %v7718 = vpack.c.b16 %v7657, %v7656
  %v7719 = vpack.c.b16 %v7659, %v7658
  %v7720 = vpack.c.b16 %v7661, %v7660
  %v7721 = vpack.c.b16 %v7663, %v7662
  %v7722 = vpack.c.b16 %v7665, %v7664
  %v7723 = vpack.c.b16 %v7667, %v7666
  %v7724 = vpack.c.b16 %v7669, %v7668
  %v7725 = vpack.c.b16 %v7671, %v7670
  %v7726 = vpack.c.b16 %v7673, %v7672
  %v7727 = vpack.c.b16 %v7675, %v7674
  %v7728 = vpack.c.b16 %v7677, %v7676
  %v7729 = vpack.c.b16 %v7679, %v7678
  %v7730 = vpack.c.b16 %v7681, %v7680
  %v7731 = vpack.c.b16 %v7683, %v7682
  %v7732 = vpack.c.b16 %v7685, %v7684
  %v7733 = vpack.c.b16 %v7687, %v7686
  %v7734 = vpack.c.b16 %v7689, %v7688
  %v7735 = vpack.c.b16 %v7691, %v7690
  %v7736 = vpack.c.b16 %v7693, %v7692
  %v7737 = vpack.c.b16 %v7695, %v7694
  %v7738 = vpack.c.b16 %v7697, %v7696
  %v7739 = vpack.c.b16 %v7699, %v7698
  %v7740 = vpack.c.b16 %v7701, %v7700
  %v7741 = vpack.c.b16 %v7703, %v7702
  %v7742 = vpack.c.b16 %v7705, %v7704
  %v7743 = vpack.c.b16 %v7707, %v7706
  %v7781 = vsel %vm97, %v7336, 0
  %v7784 = vsel %vm97, %v7341, 0
  %v7787 = vsel %vm97, %v7346, 0
  %v7790 = vsel %vm97, %v7351, 0
  %v7793 = vsel %vm97, %v7356, 0
  %v7796 = vsel %vm97, %v7361, 0
  %v7799 = vsel %vm97, %v7366, 0
  %v7802 = vsel %vm97, %v7371, 0
  %v7805 = vsel %vm97, %v7376, 0
  %v7808 = vsel %vm97, %v7381, 0
  %v7811 = vsel %vm97, %v7386, 0
  %v7814 = vsel %vm97, %v7391, 0
  %v7817 = vsel %vm97, %v7396, 0
  %v7820 = vsel %vm97, %v7401, 0
  %v7823 = vsel %vm97, %v7406, 0
  %v7826 = vsel %vm97, %v7411, 0
  %v7829 = vsel %vm97, %v7416, 0
  %v7832 = vsel %vm97, %v7421, 0
  %v7835 = vsel %vm97, %v7426, 0
  %v7838 = vsel %vm97, %v7431, 0
  %v7841 = vsel %vm97, %v7436, 0
  %v7844 = vsel %vm97, %v7441, 0
  %v7847 = vsel %vm97, %v7446, 0
  %v7850 = vsel %vm97, %v7451, 0
  %v7853 = vsel %vm97, %v7456, 0
  %v7856 = vsel %vm97, %v7461, 0
  %v7859 = vsel %vm97, %v7466, 0
  %v7862 = vsel %vm97, %v7471, 0
  %v7865 = vsel %vm97, %v7476, 0
  %v7868 = vsel %vm97, %v7481, 0
  %v7871 = vsel %vm97, %v7486, 0
  %v7874 = vsel %vm97, %v7491, 0
  %7876 = vmatpush.bf16.msra.mxu0 %v7715
  %7877 = vmatpush.bf16.msra.mxu0 %v7714
  %7878 = vmatpush.bf16.msra.mxu0 %v7713
  %7879 = vmatpush.bf16.msra.mxu0 %v7712
  %7880 = vmatpush.bf16.msra.mxu0 %v7711
  %7881 = vmatpush.bf16.msra.mxu0 %v7710
  %7882 = vmatpush.bf16.msra.mxu0 %v7709
  %7883 = vmatpush.bf16.msra.mxu0 %v7708
  %7884 = vmatmul.bf16.gmra.mxu0 %v7332
  %v7885 = vpop.f32.mrf.mxu0
  %v7886 = vadd.f32 0.0, %v7885
  %v7887 = vpop.f32.mrf.mxu0
  %v7888 = vadd.f32 0.0, %v7887
  %7889 = vmatmul.bf16.gmra.mxu0 %v7337
  %v7890 = vpop.f32.mrf.mxu0
  %v7891 = vadd.f32 0.0, %v7890
  %v7892 = vpop.f32.mrf.mxu0
  %v7893 = vadd.f32 0.0, %v7892
  %7894 = vmatmul.bf16.gmra.mxu0 %v7342
  %v7895 = vpop.f32.mrf.mxu0
  %v7896 = vadd.f32 0.0, %v7895
  %v7897 = vpop.f32.mrf.mxu0
  %v7898 = vadd.f32 0.0, %v7897
  %7899 = vmatmul.bf16.gmra.mxu0 %v7347
  %v7900 = vpop.f32.mrf.mxu0
  %v7901 = vadd.f32 0.0, %v7900
  %v7902 = vpop.f32.mrf.mxu0
  %v7903 = vadd.f32 0.0, %v7902
  %7904 = vmatmul.bf16.gmra.mxu0 %v7352
  %v7905 = vpop.f32.mrf.mxu0
  %v7906 = vadd.f32 0.0, %v7905
  %v7907 = vpop.f32.mrf.mxu0
  %v7908 = vadd.f32 0.0, %v7907
  %7909 = vmatmul.bf16.gmra.mxu0 %v7357
  %v7910 = vpop.f32.mrf.mxu0
  %v7911 = vadd.f32 0.0, %v7910
  %v7912 = vpop.f32.mrf.mxu0
  %v7913 = vadd.f32 0.0, %v7912
  %7914 = vmatmul.bf16.gmra.mxu0 %v7362
  %v7915 = vpop.f32.mrf.mxu0
  %v7916 = vadd.f32 0.0, %v7915
  %v7917 = vpop.f32.mrf.mxu0
  %v7918 = vadd.f32 0.0, %v7917
  %7919 = vmatmul.bf16.gmra.mxu0 %v7367
  %v7920 = vpop.f32.mrf.mxu0
  %v7921 = vadd.f32 0.0, %v7920
  %v7922 = vpop.f32.mrf.mxu0
  %v7923 = vadd.f32 0.0, %v7922
  %7924 = vmatmul.bf16.gmra.mxu0 %v7372
  %v7925 = vpop.f32.mrf.mxu0
  %v7926 = vadd.f32 0.0, %v7925
  %v7927 = vpop.f32.mrf.mxu0
  %v7928 = vadd.f32 0.0, %v7927
  %7929 = vmatmul.bf16.gmra.mxu0 %v7377
  %v7930 = vpop.f32.mrf.mxu0
  %v7931 = vadd.f32 0.0, %v7930
  %v7932 = vpop.f32.mrf.mxu0
  %v7933 = vadd.f32 0.0, %v7932
  %7934 = vmatmul.bf16.gmra.mxu0 %v7382
  %v7935 = vpop.f32.mrf.mxu0
  %v7936 = vadd.f32 0.0, %v7935
  %v7937 = vpop.f32.mrf.mxu0
  %v7938 = vadd.f32 0.0, %v7937
  %7939 = vmatmul.bf16.gmra.mxu0 %v7387
  %v7940 = vpop.f32.mrf.mxu0
  %v7941 = vadd.f32 0.0, %v7940
  %v7942 = vpop.f32.mrf.mxu0
  %v7943 = vadd.f32 0.0, %v7942
  %7944 = vmatmul.bf16.gmra.mxu0 %v7392
  %v7945 = vpop.f32.mrf.mxu0
  %v7946 = vadd.f32 0.0, %v7945
  %v7947 = vpop.f32.mrf.mxu0
  %v7948 = vadd.f32 0.0, %v7947
  %7949 = vmatmul.bf16.gmra.mxu0 %v7397
  %v7950 = vpop.f32.mrf.mxu0
  %v7951 = vadd.f32 0.0, %v7950
  %v7952 = vpop.f32.mrf.mxu0
  %v7953 = vadd.f32 0.0, %v7952
  %7954 = vmatmul.bf16.gmra.mxu0 %v7402
  %v7955 = vpop.f32.mrf.mxu0
  %v7956 = vadd.f32 0.0, %v7955
  %v7957 = vpop.f32.mrf.mxu0
  %v7958 = vadd.f32 0.0, %v7957
  %7959 = vmatmul.bf16.gmra.mxu0 %v7407
  %v7960 = vpop.f32.mrf.mxu0
  %v7961 = vadd.f32 0.0, %v7960
  %v7962 = vpop.f32.mrf.mxu0
  %v7963 = vadd.f32 0.0, %v7962
  %7964 = vmatmul.bf16.gmra.mxu0 %v7412
  %v7965 = vpop.f32.mrf.mxu0
  %v7966 = vadd.f32 0.0, %v7965
  %v7967 = vpop.f32.mrf.mxu0
  %v7968 = vadd.f32 0.0, %v7967
  %7969 = vmatmul.bf16.gmra.mxu0 %v7417
  %v7970 = vpop.f32.mrf.mxu0
  %v7971 = vadd.f32 0.0, %v7970
  %v7972 = vpop.f32.mrf.mxu0
  %v7973 = vadd.f32 0.0, %v7972
  %7974 = vmatmul.bf16.gmra.mxu0 %v7422
  %v7975 = vpop.f32.mrf.mxu0
  %v7976 = vadd.f32 0.0, %v7975
  %v7977 = vpop.f32.mrf.mxu0
  %v7978 = vadd.f32 0.0, %v7977
  %7979 = vmatmul.bf16.gmra.mxu0 %v7427
  %v7980 = vpop.f32.mrf.mxu0
  %v7981 = vadd.f32 0.0, %v7980
  %v7982 = vpop.f32.mrf.mxu0
  %v7983 = vadd.f32 0.0, %v7982
  %7984 = vmatmul.bf16.gmra.mxu0 %v7432
  %v7985 = vpop.f32.mrf.mxu0
  %v7986 = vadd.f32 0.0, %v7985
  %v7987 = vpop.f32.mrf.mxu0
  %v7988 = vadd.f32 0.0, %v7987
  %7989 = vmatmul.bf16.gmra.mxu0 %v7437
  %v7990 = vpop.f32.mrf.mxu0
  %v7991 = vadd.f32 0.0, %v7990
  %v7992 = vpop.f32.mrf.mxu0
  %v7993 = vadd.f32 0.0, %v7992
  %7994 = vmatmul.bf16.gmra.mxu0 %v7442
  %v7995 = vpop.f32.mrf.mxu0
  %v7996 = vadd.f32 0.0, %v7995
  %v7997 = vpop.f32.mrf.mxu0
  %v7998 = vadd.f32 0.0, %v7997
  %7999 = vmatmul.bf16.gmra.mxu0 %v7447
  %v8000 = vpop.f32.mrf.mxu0
  %v8001 = vadd.f32 0.0, %v8000
  %v8002 = vpop.f32.mrf.mxu0
  %v8003 = vadd.f32 0.0, %v8002
  %8004 = vmatmul.bf16.gmra.mxu0 %v7452
  %v8005 = vpop.f32.mrf.mxu0
  %v8006 = vadd.f32 0.0, %v8005
  %v8007 = vpop.f32.mrf.mxu0
  %v8008 = vadd.f32 0.0, %v8007
  %8009 = vmatmul.bf16.gmra.mxu0 %v7457
  %v8010 = vpop.f32.mrf.mxu0
  %v8011 = vadd.f32 0.0, %v8010
  %v8012 = vpop.f32.mrf.mxu0
  %v8013 = vadd.f32 0.0, %v8012
  %8014 = vmatmul.bf16.gmra.mxu0 %v7462
  %v8015 = vpop.f32.mrf.mxu0
  %v8016 = vadd.f32 0.0, %v8015
  %v8017 = vpop.f32.mrf.mxu0
  %v8018 = vadd.f32 0.0, %v8017
  %8019 = vmatmul.bf16.gmra.mxu0 %v7467
  %v8020 = vpop.f32.mrf.mxu0
  %v8021 = vadd.f32 0.0, %v8020
  %v8022 = vpop.f32.mrf.mxu0
  %v8023 = vadd.f32 0.0, %v8022
  %8024 = vmatmul.bf16.gmra.mxu0 %v7472
  %v8025 = vpop.f32.mrf.mxu0
  %v8026 = vadd.f32 0.0, %v8025
  %v8027 = vpop.f32.mrf.mxu0
  %v8028 = vadd.f32 0.0, %v8027
  %8029 = vmatmul.bf16.gmra.mxu0 %v7477
  %v8030 = vpop.f32.mrf.mxu0
  %v8031 = vadd.f32 0.0, %v8030
  %v8032 = vpop.f32.mrf.mxu0
  %v8033 = vadd.f32 0.0, %v8032
  %8034 = vmatmul.bf16.gmra.mxu0 %v7482
  %v8035 = vpop.f32.mrf.mxu0
  %v8036 = vadd.f32 0.0, %v8035
  %v8037 = vpop.f32.mrf.mxu0
  %v8038 = vadd.f32 0.0, %v8037
  %8039 = vmatmul.bf16.gmra.mxu0 %v7487
  %v8040 = vpop.f32.mrf.mxu0
  %v8041 = vadd.f32 0.0, %v8040
  %v8042 = vpop.f32.mrf.mxu0
  %v8043 = vadd.f32 0.0, %v8042
  %8044 = vdwg.mxu0
  %8045 = vmatpush.bf16.msra.mxu0 %v7723
  %8046 = vmatpush.bf16.msra.mxu0 %v7722
  %8047 = vmatpush.bf16.msra.mxu0 %v7721
  %8048 = vmatpush.bf16.msra.mxu0 %v7720
  %8049 = vmatpush.bf16.msra.mxu0 %v7719
  %8050 = vmatpush.bf16.msra.mxu0 %v7718
  %8051 = vmatpush.bf16.msra.mxu0 %v7717
  %8052 = vmatpush.bf16.msra.mxu0 %v7716
  %8053 = vmatmul.bf16.gmra.mxu0 %v7333
  %v8054 = vpop.f32.mrf.mxu0
  %v8055 = vadd.f32 %v7886, %v8054
  %v8056 = vpop.f32.mrf.mxu0
  %v8057 = vadd.f32 %v7888, %v8056
  %8058 = vmatmul.bf16.gmra.mxu0 %v7338
  %v8059 = vpop.f32.mrf.mxu0
  %v8060 = vadd.f32 %v7891, %v8059
  %v8061 = vpop.f32.mrf.mxu0
  %v8062 = vadd.f32 %v7893, %v8061
  %8063 = vmatmul.bf16.gmra.mxu0 %v7343
  %v8064 = vpop.f32.mrf.mxu0
  %v8065 = vadd.f32 %v7896, %v8064
  %v8066 = vpop.f32.mrf.mxu0
  %v8067 = vadd.f32 %v7898, %v8066
  %8068 = vmatmul.bf16.gmra.mxu0 %v7348
  %v8069 = vpop.f32.mrf.mxu0
  %v8070 = vadd.f32 %v7901, %v8069
  %v8071 = vpop.f32.mrf.mxu0
  %v8072 = vadd.f32 %v7903, %v8071
  %8073 = vmatmul.bf16.gmra.mxu0 %v7353
  %v8074 = vpop.f32.mrf.mxu0
  %v8075 = vadd.f32 %v7906, %v8074
  %v8076 = vpop.f32.mrf.mxu0
  %v8077 = vadd.f32 %v7908, %v8076
  %8078 = vmatmul.bf16.gmra.mxu0 %v7358
  %v8079 = vpop.f32.mrf.mxu0
  %v8080 = vadd.f32 %v7911, %v8079
  %v8081 = vpop.f32.mrf.mxu0
  %v8082 = vadd.f32 %v7913, %v8081
  %8083 = vmatmul.bf16.gmra.mxu0 %v7363
  %v8084 = vpop.f32.mrf.mxu0
  %v8085 = vadd.f32 %v7916, %v8084
  %v8086 = vpop.f32.mrf.mxu0
  %v8087 = vadd.f32 %v7918, %v8086
  %8088 = vmatmul.bf16.gmra.mxu0 %v7368
  %v8089 = vpop.f32.mrf.mxu0
  %v8090 = vadd.f32 %v7921, %v8089
  %v8091 = vpop.f32.mrf.mxu0
  %v8092 = vadd.f32 %v7923, %v8091
  %8093 = vmatmul.bf16.gmra.mxu0 %v7373
  %v8094 = vpop.f32.mrf.mxu0
  %v8095 = vadd.f32 %v7926, %v8094
  %v8096 = vpop.f32.mrf.mxu0
  %v8097 = vadd.f32 %v7928, %v8096
  %8098 = vmatmul.bf16.gmra.mxu0 %v7378
  %v8099 = vpop.f32.mrf.mxu0
  %v8100 = vadd.f32 %v7931, %v8099
  %v8101 = vpop.f32.mrf.mxu0
  %v8102 = vadd.f32 %v7933, %v8101
  %8103 = vmatmul.bf16.gmra.mxu0 %v7383
  %v8104 = vpop.f32.mrf.mxu0
  %v8105 = vadd.f32 %v7936, %v8104
  %v8106 = vpop.f32.mrf.mxu0
  %v8107 = vadd.f32 %v7938, %v8106
  %8108 = vmatmul.bf16.gmra.mxu0 %v7388
  %v8109 = vpop.f32.mrf.mxu0
  %v8110 = vadd.f32 %v7941, %v8109
  %v8111 = vpop.f32.mrf.mxu0
  %v8112 = vadd.f32 %v7943, %v8111
  %8113 = vmatmul.bf16.gmra.mxu0 %v7393
  %v8114 = vpop.f32.mrf.mxu0
  %v8115 = vadd.f32 %v7946, %v8114
  %v8116 = vpop.f32.mrf.mxu0
  %v8117 = vadd.f32 %v7948, %v8116
  %8118 = vmatmul.bf16.gmra.mxu0 %v7398
  %v8119 = vpop.f32.mrf.mxu0
  %v8120 = vadd.f32 %v7951, %v8119
  %v8121 = vpop.f32.mrf.mxu0
  %v8122 = vadd.f32 %v7953, %v8121
  %8123 = vmatmul.bf16.gmra.mxu0 %v7403
  %v8124 = vpop.f32.mrf.mxu0
  %v8125 = vadd.f32 %v7956, %v8124
  %v8126 = vpop.f32.mrf.mxu0
  %v8127 = vadd.f32 %v7958, %v8126
  %8128 = vmatmul.bf16.gmra.mxu0 %v7408
  %v8129 = vpop.f32.mrf.mxu0
  %v8130 = vadd.f32 %v7961, %v8129
  %v8131 = vpop.f32.mrf.mxu0
  %v8132 = vadd.f32 %v7963, %v8131
  %8133 = vmatmul.bf16.gmra.mxu0 %v7413
  %v8134 = vpop.f32.mrf.mxu0
  %v8135 = vadd.f32 %v7966, %v8134
  %v8136 = vpop.f32.mrf.mxu0
  %v8137 = vadd.f32 %v7968, %v8136
  %8138 = vmatmul.bf16.gmra.mxu0 %v7418
  %v8139 = vpop.f32.mrf.mxu0
  %v8140 = vadd.f32 %v7971, %v8139
  %v8141 = vpop.f32.mrf.mxu0
  %v8142 = vadd.f32 %v7973, %v8141
  %8143 = vmatmul.bf16.gmra.mxu0 %v7423
  %v8144 = vpop.f32.mrf.mxu0
  %v8145 = vadd.f32 %v7976, %v8144
  %v8146 = vpop.f32.mrf.mxu0
  %v8147 = vadd.f32 %v7978, %v8146
  %8148 = vmatmul.bf16.gmra.mxu0 %v7428
  %v8149 = vpop.f32.mrf.mxu0
  %v8150 = vadd.f32 %v7981, %v8149
  %v8151 = vpop.f32.mrf.mxu0
  %v8152 = vadd.f32 %v7983, %v8151
  %8153 = vmatmul.bf16.gmra.mxu0 %v7433
  %v8154 = vpop.f32.mrf.mxu0
  %v8155 = vadd.f32 %v7986, %v8154
  %v8156 = vpop.f32.mrf.mxu0
  %v8157 = vadd.f32 %v7988, %v8156
  %8158 = vmatmul.bf16.gmra.mxu0 %v7438
  %v8159 = vpop.f32.mrf.mxu0
  %v8160 = vadd.f32 %v7991, %v8159
  %v8161 = vpop.f32.mrf.mxu0
  %v8162 = vadd.f32 %v7993, %v8161
  %8163 = vmatmul.bf16.gmra.mxu0 %v7443
  %v8164 = vpop.f32.mrf.mxu0
  %v8165 = vadd.f32 %v7996, %v8164
  %v8166 = vpop.f32.mrf.mxu0
  %v8167 = vadd.f32 %v7998, %v8166
  %8168 = vmatmul.bf16.gmra.mxu0 %v7448
  %v8169 = vpop.f32.mrf.mxu0
  %v8170 = vadd.f32 %v8001, %v8169
  %v8171 = vpop.f32.mrf.mxu0
  %v8172 = vadd.f32 %v8003, %v8171
  %8173 = vmatmul.bf16.gmra.mxu0 %v7453
  %v8174 = vpop.f32.mrf.mxu0
  %v8175 = vadd.f32 %v8006, %v8174
  %v8176 = vpop.f32.mrf.mxu0
  %v8177 = vadd.f32 %v8008, %v8176
  %8178 = vmatmul.bf16.gmra.mxu0 %v7458
  %v8179 = vpop.f32.mrf.mxu0
  %v8180 = vadd.f32 %v8011, %v8179
  %v8181 = vpop.f32.mrf.mxu0
  %v8182 = vadd.f32 %v8013, %v8181
  %8183 = vmatmul.bf16.gmra.mxu0 %v7463
  %v8184 = vpop.f32.mrf.mxu0
  %v8185 = vadd.f32 %v8016, %v8184
  %v8186 = vpop.f32.mrf.mxu0
  %v8187 = vadd.f32 %v8018, %v8186
  %8188 = vmatmul.bf16.gmra.mxu0 %v7468
  %v8189 = vpop.f32.mrf.mxu0
  %v8190 = vadd.f32 %v8021, %v8189
  %v8191 = vpop.f32.mrf.mxu0
  %v8192 = vadd.f32 %v8023, %v8191
  %8193 = vmatmul.bf16.gmra.mxu0 %v7473
  %v8194 = vpop.f32.mrf.mxu0
  %v8195 = vadd.f32 %v8026, %v8194
  %v8196 = vpop.f32.mrf.mxu0
  %v8197 = vadd.f32 %v8028, %v8196
  %8198 = vmatmul.bf16.gmra.mxu0 %v7478
  %v8199 = vpop.f32.mrf.mxu0
  %v8200 = vadd.f32 %v8031, %v8199
  %v8201 = vpop.f32.mrf.mxu0
  %v8202 = vadd.f32 %v8033, %v8201
  %8203 = vmatmul.bf16.gmra.mxu0 %v7483
  %v8204 = vpop.f32.mrf.mxu0
  %v8205 = vadd.f32 %v8036, %v8204
  %v8206 = vpop.f32.mrf.mxu0
  %v8207 = vadd.f32 %v8038, %v8206
  %8208 = vmatmul.bf16.gmra.mxu0 %v7488
  %v8209 = vpop.f32.mrf.mxu0
  %v8210 = vadd.f32 %v8041, %v8209
  %v8211 = vpop.f32.mrf.mxu0
  %v8212 = vadd.f32 %v8043, %v8211
  %8213 = vdwg.mxu0
  %8214 = vmatpush.bf16.msra.mxu0 %v7731
  %8215 = vmatpush.bf16.msra.mxu0 %v7730
  %8216 = vmatpush.bf16.msra.mxu0 %v7729
  %8217 = vmatpush.bf16.msra.mxu0 %v7728
  %8218 = vmatpush.bf16.msra.mxu0 %v7727
  %8219 = vmatpush.bf16.msra.mxu0 %v7726
  %8220 = vmatpush.bf16.msra.mxu0 %v7725
  %8221 = vmatpush.bf16.msra.mxu0 %v7724
  %8222 = vmatmul.bf16.gmra.mxu0 %v7334
  %v8223 = vpop.f32.mrf.mxu0
  %v8224 = vadd.f32 %v8055, %v8223
  %v8225 = vpop.f32.mrf.mxu0
  %v8226 = vadd.f32 %v8057, %v8225
  %8227 = vmatmul.bf16.gmra.mxu0 %v7339
  %v8228 = vpop.f32.mrf.mxu0
  %v8229 = vadd.f32 %v8060, %v8228
  %v8230 = vpop.f32.mrf.mxu0
  %v8231 = vadd.f32 %v8062, %v8230
  %8232 = vmatmul.bf16.gmra.mxu0 %v7344
  %v8233 = vpop.f32.mrf.mxu0
  %v8234 = vadd.f32 %v8065, %v8233
  %v8235 = vpop.f32.mrf.mxu0
  %v8236 = vadd.f32 %v8067, %v8235
  %8237 = vmatmul.bf16.gmra.mxu0 %v7349
  %v8238 = vpop.f32.mrf.mxu0
  %v8239 = vadd.f32 %v8070, %v8238
  %v8240 = vpop.f32.mrf.mxu0
  %v8241 = vadd.f32 %v8072, %v8240
  %8242 = vmatmul.bf16.gmra.mxu0 %v7354
  %v8243 = vpop.f32.mrf.mxu0
  %v8244 = vadd.f32 %v8075, %v8243
  %v8245 = vpop.f32.mrf.mxu0
  %v8246 = vadd.f32 %v8077, %v8245
  %8247 = vmatmul.bf16.gmra.mxu0 %v7359
  %v8248 = vpop.f32.mrf.mxu0
  %v8249 = vadd.f32 %v8080, %v8248
  %v8250 = vpop.f32.mrf.mxu0
  %v8251 = vadd.f32 %v8082, %v8250
  %8252 = vmatmul.bf16.gmra.mxu0 %v7364
  %v8253 = vpop.f32.mrf.mxu0
  %v8254 = vadd.f32 %v8085, %v8253
  %v8255 = vpop.f32.mrf.mxu0
  %v8256 = vadd.f32 %v8087, %v8255
  %8257 = vmatmul.bf16.gmra.mxu0 %v7369
  %v8258 = vpop.f32.mrf.mxu0
  %v8259 = vadd.f32 %v8090, %v8258
  %v8260 = vpop.f32.mrf.mxu0
  %v8261 = vadd.f32 %v8092, %v8260
  %8262 = vmatmul.bf16.gmra.mxu0 %v7374
  %v8263 = vpop.f32.mrf.mxu0
  %v8264 = vadd.f32 %v8095, %v8263
  %v8265 = vpop.f32.mrf.mxu0
  %v8266 = vadd.f32 %v8097, %v8265
  %8267 = vmatmul.bf16.gmra.mxu0 %v7379
  %v8268 = vpop.f32.mrf.mxu0
  %v8269 = vadd.f32 %v8100, %v8268
  %v8270 = vpop.f32.mrf.mxu0
  %v8271 = vadd.f32 %v8102, %v8270
  %8272 = vmatmul.bf16.gmra.mxu0 %v7384
  %v8273 = vpop.f32.mrf.mxu0
  %v8274 = vadd.f32 %v8105, %v8273
  %v8275 = vpop.f32.mrf.mxu0
  %v8276 = vadd.f32 %v8107, %v8275
  %8277 = vmatmul.bf16.gmra.mxu0 %v7389
  %v8278 = vpop.f32.mrf.mxu0
  %v8279 = vadd.f32 %v8110, %v8278
  %v8280 = vpop.f32.mrf.mxu0
  %v8281 = vadd.f32 %v8112, %v8280
  %8282 = vmatmul.bf16.gmra.mxu0 %v7394
  %v8283 = vpop.f32.mrf.mxu0
  %v8284 = vadd.f32 %v8115, %v8283
  %v8285 = vpop.f32.mrf.mxu0
  %v8286 = vadd.f32 %v8117, %v8285
  %8287 = vmatmul.bf16.gmra.mxu0 %v7399
  %v8288 = vpop.f32.mrf.mxu0
  %v8289 = vadd.f32 %v8120, %v8288
  %v8290 = vpop.f32.mrf.mxu0
  %v8291 = vadd.f32 %v8122, %v8290
  %8292 = vmatmul.bf16.gmra.mxu0 %v7404
  %v8293 = vpop.f32.mrf.mxu0
  %v8294 = vadd.f32 %v8125, %v8293
  %v8295 = vpop.f32.mrf.mxu0
  %v8296 = vadd.f32 %v8127, %v8295
  %8297 = vmatmul.bf16.gmra.mxu0 %v7409
  %v8298 = vpop.f32.mrf.mxu0
  %v8299 = vadd.f32 %v8130, %v8298
  %v8300 = vpop.f32.mrf.mxu0
  %v8301 = vadd.f32 %v8132, %v8300
  %8302 = vmatmul.bf16.gmra.mxu0 %v7414
  %v8303 = vpop.f32.mrf.mxu0
  %v8304 = vadd.f32 %v8135, %v8303
  %v8305 = vpop.f32.mrf.mxu0
  %v8306 = vadd.f32 %v8137, %v8305
  %8307 = vmatmul.bf16.gmra.mxu0 %v7419
  %v8308 = vpop.f32.mrf.mxu0
  %v8309 = vadd.f32 %v8140, %v8308
  %v8310 = vpop.f32.mrf.mxu0
  %v8311 = vadd.f32 %v8142, %v8310
  %8312 = vmatmul.bf16.gmra.mxu0 %v7424
  %v8313 = vpop.f32.mrf.mxu0
  %v8314 = vadd.f32 %v8145, %v8313
  %v8315 = vpop.f32.mrf.mxu0
  %v8316 = vadd.f32 %v8147, %v8315
  %8317 = vmatmul.bf16.gmra.mxu0 %v7429
  %v8318 = vpop.f32.mrf.mxu0
  %v8319 = vadd.f32 %v8150, %v8318
  %v8320 = vpop.f32.mrf.mxu0
  %v8321 = vadd.f32 %v8152, %v8320
  %8322 = vmatmul.bf16.gmra.mxu0 %v7434
  %v8323 = vpop.f32.mrf.mxu0
  %v8324 = vadd.f32 %v8155, %v8323
  %v8325 = vpop.f32.mrf.mxu0
  %v8326 = vadd.f32 %v8157, %v8325
  %8327 = vmatmul.bf16.gmra.mxu0 %v7439
  %v8328 = vpop.f32.mrf.mxu0
  %v8329 = vadd.f32 %v8160, %v8328
  %v8330 = vpop.f32.mrf.mxu0
  %v8331 = vadd.f32 %v8162, %v8330
  %8332 = vmatmul.bf16.gmra.mxu0 %v7444
  %v8333 = vpop.f32.mrf.mxu0
  %v8334 = vadd.f32 %v8165, %v8333
  %v8335 = vpop.f32.mrf.mxu0
  %v8336 = vadd.f32 %v8167, %v8335
  %8337 = vmatmul.bf16.gmra.mxu0 %v7449
  %v8338 = vpop.f32.mrf.mxu0
  %v8339 = vadd.f32 %v8170, %v8338
  %v8340 = vpop.f32.mrf.mxu0
  %v8341 = vadd.f32 %v8172, %v8340
  %8342 = vmatmul.bf16.gmra.mxu0 %v7454
  %v8343 = vpop.f32.mrf.mxu0
  %v8344 = vadd.f32 %v8175, %v8343
  %v8345 = vpop.f32.mrf.mxu0
  %v8346 = vadd.f32 %v8177, %v8345
  %8347 = vmatmul.bf16.gmra.mxu0 %v7459
  %v8348 = vpop.f32.mrf.mxu0
  %v8349 = vadd.f32 %v8180, %v8348
  %v8350 = vpop.f32.mrf.mxu0
  %v8351 = vadd.f32 %v8182, %v8350
  %8352 = vmatmul.bf16.gmra.mxu0 %v7464
  %v8353 = vpop.f32.mrf.mxu0
  %v8354 = vadd.f32 %v8185, %v8353
  %v8355 = vpop.f32.mrf.mxu0
  %v8356 = vadd.f32 %v8187, %v8355
  %8357 = vmatmul.bf16.gmra.mxu0 %v7469
  %v8358 = vpop.f32.mrf.mxu0
  %v8359 = vadd.f32 %v8190, %v8358
  %v8360 = vpop.f32.mrf.mxu0
  %v8361 = vadd.f32 %v8192, %v8360
  %8362 = vmatmul.bf16.gmra.mxu0 %v7474
  %v8363 = vpop.f32.mrf.mxu0
  %v8364 = vadd.f32 %v8195, %v8363
  %v8365 = vpop.f32.mrf.mxu0
  %v8366 = vadd.f32 %v8197, %v8365
  %8367 = vmatmul.bf16.gmra.mxu0 %v7479
  %v8368 = vpop.f32.mrf.mxu0
  %v8369 = vadd.f32 %v8200, %v8368
  %v8370 = vpop.f32.mrf.mxu0
  %v8371 = vadd.f32 %v8202, %v8370
  %8372 = vmatmul.bf16.gmra.mxu0 %v7484
  %v8373 = vpop.f32.mrf.mxu0
  %v8374 = vadd.f32 %v8205, %v8373
  %v8375 = vpop.f32.mrf.mxu0
  %v8376 = vadd.f32 %v8207, %v8375
  %8377 = vmatmul.bf16.gmra.mxu0 %v7489
  %v8378 = vpop.f32.mrf.mxu0
  %v8379 = vadd.f32 %v8210, %v8378
  %v8380 = vpop.f32.mrf.mxu0
  %v8381 = vadd.f32 %v8212, %v8380
  %8382 = vdwg.mxu0
  %8383 = vmatpush.bf16.msra.mxu0 %v7739
  %8384 = vmatpush.bf16.msra.mxu0 %v7738
  %8385 = vmatpush.bf16.msra.mxu0 %v7737
  %8386 = vmatpush.bf16.msra.mxu0 %v7736
  %8387 = vmatpush.bf16.msra.mxu0 %v7735
  %8388 = vmatpush.bf16.msra.mxu0 %v7734
  %8389 = vmatpush.bf16.msra.mxu0 %v7733
  %8390 = vmatpush.bf16.msra.mxu0 %v7732
  %8391 = vmatmul.bf16.gmra.mxu0 %v7335
  %v8392 = vpop.f32.mrf.mxu0
  %v8393 = vadd.f32 %v8224, %v8392
  %v8394 = vpop.f32.mrf.mxu0
  %v8395 = vadd.f32 %v8226, %v8394
  %8396 = vmatmul.bf16.gmra.mxu0 %v7340
  %v8397 = vpop.f32.mrf.mxu0
  %v8398 = vadd.f32 %v8229, %v8397
  %v8399 = vpop.f32.mrf.mxu0
  %v8400 = vadd.f32 %v8231, %v8399
  %8401 = vmatmul.bf16.gmra.mxu0 %v7345
  %v8402 = vpop.f32.mrf.mxu0
  %v8403 = vadd.f32 %v8234, %v8402
  %v8404 = vpop.f32.mrf.mxu0
  %v8405 = vadd.f32 %v8236, %v8404
  %8406 = vmatmul.bf16.gmra.mxu0 %v7350
  %v8407 = vpop.f32.mrf.mxu0
  %v8408 = vadd.f32 %v8239, %v8407
  %v8409 = vpop.f32.mrf.mxu0
  %v8410 = vadd.f32 %v8241, %v8409
  %8411 = vmatmul.bf16.gmra.mxu0 %v7355
  %v8412 = vpop.f32.mrf.mxu0
  %v8413 = vadd.f32 %v8244, %v8412
  %v8414 = vpop.f32.mrf.mxu0
  %v8415 = vadd.f32 %v8246, %v8414
  %8416 = vmatmul.bf16.gmra.mxu0 %v7360
  %v8417 = vpop.f32.mrf.mxu0
  %v8418 = vadd.f32 %v8249, %v8417
  %v8419 = vpop.f32.mrf.mxu0
  %v8420 = vadd.f32 %v8251, %v8419
  %8421 = vmatmul.bf16.gmra.mxu0 %v7365
  %v8422 = vpop.f32.mrf.mxu0
  %v8423 = vadd.f32 %v8254, %v8422
  %v8424 = vpop.f32.mrf.mxu0
  %v8425 = vadd.f32 %v8256, %v8424
  %8426 = vmatmul.bf16.gmra.mxu0 %v7370
  %v8427 = vpop.f32.mrf.mxu0
  %v8428 = vadd.f32 %v8259, %v8427
  %v8429 = vpop.f32.mrf.mxu0
  %v8430 = vadd.f32 %v8261, %v8429
  %8431 = vmatmul.bf16.gmra.mxu0 %v7375
  %v8432 = vpop.f32.mrf.mxu0
  %v8433 = vadd.f32 %v8264, %v8432
  %v8434 = vpop.f32.mrf.mxu0
  %v8435 = vadd.f32 %v8266, %v8434
  %8436 = vmatmul.bf16.gmra.mxu0 %v7380
  %v8437 = vpop.f32.mrf.mxu0
  %v8438 = vadd.f32 %v8269, %v8437
  %v8439 = vpop.f32.mrf.mxu0
  %v8440 = vadd.f32 %v8271, %v8439
  %8441 = vmatmul.bf16.gmra.mxu0 %v7385
  %v8442 = vpop.f32.mrf.mxu0
  %v8443 = vadd.f32 %v8274, %v8442
  %v8444 = vpop.f32.mrf.mxu0
  %v8445 = vadd.f32 %v8276, %v8444
  %8446 = vmatmul.bf16.gmra.mxu0 %v7390
  %v8447 = vpop.f32.mrf.mxu0
  %v8448 = vadd.f32 %v8279, %v8447
  %v8449 = vpop.f32.mrf.mxu0
  %v8450 = vadd.f32 %v8281, %v8449
  %8451 = vmatmul.bf16.gmra.mxu0 %v7395
  %v8452 = vpop.f32.mrf.mxu0
  %v8453 = vadd.f32 %v8284, %v8452
  %v8454 = vpop.f32.mrf.mxu0
  %v8455 = vadd.f32 %v8286, %v8454
  %8456 = vmatmul.bf16.gmra.mxu0 %v7400
  %v8457 = vpop.f32.mrf.mxu0
  %v8458 = vadd.f32 %v8289, %v8457
  %v8459 = vpop.f32.mrf.mxu0
  %v8460 = vadd.f32 %v8291, %v8459
  %8461 = vmatmul.bf16.gmra.mxu0 %v7405
  %v8462 = vpop.f32.mrf.mxu0
  %v8463 = vadd.f32 %v8294, %v8462
  %v8464 = vpop.f32.mrf.mxu0
  %v8465 = vadd.f32 %v8296, %v8464
  %8466 = vmatmul.bf16.gmra.mxu0 %v7410
  %v8467 = vpop.f32.mrf.mxu0
  %v8468 = vadd.f32 %v8299, %v8467
  %v8469 = vpop.f32.mrf.mxu0
  %v8470 = vadd.f32 %v8301, %v8469
  %8471 = vmatmul.bf16.gmra.mxu0 %v7415
  %v8472 = vpop.f32.mrf.mxu0
  %v8473 = vadd.f32 %v8304, %v8472
  %v8474 = vpop.f32.mrf.mxu0
  %v8475 = vadd.f32 %v8306, %v8474
  %8476 = vmatmul.bf16.gmra.mxu0 %v7420
  %v8477 = vpop.f32.mrf.mxu0
  %v8478 = vadd.f32 %v8309, %v8477
  %v8479 = vpop.f32.mrf.mxu0
  %v8480 = vadd.f32 %v8311, %v8479
  %8481 = vmatmul.bf16.gmra.mxu0 %v7425
  %v8482 = vpop.f32.mrf.mxu0
  %v8483 = vadd.f32 %v8314, %v8482
  %v8484 = vpop.f32.mrf.mxu0
  %v8485 = vadd.f32 %v8316, %v8484
  %8486 = vmatmul.bf16.gmra.mxu0 %v7430
  %v8487 = vpop.f32.mrf.mxu0
  %v8488 = vadd.f32 %v8319, %v8487
  %v8489 = vpop.f32.mrf.mxu0
  %v8490 = vadd.f32 %v8321, %v8489
  %8491 = vmatmul.bf16.gmra.mxu0 %v7435
  %v8492 = vpop.f32.mrf.mxu0
  %v8493 = vadd.f32 %v8324, %v8492
  %v8494 = vpop.f32.mrf.mxu0
  %v8495 = vadd.f32 %v8326, %v8494
  %8496 = vmatmul.bf16.gmra.mxu0 %v7440
  %v8497 = vpop.f32.mrf.mxu0
  %v8498 = vadd.f32 %v8329, %v8497
  %v8499 = vpop.f32.mrf.mxu0
  %v8500 = vadd.f32 %v8331, %v8499
  %8501 = vmatmul.bf16.gmra.mxu0 %v7445
  %v8502 = vpop.f32.mrf.mxu0
  %v8503 = vadd.f32 %v8334, %v8502
  %v8504 = vpop.f32.mrf.mxu0
  %v8505 = vadd.f32 %v8336, %v8504
  %8506 = vmatmul.bf16.gmra.mxu0 %v7450
  %v8507 = vpop.f32.mrf.mxu0
  %v8508 = vadd.f32 %v8339, %v8507
  %v8509 = vpop.f32.mrf.mxu0
  %v8510 = vadd.f32 %v8341, %v8509
  %8511 = vmatmul.bf16.gmra.mxu0 %v7455
  %v8512 = vpop.f32.mrf.mxu0
  %v8513 = vadd.f32 %v8344, %v8512
  %v8514 = vpop.f32.mrf.mxu0
  %v8515 = vadd.f32 %v8346, %v8514
  %8516 = vmatmul.bf16.gmra.mxu0 %v7460
  %v8517 = vpop.f32.mrf.mxu0
  %v8518 = vadd.f32 %v8349, %v8517
  %v8519 = vpop.f32.mrf.mxu0
  %v8520 = vadd.f32 %v8351, %v8519
  %8521 = vmatmul.bf16.gmra.mxu0 %v7465
  %v8522 = vpop.f32.mrf.mxu0
  %v8523 = vadd.f32 %v8354, %v8522
  %v8524 = vpop.f32.mrf.mxu0
  %v8525 = vadd.f32 %v8356, %v8524
  %8526 = vmatmul.bf16.gmra.mxu0 %v7470
  %v8527 = vpop.f32.mrf.mxu0
  %v8528 = vadd.f32 %v8359, %v8527
  %v8529 = vpop.f32.mrf.mxu0
  %v8530 = vadd.f32 %v8361, %v8529
  %8531 = vmatmul.bf16.gmra.mxu0 %v7475
  %v8532 = vpop.f32.mrf.mxu0
  %v8533 = vadd.f32 %v8364, %v8532
  %v8534 = vpop.f32.mrf.mxu0
  %v8535 = vadd.f32 %v8366, %v8534
  %8536 = vmatmul.bf16.gmra.mxu0 %v7480
  %v8537 = vpop.f32.mrf.mxu0
  %v8538 = vadd.f32 %v8369, %v8537
  %v8539 = vpop.f32.mrf.mxu0
  %v8540 = vadd.f32 %v8371, %v8539
  %8541 = vmatmul.bf16.gmra.mxu0 %v7485
  %v8542 = vpop.f32.mrf.mxu0
  %v8543 = vadd.f32 %v8374, %v8542
  %v8544 = vpop.f32.mrf.mxu0
  %v8545 = vadd.f32 %v8376, %v8544
  %8546 = vmatmul.bf16.gmra.mxu0 %v7490
  %v8547 = vpop.f32.mrf.mxu0
  %v8548 = vadd.f32 %v8379, %v8547
  %v8549 = vpop.f32.mrf.mxu0
  %v8550 = vadd.f32 %v8381, %v8549
  %8551 = vdwg.mxu0
  %8552 = vmatpush.bf16.msra.mxu0 0
  %8553 = vmatpush.bf16.msra.mxu0 0
  %8554 = vmatpush.bf16.msra.mxu0 0
  %8555 = vmatpush.bf16.msra.mxu0 0
  %8556 = vmatpush.bf16.msra.mxu0 %v7743
  %8557 = vmatpush.bf16.msra.mxu0 %v7742
  %8558 = vmatpush.bf16.msra.mxu0 %v7741
  %8559 = vmatpush.bf16.msra.mxu0 %v7740
  %8560 = vmatmul.bf16.gmra.mxu0 %v7781
  %v8561 = vpop.f32.mrf.mxu0
  %v8562 = vadd.f32 %v8393, %v8561
  %v8563 = vpop.f32.mrf.mxu0
  %v8564 = vadd.f32 %v8395, %v8563
  %8565 = vmatmul.bf16.gmra.mxu0 %v7784
  %v8566 = vpop.f32.mrf.mxu0
  %v8567 = vadd.f32 %v8398, %v8566
  %v8568 = vpop.f32.mrf.mxu0
  %v8569 = vadd.f32 %v8400, %v8568
  %8570 = vmatmul.bf16.gmra.mxu0 %v7787
  %v8571 = vpop.f32.mrf.mxu0
  %v8572 = vadd.f32 %v8403, %v8571
  %v8573 = vpop.f32.mrf.mxu0
  %v8574 = vadd.f32 %v8405, %v8573
  %8575 = vmatmul.bf16.gmra.mxu0 %v7790
  %v8576 = vpop.f32.mrf.mxu0
  %v8577 = vadd.f32 %v8408, %v8576
  %v8578 = vpop.f32.mrf.mxu0
  %v8579 = vadd.f32 %v8410, %v8578
  %8580 = vmatmul.bf16.gmra.mxu0 %v7793
  %v8581 = vpop.f32.mrf.mxu0
  %v8582 = vadd.f32 %v8413, %v8581
  %v8583 = vpop.f32.mrf.mxu0
  %v8584 = vadd.f32 %v8415, %v8583
  %8585 = vmatmul.bf16.gmra.mxu0 %v7796
  %v8586 = vpop.f32.mrf.mxu0
  %v8587 = vadd.f32 %v8418, %v8586
  %v8588 = vpop.f32.mrf.mxu0
  %v8589 = vadd.f32 %v8420, %v8588
  %8590 = vmatmul.bf16.gmra.mxu0 %v7799
  %v8591 = vpop.f32.mrf.mxu0
  %v8592 = vadd.f32 %v8423, %v8591
  %v8593 = vpop.f32.mrf.mxu0
  %v8594 = vadd.f32 %v8425, %v8593
  %8595 = vmatmul.bf16.gmra.mxu0 %v7802
  %v8596 = vpop.f32.mrf.mxu0
  %v8597 = vadd.f32 %v8428, %v8596
  %v8598 = vpop.f32.mrf.mxu0
  %v8599 = vadd.f32 %v8430, %v8598
  %8600 = vmatmul.bf16.gmra.mxu0 %v7805
  %v8601 = vpop.f32.mrf.mxu0
  %v8602 = vadd.f32 %v8433, %v8601
  %v8603 = vpop.f32.mrf.mxu0
  %v8604 = vadd.f32 %v8435, %v8603
  %8605 = vmatmul.bf16.gmra.mxu0 %v7808
  %v8606 = vpop.f32.mrf.mxu0
  %v8607 = vadd.f32 %v8438, %v8606
  %v8608 = vpop.f32.mrf.mxu0
  %v8609 = vadd.f32 %v8440, %v8608
  %8610 = vmatmul.bf16.gmra.mxu0 %v7811
  %v8611 = vpop.f32.mrf.mxu0
  %v8612 = vadd.f32 %v8443, %v8611
  %v8613 = vpop.f32.mrf.mxu0
  %v8614 = vadd.f32 %v8445, %v8613
  %8615 = vmatmul.bf16.gmra.mxu0 %v7814
  %v8616 = vpop.f32.mrf.mxu0
  %v8617 = vadd.f32 %v8448, %v8616
  %v8618 = vpop.f32.mrf.mxu0
  %v8619 = vadd.f32 %v8450, %v8618
  %8620 = vmatmul.bf16.gmra.mxu0 %v7817
  %v8621 = vpop.f32.mrf.mxu0
  %v8622 = vadd.f32 %v8453, %v8621
  %v8623 = vpop.f32.mrf.mxu0
  %v8624 = vadd.f32 %v8455, %v8623
  %8625 = vmatmul.bf16.gmra.mxu0 %v7820
  %v8626 = vpop.f32.mrf.mxu0
  %v8627 = vadd.f32 %v8458, %v8626
  %v8628 = vpop.f32.mrf.mxu0
  %v8629 = vadd.f32 %v8460, %v8628
  %8630 = vmatmul.bf16.gmra.mxu0 %v7823
  %v8631 = vpop.f32.mrf.mxu0
  %v8632 = vadd.f32 %v8463, %v8631
  %v8633 = vpop.f32.mrf.mxu0
  %v8634 = vadd.f32 %v8465, %v8633
  %8635 = vmatmul.bf16.gmra.mxu0 %v7826
  %v8636 = vpop.f32.mrf.mxu0
  %v8637 = vadd.f32 %v8468, %v8636
  %v8638 = vpop.f32.mrf.mxu0
  %v8639 = vadd.f32 %v8470, %v8638
  %8640 = vmatmul.bf16.gmra.mxu0 %v7829
  %v8641 = vpop.f32.mrf.mxu0
  %v8642 = vadd.f32 %v8473, %v8641
  %v8643 = vpop.f32.mrf.mxu0
  %v8644 = vadd.f32 %v8475, %v8643
  %8645 = vmatmul.bf16.gmra.mxu0 %v7832
  %v8646 = vpop.f32.mrf.mxu0
  %v8647 = vadd.f32 %v8478, %v8646
  %v8648 = vpop.f32.mrf.mxu0
  %v8649 = vadd.f32 %v8480, %v8648
  %8650 = vmatmul.bf16.gmra.mxu0 %v7835
  %v8651 = vpop.f32.mrf.mxu0
  %v8652 = vadd.f32 %v8483, %v8651
  %v8653 = vpop.f32.mrf.mxu0
  %v8654 = vadd.f32 %v8485, %v8653
  %8655 = vmatmul.bf16.gmra.mxu0 %v7838
  %v8656 = vpop.f32.mrf.mxu0
  %v8657 = vadd.f32 %v8488, %v8656
  %v8658 = vpop.f32.mrf.mxu0
  %v8659 = vadd.f32 %v8490, %v8658
  %8660 = vmatmul.bf16.gmra.mxu0 %v7841
  %v8661 = vpop.f32.mrf.mxu0
  %v8662 = vadd.f32 %v8493, %v8661
  %v8663 = vpop.f32.mrf.mxu0
  %v8664 = vadd.f32 %v8495, %v8663
  %8665 = vmatmul.bf16.gmra.mxu0 %v7844
  %v8666 = vpop.f32.mrf.mxu0
  %v8667 = vadd.f32 %v8498, %v8666
  %v8668 = vpop.f32.mrf.mxu0
  %v8669 = vadd.f32 %v8500, %v8668
  %8670 = vmatmul.bf16.gmra.mxu0 %v7847
  %v8671 = vpop.f32.mrf.mxu0
  %v8672 = vadd.f32 %v8503, %v8671
  %v8673 = vpop.f32.mrf.mxu0
  %v8674 = vadd.f32 %v8505, %v8673
  %8675 = vmatmul.bf16.gmra.mxu0 %v7850
  %v8676 = vpop.f32.mrf.mxu0
  %v8677 = vadd.f32 %v8508, %v8676
  %v8678 = vpop.f32.mrf.mxu0
  %v8679 = vadd.f32 %v8510, %v8678
  %8680 = vmatmul.bf16.gmra.mxu0 %v7853
  %v8681 = vpop.f32.mrf.mxu0
  %v8682 = vadd.f32 %v8513, %v8681
  %v8683 = vpop.f32.mrf.mxu0
  %v8684 = vadd.f32 %v8515, %v8683
  %8685 = vmatmul.bf16.gmra.mxu0 %v7856
  %v8686 = vpop.f32.mrf.mxu0
  %v8687 = vadd.f32 %v8518, %v8686
  %v8688 = vpop.f32.mrf.mxu0
  %v8689 = vadd.f32 %v8520, %v8688
  %8690 = vmatmul.bf16.gmra.mxu0 %v7859
  %v8691 = vpop.f32.mrf.mxu0
  %v8692 = vadd.f32 %v8523, %v8691
  %v8693 = vpop.f32.mrf.mxu0
  %v8694 = vadd.f32 %v8525, %v8693
  %8695 = vmatmul.bf16.gmra.mxu0 %v7862
  %v8696 = vpop.f32.mrf.mxu0
  %v8697 = vadd.f32 %v8528, %v8696
  %v8698 = vpop.f32.mrf.mxu0
  %v8699 = vadd.f32 %v8530, %v8698
  %8700 = vmatmul.bf16.gmra.mxu0 %v7865
  %v8701 = vpop.f32.mrf.mxu0
  %v8702 = vadd.f32 %v8533, %v8701
  %v8703 = vpop.f32.mrf.mxu0
  %v8704 = vadd.f32 %v8535, %v8703
  %8705 = vmatmul.bf16.gmra.mxu0 %v7868
  %v8706 = vpop.f32.mrf.mxu0
  %v8707 = vadd.f32 %v8538, %v8706
  %v8708 = vpop.f32.mrf.mxu0
  %v8709 = vadd.f32 %v8540, %v8708
  %8710 = vmatmul.bf16.gmra.mxu0 %v7871
  %v8711 = vpop.f32.mrf.mxu0
  %v8712 = vadd.f32 %v8543, %v8711
  %v8713 = vpop.f32.mrf.mxu0
  %v8714 = vadd.f32 %v8545, %v8713
  %8715 = vmatmul.bf16.gmra.mxu0 %v7874
  %v8716 = vpop.f32.mrf.mxu0
  %v8717 = vadd.f32 %v8548, %v8716
  %v8718 = vpop.f32.mrf.mxu0
  %v8719 = vadd.f32 %v8550, %v8718
  %8720 = vdwg.mxu0
  %v8721 = vsel %vm97, %v8562, 0.0
  %v8722 = vsel %vm97, %v8564, 0.0
  %v8723 = vadd.f32 %v8721, %v8722
  %v8724 = vsel %vm97, %v8567, 0.0
  %v8725 = vadd.f32 %v8723, %v8724
  %v8726 = vsel %vm97, %v8569, 0.0
  %v8727 = vadd.f32 %v8725, %v8726
  %v8728 = vsel %vm97, %v8572, 0.0
  %v8729 = vadd.f32 %v8727, %v8728
  %v8730 = vsel %vm97, %v8574, 0.0
  %v8731 = vadd.f32 %v8729, %v8730
  %v8732 = vsel %vm97, %v8577, 0.0
  %v8733 = vadd.f32 %v8731, %v8732
  %v8734 = vsel %vm97, %v8579, 0.0
  %v8735 = vadd.f32 %v8733, %v8734
  %v8736 = vsel %vm97, %v8582, 0.0
  %v8737 = vadd.f32 %v8735, %v8736
  %v8738 = vsel %vm97, %v8584, 0.0
  %v8739 = vadd.f32 %v8737, %v8738
  %v8740 = vsel %vm97, %v8587, 0.0
  %v8741 = vadd.f32 %v8739, %v8740
  %v8742 = vsel %vm97, %v8589, 0.0
  %v8743 = vadd.f32 %v8741, %v8742
  %v8744 = vsel %vm97, %v8592, 0.0
  %v8745 = vadd.f32 %v8743, %v8744
  %v8746 = vsel %vm97, %v8594, 0.0
  %v8747 = vadd.f32 %v8745, %v8746
  %v8748 = vsel %vm97, %v8597, 0.0
  %v8749 = vadd.f32 %v8747, %v8748
  %v8750 = vsel %vm97, %v8599, 0.0
  %v8751 = vadd.f32 %v8749, %v8750
  %v8752 = vsel %vm97, %v8602, 0.0
  %v8753 = vadd.f32 %v8751, %v8752
  %v8754 = vsel %vm97, %v8604, 0.0
  %v8755 = vadd.f32 %v8753, %v8754
  %v8756 = vsel %vm97, %v8607, 0.0
  %v8757 = vadd.f32 %v8755, %v8756
  %v8758 = vsel %vm97, %v8609, 0.0
  %v8759 = vadd.f32 %v8757, %v8758
  %v8760 = vsel %vm97, %v8612, 0.0
  %v8761 = vadd.f32 %v8759, %v8760
  %v8762 = vsel %vm97, %v8614, 0.0
  %v8763 = vadd.f32 %v8761, %v8762
  %v8764 = vsel %vm97, %v8617, 0.0
  %v8765 = vadd.f32 %v8763, %v8764
  %v8766 = vsel %vm97, %v8619, 0.0
  %v8767 = vadd.f32 %v8765, %v8766
  %v8768 = vsel %vm97, %v8622, 0.0
  %v8769 = vadd.f32 %v8767, %v8768
  %v8770 = vsel %vm97, %v8624, 0.0
  %v8771 = vadd.f32 %v8769, %v8770
  %v8772 = vsel %vm97, %v8627, 0.0
  %v8773 = vadd.f32 %v8771, %v8772
  %v8774 = vsel %vm97, %v8629, 0.0
  %v8775 = vadd.f32 %v8773, %v8774
  %v8776 = vsel %vm97, %v8632, 0.0
  %v8777 = vadd.f32 %v8775, %v8776
  %v8778 = vsel %vm97, %v8634, 0.0
  %v8779 = vadd.f32 %v8777, %v8778
  %v8780 = vsel %vm97, %v8637, 0.0
  %v8781 = vadd.f32 %v8779, %v8780
  %v8782 = vsel %vm97, %v8639, 0.0
  %v8783 = vadd.f32 %v8781, %v8782
  %v8784 = vsel %vm97, %v8642, 0.0
  %v8785 = vadd.f32 %v8783, %v8784
  %v8786 = vsel %vm97, %v8644, 0.0
  %v8787 = vadd.f32 %v8785, %v8786
  %v8788 = vsel %vm97, %v8647, 0.0
  %v8789 = vadd.f32 %v8787, %v8788
  %v8790 = vsel %vm97, %v8649, 0.0
  %v8791 = vadd.f32 %v8789, %v8790
  %v8792 = vsel %vm97, %v8652, 0.0
  %v8793 = vadd.f32 %v8791, %v8792
  %v8794 = vsel %vm97, %v8654, 0.0
  %v8795 = vadd.f32 %v8793, %v8794
  %v8796 = vsel %vm97, %v8657, 0.0
  %v8797 = vadd.f32 %v8795, %v8796
  %v8798 = vsel %vm97, %v8659, 0.0
  %v8799 = vadd.f32 %v8797, %v8798
  %v8800 = vsel %vm97, %v8662, 0.0
  %v8801 = vadd.f32 %v8799, %v8800
  %v8802 = vsel %vm97, %v8664, 0.0
  %v8803 = vadd.f32 %v8801, %v8802
  %v8804 = vsel %vm97, %v8667, 0.0
  %v8805 = vadd.f32 %v8803, %v8804
  %v8806 = vsel %vm97, %v8669, 0.0
  %v8807 = vadd.f32 %v8805, %v8806
  %v8808 = vsel %vm97, %v8672, 0.0
  %v8809 = vadd.f32 %v8807, %v8808
  %v8810 = vsel %vm97, %v8674, 0.0
  %v8811 = vadd.f32 %v8809, %v8810
  %v8812 = vsel %vm97, %v8677, 0.0
  %v8813 = vadd.f32 %v8811, %v8812
  %v8814 = vsel %vm97, %v8679, 0.0
  %v8815 = vadd.f32 %v8813, %v8814
  %v8816 = vsel %vm97, %v8682, 0.0
  %v8817 = vadd.f32 %v8815, %v8816
  %v8818 = vsel %vm97, %v8684, 0.0
  %v8819 = vadd.f32 %v8817, %v8818
  %v8820 = vsel %vm97, %v8687, 0.0
  %v8821 = vadd.f32 %v8819, %v8820
  %v8822 = vsel %vm97, %v8689, 0.0
  %v8823 = vadd.f32 %v8821, %v8822
  %v8824 = vsel %vm97, %v8692, 0.0
  %v8825 = vadd.f32 %v8823, %v8824
  %v8826 = vsel %vm97, %v8694, 0.0
  %v8827 = vadd.f32 %v8825, %v8826
  %v8828 = vsel %vm97, %v8697, 0.0
  %v8829 = vadd.f32 %v8827, %v8828
  %v8830 = vsel %vm97, %v8699, 0.0
  %v8831 = vadd.f32 %v8829, %v8830
  %v8832 = vsel %vm97, %v8702, 0.0
  %v8833 = vadd.f32 %v8831, %v8832
  %v8834 = vsel %vm97, %v8704, 0.0
  %v8835 = vadd.f32 %v8833, %v8834
  %v8836 = vsel %vm97, %v8707, 0.0
  %v8837 = vadd.f32 %v8835, %v8836
  %v8838 = vsel %vm97, %v8709, 0.0
  %v8839 = vadd.f32 %v8837, %v8838
  %v8840 = vsel %vm97, %v8712, 0.0
  %v8841 = vadd.f32 %v8839, %v8840
  %v8842 = vsel %vm97, %v8714, 0.0
  %v8843 = vadd.f32 %v8841, %v8842
  %v8844 = vsel %vm97, %v8717, 0.0
  %v8845 = vadd.f32 %v8843, %v8844
  %v8846 = vsel %vm97, %v8719, 0.0
  %v8847 = vadd.f32 %v8845, %v8846
  %v8848 = vrot.slane %v8847, 4
  %v8849 = vadd.f32 %v8847, %v8848
  %v8850 = vrot.slane %v8849, 2
  %v8851 = vadd.f32 %v8849, %v8850
  %v8852 = vrot.slane %v8851, 1
  %v8853 = vadd.f32 %v8851, %v8852
  %v8854 = vmul.f32 %v8853, 0.001953125
  %v8855 = vmul.f32 %v8562, %v8562
  %v8856 = vmul.f32 %v8564, %v8564
  %v8857 = vmul.f32 %v8567, %v8567
  %v8858 = vmul.f32 %v8569, %v8569
  %v8859 = vmul.f32 %v8572, %v8572
  %v8860 = vmul.f32 %v8574, %v8574
  %v8861 = vmul.f32 %v8577, %v8577
  %v8862 = vmul.f32 %v8579, %v8579
  %v8863 = vmul.f32 %v8582, %v8582
  %v8864 = vmul.f32 %v8584, %v8584
  %v8865 = vmul.f32 %v8587, %v8587
  %v8866 = vmul.f32 %v8589, %v8589
  %v8867 = vmul.f32 %v8592, %v8592
  %v8868 = vmul.f32 %v8594, %v8594
  %v8869 = vmul.f32 %v8597, %v8597
  %v8870 = vmul.f32 %v8599, %v8599
  %v8871 = vmul.f32 %v8602, %v8602
  %v8872 = vmul.f32 %v8604, %v8604
  %v8873 = vmul.f32 %v8607, %v8607
  %v8874 = vmul.f32 %v8609, %v8609
  %v8875 = vmul.f32 %v8612, %v8612
  %v8876 = vmul.f32 %v8614, %v8614
  %v8877 = vmul.f32 %v8617, %v8617
  %v8878 = vmul.f32 %v8619, %v8619
  %v8879 = vmul.f32 %v8622, %v8622
  %v8880 = vmul.f32 %v8624, %v8624
  %v8881 = vmul.f32 %v8627, %v8627
  %v8882 = vmul.f32 %v8629, %v8629
  %v8883 = vmul.f32 %v8632, %v8632
  %v8884 = vmul.f32 %v8634, %v8634
  %v8885 = vmul.f32 %v8637, %v8637
  %v8886 = vmul.f32 %v8639, %v8639
  %v8887 = vmul.f32 %v8642, %v8642
  %v8888 = vmul.f32 %v8644, %v8644
  %v8889 = vmul.f32 %v8647, %v8647
  %v8890 = vmul.f32 %v8649, %v8649
  %v8891 = vmul.f32 %v8652, %v8652
  %v8892 = vmul.f32 %v8654, %v8654
  %v8893 = vmul.f32 %v8657, %v8657
  %v8894 = vmul.f32 %v8659, %v8659
  %v8895 = vmul.f32 %v8662, %v8662
  %v8896 = vmul.f32 %v8664, %v8664
  %v8897 = vmul.f32 %v8667, %v8667
  %v8898 = vmul.f32 %v8669, %v8669
  %v8899 = vmul.f32 %v8672, %v8672
  %v8900 = vmul.f32 %v8674, %v8674
  %v8901 = vmul.f32 %v8677, %v8677
  %v8902 = vmul.f32 %v8679, %v8679
  %v8903 = vmul.f32 %v8682, %v8682
  %v8904 = vmul.f32 %v8684, %v8684
  %v8905 = vmul.f32 %v8687, %v8687
  %v8906 = vmul.f32 %v8689, %v8689
  %v8907 = vmul.f32 %v8692, %v8692
  %v8908 = vmul.f32 %v8694, %v8694
  %v8909 = vmul.f32 %v8697, %v8697
  %v8910 = vmul.f32 %v8699, %v8699
  %v8911 = vmul.f32 %v8702, %v8702
  %v8912 = vmul.f32 %v8704, %v8704
  %v8913 = vmul.f32 %v8707, %v8707
  %v8914 = vmul.f32 %v8709, %v8709
  %v8915 = vmul.f32 %v8712, %v8712
  %v8916 = vmul.f32 %v8714, %v8714
  %v8917 = vmul.f32 %v8717, %v8717
  %v8918 = vmul.f32 %v8719, %v8719
  %v8919 = vsel %vm97, %v8855, 0.0
  %v8920 = vsel %vm97, %v8856, 0.0
  %v8921 = vadd.f32 %v8919, %v8920
  %v8922 = vsel %vm97, %v8857, 0.0
  %v8923 = vadd.f32 %v8921, %v8922
  %v8924 = vsel %vm97, %v8858, 0.0
  %v8925 = vadd.f32 %v8923, %v8924
  %v8926 = vsel %vm97, %v8859, 0.0
  %v8927 = vadd.f32 %v8925, %v8926
  %v8928 = vsel %vm97, %v8860, 0.0
  %v8929 = vadd.f32 %v8927, %v8928
  %v8930 = vsel %vm97, %v8861, 0.0
  %v8931 = vadd.f32 %v8929, %v8930
  %v8932 = vsel %vm97, %v8862, 0.0
  %v8933 = vadd.f32 %v8931, %v8932
  %v8934 = vsel %vm97, %v8863, 0.0
  %v8935 = vadd.f32 %v8933, %v8934
  %v8936 = vsel %vm97, %v8864, 0.0
  %v8937 = vadd.f32 %v8935, %v8936
  %v8938 = vsel %vm97, %v8865, 0.0
  %v8939 = vadd.f32 %v8937, %v8938
  %v8940 = vsel %vm97, %v8866, 0.0
  %v8941 = vadd.f32 %v8939, %v8940
  %v8942 = vsel %vm97, %v8867, 0.0
  %v8943 = vadd.f32 %v8941, %v8942
  %v8944 = vsel %vm97, %v8868, 0.0
  %v8945 = vadd.f32 %v8943, %v8944
  %v8946 = vsel %vm97, %v8869, 0.0
  %v8947 = vadd.f32 %v8945, %v8946
  %v8948 = vsel %vm97, %v8870, 0.0
  %v8949 = vadd.f32 %v8947, %v8948
  %v8950 = vsel %vm97, %v8871, 0.0
  %v8951 = vadd.f32 %v8949, %v8950
  %v8952 = vsel %vm97, %v8872, 0.0
  %v8953 = vadd.f32 %v8951, %v8952
  %v8954 = vsel %vm97, %v8873, 0.0
  %v8955 = vadd.f32 %v8953, %v8954
  %v8956 = vsel %vm97, %v8874, 0.0
  %v8957 = vadd.f32 %v8955, %v8956
  %v8958 = vsel %vm97, %v8875, 0.0
  %v8959 = vadd.f32 %v8957, %v8958
  %v8960 = vsel %vm97, %v8876, 0.0
  %v8961 = vadd.f32 %v8959, %v8960
  %v8962 = vsel %vm97, %v8877, 0.0
  %v8963 = vadd.f32 %v8961, %v8962
  %v8964 = vsel %vm97, %v8878, 0.0
  %v8965 = vadd.f32 %v8963, %v8964
  %v8966 = vsel %vm97, %v8879, 0.0
  %v8967 = vadd.f32 %v8965, %v8966
  %v8968 = vsel %vm97, %v8880, 0.0
  %v8969 = vadd.f32 %v8967, %v8968
  %v8970 = vsel %vm97, %v8881, 0.0
  %v8971 = vadd.f32 %v8969, %v8970
  %v8972 = vsel %vm97, %v8882, 0.0
  %v8973 = vadd.f32 %v8971, %v8972
  %v8974 = vsel %vm97, %v8883, 0.0
  %v8975 = vadd.f32 %v8973, %v8974
  %v8976 = vsel %vm97, %v8884, 0.0
  %v8977 = vadd.f32 %v8975, %v8976
  %v8978 = vsel %vm97, %v8885, 0.0
  %v8979 = vadd.f32 %v8977, %v8978
  %v8980 = vsel %vm97, %v8886, 0.0
  %v8981 = vadd.f32 %v8979, %v8980
  %v8982 = vsel %vm97, %v8887, 0.0
  %v8983 = vadd.f32 %v8981, %v8982
  %v8984 = vsel %vm97, %v8888, 0.0
  %v8985 = vadd.f32 %v8983, %v8984
  %v8986 = vsel %vm97, %v8889, 0.0
  %v8987 = vadd.f32 %v8985, %v8986
  %v8988 = vsel %vm97, %v8890, 0.0
  %v8989 = vadd.f32 %v8987, %v8988
  %v8990 = vsel %vm97, %v8891, 0.0
  %v8991 = vadd.f32 %v8989, %v8990
  %v8992 = vsel %vm97, %v8892, 0.0
  %v8993 = vadd.f32 %v8991, %v8992
  %v8994 = vsel %vm97, %v8893, 0.0
  %v8995 = vadd.f32 %v8993, %v8994
  %v8996 = vsel %vm97, %v8894, 0.0
  %v8997 = vadd.f32 %v8995, %v8996
  %v8998 = vsel %vm97, %v8895, 0.0
  %v8999 = vadd.f32 %v8997, %v8998
  %v9000 = vsel %vm97, %v8896, 0.0
  %v9001 = vadd.f32 %v8999, %v9000
  %v9002 = vsel %vm97, %v8897, 0.0
  %v9003 = vadd.f32 %v9001, %v9002
  %v9004 = vsel %vm97, %v8898, 0.0
  %v9005 = vadd.f32 %v9003, %v9004
  %v9006 = vsel %vm97, %v8899, 0.0
  %v9007 = vadd.f32 %v9005, %v9006
  %v9008 = vsel %vm97, %v8900, 0.0
  %v9009 = vadd.f32 %v9007, %v9008
  %v9010 = vsel %vm97, %v8901, 0.0
  %v9011 = vadd.f32 %v9009, %v9010
  %v9012 = vsel %vm97, %v8902, 0.0
  %v9013 = vadd.f32 %v9011, %v9012
  %v9014 = vsel %vm97, %v8903, 0.0
  %v9015 = vadd.f32 %v9013, %v9014
  %v9016 = vsel %vm97, %v8904, 0.0
  %v9017 = vadd.f32 %v9015, %v9016
  %v9018 = vsel %vm97, %v8905, 0.0
  %v9019 = vadd.f32 %v9017, %v9018
  %v9020 = vsel %vm97, %v8906, 0.0
  %v9021 = vadd.f32 %v9019, %v9020
  %v9022 = vsel %vm97, %v8907, 0.0
  %v9023 = vadd.f32 %v9021, %v9022
  %v9024 = vsel %vm97, %v8908, 0.0
  %v9025 = vadd.f32 %v9023, %v9024
  %v9026 = vsel %vm97, %v8909, 0.0
  %v9027 = vadd.f32 %v9025, %v9026
  %v9028 = vsel %vm97, %v8910, 0.0
  %v9029 = vadd.f32 %v9027, %v9028
  %v9030 = vsel %vm97, %v8911, 0.0
  %v9031 = vadd.f32 %v9029, %v9030
  %v9032 = vsel %vm97, %v8912, 0.0
  %v9033 = vadd.f32 %v9031, %v9032
  %v9034 = vsel %vm97, %v8913, 0.0
  %v9035 = vadd.f32 %v9033, %v9034
  %v9036 = vsel %vm97, %v8914, 0.0
  %v9037 = vadd.f32 %v9035, %v9036
  %v9038 = vsel %vm97, %v8915, 0.0
  %v9039 = vadd.f32 %v9037, %v9038
  %v9040 = vsel %vm97, %v8916, 0.0
  %v9041 = vadd.f32 %v9039, %v9040
  %v9042 = vsel %vm97, %v8917, 0.0
  %v9043 = vadd.f32 %v9041, %v9042
  %v9044 = vsel %vm97, %v8918, 0.0
  %v9045 = vadd.f32 %v9043, %v9044
  %v9046 = vrot.slane %v9045, 4
  %v9047 = vadd.f32 %v9045, %v9046
  %v9048 = vrot.slane %v9047, 2
  %v9049 = vadd.f32 %v9047, %v9048
  %v9050 = vrot.slane %v9049, 1
  %v9051 = vadd.f32 %v9049, %v9050
  %v9052 = vmul.f32 %v9051, 0.001953125
  %v9053 = vmul.f32 %v8854, %v8854
  %v9054 = vsub.f32 %v9052, %v9053
  %v9055 = vsub.f32 %v8562, %v8854
  %v9056 = vsub.f32 %v8564, %v8854
  %v9057 = vsub.f32 %v8567, %v8854
  %v9058 = vsub.f32 %v8569, %v8854
  %v9059 = vsub.f32 %v8572, %v8854
  %v9060 = vsub.f32 %v8574, %v8854
  %v9061 = vsub.f32 %v8577, %v8854
  %v9062 = vsub.f32 %v8579, %v8854
  %v9063 = vsub.f32 %v8582, %v8854
  %v9064 = vsub.f32 %v8584, %v8854
  %v9065 = vsub.f32 %v8587, %v8854
  %v9066 = vsub.f32 %v8589, %v8854
  %v9067 = vsub.f32 %v8592, %v8854
  %v9068 = vsub.f32 %v8594, %v8854
  %v9069 = vsub.f32 %v8597, %v8854
  %v9070 = vsub.f32 %v8599, %v8854
  %v9071 = vsub.f32 %v8602, %v8854
  %v9072 = vsub.f32 %v8604, %v8854
  %v9073 = vsub.f32 %v8607, %v8854
  %v9074 = vsub.f32 %v8609, %v8854
  %v9075 = vsub.f32 %v8612, %v8854
  %v9076 = vsub.f32 %v8614, %v8854
  %v9077 = vsub.f32 %v8617, %v8854
  %v9078 = vsub.f32 %v8619, %v8854
  %v9079 = vsub.f32 %v8622, %v8854
  %v9080 = vsub.f32 %v8624, %v8854
  %v9081 = vsub.f32 %v8627, %v8854
  %v9082 = vsub.f32 %v8629, %v8854
  %v9083 = vsub.f32 %v8632, %v8854
  %v9084 = vsub.f32 %v8634, %v8854
  %v9085 = vsub.f32 %v8637, %v8854
  %v9086 = vsub.f32 %v8639, %v8854
  %v9087 = vsub.f32 %v8642, %v8854
  %v9088 = vsub.f32 %v8644, %v8854
  %v9089 = vsub.f32 %v8647, %v8854
  %v9090 = vsub.f32 %v8649, %v8854
  %v9091 = vsub.f32 %v8652, %v8854
  %v9092 = vsub.f32 %v8654, %v8854
  %v9093 = vsub.f32 %v8657, %v8854
  %v9094 = vsub.f32 %v8659, %v8854
  %v9095 = vsub.f32 %v8662, %v8854
  %v9096 = vsub.f32 %v8664, %v8854
  %v9097 = vsub.f32 %v8667, %v8854
  %v9098 = vsub.f32 %v8669, %v8854
  %v9099 = vsub.f32 %v8672, %v8854
  %v9100 = vsub.f32 %v8674, %v8854
  %v9101 = vsub.f32 %v8677, %v8854
  %v9102 = vsub.f32 %v8679, %v8854
  %v9103 = vsub.f32 %v8682, %v8854
  %v9104 = vsub.f32 %v8684, %v8854
  %v9105 = vsub.f32 %v8687, %v8854
  %v9106 = vsub.f32 %v8689, %v8854
  %v9107 = vsub.f32 %v8692, %v8854
  %v9108 = vsub.f32 %v8694, %v8854
  %v9109 = vsub.f32 %v8697, %v8854
  %v9110 = vsub.f32 %v8699, %v8854
  %v9111 = vsub.f32 %v8702, %v8854
  %v9112 = vsub.f32 %v8704, %v8854
  %v9113 = vsub.f32 %v8707, %v8854
  %v9114 = vsub.f32 %v8709, %v8854
  %v9115 = vsub.f32 %v8712, %v8854
  %v9116 = vsub.f32 %v8714, %v8854
  %v9117 = vsub.f32 %v8717, %v8854
  %v9118 = vsub.f32 %v8719, %v8854
  %v9119 = vadd.f32 %v9054, 1e-05
  %v9120 = vrsqrt.pop %v9119
  %v9121 = vmul.f32 %v9120, %v9119
  %v9122 = vmul.f32 %v9121, %v9120
  %v9123 = vmul.f32 0.5, %v9122
  %v9124 = vsub.f32 1.5, %v9123
  %v9125 = vmul.f32 %v9120, %v9124
  %vm9126 = vweird.f32 %v9119
  %vm9127 = vweird.f32 %v9120
  %vm9128 = vmor %vm9126, %vm9127
  %v9129 = vsel %vm9128, %v9120, %v9125
  %v9130 = vld [vmem:[%s7] sm:$0x1]
  %v9131 = vmul.f32 %v9129, %v9130
  %v9132 = vperm.slane %v9131, 0
  %v9133 = vmul.f32 %v9055, %v9132
  %v9134 = vmul.f32 %v9056, %v9132
  %v9135 = vmul.f32 %v9057, %v9132
  %v9136 = vmul.f32 %v9058, %v9132
  %v9137 = vmul.f32 %v9059, %v9132
  %v9138 = vmul.f32 %v9060, %v9132
  %v9139 = vmul.f32 %v9061, %v9132
  %v9140 = vmul.f32 %v9062, %v9132
  %v9141 = vmul.f32 %v9063, %v9132
  %v9142 = vmul.f32 %v9064, %v9132
  %v9143 = vmul.f32 %v9065, %v9132
  %v9144 = vmul.f32 %v9066, %v9132
  %v9145 = vmul.f32 %v9067, %v9132
  %v9146 = vmul.f32 %v9068, %v9132
  %v9147 = vmul.f32 %v9069, %v9132
  %v9148 = vmul.f32 %v9070, %v9132
  %v9149 = vmul.f32 %v9071, %v9132
  %v9150 = vmul.f32 %v9072, %v9132
  %v9151 = vmul.f32 %v9073, %v9132
  %v9152 = vmul.f32 %v9074, %v9132
  %v9153 = vmul.f32 %v9075, %v9132
  %v9154 = vmul.f32 %v9076, %v9132
  %v9155 = vmul.f32 %v9077, %v9132
  %v9156 = vmul.f32 %v9078, %v9132
  %v9157 = vmul.f32 %v9079, %v9132
  %v9158 = vmul.f32 %v9080, %v9132
  %v9159 = vmul.f32 %v9081, %v9132
  %v9160 = vmul.f32 %v9082, %v9132
  %v9161 = vmul.f32 %v9083, %v9132
  %v9162 = vmul.f32 %v9084, %v9132
  %v9163 = vmul.f32 %v9085, %v9132
  %v9164 = vmul.f32 %v9086, %v9132
  %v9165 = vmul.f32 %v9087, %v9132
  %v9166 = vmul.f32 %v9088, %v9132
  %v9167 = vmul.f32 %v9089, %v9132
  %v9168 = vmul.f32 %v9090, %v9132
  %v9169 = vmul.f32 %v9091, %v9132
  %v9170 = vmul.f32 %v9092, %v9132
  %v9171 = vmul.f32 %v9093, %v9132
  %v9172 = vmul.f32 %v9094, %v9132
  %v9173 = vmul.f32 %v9095, %v9132
  %v9174 = vmul.f32 %v9096, %v9132
  %v9175 = vmul.f32 %v9097, %v9132
  %v9176 = vmul.f32 %v9098, %v9132
  %v9177 = vmul.f32 %v9099, %v9132
  %v9178 = vmul.f32 %v9100, %v9132
  %v9179 = vmul.f32 %v9101, %v9132
  %v9180 = vmul.f32 %v9102, %v9132
  %v9181 = vmul.f32 %v9103, %v9132
  %v9182 = vmul.f32 %v9104, %v9132
  %v9183 = vmul.f32 %v9105, %v9132
  %v9184 = vmul.f32 %v9106, %v9132
  %v9185 = vmul.f32 %v9107, %v9132
  %v9186 = vmul.f32 %v9108, %v9132
  %v9187 = vmul.f32 %v9109, %v9132
  %v9188 = vmul.f32 %v9110, %v9132
  %v9189 = vmul.f32 %v9111, %v9132
  %v9190 = vmul.f32 %v9112, %v9132
  %v9191 = vmul.f32 %v9113, %v9132
  %v9192 = vmul.f32 %v9114, %v9132
  %v9193 = vmul.f32 %v9115, %v9132
  %v9194 = vmul.f32 %v9116, %v9132
  %v9195 = vmul.f32 %v9117, %v9132
  %v9196 = vmul.f32 %v9118, %v9132
  %v9197 = vld [vmem:[%s8] sm:$0x1]
  %v9199 = vperm.slane %v9197, 0
  %v9201 = vadd.f32 %v9133, %v9199
  %v9202 = vadd.f32 %v9134, %v9199
  %v9203 = vadd.f32 %v9135, %v9199
  %v9204 = vadd.f32 %v9136, %v9199
  %v9205 = vadd.f32 %v9137, %v9199
  %v9206 = vadd.f32 %v9138, %v9199
  %v9207 = vadd.f32 %v9139, %v9199
  %v9208 = vadd.f32 %v9140, %v9199
  %v9209 = vadd.f32 %v9141, %v9199
  %v9210 = vadd.f32 %v9142, %v9199
  %v9211 = vadd.f32 %v9143, %v9199
  %v9212 = vadd.f32 %v9144, %v9199
  %v9213 = vadd.f32 %v9145, %v9199
  %v9214 = vadd.f32 %v9146, %v9199
  %v9215 = vadd.f32 %v9147, %v9199
  %v9216 = vadd.f32 %v9148, %v9199
  %v9217 = vadd.f32 %v9149, %v9199
  %v9218 = vadd.f32 %v9150, %v9199
  %v9219 = vadd.f32 %v9151, %v9199
  %v9220 = vadd.f32 %v9152, %v9199
  %v9221 = vadd.f32 %v9153, %v9199
  %v9222 = vadd.f32 %v9154, %v9199
  %v9223 = vadd.f32 %v9155, %v9199
  %v9224 = vadd.f32 %v9156, %v9199
  %v9225 = vadd.f32 %v9157, %v9199
  %v9226 = vadd.f32 %v9158, %v9199
  %v9227 = vadd.f32 %v9159, %v9199
  %v9228 = vadd.f32 %v9160, %v9199
  %v9229 = vadd.f32 %v9161, %v9199
  %v9230 = vadd.f32 %v9162, %v9199
  %v9231 = vadd.f32 %v9163, %v9199
  %v9232 = vadd.f32 %v9164, %v9199
  %v9233 = vadd.f32 %v9165, %v9199
  %v9234 = vadd.f32 %v9166, %v9199
  %v9235 = vadd.f32 %v9167, %v9199
  %v9236 = vadd.f32 %v9168, %v9199
  %v9237 = vadd.f32 %v9169, %v9199
  %v9238 = vadd.f32 %v9170, %v9199
  %v9239 = vadd.f32 %v9171, %v9199
  %v9240 = vadd.f32 %v9172, %v9199
  %v9241 = vadd.f32 %v9173, %v9199
  %v9242 = vadd.f32 %v9174, %v9199
  %v9243 = vadd.f32 %v9175, %v9199
  %v9244 = vadd.f32 %v9176, %v9199
  %v9245 = vadd.f32 %v9177, %v9199
  %v9246 = vadd.f32 %v9178, %v9199
  %v9247 = vadd.f32 %v9179, %v9199
  %v9248 = vadd.f32 %v9180, %v9199
  %v9249 = vadd.f32 %v9181, %v9199
  %v9250 = vadd.f32 %v9182, %v9199
  %v9251 = vadd.f32 %v9183, %v9199
  %v9252 = vadd.f32 %v9184, %v9199
  %v9253 = vadd.f32 %v9185, %v9199
  %v9254 = vadd.f32 %v9186, %v9199
  %v9255 = vadd.f32 %v9187, %v9199
  %v9256 = vadd.f32 %v9188, %v9199
  %v9257 = vadd.f32 %v9189, %v9199
  %v9258 = vadd.f32 %v9190, %v9199
  %v9259 = vadd.f32 %v9191, %v9199
  %v9260 = vadd.f32 %v9192, %v9199
  %v9261 = vadd.f32 %v9193, %v9199
  %v9262 = vadd.f32 %v9194, %v9199
  %v9263 = vadd.f32 %v9195, %v9199
  %v9264 = vadd.f32 %v9196, %v9199
  %v9265 = vld [vmem:[%s1] sm:$0xff]
  %v9266 = vld [vmem:[%s1 + $0x8] sm:$0xff]
  %v9267 = vld [vmem:[%s1 + $0x10] sm:$0xff]
  %v9268 = vld [vmem:[%s1 + $0x18] sm:$0xff]
  %v9269 = vld [vmem:[%s1 + $0x20] sm:$0xff]
  %v9270 = vld [vmem:[%s1 + $0x28] sm:$0xff]
  %v9271 = vld [vmem:[%s1 + $0x30] sm:$0xff]
  %v9272 = vld [vmem:[%s1 + $0x38] sm:$0xff]
  %v9273 = vld [vmem:[%s1 + $0x40] sm:$0xff]
  %v9274 = vld [vmem:[%s1 + $0x48] sm:$0xff]
  %v9275 = vld [vmem:[%s1 + $0x50] sm:$0xff]
  %v9276 = vld [vmem:[%s1 + $0x58] sm:$0xff]
  %v9277 = vld [vmem:[%s1 + $0x60] sm:$0xff]
  %v9278 = vld [vmem:[%s1 + $0x68] sm:$0xff]
  %v9279 = vld [vmem:[%s1 + $0x70] sm:$0xff]
  %v9280 = vld [vmem:[%s1 + $0x78] sm:$0xff]
  %v9281 = vld [vmem:[%s1 + $0x80] sm:$0xff]
  %v9282 = vld [vmem:[%s1 + $0x88] sm:$0xff]
  %v9283 = vld [vmem:[%s1 + $0x90] sm:$0xff]
  %v9284 = vld [vmem:[%s1 + $0x98] sm:$0xff]
  %v9285 = vld [vmem:[%s1 + $0xa0] sm:$0xff]
  %v9286 = vld [vmem:[%s1 + $0xa8] sm:$0xff]
  %v9287 = vld [vmem:[%s1 + $0xb0] sm:$0xff]
  %v9288 = vld [vmem:[%s1 + $0xb8] sm:$0xff]
  %v9289 = vld [vmem:[%s1 + $0xc0] sm:$0xff]
  %v9290 = vld [vmem:[%s1 + $0xc8] sm:$0xff]
  %v9291 = vld [vmem:[%s1 + $0xd0] sm:$0xff]
  %v9292 = vld [vmem:[%s1 + $0xd8] sm:$0xff]
  %v9293 = vld [vmem:[%s1 + $0xe0] sm:$0xff]
  %v9294 = vld [vmem:[%s1 + $0xe8] sm:$0xff]
  %v9295 = vld [vmem:[%s1 + $0xf0] sm:$0xff]
  %v9296 = vld [vmem:[%s1 + $0xf8] sm:$0xff]
  %v9297 = vld [vmem:[%s1 + $0x100] sm:$0xff]
  %v9298 = vld [vmem:[%s1 + $0x108] sm:$0xff]
  %v9299 = vld [vmem:[%s1 + $0x110] sm:$0xff]
  %v9300 = vld [vmem:[%s1 + $0x118] sm:$0xff]
  %v9301 = vld [vmem:[%s1 + $0x120] sm:$0xff]
  %v9302 = vld [vmem:[%s1 + $0x128] sm:$0xff]
  %v9303 = vld [vmem:[%s1 + $0x130] sm:$0xff]
  %v9304 = vld [vmem:[%s1 + $0x138] sm:$0xff]
  %v9305 = vld [vmem:[%s1 + $0x140] sm:$0xff]
  %v9306 = vld [vmem:[%s1 + $0x148] sm:$0xff]
  %v9307 = vld [vmem:[%s1 + $0x150] sm:$0xff]
  %v9308 = vld [vmem:[%s1 + $0x158] sm:$0xff]
  %v9309 = vld [vmem:[%s1 + $0x160] sm:$0xff]
  %v9310 = vld [vmem:[%s1 + $0x168] sm:$0xff]
  %v9311 = vld [vmem:[%s1 + $0x170] sm:$0xff]
  %v9312 = vld [vmem:[%s1 + $0x178] sm:$0xff]
  %v9313 = vld [vmem:[%s1 + $0x180] sm:$0xff]
  %v9314 = vld [vmem:[%s1 + $0x188] sm:$0xff]
  %v9315 = vld [vmem:[%s1 + $0x190] sm:$0xff]
  %v9316 = vld [vmem:[%s1 + $0x198] sm:$0xff]
  %v9317 = vld [vmem:[%s1 + $0x1a0] sm:$0xff]
  %v9318 = vld [vmem:[%s1 + $0x1a8] sm:$0xff]
  %v9319 = vld [vmem:[%s1 + $0x1b0] sm:$0xff]
  %v9320 = vld [vmem:[%s1 + $0x1b8] sm:$0xff]
  %v9321 = vld [vmem:[%s1 + $0x1c0] sm:$0xff]
  %v9322 = vld [vmem:[%s1 + $0x1c8] sm:$0xff]
  %v9323 = vld [vmem:[%s1 + $0x1d0] sm:$0xff]
  %v9324 = vld [vmem:[%s1 + $0x1d8] sm:$0xff]
  %v9325 = vld [vmem:[%s1 + $0x1e0] sm:$0xff]
  %v9326 = vld [vmem:[%s1 + $0x1e8] sm:$0xff]
  %v9327 = vld [vmem:[%s1 + $0x1f0] sm:$0xff]
  %v9328 = vld [vmem:[%s1 + $0x1f8] sm:$0xff]
  %v9329 = vadd.f32 %v9201, %v9265
  %v9330 = vadd.f32 %v9202, %v9266
  %v9331 = vadd.f32 %v9203, %v9267
  %v9332 = vadd.f32 %v9204, %v9268
  %v9333 = vadd.f32 %v9205, %v9269
  %v9334 = vadd.f32 %v9206, %v9270
  %v9335 = vadd.f32 %v9207, %v9271
  %v9336 = vadd.f32 %v9208, %v9272
  %v9337 = vadd.f32 %v9209, %v9273
  %v9338 = vadd.f32 %v9210, %v9274
  %v9339 = vadd.f32 %v9211, %v9275
  %v9340 = vadd.f32 %v9212, %v9276
  %v9341 = vadd.f32 %v9213, %v9277
  %v9342 = vadd.f32 %v9214, %v9278
  %v9343 = vadd.f32 %v9215, %v9279
  %v9344 = vadd.f32 %v9216, %v9280
  %v9345 = vadd.f32 %v9217, %v9281
  %v9346 = vadd.f32 %v9218, %v9282
  %v9347 = vadd.f32 %v9219, %v9283
  %v9348 = vadd.f32 %v9220, %v9284
  %v9349 = vadd.f32 %v9221, %v9285
  %v9350 = vadd.f32 %v9222, %v9286
  %v9351 = vadd.f32 %v9223, %v9287
  %v9352 = vadd.f32 %v9224, %v9288
  %v9353 = vadd.f32 %v9225, %v9289
  %v9354 = vadd.f32 %v9226, %v9290
  %v9355 = vadd.f32 %v9227, %v9291
  %v9356 = vadd.f32 %v9228, %v9292
  %v9357 = vadd.f32 %v9229, %v9293
  %v9358 = vadd.f32 %v9230, %v9294
  %v9359 = vadd.f32 %v9231, %v9295
  %v9360 = vadd.f32 %v9232, %v9296
  %v9361 = vadd.f32 %v9233, %v9297
  %v9362 = vadd.f32 %v9234, %v9298
  %v9363 = vadd.f32 %v9235, %v9299
  %v9364 = vadd.f32 %v9236, %v9300
  %v9365 = vadd.f32 %v9237, %v9301
  %v9366 = vadd.f32 %v9238, %v9302
  %v9367 = vadd.f32 %v9239, %v9303
  %v9368 = vadd.f32 %v9240, %v9304
  %v9369 = vadd.f32 %v9241, %v9305
  %v9370 = vadd.f32 %v9242, %v9306
  %v9371 = vadd.f32 %v9243, %v9307
  %v9372 = vadd.f32 %v9244, %v9308
  %v9373 = vadd.f32 %v9245, %v9309
  %v9374 = vadd.f32 %v9246, %v9310
  %v9375 = vadd.f32 %v9247, %v9311
  %v9376 = vadd.f32 %v9248, %v9312
  %v9377 = vadd.f32 %v9249, %v9313
  %v9378 = vadd.f32 %v9250, %v9314
  %v9379 = vadd.f32 %v9251, %v9315
  %v9380 = vadd.f32 %v9252, %v9316
  %v9381 = vadd.f32 %v9253, %v9317
  %v9382 = vadd.f32 %v9254, %v9318
  %v9383 = vadd.f32 %v9255, %v9319
  %v9384 = vadd.f32 %v9256, %v9320
  %v9385 = vadd.f32 %v9257, %v9321
  %v9386 = vadd.f32 %v9258, %v9322
  %v9387 = vadd.f32 %v9259, %v9323
  %v9388 = vadd.f32 %v9260, %v9324
  %v9389 = vadd.f32 %v9261, %v9325
  %v9390 = vadd.f32 %v9262, %v9326
  %v9391 = vadd.f32 %v9263, %v9327
  %v9392 = vadd.f32 %v9264, %v9328
  %9393 = vst.msk [vmem:[%s9] sm:$0xff] %vm97, %v9329
  %9394 = vst.msk [vmem:[%s9 + $0x8] sm:$0xff] %vm97, %v9330
  %9395 = vst.msk [vmem:[%s9 + $0x10] sm:$0xff] %vm97, %v9331
  %9396 = vst.msk [vmem:[%s9 + $0x18] sm:$0xff] %vm97, %v9332
  %9397 = vst.msk [vmem:[%s9 + $0x20] sm:$0xff] %vm97, %v9333
  %9398 = vst.msk [vmem:[%s9 + $0x28] sm:$0xff] %vm97, %v9334
  %9399 = vst.msk [vmem:[%s9 + $0x30] sm:$0xff] %vm97, %v9335
  %9400 = vst.msk [vmem:[%s9 + $0x38] sm:$0xff] %vm97, %v9336
  %9401 = vst.msk [vmem:[%s9 + $0x40] sm:$0xff] %vm97, %v9337
  %9402 = vst.msk [vmem:[%s9 + $0x48] sm:$0xff] %vm97, %v9338
  %9403 = vst.msk [vmem:[%s9 + $0x50] sm:$0xff] %vm97, %v9339
  %9404 = vst.msk [vmem:[%s9 + $0x58] sm:$0xff] %vm97, %v9340
  %9405 = vst.msk [vmem:[%s9 + $0x60] sm:$0xff] %vm97, %v9341
  %9406 = vst.msk [vmem:[%s9 + $0x68] sm:$0xff] %vm97, %v9342
  %9407 = vst.msk [vmem:[%s9 + $0x70] sm:$0xff] %vm97, %v9343
  %9408 = vst.msk [vmem:[%s9 + $0x78] sm:$0xff] %vm97, %v9344
  %9409 = vst.msk [vmem:[%s9 + $0x80] sm:$0xff] %vm97, %v9345
  %9410 = vst.msk [vmem:[%s9 + $0x88] sm:$0xff] %vm97, %v9346
  %9411 = vst.msk [vmem:[%s9 + $0x90] sm:$0xff] %vm97, %v9347
  %9412 = vst.msk [vmem:[%s9 + $0x98] sm:$0xff] %vm97, %v9348
  %9413 = vst.msk [vmem:[%s9 + $0xa0] sm:$0xff] %vm97, %v9349
  %9414 = vst.msk [vmem:[%s9 + $0xa8] sm:$0xff] %vm97, %v9350
  %9415 = vst.msk [vmem:[%s9 + $0xb0] sm:$0xff] %vm97, %v9351
  %9416 = vst.msk [vmem:[%s9 + $0xb8] sm:$0xff] %vm97, %v9352
  %9417 = vst.msk [vmem:[%s9 + $0xc0] sm:$0xff] %vm97, %v9353
  %9418 = vst.msk [vmem:[%s9 + $0xc8] sm:$0xff] %vm97, %v9354
  %9419 = vst.msk [vmem:[%s9 + $0xd0] sm:$0xff] %vm97, %v9355
  %9420 = vst.msk [vmem:[%s9 + $0xd8] sm:$0xff] %vm97, %v9356
  %9421 = vst.msk [vmem:[%s9 + $0xe0] sm:$0xff] %vm97, %v9357
  %9422 = vst.msk [vmem:[%s9 + $0xe8] sm:$0xff] %vm97, %v9358
  %9423 = vst.msk [vmem:[%s9 + $0xf0] sm:$0xff] %vm97, %v9359
  %9424 = vst.msk [vmem:[%s9 + $0xf8] sm:$0xff] %vm97, %v9360
  %9425 = vst.msk [vmem:[%s9 + $0x100] sm:$0xff] %vm97, %v9361
  %9426 = vst.msk [vmem:[%s9 + $0x108] sm:$0xff] %vm97, %v9362
  %9427 = vst.msk [vmem:[%s9 + $0x110] sm:$0xff] %vm97, %v9363
  %9428 = vst.msk [vmem:[%s9 + $0x118] sm:$0xff] %vm97, %v9364
  %9429 = vst.msk [vmem:[%s9 + $0x120] sm:$0xff] %vm97, %v9365
  %9430 = vst.msk [vmem:[%s9 + $0x128] sm:$0xff] %vm97, %v9366
  %9431 = vst.msk [vmem:[%s9 + $0x130] sm:$0xff] %vm97, %v9367
  %9432 = vst.msk [vmem:[%s9 + $0x138] sm:$0xff] %vm97, %v9368
  %9433 = vst.msk [vmem:[%s9 + $0x140] sm:$0xff] %vm97, %v9369
  %9434 = vst.msk [vmem:[%s9 + $0x148] sm:$0xff] %vm97, %v9370
  %9435 = vst.msk [vmem:[%s9 + $0x150] sm:$0xff] %vm97, %v9371
  %9436 = vst.msk [vmem:[%s9 + $0x158] sm:$0xff] %vm97, %v9372
  %9437 = vst.msk [vmem:[%s9 + $0x160] sm:$0xff] %vm97, %v9373
  %9438 = vst.msk [vmem:[%s9 + $0x168] sm:$0xff] %vm97, %v9374
  %9439 = vst.msk [vmem:[%s9 + $0x170] sm:$0xff] %vm97, %v9375
  %9440 = vst.msk [vmem:[%s9 + $0x178] sm:$0xff] %vm97, %v9376
  %9441 = vst.msk [vmem:[%s9 + $0x180] sm:$0xff] %vm97, %v9377
  %9442 = vst.msk [vmem:[%s9 + $0x188] sm:$0xff] %vm97, %v9378
  %9443 = vst.msk [vmem:[%s9 + $0x190] sm:$0xff] %vm97, %v9379
  %9444 = vst.msk [vmem:[%s9 + $0x198] sm:$0xff] %vm97, %v9380
  %9445 = vst.msk [vmem:[%s9 + $0x1a0] sm:$0xff] %vm97, %v9381
  %9446 = vst.msk [vmem:[%s9 + $0x1a8] sm:$0xff] %vm97, %v9382
  %9447 = vst.msk [vmem:[%s9 + $0x1b0] sm:$0xff] %vm97, %v9383
  %9448 = vst.msk [vmem:[%s9 + $0x1b8] sm:$0xff] %vm97, %v9384
  %9449 = vst.msk [vmem:[%s9 + $0x1c0] sm:$0xff] %vm97, %v9385
  %9450 = vst.msk [vmem:[%s9 + $0x1c8] sm:$0xff] %vm97, %v9386
  %9451 = vst.msk [vmem:[%s9 + $0x1d0] sm:$0xff] %vm97, %v9387
  %9452 = vst.msk [vmem:[%s9 + $0x1d8] sm:$0xff] %vm97, %v9388
  %9453 = vst.msk [vmem:[%s9 + $0x1e0] sm:$0xff] %vm97, %v9389
  %9454 = vst.msk [vmem:[%s9 + $0x1e8] sm:$0xff] %vm97, %v9390
  %9455 = vst.msk [vmem:[%s9 + $0x1f0] sm:$0xff] %vm97, %v9391
  %9456 = vst.msk [vmem:[%s9 + $0x1f8] sm:$0xff] %vm97, %v9392
  // Predicated region
  $region38: #{tpu_custom_call.1} parent=0 // pred_check
    _
  $region39: #{tpu_custom_call.1} parent=0 // pred_check_branch
    %9458 = sbr.rel (0) target = $region41
  $region40: #{tpu_custom_call.1} parent=0 // pred_region
    _
  $region41: #{tpu_custom_call.1} parent=0 // pred_fallthru
    _
  // Predicated region
  $region42: #{tpu_custom_call.1} parent=0 // pred_check
    _
  $region43: #{tpu_custom_call.1} parent=0 // pred_check_branch
    %9460 = sbr.rel (0) target = $region45
  $region44: #{tpu_custom_call.1} parent=0 // pred_region
    _
  $region45: #{tpu_custom_call.1} parent=0 // pred_fallthru
    _

</llo_original>
